<compile_context>
chip_gen: v7x
topology: tpu7x:2x2x1
jax: 0.10.0
libtpu: 0.0.40
codegen_flags: <defaults>
</compile_context>

<pallas_src>
import numpy as np
import jax
import jax.numpy as jnp
from jax.experimental import pallas as pl
from jax.experimental.pallas import tpu as pltpu

FC1 = 32              # fc1 hidden width (undefined in the PyTorch source)
NUM_CLUSTERS = 4      # NetVLAD(num_clusters=4, dim=16, alpha=1.0)
ALPHA = 1.0
VLAD_DIM = 16         # channels of the last CNN conv (== last param's shape[0])
C1 = 4                # conv1 output channels
N_BATCH = 2
H_IN = W_IN = 22      # input 22x22 -> conv 20x20 -> pool 10x10 -> conv 8x8 -> pool 4x4
H1 = W1 = H_IN - 2    # 20 : conv1 output spatial
HP1 = WP1 = H1 // 2   # 10 : pool1 output spatial
H2 = W2 = HP1 - 2     # 8  : conv2 output spatial
HP2 = WP2 = H2 // 2   # 4  : pool2 output spatial
S_DESC = HP2 * WP2    # 16 : NetVLAD descriptors per sample


# ------------------------- fused forward-pass kernel -------------------------

def embednet_kernel(cols1_ref, w1_ref, b1_ref, pool1_ref, sel2_ref, w2_ref,
                    b2_ref, pool2_ref, vw_ref, vb_ref, cent_ref,
                    f1w_ref, f1b_ref, f2w_ref, f2b_ref, o_ref):
    """Whole EmbedNet forward, single grid point, everything resident in VMEM.

    cols1 : (N*H1*W1, 27)  im2col of the NHWC input, col order (di, dj, cin)
    w1/b1 : (27, 4), (1, 4)            conv1 as GEMM
    pool1 : (HP1*WP1, H1*W1)           per-sample 2x2 avg-pool matrix
    sel2  : (9, H2*W2, HP1*WP1)        one-hot row gather per 3x3 tap (conv2 im2col)
    w2/b2 : (9, 4, 16), (1, 16)        conv2, one (Cin, Cout) block per tap
    pool2 : (HP2*WP2, H2*W2)           per-sample 2x2 avg-pool matrix
    vw/vb/cent : NetVLAD 1x1-conv weight (C, K), bias (1, K), centroids (K, C)
    f1w/f1b/f2w/f2b : MLP head
    o_ref : (N, 7)
    """
    f32 = jnp.float32

    # ---- conv1 (3x3) + ReLU: one GEMM for the whole batch -------------------
    conv1 = jnp.maximum(
        jnp.dot(cols1_ref[...], w1_ref[...], preferred_element_type=f32)
        + b1_ref[...], 0.0)                                   # (N*400, 4)

    cent = cent_ref[...]                                      # (K, C)
    sp1 = H1 * W1                                             # rows per sample
    desc_list = []
    for n in range(N_BATCH):                                  # N tiny & static
        c1n = conv1[n * sp1:(n + 1) * sp1]                    # (400, 4)
        # 2x2 avg-pool as a constant matmul (stays in VMEM, no HBM round-trip)
        p1n = jnp.dot(pool1_ref[...], c1n, preferred_element_type=f32)   # (100, 4)
        # conv2 (3x3): im2col via one-hot row-selection matmuls, accumulate taps
        acc = jnp.zeros((H2 * W2, VLAD_DIM), f32)             # (64, 16)
        for k in range(9):
            g = jnp.dot(sel2_ref[k], p1n, preferred_element_type=f32)      # (64, 4)
            acc = acc + jnp.dot(g, w2_ref[k], preferred_element_type=f32)  # (64, 16)
        c2n = jnp.maximum(acc + b2_ref[...], 0.0)             # (64, 16)
        desc_list.append(
            jnp.dot(pool2_ref[...], c2n, preferred_element_type=f32))      # (16, 16)

    # ---- NetVLAD: normalize + soft-assign batched over all N*S descriptors --
    desc = jnp.concatenate(desc_list, axis=0)                 # (N*S, C) = (32, 16)
    xn = desc * jax.lax.rsqrt(
        jnp.sum(desc * desc, axis=-1, keepdims=True) + 1e-12)
    logits = (jnp.dot(xn, vw_ref[...], preferred_element_type=f32)
              + vb_ref[...])                                  # (32, K)
    m = jnp.max(logits, axis=-1, keepdims=True)
    e = jnp.exp(logits - m)
    sa = e / jnp.sum(e, axis=-1, keepdims=True)               # (32, K)

    ones_s = jnp.ones((S_DESC, 1), f32)
    outs = []
    for n in range(N_BATCH):
        sa_n = sa[n * S_DESC:(n + 1) * S_DESC]                # (S, K)
        xn_n = xn[n * S_DESC:(n + 1) * S_DESC]                # (S, C)
        saT = sa_n.T                                          # (K, S)
        t1 = jnp.dot(saT, xn_n, preferred_element_type=f32)   # (K, C)
        a_sum = jnp.dot(saT, ones_s, preferred_element_type=f32)   # (K, 1)
        vlad = t1 - a_sum * cent                              # (K, C)
        # intra-normalization over C, then global L2 over the flattened K*C
        vlad = vlad * jax.lax.rsqrt(
            jnp.sum(vlad * vlad, axis=-1, keepdims=True) + 1e-12)
        vlad = vlad * jax.lax.rsqrt(jnp.sum(vlad * vlad) + 1e-12)
        # ---- head: fc1 over the flattened (k, c) order without reshaping ----
        h = f1b_ref[...]                                      # (1, FC1)
        for k in range(NUM_CLUSTERS):
            h = h + jnp.dot(vlad[k:k + 1, :],
                            f1w_ref[k * VLAD_DIM:(k + 1) * VLAD_DIM, :],
                            preferred_element_type=f32)
        h = jnp.maximum(h, 0.0)
        outs.append(jnp.dot(h, f2w_ref[...], preferred_element_type=f32)
                    + f2b_ref[...])                           # (1, 7)

    o_ref[...] = jnp.concatenate(outs, axis=0)                # (N, 7)


# ----------------------------- constant matrices -----------------------------

def _pool_matrix(hi, wi):
    """(hi*wi,) -> (hi//2 * wi//2,) 2x2 average-pool as a matrix, row-major."""
    hp, wp = hi // 2, wi // 2
    m = np.zeros((hp * wp, hi * wi), np.float32)
    for i in range(hp):
        for j in range(wp):
            for a in range(2):
                for b in range(2):
                    m[i * wp + j, (2 * i + a) * wi + (2 * j + b)] = 0.25
    return m


def _shift_select(hi, wi, k):
    """(k*k, ho*wo, hi*wi): one-hot row-gather matrix for each 3x3 tap."""
    ho, wo = hi - k + 1, wi - k + 1
    s = np.zeros((k * k, ho * wo, hi * wi), np.float32)
    for di in range(k):
        for dj in range(k):
            for i in range(ho):
                for j in range(wo):
                    s[di * k + dj, i * wo + j, (i + di) * wi + (j + dj)] = 1.0
    return s


def build_consts():
    return {
        "pool1": jnp.asarray(_pool_matrix(H1, W1)),      # (100, 400)
        "sel2": jnp.asarray(_shift_select(HP1, WP1, 3)),  # (9, 64, 100)
        "pool2": jnp.asarray(_pool_matrix(H2, W2)),       # (16, 64)
    }


# --------------------------------- parameters --------------------------------

def init_params(key):
    ks = jax.random.split(key, 8)
    p = {}
    # conv1: (9*Cin, Cout) matching im2col column order (di, dj, cin)
    p["w1"] = jax.random.normal(ks[0], (9 * 3, C1), jnp.float32) * 0.1
    p["b1"] = jax.random.normal(ks[1], (1, C1), jnp.float32) * 0.01
    # conv2: (9, Cin, Cout), one block per (di, dj) tap
    p["w2"] = jax.random.normal(ks[2], (9, C1, VLAD_DIM), jnp.float32) * 0.1
    p["b2"] = jax.random.normal(ks[3], (1, VLAD_DIM), jnp.float32) * 0.01
    # NetVLAD (centroids random; 1x1-conv init per the standard implementation)
    cent = jax.random.uniform(ks[4], (NUM_CLUSTERS, VLAD_DIM), jnp.float32)
    p["cent"] = cent
    p["vlad_w"] = (2.0 * ALPHA * cent).T                               # (C, K)
    p["vlad_b"] = (-ALPHA * jnp.sum(cent * cent, axis=1))[None, :]     # (1, K)
    # head: Linear(64 -> FC1) -> ReLU -> Linear(FC1 -> 7)
    p["fc1_w"] = jax.random.normal(ks[5], (NUM_CLUSTERS * VLAD_DIM, FC1),
                                   jnp.float32) * 0.1
    p["fc1_b"] = jnp.zeros((1, FC1), jnp.float32)
    p["fc2_w"] = jax.random.normal(ks[6], (FC1, 7), jnp.float32) * 0.1
    p["fc2_b"] = jnp.zeros((1, 7), jnp.float32)
    return p


# ----------------------------------- wrapper ----------------------------------

@jax.jit
def embednet_forward(params, consts, x_nchw):
    # NCHW -> NHWC once; conv1 im2col (86 KB) is the only pre-kernel XLA glue.
    x = jnp.transpose(x_nchw, (0, 2, 3, 1)).astype(jnp.float32)     # (N,22,22,3)
    n, h, w, cin = x.shape
    ho, wo = h - 2, w - 2
    cols1 = jnp.concatenate([x[:, i:i + ho, j:j + wo, :]
                             for i in range(3) for j in range(3)], axis=-1)
    cols1 = cols1.reshape(n * ho * wo, 9 * cin)                     # (800, 27)

    args = (cols1, params["w1"], params["b1"], consts["pool1"], consts["sel2"],
            params["w2"], params["b2"], consts["pool2"], params["vlad_w"],
            params["vlad_b"], params["cent"], params["fc1_w"], params["fc1_b"],
            params["fc2_w"], params["fc2_b"])

    return pl.pallas_call(
        embednet_kernel,
        out_shape=jax.ShapeDtypeStruct((n, 7), jnp.float32),
        # Single grid point: whole arrays resident in VMEM (< 1 MiB total),
        # no tiling needed on any TPU generation.
        in_specs=[pl.BlockSpec(memory_space=pltpu.MemorySpace.VMEM)] * len(args),
        out_specs=pl.BlockSpec(memory_space=pltpu.MemorySpace.VMEM),
        cost_estimate=pl.CostEstimate(flops=2_000_000, transcendentals=256,
                                      bytes_accessed=700_000),
    )(*args)


# -------------------------- pure-JAX reference (check) ------------------------

def reference_forward(params, x_nchw):
    x = jnp.transpose(x_nchw, (0, 2, 3, 1)).astype(jnp.float32)

    def conv_relu_pool(inp, w_mat, b_row, c_out):
        n, h, w, cin = inp.shape
        ho, wo = h - 2, w - 2
        cols = jnp.concatenate([inp[:, i:i + ho, j:j + wo, :]
                                for i in range(3) for j in range(3)], axis=-1)
        y = jnp.maximum(cols.reshape(n * ho * wo, 9 * cin) @ w_mat + b_row, 0.0)
        y = y.reshape(n, ho, wo, c_out)
        y = y.reshape(n, ho // 2, 2, wo // 2, 2, c_out).mean(axis=(2, 4))
        return y

    f = conv_relu_pool(x, params["w1"], params["b1"], C1)
    f = conv_relu_pool(f, params["w2"].reshape(9 * C1, VLAD_DIM),
                       params["b2"], VLAD_DIM)
    n, hf, wf, c = f.shape
    desc = f.reshape(n, hf * wf, c)
    xn = desc * jax.lax.rsqrt(jnp.sum(desc * desc, axis=-1, keepdims=True) + 1e-12)
    logits = xn @ params["vlad_w"] + params["vlad_b"]
    sa = jax.nn.softmax(logits, axis=-1)
    t1 = jnp.einsum("nsk,nsc->nkc", sa, xn)
    a_sum = jnp.sum(sa, axis=1)[..., None]
    vlad = t1 - a_sum * params["cent"][None]
    vlad = vlad * jax.lax.rsqrt(jnp.sum(vlad * vlad, axis=-1, keepdims=True) + 1e-12)
    vlad = vlad.reshape(n, -1)
    vlad = vlad * jax.lax.rsqrt(jnp.sum(vlad * vlad, axis=-1, keepdims=True) + 1e-12)
    h1 = jnp.maximum(vlad @ params["fc1_w"] + params["fc1_b"], 0.0)
    return h1 @ params["fc2_w"] + params["fc2_b"]


if __name__ == "__main__":
    key = jax.random.PRNGKey(0)
    kx, kp = jax.random.split(key)
    x = jax.random.normal(kx, (N_BATCH, 3, H_IN, W_IN), jnp.float32)  # NCHW
    params = init_params(kp)
    consts = build_consts()

    out = embednet_forward(params, consts, x)
    out = jax.block_until_ready(out)
    assert out.shape == (N_BATCH, 7) and out.dtype == jnp.float32
    assert bool(jnp.all(jnp.isfinite(out)))

    ref = jax.block_until_ready(reference_forward(params, x))
    np.testing.assert_allclose(np.asarray(out), np.asarray(ref),
                               rtol=2e-2, atol=2e-2)
    print("KERNEL_OK")
</pallas_src>

<mosaic_0001>
module attributes {stable_mosaic.version = 11 : i64} {
  func.func @embednet_kernel(%arg0: memref<800x27xf32, #tpu.memory_space<vmem>>, %arg1: memref<27x4xf32, #tpu.memory_space<vmem>>, %arg2: memref<1x4xf32, #tpu.memory_space<vmem>>, %arg3: memref<100x400xf32, #tpu.memory_space<vmem>>, %arg4: memref<9x64x100xf32, #tpu.memory_space<vmem>>, %arg5: memref<9x4x16xf32, #tpu.memory_space<vmem>>, %arg6: memref<1x16xf32, #tpu.memory_space<vmem>>, %arg7: memref<16x64xf32, #tpu.memory_space<vmem>>, %arg8: memref<16x4xf32, #tpu.memory_space<vmem>>, %arg9: memref<1x4xf32, #tpu.memory_space<vmem>>, %arg10: memref<4x16xf32, #tpu.memory_space<vmem>>, %arg11: memref<64x32xf32, #tpu.memory_space<vmem>>, %arg12: memref<1x32xf32, #tpu.memory_space<vmem>>, %arg13: memref<32x7xf32, #tpu.memory_space<vmem>>, %arg14: memref<1x7xf32, #tpu.memory_space<vmem>>, %arg15: memref<2x7xf32, #tpu.memory_space<vmem>>) attributes {dimension_semantics = [], scalar_prefetch = 0 : i64, scratch_operands = 0 : i64, tpu.core_type = #tpu.core_type<tc>} {
    %c0 = arith.constant 0 : index
    %c0_0 = arith.constant 0 : index
    %0 = vector.load %arg0[%c0, %c0_0] : memref<800x27xf32, #tpu.memory_space<vmem>>, vector<800x27xf32>
    %c0_1 = arith.constant 0 : index
    %c0_2 = arith.constant 0 : index
    %1 = vector.load %arg1[%c0_1, %c0_2] : memref<27x4xf32, #tpu.memory_space<vmem>>, vector<27x4xf32>
    %cst = arith.constant dense<0.000000e+00> : vector<800x4xf32>
    %2 = tpu.matmul %0, %1, %cst {dimension_numbers = #tpu.dot_dimension_numbers<[1], [0], [0], [1], [0, 0, 1, 1], [], []>} : vector<800x27xf32>, vector<27x4xf32>, vector<800x4xf32> -> vector<800x4xf32>
    %c0_3 = arith.constant 0 : index
    %c0_4 = arith.constant 0 : index
    %3 = vector.load %arg2[%c0_3, %c0_4] : memref<1x4xf32, #tpu.memory_space<vmem>>, vector<1x4xf32>
    %4 = vector.broadcast %3 : vector<1x4xf32> to vector<800x4xf32>
    %5 = arith.addf %2, %4 : vector<800x4xf32>
    %cst_5 = arith.constant 0.000000e+00 : f32
    %6 = vector.broadcast %cst_5 : f32 to vector<800x4xf32>
    %7 = arith.maximumf %5, %6 : vector<800x4xf32>
    %c0_6 = arith.constant 0 : index
    %c0_7 = arith.constant 0 : index
    %8 = vector.load %arg10[%c0_6, %c0_7] : memref<4x16xf32, #tpu.memory_space<vmem>>, vector<4x16xf32>
    %9 = vector.extract_strided_slice %7 {offsets = [0, 0], sizes = [400, 4], strides = [1, 1]} : vector<800x4xf32> to vector<400x4xf32>
    %c0_8 = arith.constant 0 : index
    %c0_9 = arith.constant 0 : index
    %10 = vector.load %arg3[%c0_8, %c0_9] : memref<100x400xf32, #tpu.memory_space<vmem>>, vector<100x400xf32>
    %cst_10 = arith.constant dense<0.000000e+00> : vector<100x4xf32>
    %11 = tpu.matmul %10, %9, %cst_10 {dimension_numbers = #tpu.dot_dimension_numbers<[1], [0], [0], [1], [0, 0, 1, 1], [], []>} : vector<100x400xf32>, vector<400x4xf32>, vector<100x4xf32> -> vector<100x4xf32>
    %cst_11 = arith.constant 0.000000e+00 : f32
    %12 = vector.broadcast %cst_11 : f32 to vector<64x16xf32>
    %c0_12 = arith.constant 0 : index
    %c0_13 = arith.constant 0 : index
    %c0_14 = arith.constant 0 : index
    %13 = vector.load %arg4[%c0_12, %c0_13, %c0_14] : memref<9x64x100xf32, #tpu.memory_space<vmem>>, vector<1x64x100xf32>
    %14 = vector.shape_cast %13 : vector<1x64x100xf32> to vector<64x100xf32>
    %cst_15 = arith.constant dense<0.000000e+00> : vector<64x4xf32>
    %15 = tpu.matmul %14, %11, %cst_15 {dimension_numbers = #tpu.dot_dimension_numbers<[1], [0], [0], [1], [0, 0, 1, 1], [], []>} : vector<64x100xf32>, vector<100x4xf32>, vector<64x4xf32> -> vector<64x4xf32>
    %c0_16 = arith.constant 0 : index
    %c0_17 = arith.constant 0 : index
    %c0_18 = arith.constant 0 : index
    %16 = vector.load %arg5[%c0_16, %c0_17, %c0_18] : memref<9x4x16xf32, #tpu.memory_space<vmem>>, vector<1x4x16xf32>
    %17 = vector.shape_cast %16 : vector<1x4x16xf32> to vector<4x16xf32>
    %cst_19 = arith.constant dense<0.000000e+00> : vector<64x16xf32>
    %18 = tpu.matmul %15, %17, %cst_19 {dimension_numbers = #tpu.dot_dimension_numbers<[1], [0], [0], [1], [0, 0, 1, 1], [], []>} : vector<64x4xf32>, vector<4x16xf32>, vector<64x16xf32> -> vector<64x16xf32>
    %19 = arith.addf %12, %18 : vector<64x16xf32>
    %c1 = arith.constant 1 : index
    %c0_20 = arith.constant 0 : index
    %c0_21 = arith.constant 0 : index
    %20 = vector.load %arg4[%c1, %c0_20, %c0_21] : memref<9x64x100xf32, #tpu.memory_space<vmem>>, vector<1x64x100xf32>
    %21 = vector.shape_cast %20 : vector<1x64x100xf32> to vector<64x100xf32>
    %cst_22 = arith.constant dense<0.000000e+00> : vector<64x4xf32>
    %22 = tpu.matmul %21, %11, %cst_22 {dimension_numbers = #tpu.dot_dimension_numbers<[1], [0], [0], [1], [0, 0, 1, 1], [], []>} : vector<64x100xf32>, vector<100x4xf32>, vector<64x4xf32> -> vector<64x4xf32>
    %c1_23 = arith.constant 1 : index
    %c0_24 = arith.constant 0 : index
    %c0_25 = arith.constant 0 : index
    %23 = vector.load %arg5[%c1_23, %c0_24, %c0_25] : memref<9x4x16xf32, #tpu.memory_space<vmem>>, vector<1x4x16xf32>
    %24 = vector.shape_cast %23 : vector<1x4x16xf32> to vector<4x16xf32>
    %cst_26 = arith.constant dense<0.000000e+00> : vector<64x16xf32>
    %25 = tpu.matmul %22, %24, %cst_26 {dimension_numbers = #tpu.dot_dimension_numbers<[1], [0], [0], [1], [0, 0, 1, 1], [], []>} : vector<64x4xf32>, vector<4x16xf32>, vector<64x16xf32> -> vector<64x16xf32>
    %26 = arith.addf %19, %25 : vector<64x16xf32>
    %c2 = arith.constant 2 : index
    %c0_27 = arith.constant 0 : index
    %c0_28 = arith.constant 0 : index
    %27 = vector.load %arg4[%c2, %c0_27, %c0_28] : memref<9x64x100xf32, #tpu.memory_space<vmem>>, vector<1x64x100xf32>
    %28 = vector.shape_cast %27 : vector<1x64x100xf32> to vector<64x100xf32>
    %cst_29 = arith.constant dense<0.000000e+00> : vector<64x4xf32>
    %29 = tpu.matmul %28, %11, %cst_29 {dimension_numbers = #tpu.dot_dimension_numbers<[1], [0], [0], [1], [0, 0, 1, 1], [], []>} : vector<64x100xf32>, vector<100x4xf32>, vector<64x4xf32> -> vector<64x4xf32>
    %c2_30 = arith.constant 2 : index
    %c0_31 = arith.constant 0 : index
    %c0_32 = arith.constant 0 : index
    %30 = vector.load %arg5[%c2_30, %c0_31, %c0_32] : memref<9x4x16xf32, #tpu.memory_space<vmem>>, vector<1x4x16xf32>
    %31 = vector.shape_cast %30 : vector<1x4x16xf32> to vector<4x16xf32>
    %cst_33 = arith.constant dense<0.000000e+00> : vector<64x16xf32>
    %32 = tpu.matmul %29, %31, %cst_33 {dimension_numbers = #tpu.dot_dimension_numbers<[1], [0], [0], [1], [0, 0, 1, 1], [], []>} : vector<64x4xf32>, vector<4x16xf32>, vector<64x16xf32> -> vector<64x16xf32>
    %33 = arith.addf %26, %32 : vector<64x16xf32>
    %c3 = arith.constant 3 : index
    %c0_34 = arith.constant 0 : index
    %c0_35 = arith.constant 0 : index
    %34 = vector.load %arg4[%c3, %c0_34, %c0_35] : memref<9x64x100xf32, #tpu.memory_space<vmem>>, vector<1x64x100xf32>
    %35 = vector.shape_cast %34 : vector<1x64x100xf32> to vector<64x100xf32>
    %cst_36 = arith.constant dense<0.000000e+00> : vector<64x4xf32>
    %36 = tpu.matmul %35, %11, %cst_36 {dimension_numbers = #tpu.dot_dimension_numbers<[1], [0], [0], [1], [0, 0, 1, 1], [], []>} : vector<64x100xf32>, vector<100x4xf32>, vector<64x4xf32> -> vector<64x4xf32>
    %c3_37 = arith.constant 3 : index
    %c0_38 = arith.constant 0 : index
    %c0_39 = arith.constant 0 : index
    %37 = vector.load %arg5[%c3_37, %c0_38, %c0_39] : memref<9x4x16xf32, #tpu.memory_space<vmem>>, vector<1x4x16xf32>
    %38 = vector.shape_cast %37 : vector<1x4x16xf32> to vector<4x16xf32>
    %cst_40 = arith.constant dense<0.000000e+00> : vector<64x16xf32>
    %39 = tpu.matmul %36, %38, %cst_40 {dimension_numbers = #tpu.dot_dimension_numbers<[1], [0], [0], [1], [0, 0, 1, 1], [], []>} : vector<64x4xf32>, vector<4x16xf32>, vector<64x16xf32> -> vector<64x16xf32>
    %40 = arith.addf %33, %39 : vector<64x16xf32>
    %c4 = arith.constant 4 : index
    %c0_41 = arith.constant 0 : index
    %c0_42 = arith.constant 0 : index
    %41 = vector.load %arg4[%c4, %c0_41, %c0_42] : memref<9x64x100xf32, #tpu.memory_space<vmem>>, vector<1x64x100xf32>
    %42 = vector.shape_cast %41 : vector<1x64x100xf32> to vector<64x100xf32>
    %cst_43 = arith.constant dense<0.000000e+00> : vector<64x4xf32>
    %43 = tpu.matmul %42, %11, %cst_43 {dimension_numbers = #tpu.dot_dimension_numbers<[1], [0], [0], [1], [0, 0, 1, 1], [], []>} : vector<64x100xf32>, vector<100x4xf32>, vector<64x4xf32> -> vector<64x4xf32>
    %c4_44 = arith.constant 4 : index
    %c0_45 = arith.constant 0 : index
    %c0_46 = arith.constant 0 : index
    %44 = vector.load %arg5[%c4_44, %c0_45, %c0_46] : memref<9x4x16xf32, #tpu.memory_space<vmem>>, vector<1x4x16xf32>
    %45 = vector.shape_cast %44 : vector<1x4x16xf32> to vector<4x16xf32>
    %cst_47 = arith.constant dense<0.000000e+00> : vector<64x16xf32>
    %46 = tpu.matmul %43, %45, %cst_47 {dimension_numbers = #tpu.dot_dimension_numbers<[1], [0], [0], [1], [0, 0, 1, 1], [], []>} : vector<64x4xf32>, vector<4x16xf32>, vector<64x16xf32> -> vector<64x16xf32>
    %47 = arith.addf %40, %46 : vector<64x16xf32>
    %c5 = arith.constant 5 : index
    %c0_48 = arith.constant 0 : index
    %c0_49 = arith.constant 0 : index
    %48 = vector.load %arg4[%c5, %c0_48, %c0_49] : memref<9x64x100xf32, #tpu.memory_space<vmem>>, vector<1x64x100xf32>
    %49 = vector.shape_cast %48 : vector<1x64x100xf32> to vector<64x100xf32>
    %cst_50 = arith.constant dense<0.000000e+00> : vector<64x4xf32>
    %50 = tpu.matmul %49, %11, %cst_50 {dimension_numbers = #tpu.dot_dimension_numbers<[1], [0], [0], [1], [0, 0, 1, 1], [], []>} : vector<64x100xf32>, vector<100x4xf32>, vector<64x4xf32> -> vector<64x4xf32>
    %c5_51 = arith.constant 5 : index
    %c0_52 = arith.constant 0 : index
    %c0_53 = arith.constant 0 : index
    %51 = vector.load %arg5[%c5_51, %c0_52, %c0_53] : memref<9x4x16xf32, #tpu.memory_space<vmem>>, vector<1x4x16xf32>
    %52 = vector.shape_cast %51 : vector<1x4x16xf32> to vector<4x16xf32>
    %cst_54 = arith.constant dense<0.000000e+00> : vector<64x16xf32>
    %53 = tpu.matmul %50, %52, %cst_54 {dimension_numbers = #tpu.dot_dimension_numbers<[1], [0], [0], [1], [0, 0, 1, 1], [], []>} : vector<64x4xf32>, vector<4x16xf32>, vector<64x16xf32> -> vector<64x16xf32>
    %54 = arith.addf %47, %53 : vector<64x16xf32>
    %c6 = arith.constant 6 : index
    %c0_55 = arith.constant 0 : index
    %c0_56 = arith.constant 0 : index
    %55 = vector.load %arg4[%c6, %c0_55, %c0_56] : memref<9x64x100xf32, #tpu.memory_space<vmem>>, vector<1x64x100xf32>
    %56 = vector.shape_cast %55 : vector<1x64x100xf32> to vector<64x100xf32>
    %cst_57 = arith.constant dense<0.000000e+00> : vector<64x4xf32>
    %57 = tpu.matmul %56, %11, %cst_57 {dimension_numbers = #tpu.dot_dimension_numbers<[1], [0], [0], [1], [0, 0, 1, 1], [], []>} : vector<64x100xf32>, vector<100x4xf32>, vector<64x4xf32> -> vector<64x4xf32>
    %c6_58 = arith.constant 6 : index
    %c0_59 = arith.constant 0 : index
    %c0_60 = arith.constant 0 : index
    %58 = vector.load %arg5[%c6_58, %c0_59, %c0_60] : memref<9x4x16xf32, #tpu.memory_space<vmem>>, vector<1x4x16xf32>
    %59 = vector.shape_cast %58 : vector<1x4x16xf32> to vector<4x16xf32>
    %cst_61 = arith.constant dense<0.000000e+00> : vector<64x16xf32>
    %60 = tpu.matmul %57, %59, %cst_61 {dimension_numbers = #tpu.dot_dimension_numbers<[1], [0], [0], [1], [0, 0, 1, 1], [], []>} : vector<64x4xf32>, vector<4x16xf32>, vector<64x16xf32> -> vector<64x16xf32>
    %61 = arith.addf %54, %60 : vector<64x16xf32>
    %c7 = arith.constant 7 : index
    %c0_62 = arith.constant 0 : index
    %c0_63 = arith.constant 0 : index
    %62 = vector.load %arg4[%c7, %c0_62, %c0_63] : memref<9x64x100xf32, #tpu.memory_space<vmem>>, vector<1x64x100xf32>
    %63 = vector.shape_cast %62 : vector<1x64x100xf32> to vector<64x100xf32>
    %cst_64 = arith.constant dense<0.000000e+00> : vector<64x4xf32>
    %64 = tpu.matmul %63, %11, %cst_64 {dimension_numbers = #tpu.dot_dimension_numbers<[1], [0], [0], [1], [0, 0, 1, 1], [], []>} : vector<64x100xf32>, vector<100x4xf32>, vector<64x4xf32> -> vector<64x4xf32>
    %c7_65 = arith.constant 7 : index
    %c0_66 = arith.constant 0 : index
    %c0_67 = arith.constant 0 : index
    %65 = vector.load %arg5[%c7_65, %c0_66, %c0_67] : memref<9x4x16xf32, #tpu.memory_space<vmem>>, vector<1x4x16xf32>
    %66 = vector.shape_cast %65 : vector<1x4x16xf32> to vector<4x16xf32>
    %cst_68 = arith.constant dense<0.000000e+00> : vector<64x16xf32>
    %67 = tpu.matmul %64, %66, %cst_68 {dimension_numbers = #tpu.dot_dimension_numbers<[1], [0], [0], [1], [0, 0, 1, 1], [], []>} : vector<64x4xf32>, vector<4x16xf32>, vector<64x16xf32> -> vector<64x16xf32>
    %68 = arith.addf %61, %67 : vector<64x16xf32>
    %c8 = arith.constant 8 : index
    %c0_69 = arith.constant 0 : index
    %c0_70 = arith.constant 0 : index
    %69 = vector.load %arg4[%c8, %c0_69, %c0_70] : memref<9x64x100xf32, #tpu.memory_space<vmem>>, vector<1x64x100xf32>
    %70 = vector.shape_cast %69 : vector<1x64x100xf32> to vector<64x100xf32>
    %cst_71 = arith.constant dense<0.000000e+00> : vector<64x4xf32>
    %71 = tpu.matmul %70, %11, %cst_71 {dimension_numbers = #tpu.dot_dimension_numbers<[1], [0], [0], [1], [0, 0, 1, 1], [], []>} : vector<64x100xf32>, vector<100x4xf32>, vector<64x4xf32> -> vector<64x4xf32>
    %c8_72 = arith.constant 8 : index
    %c0_73 = arith.constant 0 : index
    %c0_74 = arith.constant 0 : index
    %72 = vector.load %arg5[%c8_72, %c0_73, %c0_74] : memref<9x4x16xf32, #tpu.memory_space<vmem>>, vector<1x4x16xf32>
    %73 = vector.shape_cast %72 : vector<1x4x16xf32> to vector<4x16xf32>
    %cst_75 = arith.constant dense<0.000000e+00> : vector<64x16xf32>
    %74 = tpu.matmul %71, %73, %cst_75 {dimension_numbers = #tpu.dot_dimension_numbers<[1], [0], [0], [1], [0, 0, 1, 1], [], []>} : vector<64x4xf32>, vector<4x16xf32>, vector<64x16xf32> -> vector<64x16xf32>
    %75 = arith.addf %68, %74 : vector<64x16xf32>
    %c0_76 = arith.constant 0 : index
    %c0_77 = arith.constant 0 : index
    %76 = vector.load %arg6[%c0_76, %c0_77] : memref<1x16xf32, #tpu.memory_space<vmem>>, vector<1x16xf32>
    %77 = vector.broadcast %76 : vector<1x16xf32> to vector<64x16xf32>
    %78 = arith.addf %75, %77 : vector<64x16xf32>
    %cst_78 = arith.constant 0.000000e+00 : f32
    %79 = vector.broadcast %cst_78 : f32 to vector<64x16xf32>
    %80 = arith.maximumf %78, %79 : vector<64x16xf32>
    %c0_79 = arith.constant 0 : index
    %c0_80 = arith.constant 0 : index
    %81 = vector.load %arg7[%c0_79, %c0_80] : memref<16x64xf32, #tpu.memory_space<vmem>>, vector<16x64xf32>
    %cst_81 = arith.constant dense<0.000000e+00> : vector<16x16xf32>
    %82 = tpu.matmul %81, %80, %cst_81 {dimension_numbers = #tpu.dot_dimension_numbers<[1], [0], [0], [1], [0, 0, 1, 1], [], []>} : vector<16x64xf32>, vector<64x16xf32>, vector<16x16xf32> -> vector<16x16xf32>
    %83 = vector.extract_strided_slice %7 {offsets = [400, 0], sizes = [400, 4], strides = [1, 1]} : vector<800x4xf32> to vector<400x4xf32>
    %c0_82 = arith.constant 0 : index
    %c0_83 = arith.constant 0 : index
    %84 = vector.load %arg3[%c0_82, %c0_83] : memref<100x400xf32, #tpu.memory_space<vmem>>, vector<100x400xf32>
    %cst_84 = arith.constant dense<0.000000e+00> : vector<100x4xf32>
    %85 = tpu.matmul %84, %83, %cst_84 {dimension_numbers = #tpu.dot_dimension_numbers<[1], [0], [0], [1], [0, 0, 1, 1], [], []>} : vector<100x400xf32>, vector<400x4xf32>, vector<100x4xf32> -> vector<100x4xf32>
    %cst_85 = arith.constant 0.000000e+00 : f32
    %86 = vector.broadcast %cst_85 : f32 to vector<64x16xf32>
    %c0_86 = arith.constant 0 : index
    %c0_87 = arith.constant 0 : index
    %c0_88 = arith.constant 0 : index
    %87 = vector.load %arg4[%c0_86, %c0_87, %c0_88] : memref<9x64x100xf32, #tpu.memory_space<vmem>>, vector<1x64x100xf32>
    %88 = vector.shape_cast %87 : vector<1x64x100xf32> to vector<64x100xf32>
    %cst_89 = arith.constant dense<0.000000e+00> : vector<64x4xf32>
    %89 = tpu.matmul %88, %85, %cst_89 {dimension_numbers = #tpu.dot_dimension_numbers<[1], [0], [0], [1], [0, 0, 1, 1], [], []>} : vector<64x100xf32>, vector<100x4xf32>, vector<64x4xf32> -> vector<64x4xf32>
    %c0_90 = arith.constant 0 : index
    %c0_91 = arith.constant 0 : index
    %c0_92 = arith.constant 0 : index
    %90 = vector.load %arg5[%c0_90, %c0_91, %c0_92] : memref<9x4x16xf32, #tpu.memory_space<vmem>>, vector<1x4x16xf32>
    %91 = vector.shape_cast %90 : vector<1x4x16xf32> to vector<4x16xf32>
    %cst_93 = arith.constant dense<0.000000e+00> : vector<64x16xf32>
    %92 = tpu.matmul %89, %91, %cst_93 {dimension_numbers = #tpu.dot_dimension_numbers<[1], [0], [0], [1], [0, 0, 1, 1], [], []>} : vector<64x4xf32>, vector<4x16xf32>, vector<64x16xf32> -> vector<64x16xf32>
    %93 = arith.addf %86, %92 : vector<64x16xf32>
    %c1_94 = arith.constant 1 : index
    %c0_95 = arith.constant 0 : index
    %c0_96 = arith.constant 0 : index
    %94 = vector.load %arg4[%c1_94, %c0_95, %c0_96] : memref<9x64x100xf32, #tpu.memory_space<vmem>>, vector<1x64x100xf32>
    %95 = vector.shape_cast %94 : vector<1x64x100xf32> to vector<64x100xf32>
    %cst_97 = arith.constant dense<0.000000e+00> : vector<64x4xf32>
    %96 = tpu.matmul %95, %85, %cst_97 {dimension_numbers = #tpu.dot_dimension_numbers<[1], [0], [0], [1], [0, 0, 1, 1], [], []>} : vector<64x100xf32>, vector<100x4xf32>, vector<64x4xf32> -> vector<64x4xf32>
    %c1_98 = arith.constant 1 : index
    %c0_99 = arith.constant 0 : index
    %c0_100 = arith.constant 0 : index
    %97 = vector.load %arg5[%c1_98, %c0_99, %c0_100] : memref<9x4x16xf32, #tpu.memory_space<vmem>>, vector<1x4x16xf32>
    %98 = vector.shape_cast %97 : vector<1x4x16xf32> to vector<4x16xf32>
    %cst_101 = arith.constant dense<0.000000e+00> : vector<64x16xf32>
    %99 = tpu.matmul %96, %98, %cst_101 {dimension_numbers = #tpu.dot_dimension_numbers<[1], [0], [0], [1], [0, 0, 1, 1], [], []>} : vector<64x4xf32>, vector<4x16xf32>, vector<64x16xf32> -> vector<64x16xf32>
    %100 = arith.addf %93, %99 : vector<64x16xf32>
    %c2_102 = arith.constant 2 : index
    %c0_103 = arith.constant 0 : index
    %c0_104 = arith.constant 0 : index
    %101 = vector.load %arg4[%c2_102, %c0_103, %c0_104] : memref<9x64x100xf32, #tpu.memory_space<vmem>>, vector<1x64x100xf32>
    %102 = vector.shape_cast %101 : vector<1x64x100xf32> to vector<64x100xf32>
    %cst_105 = arith.constant dense<0.000000e+00> : vector<64x4xf32>
    %103 = tpu.matmul %102, %85, %cst_105 {dimension_numbers = #tpu.dot_dimension_numbers<[1], [0], [0], [1], [0, 0, 1, 1], [], []>} : vector<64x100xf32>, vector<100x4xf32>, vector<64x4xf32> -> vector<64x4xf32>
    %c2_106 = arith.constant 2 : index
    %c0_107 = arith.constant 0 : index
    %c0_108 = arith.constant 0 : index
    %104 = vector.load %arg5[%c2_106, %c0_107, %c0_108] : memref<9x4x16xf32, #tpu.memory_space<vmem>>, vector<1x4x16xf32>
    %105 = vector.shape_cast %104 : vector<1x4x16xf32> to vector<4x16xf32>
    %cst_109 = arith.constant dense<0.000000e+00> : vector<64x16xf32>
    %106 = tpu.matmul %103, %105, %cst_109 {dimension_numbers = #tpu.dot_dimension_numbers<[1], [0], [0], [1], [0, 0, 1, 1], [], []>} : vector<64x4xf32>, vector<4x16xf32>, vector<64x16xf32> -> vector<64x16xf32>
    %107 = arith.addf %100, %106 : vector<64x16xf32>
    %c3_110 = arith.constant 3 : index
    %c0_111 = arith.constant 0 : index
    %c0_112 = arith.constant 0 : index
    %108 = vector.load %arg4[%c3_110, %c0_111, %c0_112] : memref<9x64x100xf32, #tpu.memory_space<vmem>>, vector<1x64x100xf32>
    %109 = vector.shape_cast %108 : vector<1x64x100xf32> to vector<64x100xf32>
    %cst_113 = arith.constant dense<0.000000e+00> : vector<64x4xf32>
    %110 = tpu.matmul %109, %85, %cst_113 {dimension_numbers = #tpu.dot_dimension_numbers<[1], [0], [0], [1], [0, 0, 1, 1], [], []>} : vector<64x100xf32>, vector<100x4xf32>, vector<64x4xf32> -> vector<64x4xf32>
    %c3_114 = arith.constant 3 : index
    %c0_115 = arith.constant 0 : index
    %c0_116 = arith.constant 0 : index
    %111 = vector.load %arg5[%c3_114, %c0_115, %c0_116] : memref<9x4x16xf32, #tpu.memory_space<vmem>>, vector<1x4x16xf32>
    %112 = vector.shape_cast %111 : vector<1x4x16xf32> to vector<4x16xf32>
    %cst_117 = arith.constant dense<0.000000e+00> : vector<64x16xf32>
    %113 = tpu.matmul %110, %112, %cst_117 {dimension_numbers = #tpu.dot_dimension_numbers<[1], [0], [0], [1], [0, 0, 1, 1], [], []>} : vector<64x4xf32>, vector<4x16xf32>, vector<64x16xf32> -> vector<64x16xf32>
    %114 = arith.addf %107, %113 : vector<64x16xf32>
    %c4_118 = arith.constant 4 : index
    %c0_119 = arith.constant 0 : index
    %c0_120 = arith.constant 0 : index
    %115 = vector.load %arg4[%c4_118, %c0_119, %c0_120] : memref<9x64x100xf32, #tpu.memory_space<vmem>>, vector<1x64x100xf32>
    %116 = vector.shape_cast %115 : vector<1x64x100xf32> to vector<64x100xf32>
    %cst_121 = arith.constant dense<0.000000e+00> : vector<64x4xf32>
    %117 = tpu.matmul %116, %85, %cst_121 {dimension_numbers = #tpu.dot_dimension_numbers<[1], [0], [0], [1], [0, 0, 1, 1], [], []>} : vector<64x100xf32>, vector<100x4xf32>, vector<64x4xf32> -> vector<64x4xf32>
    %c4_122 = arith.constant 4 : index
    %c0_123 = arith.constant 0 : index
    %c0_124 = arith.constant 0 : index
    %118 = vector.load %arg5[%c4_122, %c0_123, %c0_124] : memref<9x4x16xf32, #tpu.memory_space<vmem>>, vector<1x4x16xf32>
    %119 = vector.shape_cast %118 : vector<1x4x16xf32> to vector<4x16xf32>
    %cst_125 = arith.constant dense<0.000000e+00> : vector<64x16xf32>
    %120 = tpu.matmul %117, %119, %cst_125 {dimension_numbers = #tpu.dot_dimension_numbers<[1], [0], [0], [1], [0, 0, 1, 1], [], []>} : vector<64x4xf32>, vector<4x16xf32>, vector<64x16xf32> -> vector<64x16xf32>
    %121 = arith.addf %114, %120 : vector<64x16xf32>
    %c5_126 = arith.constant 5 : index
    %c0_127 = arith.constant 0 : index
    %c0_128 = arith.constant 0 : index
    %122 = vector.load %arg4[%c5_126, %c0_127, %c0_128] : memref<9x64x100xf32, #tpu.memory_space<vmem>>, vector<1x64x100xf32>
    %123 = vector.shape_cast %122 : vector<1x64x100xf32> to vector<64x100xf32>
    %cst_129 = arith.constant dense<0.000000e+00> : vector<64x4xf32>
    %124 = tpu.matmul %123, %85, %cst_129 {dimension_numbers = #tpu.dot_dimension_numbers<[1], [0], [0], [1], [0, 0, 1, 1], [], []>} : vector<64x100xf32>, vector<100x4xf32>, vector<64x4xf32> -> vector<64x4xf32>
    %c5_130 = arith.constant 5 : index
    %c0_131 = arith.constant 0 : index
    %c0_132 = arith.constant 0 : index
    %125 = vector.load %arg5[%c5_130, %c0_131, %c0_132] : memref<9x4x16xf32, #tpu.memory_space<vmem>>, vector<1x4x16xf32>
    %126 = vector.shape_cast %125 : vector<1x4x16xf32> to vector<4x16xf32>
    %cst_133 = arith.constant dense<0.000000e+00> : vector<64x16xf32>
    %127 = tpu.matmul %124, %126, %cst_133 {dimension_numbers = #tpu.dot_dimension_numbers<[1], [0], [0], [1], [0, 0, 1, 1], [], []>} : vector<64x4xf32>, vector<4x16xf32>, vector<64x16xf32> -> vector<64x16xf32>
    %128 = arith.addf %121, %127 : vector<64x16xf32>
    %c6_134 = arith.constant 6 : index
    %c0_135 = arith.constant 0 : index
    %c0_136 = arith.constant 0 : index
    %129 = vector.load %arg4[%c6_134, %c0_135, %c0_136] : memref<9x64x100xf32, #tpu.memory_space<vmem>>, vector<1x64x100xf32>
    %130 = vector.shape_cast %129 : vector<1x64x100xf32> to vector<64x100xf32>
    %cst_137 = arith.constant dense<0.000000e+00> : vector<64x4xf32>
    %131 = tpu.matmul %130, %85, %cst_137 {dimension_numbers = #tpu.dot_dimension_numbers<[1], [0], [0], [1], [0, 0, 1, 1], [], []>} : vector<64x100xf32>, vector<100x4xf32>, vector<64x4xf32> -> vector<64x4xf32>
    %c6_138 = arith.constant 6 : index
    %c0_139 = arith.constant 0 : index
    %c0_140 = arith.constant 0 : index
    %132 = vector.load %arg5[%c6_138, %c0_139, %c0_140] : memref<9x4x16xf32, #tpu.memory_space<vmem>>, vector<1x4x16xf32>
    %133 = vector.shape_cast %132 : vector<1x4x16xf32> to vector<4x16xf32>
    %cst_141 = arith.constant dense<0.000000e+00> : vector<64x16xf32>
    %134 = tpu.matmul %131, %133, %cst_141 {dimension_numbers = #tpu.dot_dimension_numbers<[1], [0], [0], [1], [0, 0, 1, 1], [], []>} : vector<64x4xf32>, vector<4x16xf32>, vector<64x16xf32> -> vector<64x16xf32>
    %135 = arith.addf %128, %134 : vector<64x16xf32>
    %c7_142 = arith.constant 7 : index
    %c0_143 = arith.constant 0 : index
    %c0_144 = arith.constant 0 : index
    %136 = vector.load %arg4[%c7_142, %c0_143, %c0_144] : memref<9x64x100xf32, #tpu.memory_space<vmem>>, vector<1x64x100xf32>
    %137 = vector.shape_cast %136 : vector<1x64x100xf32> to vector<64x100xf32>
    %cst_145 = arith.constant dense<0.000000e+00> : vector<64x4xf32>
    %138 = tpu.matmul %137, %85, %cst_145 {dimension_numbers = #tpu.dot_dimension_numbers<[1], [0], [0], [1], [0, 0, 1, 1], [], []>} : vector<64x100xf32>, vector<100x4xf32>, vector<64x4xf32> -> vector<64x4xf32>
    %c7_146 = arith.constant 7 : index
    %c0_147 = arith.constant 0 : index
    %c0_148 = arith.constant 0 : index
    %139 = vector.load %arg5[%c7_146, %c0_147, %c0_148] : memref<9x4x16xf32, #tpu.memory_space<vmem>>, vector<1x4x16xf32>
    %140 = vector.shape_cast %139 : vector<1x4x16xf32> to vector<4x16xf32>
    %cst_149 = arith.constant dense<0.000000e+00> : vector<64x16xf32>
    %141 = tpu.matmul %138, %140, %cst_149 {dimension_numbers = #tpu.dot_dimension_numbers<[1], [0], [0], [1], [0, 0, 1, 1], [], []>} : vector<64x4xf32>, vector<4x16xf32>, vector<64x16xf32> -> vector<64x16xf32>
    %142 = arith.addf %135, %141 : vector<64x16xf32>
    %c8_150 = arith.constant 8 : index
    %c0_151 = arith.constant 0 : index
    %c0_152 = arith.constant 0 : index
    %143 = vector.load %arg4[%c8_150, %c0_151, %c0_152] : memref<9x64x100xf32, #tpu.memory_space<vmem>>, vector<1x64x100xf32>
    %144 = vector.shape_cast %143 : vector<1x64x100xf32> to vector<64x100xf32>
    %cst_153 = arith.constant dense<0.000000e+00> : vector<64x4xf32>
    %145 = tpu.matmul %144, %85, %cst_153 {dimension_numbers = #tpu.dot_dimension_numbers<[1], [0], [0], [1], [0, 0, 1, 1], [], []>} : vector<64x100xf32>, vector<100x4xf32>, vector<64x4xf32> -> vector<64x4xf32>
    %c8_154 = arith.constant 8 : index
    %c0_155 = arith.constant 0 : index
    %c0_156 = arith.constant 0 : index
    %146 = vector.load %arg5[%c8_154, %c0_155, %c0_156] : memref<9x4x16xf32, #tpu.memory_space<vmem>>, vector<1x4x16xf32>
    %147 = vector.shape_cast %146 : vector<1x4x16xf32> to vector<4x16xf32>
    %cst_157 = arith.constant dense<0.000000e+00> : vector<64x16xf32>
    %148 = tpu.matmul %145, %147, %cst_157 {dimension_numbers = #tpu.dot_dimension_numbers<[1], [0], [0], [1], [0, 0, 1, 1], [], []>} : vector<64x4xf32>, vector<4x16xf32>, vector<64x16xf32> -> vector<64x16xf32>
    %149 = arith.addf %142, %148 : vector<64x16xf32>
    %c0_158 = arith.constant 0 : index
    %c0_159 = arith.constant 0 : index
    %150 = vector.load %arg6[%c0_158, %c0_159] : memref<1x16xf32, #tpu.memory_space<vmem>>, vector<1x16xf32>
    %151 = vector.broadcast %150 : vector<1x16xf32> to vector<64x16xf32>
    %152 = arith.addf %149, %151 : vector<64x16xf32>
    %cst_160 = arith.constant 0.000000e+00 : f32
    %153 = vector.broadcast %cst_160 : f32 to vector<64x16xf32>
    %154 = arith.maximumf %152, %153 : vector<64x16xf32>
    %c0_161 = arith.constant 0 : index
    %c0_162 = arith.constant 0 : index
    %155 = vector.load %arg7[%c0_161, %c0_162] : memref<16x64xf32, #tpu.memory_space<vmem>>, vector<16x64xf32>
    %cst_163 = arith.constant dense<0.000000e+00> : vector<16x16xf32>
    %156 = tpu.matmul %155, %154, %cst_163 {dimension_numbers = #tpu.dot_dimension_numbers<[1], [0], [0], [1], [0, 0, 1, 1], [], []>} : vector<16x64xf32>, vector<64x16xf32>, vector<16x16xf32> -> vector<16x16xf32>
    %157 = tpu.concatenate %82, %156 in 0 : vector<16x16xf32>, vector<16x16xf32> -> vector<32x16xf32>
    %158 = arith.mulf %157, %157 : vector<32x16xf32>
    %cst_164 = arith.constant dense<0.000000e+00> : vector<32xf32>
    %159 = vector.multi_reduction <add>, %158, %cst_164 [1] : vector<32x16xf32> to vector<32xf32>
    %160 = vector.shape_cast %159 : vector<32xf32> to vector<32x1xf32>
    %cst_165 = arith.constant 9.99999996E-13 : f32
    %161 = vector.broadcast %cst_165 : f32 to vector<32x1xf32>
    %162 = arith.addf %160, %161 : vector<32x1xf32>
    %163 = math.rsqrt %162 : vector<32x1xf32>
    %164 = vector.broadcast %163 : vector<32x1xf32> to vector<32x16xf32>
    %165 = arith.mulf %157, %164 : vector<32x16xf32>
    %c0_166 = arith.constant 0 : index
    %c0_167 = arith.constant 0 : index
    %166 = vector.load %arg8[%c0_166, %c0_167] : memref<16x4xf32, #tpu.memory_space<vmem>>, vector<16x4xf32>
    %cst_168 = arith.constant dense<0.000000e+00> : vector<32x4xf32>
    %167 = tpu.matmul %165, %166, %cst_168 {dimension_numbers = #tpu.dot_dimension_numbers<[1], [0], [0], [1], [0, 0, 1, 1], [], []>} : vector<32x16xf32>, vector<16x4xf32>, vector<32x4xf32> -> vector<32x4xf32>
    %c0_169 = arith.constant 0 : index
    %c0_170 = arith.constant 0 : index
    %168 = vector.load %arg9[%c0_169, %c0_170] : memref<1x4xf32, #tpu.memory_space<vmem>>, vector<1x4xf32>
    %169 = vector.broadcast %168 : vector<1x4xf32> to vector<32x4xf32>
    %170 = arith.addf %167, %169 : vector<32x4xf32>
    %cst_171 = arith.constant dense<0xFF800000> : vector<32xf32>
    %171 = vector.multi_reduction <maximumf>, %170, %cst_171 [1] : vector<32x4xf32> to vector<32xf32>
    %172 = vector.shape_cast %171 : vector<32xf32> to vector<32x1xf32>
    %173 = vector.broadcast %172 : vector<32x1xf32> to vector<32x4xf32>
    %174 = arith.subf %170, %173 : vector<32x4xf32>
    %175 = math.exp %174 : vector<32x4xf32>
    %cst_172 = arith.constant dense<0.000000e+00> : vector<32xf32>
    %176 = vector.multi_reduction <add>, %175, %cst_172 [1] : vector<32x4xf32> to vector<32xf32>
    %177 = vector.shape_cast %176 : vector<32xf32> to vector<32x1xf32>
    %178 = vector.broadcast %177 : vector<32x1xf32> to vector<32x4xf32>
    %179 = arith.divf %175, %178 : vector<32x4xf32>
    %cst_173 = arith.constant 1.000000e+00 : f32
    %180 = vector.broadcast %cst_173 : f32 to vector<16x1xf32>
    %181 = vector.extract_strided_slice %179 {offsets = [0, 0], sizes = [16, 4], strides = [1, 1]} : vector<32x4xf32> to vector<16x4xf32>
    %182 = vector.extract_strided_slice %165 {offsets = [0, 0], sizes = [16, 16], strides = [1, 1]} : vector<32x16xf32> to vector<16x16xf32>
    %183 = tpu.transpose %181, [1, 0] : vector<16x4xf32> -> vector<4x16xf32>
    %cst_174 = arith.constant dense<0.000000e+00> : vector<4x16xf32>
    %184 = tpu.matmul %183, %182, %cst_174 {dimension_numbers = #tpu.dot_dimension_numbers<[1], [0], [0], [1], [0, 0, 1, 1], [], []>} : vector<4x16xf32>, vector<16x16xf32>, vector<4x16xf32> -> vector<4x16xf32>
    %cst_175 = arith.constant dense<0.000000e+00> : vector<4x1xf32>
    %185 = tpu.matmul %183, %180, %cst_175 {dimension_numbers = #tpu.dot_dimension_numbers<[1], [0], [0], [1], [0, 0, 1, 1], [], []>} : vector<4x16xf32>, vector<16x1xf32>, vector<4x1xf32> -> vector<4x1xf32>
    %186 = vector.broadcast %185 : vector<4x1xf32> to vector<4x16xf32>
    %187 = arith.mulf %186, %8 : vector<4x16xf32>
    %188 = arith.subf %184, %187 : vector<4x16xf32>
    %189 = arith.mulf %188, %188 : vector<4x16xf32>
    %cst_176 = arith.constant dense<0.000000e+00> : vector<4xf32>
    %190 = vector.multi_reduction <add>, %189, %cst_176 [1] : vector<4x16xf32> to vector<4xf32>
    %191 = vector.shape_cast %190 : vector<4xf32> to vector<4x1xf32>
    %cst_177 = arith.constant 9.99999996E-13 : f32
    %192 = vector.broadcast %cst_177 : f32 to vector<4x1xf32>
    %193 = arith.addf %191, %192 : vector<4x1xf32>
    %194 = math.rsqrt %193 : vector<4x1xf32>
    %195 = vector.broadcast %194 : vector<4x1xf32> to vector<4x16xf32>
    %196 = arith.mulf %188, %195 : vector<4x16xf32>
    %197 = arith.mulf %196, %196 : vector<4x16xf32>
    %198 = vector.shape_cast %197 : vector<4x16xf32> to vector<1x4x16xf32>
    %cst_178 = arith.constant dense<0.000000e+00> : vector<1xf32>
    %199 = vector.multi_reduction <add>, %198, %cst_178 [1, 2] : vector<1x4x16xf32> to vector<1xf32>
    %200 = vector.shape_cast %199 : vector<1xf32> to vector<1x1x1xf32>
    %201 = vector.extract %200[0, 0, 0] : f32 from vector<1x1x1xf32>
    %cst_179 = arith.constant 9.99999996E-13 : f32
    %202 = arith.addf %201, %cst_179 : f32
    %203 = math.rsqrt %202 : f32
    %204 = vector.broadcast %203 : f32 to vector<4x16xf32>
    %205 = arith.mulf %196, %204 : vector<4x16xf32>
    %c0_180 = arith.constant 0 : index
    %c0_181 = arith.constant 0 : index
    %206 = vector.load %arg12[%c0_180, %c0_181] : memref<1x32xf32, #tpu.memory_space<vmem>>, vector<1x32xf32>
    %207 = vector.extract_strided_slice %205 {offsets = [0, 0], sizes = [1, 16], strides = [1, 1]} : vector<4x16xf32> to vector<1x16xf32>
    %c0_182 = arith.constant 0 : index
    %c0_183 = arith.constant 0 : index
    %208 = vector.load %arg11[%c0_182, %c0_183] : memref<64x32xf32, #tpu.memory_space<vmem>>, vector<16x32xf32>
    %cst_184 = arith.constant dense<0.000000e+00> : vector<1x32xf32>
    %209 = tpu.matmul %207, %208, %cst_184 {dimension_numbers = #tpu.dot_dimension_numbers<[1], [0], [0], [1], [0, 0, 1, 1], [], []>} : vector<1x16xf32>, vector<16x32xf32>, vector<1x32xf32> -> vector<1x32xf32>
    %210 = arith.addf %206, %209 : vector<1x32xf32>
    %211 = vector.extract_strided_slice %205 {offsets = [1, 0], sizes = [1, 16], strides = [1, 1]} : vector<4x16xf32> to vector<1x16xf32>
    %c16 = arith.constant 16 : index
    %c0_185 = arith.constant 0 : index
    %212 = vector.load %arg11[%c16, %c0_185] : memref<64x32xf32, #tpu.memory_space<vmem>>, vector<16x32xf32>
    %cst_186 = arith.constant dense<0.000000e+00> : vector<1x32xf32>
    %213 = tpu.matmul %211, %212, %cst_186 {dimension_numbers = #tpu.dot_dimension_numbers<[1], [0], [0], [1], [0, 0, 1, 1], [], []>} : vector<1x16xf32>, vector<16x32xf32>, vector<1x32xf32> -> vector<1x32xf32>
    %214 = arith.addf %210, %213 : vector<1x32xf32>
    %215 = vector.extract_strided_slice %205 {offsets = [2, 0], sizes = [1, 16], strides = [1, 1]} : vector<4x16xf32> to vector<1x16xf32>
    %c32 = arith.constant 32 : index
    %c0_187 = arith.constant 0 : index
    %216 = vector.load %arg11[%c32, %c0_187] : memref<64x32xf32, #tpu.memory_space<vmem>>, vector<16x32xf32>
    %cst_188 = arith.constant dense<0.000000e+00> : vector<1x32xf32>
    %217 = tpu.matmul %215, %216, %cst_188 {dimension_numbers = #tpu.dot_dimension_numbers<[1], [0], [0], [1], [0, 0, 1, 1], [], []>} : vector<1x16xf32>, vector<16x32xf32>, vector<1x32xf32> -> vector<1x32xf32>
    %218 = arith.addf %214, %217 : vector<1x32xf32>
    %219 = vector.extract_strided_slice %205 {offsets = [3, 0], sizes = [1, 16], strides = [1, 1]} : vector<4x16xf32> to vector<1x16xf32>
    %c48 = arith.constant 48 : index
    %c0_189 = arith.constant 0 : index
    %220 = vector.load %arg11[%c48, %c0_189] : memref<64x32xf32, #tpu.memory_space<vmem>>, vector<16x32xf32>
    %cst_190 = arith.constant dense<0.000000e+00> : vector<1x32xf32>
    %221 = tpu.matmul %219, %220, %cst_190 {dimension_numbers = #tpu.dot_dimension_numbers<[1], [0], [0], [1], [0, 0, 1, 1], [], []>} : vector<1x16xf32>, vector<16x32xf32>, vector<1x32xf32> -> vector<1x32xf32>
    %222 = arith.addf %218, %221 : vector<1x32xf32>
    %cst_191 = arith.constant 0.000000e+00 : f32
    %223 = vector.broadcast %cst_191 : f32 to vector<1x32xf32>
    %224 = arith.maximumf %222, %223 : vector<1x32xf32>
    %c0_192 = arith.constant 0 : index
    %c0_193 = arith.constant 0 : index
    %225 = vector.load %arg13[%c0_192, %c0_193] : memref<32x7xf32, #tpu.memory_space<vmem>>, vector<32x7xf32>
    %cst_194 = arith.constant dense<0.000000e+00> : vector<1x7xf32>
    %226 = tpu.matmul %224, %225, %cst_194 {dimension_numbers = #tpu.dot_dimension_numbers<[1], [0], [0], [1], [0, 0, 1, 1], [], []>} : vector<1x32xf32>, vector<32x7xf32>, vector<1x7xf32> -> vector<1x7xf32>
    %c0_195 = arith.constant 0 : index
    %c0_196 = arith.constant 0 : index
    %227 = vector.load %arg14[%c0_195, %c0_196] : memref<1x7xf32, #tpu.memory_space<vmem>>, vector<1x7xf32>
    %228 = arith.addf %226, %227 : vector<1x7xf32>
    %229 = vector.extract_strided_slice %179 {offsets = [16, 0], sizes = [16, 4], strides = [1, 1]} : vector<32x4xf32> to vector<16x4xf32>
    %230 = vector.extract_strided_slice %165 {offsets = [16, 0], sizes = [16, 16], strides = [1, 1]} : vector<32x16xf32> to vector<16x16xf32>
    %231 = tpu.transpose %229, [1, 0] : vector<16x4xf32> -> vector<4x16xf32>
    %cst_197 = arith.constant dense<0.000000e+00> : vector<4x16xf32>
    %232 = tpu.matmul %231, %230, %cst_197 {dimension_numbers = #tpu.dot_dimension_numbers<[1], [0], [0], [1], [0, 0, 1, 1], [], []>} : vector<4x16xf32>, vector<16x16xf32>, vector<4x16xf32> -> vector<4x16xf32>
    %cst_198 = arith.constant dense<0.000000e+00> : vector<4x1xf32>
    %233 = tpu.matmul %231, %180, %cst_198 {dimension_numbers = #tpu.dot_dimension_numbers<[1], [0], [0], [1], [0, 0, 1, 1], [], []>} : vector<4x16xf32>, vector<16x1xf32>, vector<4x1xf32> -> vector<4x1xf32>
    %234 = vector.broadcast %233 : vector<4x1xf32> to vector<4x16xf32>
    %235 = arith.mulf %234, %8 : vector<4x16xf32>
    %236 = arith.subf %232, %235 : vector<4x16xf32>
    %237 = arith.mulf %236, %236 : vector<4x16xf32>
    %cst_199 = arith.constant dense<0.000000e+00> : vector<4xf32>
    %238 = vector.multi_reduction <add>, %237, %cst_199 [1] : vector<4x16xf32> to vector<4xf32>
    %239 = vector.shape_cast %238 : vector<4xf32> to vector<4x1xf32>
    %cst_200 = arith.constant 9.99999996E-13 : f32
    %240 = vector.broadcast %cst_200 : f32 to vector<4x1xf32>
    %241 = arith.addf %239, %240 : vector<4x1xf32>
    %242 = math.rsqrt %241 : vector<4x1xf32>
    %243 = vector.broadcast %242 : vector<4x1xf32> to vector<4x16xf32>
    %244 = arith.mulf %236, %243 : vector<4x16xf32>
    %245 = arith.mulf %244, %244 : vector<4x16xf32>
    %246 = vector.shape_cast %245 : vector<4x16xf32> to vector<1x4x16xf32>
    %cst_201 = arith.constant dense<0.000000e+00> : vector<1xf32>
    %247 = vector.multi_reduction <add>, %246, %cst_201 [1, 2] : vector<1x4x16xf32> to vector<1xf32>
    %248 = vector.shape_cast %247 : vector<1xf32> to vector<1x1x1xf32>
    %249 = vector.extract %248[0, 0, 0] : f32 from vector<1x1x1xf32>
    %cst_202 = arith.constant 9.99999996E-13 : f32
    %250 = arith.addf %249, %cst_202 : f32
    %251 = math.rsqrt %250 : f32
    %252 = vector.broadcast %251 : f32 to vector<4x16xf32>
    %253 = arith.mulf %244, %252 : vector<4x16xf32>
    %c0_203 = arith.constant 0 : index
    %c0_204 = arith.constant 0 : index
    %254 = vector.load %arg12[%c0_203, %c0_204] : memref<1x32xf32, #tpu.memory_space<vmem>>, vector<1x32xf32>
    %255 = vector.extract_strided_slice %253 {offsets = [0, 0], sizes = [1, 16], strides = [1, 1]} : vector<4x16xf32> to vector<1x16xf32>
    %c0_205 = arith.constant 0 : index
    %c0_206 = arith.constant 0 : index
    %256 = vector.load %arg11[%c0_205, %c0_206] : memref<64x32xf32, #tpu.memory_space<vmem>>, vector<16x32xf32>
    %cst_207 = arith.constant dense<0.000000e+00> : vector<1x32xf32>
    %257 = tpu.matmul %255, %256, %cst_207 {dimension_numbers = #tpu.dot_dimension_numbers<[1], [0], [0], [1], [0, 0, 1, 1], [], []>} : vector<1x16xf32>, vector<16x32xf32>, vector<1x32xf32> -> vector<1x32xf32>
    %258 = arith.addf %254, %257 : vector<1x32xf32>
    %259 = vector.extract_strided_slice %253 {offsets = [1, 0], sizes = [1, 16], strides = [1, 1]} : vector<4x16xf32> to vector<1x16xf32>
    %c16_208 = arith.constant 16 : index
    %c0_209 = arith.constant 0 : index
    %260 = vector.load %arg11[%c16_208, %c0_209] : memref<64x32xf32, #tpu.memory_space<vmem>>, vector<16x32xf32>
    %cst_210 = arith.constant dense<0.000000e+00> : vector<1x32xf32>
    %261 = tpu.matmul %259, %260, %cst_210 {dimension_numbers = #tpu.dot_dimension_numbers<[1], [0], [0], [1], [0, 0, 1, 1], [], []>} : vector<1x16xf32>, vector<16x32xf32>, vector<1x32xf32> -> vector<1x32xf32>
    %262 = arith.addf %258, %261 : vector<1x32xf32>
    %263 = vector.extract_strided_slice %253 {offsets = [2, 0], sizes = [1, 16], strides = [1, 1]} : vector<4x16xf32> to vector<1x16xf32>
    %c32_211 = arith.constant 32 : index
    %c0_212 = arith.constant 0 : index
    %264 = vector.load %arg11[%c32_211, %c0_212] : memref<64x32xf32, #tpu.memory_space<vmem>>, vector<16x32xf32>
    %cst_213 = arith.constant dense<0.000000e+00> : vector<1x32xf32>
    %265 = tpu.matmul %263, %264, %cst_213 {dimension_numbers = #tpu.dot_dimension_numbers<[1], [0], [0], [1], [0, 0, 1, 1], [], []>} : vector<1x16xf32>, vector<16x32xf32>, vector<1x32xf32> -> vector<1x32xf32>
    %266 = arith.addf %262, %265 : vector<1x32xf32>
    %267 = vector.extract_strided_slice %253 {offsets = [3, 0], sizes = [1, 16], strides = [1, 1]} : vector<4x16xf32> to vector<1x16xf32>
    %c48_214 = arith.constant 48 : index
    %c0_215 = arith.constant 0 : index
    %268 = vector.load %arg11[%c48_214, %c0_215] : memref<64x32xf32, #tpu.memory_space<vmem>>, vector<16x32xf32>
    %cst_216 = arith.constant dense<0.000000e+00> : vector<1x32xf32>
    %269 = tpu.matmul %267, %268, %cst_216 {dimension_numbers = #tpu.dot_dimension_numbers<[1], [0], [0], [1], [0, 0, 1, 1], [], []>} : vector<1x16xf32>, vector<16x32xf32>, vector<1x32xf32> -> vector<1x32xf32>
    %270 = arith.addf %266, %269 : vector<1x32xf32>
    %cst_217 = arith.constant 0.000000e+00 : f32
    %271 = vector.broadcast %cst_217 : f32 to vector<1x32xf32>
    %272 = arith.maximumf %270, %271 : vector<1x32xf32>
    %c0_218 = arith.constant 0 : index
    %c0_219 = arith.constant 0 : index
    %273 = vector.load %arg13[%c0_218, %c0_219] : memref<32x7xf32, #tpu.memory_space<vmem>>, vector<32x7xf32>
    %cst_220 = arith.constant dense<0.000000e+00> : vector<1x7xf32>
    %274 = tpu.matmul %272, %273, %cst_220 {dimension_numbers = #tpu.dot_dimension_numbers<[1], [0], [0], [1], [0, 0, 1, 1], [], []>} : vector<1x32xf32>, vector<32x7xf32>, vector<1x7xf32> -> vector<1x7xf32>
    %c0_221 = arith.constant 0 : index
    %c0_222 = arith.constant 0 : index
    %275 = vector.load %arg14[%c0_221, %c0_222] : memref<1x7xf32, #tpu.memory_space<vmem>>, vector<1x7xf32>
    %276 = arith.addf %274, %275 : vector<1x7xf32>
    %277 = tpu.concatenate %228, %276 in 0 : vector<1x7xf32>, vector<1x7xf32> -> vector<2x7xf32>
    %c0_223 = arith.constant 0 : index
    %c0_224 = arith.constant 0 : index
    %278 = vector.load %arg15[%c0_223, %c0_224] : memref<2x7xf32, #tpu.memory_space<vmem>>, vector<2x7xf32>
    tpu.vector_store %arg15[%c0_223, %c0_224], %277 {strides = array<i32>} : memref<2x7xf32, #tpu.memory_space<vmem>>, vector<2x7xf32>,
    return
  }
}

</mosaic_0001>

<llo_original>
// kernel: embednet_forward.1
$region0: #{embednet_forward.1}
  #allocation0 [shape = 'u32[]', space=smem, size = 0x4, offset = 0x4, fixed_abs, tag = 'smem constant byte address 0x4 - core index']
  #allocation1 [shape = 'u32[144,128]{1,0:T(1,128)}', space=vmem, size = 0x12000, scoped, tag = 'internal scratch']
  %s0 = inlined_call_operand.vmem [shape: f32[800,27], index: 0, kind: input, shape index: {}]
  %s1 = inlined_call_operand.vmem [shape: f32[27,4], index: 1, kind: input, shape index: {}]
  %s2 = inlined_call_operand.vmem [shape: f32[1,4], index: 2, kind: input, shape index: {}]
  %s3 = inlined_call_operand.vmem [shape: f32[100,400], index: 3, kind: input, shape index: {}]
  %s4 = inlined_call_operand.vmem [shape: f32[9,64,100], index: 4, kind: input, shape index: {}]
  %s5 = inlined_call_operand.vmem [shape: f32[9,4,16], index: 5, kind: input, shape index: {}]
  %s6 = inlined_call_operand.vmem [shape: f32[1,16], index: 6, kind: input, shape index: {}]
  %s7 = inlined_call_operand.vmem [shape: f32[16,64], index: 7, kind: input, shape index: {}]
  %s8 = inlined_call_operand.vmem [shape: f32[16,4], index: 8, kind: input, shape index: {}]
  %s9 = inlined_call_operand.vmem [shape: f32[1,4], index: 9, kind: input, shape index: {}]
  %s10 = inlined_call_operand.vmem [shape: f32[4,16], index: 10, kind: input, shape index: {}]
  %s11 = inlined_call_operand.vmem [shape: f32[64,32], index: 11, kind: input, shape index: {}]
  %s12 = inlined_call_operand.vmem [shape: f32[1,32], index: 12, kind: input, shape index: {}]
  %s13 = inlined_call_operand.vmem [shape: f32[32,7], index: 13, kind: input, shape index: {}]
  %s14 = inlined_call_operand.vmem [shape: f32[1,7], index: 14, kind: input, shape index: {}]
  %s15 = inlined_call_operand.hbm [shape: f32[2,7], index: 15, kind: output, shape index: {}]
  %s16 = sld [smem:[#allocation0]]
  $region70: #{embednet_forward.1} parent=0
    _
  %s18 = ssub.s32 1, %s16
  %s19 = scalar_select 0, %s18, %s16
  $region1: #{embednet_forward.1} parent=0
    #allocation2 [shape = 'u8[1024]{0}', space=vmem, size = 0x400, scoped, tag = 'output window, operand 0, single buffered']
    #allocation3 [shape = 's32[1]{0}', space=sflag, size = 0x4, scoped, tag = 'scoped memory for embednet_forward.1']
    %20 = vsyncpa [#allocation3], 0
    // Predicated region
    $region2: #{embednet_forward.1} parent=1 // pred_check
      _
    $region3: #{embednet_forward.1} parent=1 // pred_check_branch
      %22 = sbr.rel (0) target = $region5
    $region4: #{embednet_forward.1} parent=1 // pred_region
      _
    $region5: #{embednet_forward.1} parent=1 // pred_fallthru
      _
    // Predicated region
    $region6: #{embednet_forward.1} parent=1 // pred_check
      _
    $region7: #{embednet_forward.1} parent=1 // pred_check_branch
      %24 = sbr.rel (0) target = $region9
    $region8: #{embednet_forward.1} parent=1 // pred_region
      _
    $region9: #{embednet_forward.1} parent=1 // pred_fallthru
      _
    // Predicated region
    $region10: #{embednet_forward.1} parent=1 // pred_check
      _
    $region11: #{embednet_forward.1} parent=1 // pred_check_branch
      %26 = sbr.rel (0) target = $region13
    $region12: #{embednet_forward.1} parent=1 // pred_region
      _
    $region13: #{embednet_forward.1} parent=1 // pred_fallthru
      _
    // Predicated region
    $region14: #{embednet_forward.1} parent=1 // pred_check
      _
    $region15: #{embednet_forward.1} parent=1 // pred_check_branch
      %28 = sbr.rel (0) target = $region17
    $region16: #{embednet_forward.1} parent=1 // pred_region
      _
    $region17: #{embednet_forward.1} parent=1 // pred_fallthru
      _
    // Predicated region
    $region18: #{embednet_forward.1} parent=1 // pred_check
      _
    $region19: #{embednet_forward.1} parent=1 // pred_check_branch
      %30 = sbr.rel (0) target = $region21
    $region20: #{embednet_forward.1} parent=1 // pred_region
      _
    $region21: #{embednet_forward.1} parent=1 // pred_fallthru
      _
    // Predicated region
    $region22: #{embednet_forward.1} parent=1 // pred_check
      _
    $region23: #{embednet_forward.1} parent=1 // pred_check_branch
      %32 = sbr.rel (0) target = $region25
    $region24: #{embednet_forward.1} parent=1 // pred_region
      _
    $region25: #{embednet_forward.1} parent=1 // pred_fallthru
      _
    // Predicated region
    $region26: #{embednet_forward.1} parent=1 // pred_check
      _
    $region27: #{embednet_forward.1} parent=1 // pred_check_branch
      %34 = sbr.rel (0) target = $region29
    $region28: #{embednet_forward.1} parent=1 // pred_region
      _
    $region29: #{embednet_forward.1} parent=1 // pred_fallthru
      _
    // Predicated region
    $region30: #{embednet_forward.1} parent=1 // pred_check
      _
    $region31: #{embednet_forward.1} parent=1 // pred_check_branch
      %36 = sbr.rel (0) target = $region33
    $region32: #{embednet_forward.1} parent=1 // pred_region
      _
    $region33: #{embednet_forward.1} parent=1 // pred_fallthru
      _
    // Predicated region
    $region34: #{embednet_forward.1} parent=1 // pred_check
      _
    $region35: #{embednet_forward.1} parent=1 // pred_check_branch
      %38 = sbr.rel (0) target = $region37
    $region36: #{embednet_forward.1} parent=1 // pred_region
      _
    $region37: #{embednet_forward.1} parent=1 // pred_fallthru
      _
    // Predicated region
    $region38: #{embednet_forward.1} parent=1 // pred_check
      _
    $region39: #{embednet_forward.1} parent=1 // pred_check_branch
      %40 = sbr.rel (0) target = $region41
    $region40: #{embednet_forward.1} parent=1 // pred_region
      _
    $region41: #{embednet_forward.1} parent=1 // pred_fallthru
      _
    // Predicated region
    $region42: #{embednet_forward.1} parent=1 // pred_check
      _
    $region43: #{embednet_forward.1} parent=1 // pred_check_branch
      %42 = sbr.rel (0) target = $region45
    $region44: #{embednet_forward.1} parent=1 // pred_region
      _
    $region45: #{embednet_forward.1} parent=1 // pred_fallthru
      _
    // Predicated region
    $region46: #{embednet_forward.1} parent=1 // pred_check
      _
    $region47: #{embednet_forward.1} parent=1 // pred_check_branch
      %44 = sbr.rel (0) target = $region49
    $region48: #{embednet_forward.1} parent=1 // pred_region
      _
    $region49: #{embednet_forward.1} parent=1 // pred_fallthru
      _
    // Predicated region
    $region50: #{embednet_forward.1} parent=1 // pred_check
      _
    $region51: #{embednet_forward.1} parent=1 // pred_check_branch
      %46 = sbr.rel (0) target = $region53
    $region52: #{embednet_forward.1} parent=1 // pred_region
      _
    $region53: #{embednet_forward.1} parent=1 // pred_fallthru
      _
    // Predicated region
    $region54: #{embednet_forward.1} parent=1 // pred_check
      _
    $region55: #{embednet_forward.1} parent=1 // pred_check_branch
      %48 = sbr.rel (0) target = $region57
    $region56: #{embednet_forward.1} parent=1 // pred_region
      _
    $region57: #{embednet_forward.1} parent=1 // pred_fallthru
      _
    // Predicated region
    $region58: #{embednet_forward.1} parent=1 // pred_check
      _
    $region59: #{embednet_forward.1} parent=1 // pred_check_branch
      %50 = sbr.rel (0) target = $region61
    $region60: #{embednet_forward.1} parent=1 // pred_region
      _
    $region61: #{embednet_forward.1} parent=1 // pred_fallthru
      _
    %v51 = vld [vmem:[%s0] sm:$0xff]
    %v52 = vld [vmem:[%s0 + $0x8] sm:$0xff]
    %v53 = vld [vmem:[%s0 + $0x10] sm:$0xff]
    %v54 = vld [vmem:[%s0 + $0x18] sm:$0xff]
    %v55 = vld [vmem:[%s0 + $0x20] sm:$0xff]
    %v56 = vld [vmem:[%s0 + $0x28] sm:$0xff]
    %v57 = vld [vmem:[%s0 + $0x30] sm:$0xff]
    %v58 = vld [vmem:[%s0 + $0x38] sm:$0xff]
    %v59 = vld [vmem:[%s0 + $0x40] sm:$0xff]
    %v60 = vld [vmem:[%s0 + $0x48] sm:$0xff]
    %v61 = vld [vmem:[%s0 + $0x50] sm:$0xff]
    %v62 = vld [vmem:[%s0 + $0x58] sm:$0xff]
    %v63 = vld [vmem:[%s0 + $0x60] sm:$0xff]
    %v64 = vld [vmem:[%s0 + $0x68] sm:$0xff]
    %v65 = vld [vmem:[%s0 + $0x70] sm:$0xff]
    %v66 = vld [vmem:[%s0 + $0x78] sm:$0xff]
    %v67 = vld [vmem:[%s0 + $0x80] sm:$0xff]
    %v68 = vld [vmem:[%s0 + $0x88] sm:$0xff]
    %v69 = vld [vmem:[%s0 + $0x90] sm:$0xff]
    %v70 = vld [vmem:[%s0 + $0x98] sm:$0xff]
    %v71 = vld [vmem:[%s0 + $0xa0] sm:$0xff]
    %v72 = vld [vmem:[%s0 + $0xa8] sm:$0xff]
    %v73 = vld [vmem:[%s0 + $0xb0] sm:$0xff]
    %v74 = vld [vmem:[%s0 + $0xb8] sm:$0xff]
    %v75 = vld [vmem:[%s0 + $0xc0] sm:$0xff]
    %v76 = vld [vmem:[%s0 + $0xc8] sm:$0xff]
    %v77 = vld [vmem:[%s0 + $0xd0] sm:$0xff]
    %v78 = vld [vmem:[%s0 + $0xd8] sm:$0xff]
    %v79 = vld [vmem:[%s0 + $0xe0] sm:$0xff]
    %v80 = vld [vmem:[%s0 + $0xe8] sm:$0xff]
    %v81 = vld [vmem:[%s0 + $0xf0] sm:$0xff]
    %v82 = vld [vmem:[%s0 + $0xf8] sm:$0xff]
    %v83 = vld [vmem:[%s0 + $0x100] sm:$0xff]
    %v84 = vld [vmem:[%s0 + $0x108] sm:$0xff]
    %v85 = vld [vmem:[%s0 + $0x110] sm:$0xff]
    %v86 = vld [vmem:[%s0 + $0x118] sm:$0xff]
    %v87 = vld [vmem:[%s0 + $0x120] sm:$0xff]
    %v88 = vld [vmem:[%s0 + $0x128] sm:$0xff]
    %v89 = vld [vmem:[%s0 + $0x130] sm:$0xff]
    %v90 = vld [vmem:[%s0 + $0x138] sm:$0xff]
    %v91 = vld [vmem:[%s0 + $0x140] sm:$0xff]
    %v92 = vld [vmem:[%s0 + $0x148] sm:$0xff]
    %v93 = vld [vmem:[%s0 + $0x150] sm:$0xff]
    %v94 = vld [vmem:[%s0 + $0x158] sm:$0xff]
    %v95 = vld [vmem:[%s0 + $0x160] sm:$0xff]
    %v96 = vld [vmem:[%s0 + $0x168] sm:$0xff]
    %v97 = vld [vmem:[%s0 + $0x170] sm:$0xff]
    %v98 = vld [vmem:[%s0 + $0x178] sm:$0xff]
    %v99 = vld [vmem:[%s0 + $0x180] sm:$0xff]
    %v100 = vld [vmem:[%s0 + $0x188] sm:$0xff]
    %v101 = vld [vmem:[%s0 + $0x190] sm:$0xff]
    %v102 = vld [vmem:[%s0 + $0x198] sm:$0xff]
    %v103 = vld [vmem:[%s0 + $0x1a0] sm:$0xff]
    %v104 = vld [vmem:[%s0 + $0x1a8] sm:$0xff]
    %v105 = vld [vmem:[%s0 + $0x1b0] sm:$0xff]
    %v106 = vld [vmem:[%s0 + $0x1b8] sm:$0xff]
    %v107 = vld [vmem:[%s0 + $0x1c0] sm:$0xff]
    %v108 = vld [vmem:[%s0 + $0x1c8] sm:$0xff]
    %v109 = vld [vmem:[%s0 + $0x1d0] sm:$0xff]
    %v110 = vld [vmem:[%s0 + $0x1d8] sm:$0xff]
    %v111 = vld [vmem:[%s0 + $0x1e0] sm:$0xff]
    %v112 = vld [vmem:[%s0 + $0x1e8] sm:$0xff]
    %v113 = vld [vmem:[%s0 + $0x1f0] sm:$0xff]
    %v114 = vld [vmem:[%s0 + $0x1f8] sm:$0xff]
    %v115 = vld [vmem:[%s0 + $0x200] sm:$0xff]
    %v116 = vld [vmem:[%s0 + $0x208] sm:$0xff]
    %v117 = vld [vmem:[%s0 + $0x210] sm:$0xff]
    %v118 = vld [vmem:[%s0 + $0x218] sm:$0xff]
    %v119 = vld [vmem:[%s0 + $0x220] sm:$0xff]
    %v120 = vld [vmem:[%s0 + $0x228] sm:$0xff]
    %v121 = vld [vmem:[%s0 + $0x230] sm:$0xff]
    %v122 = vld [vmem:[%s0 + $0x238] sm:$0xff]
    %v123 = vld [vmem:[%s0 + $0x240] sm:$0xff]
    %v124 = vld [vmem:[%s0 + $0x248] sm:$0xff]
    %v125 = vld [vmem:[%s0 + $0x250] sm:$0xff]
    %v126 = vld [vmem:[%s0 + $0x258] sm:$0xff]
    %v127 = vld [vmem:[%s0 + $0x260] sm:$0xff]
    %v128 = vld [vmem:[%s0 + $0x268] sm:$0xff]
    %v129 = vld [vmem:[%s0 + $0x270] sm:$0xff]
    %v130 = vld [vmem:[%s0 + $0x278] sm:$0xff]
    %v131 = vld [vmem:[%s0 + $0x280] sm:$0xff]
    %v132 = vld [vmem:[%s0 + $0x288] sm:$0xff]
    %v133 = vld [vmem:[%s0 + $0x290] sm:$0xff]
    %v134 = vld [vmem:[%s0 + $0x298] sm:$0xff]
    %v135 = vld [vmem:[%s0 + $0x2a0] sm:$0xff]
    %v136 = vld [vmem:[%s0 + $0x2a8] sm:$0xff]
    %v137 = vld [vmem:[%s0 + $0x2b0] sm:$0xff]
    %v138 = vld [vmem:[%s0 + $0x2b8] sm:$0xff]
    %v139 = vld [vmem:[%s0 + $0x2c0] sm:$0xff]
    %v140 = vld [vmem:[%s0 + $0x2c8] sm:$0xff]
    %v141 = vld [vmem:[%s0 + $0x2d0] sm:$0xff]
    %v142 = vld [vmem:[%s0 + $0x2d8] sm:$0xff]
    %v143 = vld [vmem:[%s0 + $0x2e0] sm:$0xff]
    %v144 = vld [vmem:[%s0 + $0x2e8] sm:$0xff]
    %v145 = vld [vmem:[%s0 + $0x2f0] sm:$0xff]
    %v146 = vld [vmem:[%s0 + $0x2f8] sm:$0xff]
    %v147 = vld [vmem:[%s0 + $0x300] sm:$0xff]
    %v148 = vld [vmem:[%s0 + $0x308] sm:$0xff]
    %v149 = vld [vmem:[%s0 + $0x310] sm:$0xff]
    %v150 = vld [vmem:[%s0 + $0x318] sm:$0xff]
    %v151 = vld [vmem:[%s1] sm:$0xff]
    %v152 = vld [vmem:[%s1 + $0x8] sm:$0xff]
    %v153 = vld [vmem:[%s1 + $0x10] sm:$0xff]
    %v154 = vld [vmem:[%s1 + $0x18] sm:$0x7]
    %v155 = vld [vmem:[%s2] sm:$0x1]
    %v157 = vlaneseq
    %v158 = vshrl.u32 %v157, 7
    %v159 = vsub.s32 0, %v158
    %v160 = vrot.slane %v155, %v159
    %vm162 = vcmask 220160
    %v164 = vsel %vm162, %v51, 0
    %v167 = vsel %vm162, %v52, 0
    %v170 = vsel %vm162, %v53, 0
    %v173 = vsel %vm162, %v54, 0
    %v176 = vsel %vm162, %v55, 0
    %v179 = vsel %vm162, %v56, 0
    %v182 = vsel %vm162, %v57, 0
    %v185 = vsel %vm162, %v58, 0
    %v188 = vsel %vm162, %v59, 0
    %v191 = vsel %vm162, %v60, 0
    %v194 = vsel %vm162, %v61, 0
    %v197 = vsel %vm162, %v62, 0
    %v200 = vsel %vm162, %v63, 0
    %v203 = vsel %vm162, %v64, 0
    %v206 = vsel %vm162, %v65, 0
    %v209 = vsel %vm162, %v66, 0
    %v212 = vsel %vm162, %v67, 0
    %v215 = vsel %vm162, %v68, 0
    %v218 = vsel %vm162, %v69, 0
    %v221 = vsel %vm162, %v70, 0
    %v224 = vsel %vm162, %v71, 0
    %v227 = vsel %vm162, %v72, 0
    %v230 = vsel %vm162, %v73, 0
    %v233 = vsel %vm162, %v74, 0
    %v236 = vsel %vm162, %v75, 0
    %v239 = vsel %vm162, %v76, 0
    %v242 = vsel %vm162, %v77, 0
    %v245 = vsel %vm162, %v78, 0
    %v248 = vsel %vm162, %v79, 0
    %v251 = vsel %vm162, %v80, 0
    %v254 = vsel %vm162, %v81, 0
    %v257 = vsel %vm162, %v82, 0
    %v260 = vsel %vm162, %v83, 0
    %v263 = vsel %vm162, %v84, 0
    %v266 = vsel %vm162, %v85, 0
    %v269 = vsel %vm162, %v86, 0
    %v272 = vsel %vm162, %v87, 0
    %v275 = vsel %vm162, %v88, 0
    %v278 = vsel %vm162, %v89, 0
    %v281 = vsel %vm162, %v90, 0
    %v284 = vsel %vm162, %v91, 0
    %v287 = vsel %vm162, %v92, 0
    %v290 = vsel %vm162, %v93, 0
    %v293 = vsel %vm162, %v94, 0
    %v296 = vsel %vm162, %v95, 0
    %v299 = vsel %vm162, %v96, 0
    %v302 = vsel %vm162, %v97, 0
    %v305 = vsel %vm162, %v98, 0
    %v308 = vsel %vm162, %v99, 0
    %v311 = vsel %vm162, %v100, 0
    %v314 = vsel %vm162, %v101, 0
    %v317 = vsel %vm162, %v102, 0
    %v320 = vsel %vm162, %v103, 0
    %v323 = vsel %vm162, %v104, 0
    %v326 = vsel %vm162, %v105, 0
    %v329 = vsel %vm162, %v106, 0
    %v332 = vsel %vm162, %v107, 0
    %v335 = vsel %vm162, %v108, 0
    %v338 = vsel %vm162, %v109, 0
    %v341 = vsel %vm162, %v110, 0
    %v344 = vsel %vm162, %v111, 0
    %v347 = vsel %vm162, %v112, 0
    %v350 = vsel %vm162, %v113, 0
    %v353 = vsel %vm162, %v114, 0
    %v356 = vsel %vm162, %v115, 0
    %v359 = vsel %vm162, %v116, 0
    %v362 = vsel %vm162, %v117, 0
    %v365 = vsel %vm162, %v118, 0
    %v368 = vsel %vm162, %v119, 0
    %v371 = vsel %vm162, %v120, 0
    %v374 = vsel %vm162, %v121, 0
    %v377 = vsel %vm162, %v122, 0
    %v380 = vsel %vm162, %v123, 0
    %v383 = vsel %vm162, %v124, 0
    %v386 = vsel %vm162, %v125, 0
    %v389 = vsel %vm162, %v126, 0
    %v392 = vsel %vm162, %v127, 0
    %v395 = vsel %vm162, %v128, 0
    %v398 = vsel %vm162, %v129, 0
    %v401 = vsel %vm162, %v130, 0
    %v404 = vsel %vm162, %v131, 0
    %v407 = vsel %vm162, %v132, 0
    %v410 = vsel %vm162, %v133, 0
    %v413 = vsel %vm162, %v134, 0
    %v416 = vsel %vm162, %v135, 0
    %v419 = vsel %vm162, %v136, 0
    %v422 = vsel %vm162, %v137, 0
    %v425 = vsel %vm162, %v138, 0
    %v428 = vsel %vm162, %v139, 0
    %v431 = vsel %vm162, %v140, 0
    %v434 = vsel %vm162, %v141, 0
    %v437 = vsel %vm162, %v142, 0
    %v440 = vsel %vm162, %v143, 0
    %v443 = vsel %vm162, %v144, 0
    %v446 = vsel %vm162, %v145, 0
    %v449 = vsel %vm162, %v146, 0
    %v452 = vsel %vm162, %v147, 0
    %v455 = vsel %vm162, %v148, 0
    %v458 = vsel %vm162, %v149, 0
    %v461 = vsel %vm162, %v150, 0
    %vm463 = vcmask 1042432
    %v465 = vsel %vm463, %v154, 0
    %467 = vmatprep.subr.mxu0 0.0
    %468 = vmatpush1.msra.mxu0 %v151
    %469 = vmatprep.subr.mxu0 0.0
    %470 = vmatpush1.msra.mxu0 %v152
    %471 = vmatprep.subr.mxu0 0.0
    %472 = vmatpush1.msra.mxu0 %v153
    %473 = vmatprep.subr.mxu0 0.0
    %474 = vmatpush1.msra.mxu0 %v465
    %475 = vmatprep.subr.mxu0 0.0
    %476 = vmatpush1.msra.mxu0 0.0
    %477 = vmatprep.subr.mxu0 0.0
    %478 = vmatpush1.msra.mxu0 0.0
    %479 = vmatprep.subr.mxu0 0.0
    %480 = vmatpush1.msra.mxu0 0.0
    %481 = vmatprep.subr.mxu0 0.0
    %482 = vmatpush1.msra.mxu0 0.0
    %483 = vmatprep.subr.mxu0 0.0
    %484 = vmatpush1.msra.mxu0 0.0
    %485 = vmatprep.subr.mxu0 0.0
    %486 = vmatpush1.msra.mxu0 0.0
    %487 = vmatprep.subr.mxu0 0.0
    %488 = vmatpush1.msra.mxu0 0.0
    %489 = vmatprep.subr.mxu0 0.0
    %490 = vmatpush1.msra.mxu0 0.0
    %491 = vmatprep.subr.mxu0 0.0
    %492 = vmatpush1.msra.mxu0 0.0
    %493 = vmatprep.subr.mxu0 0.0
    %494 = vmatpush1.msra.mxu0 0.0
    %495 = vmatprep.subr.mxu0 0.0
    %496 = vmatpush1.msra.mxu0 0.0
    %497 = vmatprep.subr.mxu0 0.0
    %498 = vmatpush1.msra.mxu0 0.0
    %499 = vmatprep.subr.mxu0 0.0
    %500 = vmatpush1.msra.mxu0 0.0
    %501 = vmatprep.subr.mxu0 0.0
    %502 = vmatpush1.msra.mxu0 0.0
    %503 = vmatprep.subr.mxu0 0.0
    %504 = vmatpush1.msra.mxu0 0.0
    %505 = vmatprep.subr.mxu0 0.0
    %506 = vmatpush1.msra.mxu0 0.0
    %507 = vmatprep.subr.mxu0 0.0
    %508 = vmatpush1.msra.mxu0 0.0
    %509 = vmatprep.subr.mxu0 0.0
    %510 = vmatpush1.msra.mxu0 0.0
    %511 = vmatprep.subr.mxu0 0.0
    %512 = vmatpush1.msra.mxu0 0.0
    %513 = vmatprep.subr.mxu0 0.0
    %514 = vmatpush1.msra.mxu0 0.0
    %515 = vmatprep.subr.mxu0 0.0
    %516 = vmatpush1.msra.mxu0 0.0
    %517 = vmatprep.subr.mxu0 0.0
    %518 = vmatpush1.msra.mxu0 0.0
    %519 = vmatprep.subr.mxu0 0.0
    %520 = vmatpush1.msra.mxu0 0.0
    %521 = vmatprep.subr.mxu0 0.0
    %522 = vmatpush1.msra.mxu0 0.0
    %523 = vmatprep.subr.mxu0 0.0
    %524 = vmatpush1.msra.mxu0 0.0
    %525 = vmatprep.subr.mxu0 0.0
    %526 = vmatpush1.msra.mxu0 0.0
    %527 = vmatprep.subr.mxu0 0.0
    %528 = vmatpush1.msra.mxu0 0.0
    %529 = vmatprep.subr.mxu0 0.0
    %530 = vmatpush1.msra.mxu0 0.0
    %531 = vmatprep.mubr.f32.mxu0 0.0
    %532 = vmatmul.mubr.f32.gmra.mrb[0].mxu0 %v164
    %v533 = vpop.f32.mrb[0].mxu0
    %v534 = vadd.f32 %v160, %v533
    %v535 = vpop.f32.mrb[0].mxu0
    %536 = vmatprep.mubr.f32.mxu0 0.0
    %537 = vmatmul.mubr.f32.gmra.mrb[0].mxu0 %v167
    %v538 = vpop.f32.mrb[0].mxu0
    %v539 = vadd.f32 %v160, %v538
    %v540 = vpop.f32.mrb[0].mxu0
    %541 = vmatprep.mubr.f32.mxu0 0.0
    %542 = vmatmul.mubr.f32.gmra.mrb[0].mxu0 %v170
    %v543 = vpop.f32.mrb[0].mxu0
    %v544 = vadd.f32 %v160, %v543
    %v545 = vpop.f32.mrb[0].mxu0
    %546 = vmatprep.mubr.f32.mxu0 0.0
    %547 = vmatmul.mubr.f32.gmra.mrb[0].mxu0 %v173
    %v548 = vpop.f32.mrb[0].mxu0
    %v549 = vadd.f32 %v160, %v548
    %v550 = vpop.f32.mrb[0].mxu0
    %551 = vmatprep.mubr.f32.mxu0 0.0
    %552 = vmatmul.mubr.f32.gmra.mrb[0].mxu0 %v176
    %v553 = vpop.f32.mrb[0].mxu0
    %v554 = vadd.f32 %v160, %v553
    %v555 = vpop.f32.mrb[0].mxu0
    %556 = vmatprep.mubr.f32.mxu0 0.0
    %557 = vmatmul.mubr.f32.gmra.mrb[0].mxu0 %v179
    %v558 = vpop.f32.mrb[0].mxu0
    %v559 = vadd.f32 %v160, %v558
    %v560 = vpop.f32.mrb[0].mxu0
    %561 = vmatprep.mubr.f32.mxu0 0.0
    %562 = vmatmul.mubr.f32.gmra.mrb[0].mxu0 %v182
    %v563 = vpop.f32.mrb[0].mxu0
    %v564 = vadd.f32 %v160, %v563
    %v565 = vpop.f32.mrb[0].mxu0
    %566 = vmatprep.mubr.f32.mxu0 0.0
    %567 = vmatmul.mubr.f32.gmra.mrb[0].mxu0 %v185
    %v568 = vpop.f32.mrb[0].mxu0
    %v569 = vadd.f32 %v160, %v568
    %v570 = vpop.f32.mrb[0].mxu0
    %571 = vmatprep.mubr.f32.mxu0 0.0
    %572 = vmatmul.mubr.f32.gmra.mrb[0].mxu0 %v188
    %v573 = vpop.f32.mrb[0].mxu0
    %v574 = vadd.f32 %v160, %v573
    %v575 = vpop.f32.mrb[0].mxu0
    %576 = vmatprep.mubr.f32.mxu0 0.0
    %577 = vmatmul.mubr.f32.gmra.mrb[0].mxu0 %v191
    %v578 = vpop.f32.mrb[0].mxu0
    %v579 = vadd.f32 %v160, %v578
    %v580 = vpop.f32.mrb[0].mxu0
    %581 = vmatprep.mubr.f32.mxu0 0.0
    %582 = vmatmul.mubr.f32.gmra.mrb[0].mxu0 %v194
    %v583 = vpop.f32.mrb[0].mxu0
    %v584 = vadd.f32 %v160, %v583
    %v585 = vpop.f32.mrb[0].mxu0
    %586 = vmatprep.mubr.f32.mxu0 0.0
    %587 = vmatmul.mubr.f32.gmra.mrb[0].mxu0 %v197
    %v588 = vpop.f32.mrb[0].mxu0
    %v589 = vadd.f32 %v160, %v588
    %v590 = vpop.f32.mrb[0].mxu0
    %591 = vmatprep.mubr.f32.mxu0 0.0
    %592 = vmatmul.mubr.f32.gmra.mrb[0].mxu0 %v200
    %v593 = vpop.f32.mrb[0].mxu0
    %v594 = vadd.f32 %v160, %v593
    %v595 = vpop.f32.mrb[0].mxu0
    %596 = vmatprep.mubr.f32.mxu0 0.0
    %597 = vmatmul.mubr.f32.gmra.mrb[0].mxu0 %v203
    %v598 = vpop.f32.mrb[0].mxu0
    %v599 = vadd.f32 %v160, %v598
    %v600 = vpop.f32.mrb[0].mxu0
    %601 = vmatprep.mubr.f32.mxu0 0.0
    %602 = vmatmul.mubr.f32.gmra.mrb[0].mxu0 %v206
    %v603 = vpop.f32.mrb[0].mxu0
    %v604 = vadd.f32 %v160, %v603
    %v605 = vpop.f32.mrb[0].mxu0
    %606 = vmatprep.mubr.f32.mxu0 0.0
    %607 = vmatmul.mubr.f32.gmra.mrb[0].mxu0 %v209
    %v608 = vpop.f32.mrb[0].mxu0
    %v609 = vadd.f32 %v160, %v608
    %v610 = vpop.f32.mrb[0].mxu0
    %611 = vmatprep.mubr.f32.mxu0 0.0
    %612 = vmatmul.mubr.f32.gmra.mrb[0].mxu0 %v212
    %v613 = vpop.f32.mrb[0].mxu0
    %v614 = vadd.f32 %v160, %v613
    %v615 = vpop.f32.mrb[0].mxu0
    %616 = vmatprep.mubr.f32.mxu0 0.0
    %617 = vmatmul.mubr.f32.gmra.mrb[0].mxu0 %v215
    %v618 = vpop.f32.mrb[0].mxu0
    %v619 = vadd.f32 %v160, %v618
    %v620 = vpop.f32.mrb[0].mxu0
    %621 = vmatprep.mubr.f32.mxu0 0.0
    %622 = vmatmul.mubr.f32.gmra.mrb[0].mxu0 %v218
    %v623 = vpop.f32.mrb[0].mxu0
    %v624 = vadd.f32 %v160, %v623
    %v625 = vpop.f32.mrb[0].mxu0
    %626 = vmatprep.mubr.f32.mxu0 0.0
    %627 = vmatmul.mubr.f32.gmra.mrb[0].mxu0 %v221
    %v628 = vpop.f32.mrb[0].mxu0
    %v629 = vadd.f32 %v160, %v628
    %v630 = vpop.f32.mrb[0].mxu0
    %631 = vmatprep.mubr.f32.mxu0 0.0
    %632 = vmatmul.mubr.f32.gmra.mrb[0].mxu0 %v224
    %v633 = vpop.f32.mrb[0].mxu0
    %v634 = vadd.f32 %v160, %v633
    %v635 = vpop.f32.mrb[0].mxu0
    %636 = vmatprep.mubr.f32.mxu0 0.0
    %637 = vmatmul.mubr.f32.gmra.mrb[0].mxu0 %v227
    %v638 = vpop.f32.mrb[0].mxu0
    %v639 = vadd.f32 %v160, %v638
    %v640 = vpop.f32.mrb[0].mxu0
    %641 = vmatprep.mubr.f32.mxu0 0.0
    %642 = vmatmul.mubr.f32.gmra.mrb[0].mxu0 %v230
    %v643 = vpop.f32.mrb[0].mxu0
    %v644 = vadd.f32 %v160, %v643
    %v645 = vpop.f32.mrb[0].mxu0
    %646 = vmatprep.mubr.f32.mxu0 0.0
    %647 = vmatmul.mubr.f32.gmra.mrb[0].mxu0 %v233
    %v648 = vpop.f32.mrb[0].mxu0
    %v649 = vadd.f32 %v160, %v648
    %v650 = vpop.f32.mrb[0].mxu0
    %651 = vmatprep.mubr.f32.mxu0 0.0
    %652 = vmatmul.mubr.f32.gmra.mrb[0].mxu0 %v236
    %v653 = vpop.f32.mrb[0].mxu0
    %v654 = vadd.f32 %v160, %v653
    %v655 = vpop.f32.mrb[0].mxu0
    %656 = vmatprep.mubr.f32.mxu0 0.0
    %657 = vmatmul.mubr.f32.gmra.mrb[0].mxu0 %v239
    %v658 = vpop.f32.mrb[0].mxu0
    %v659 = vadd.f32 %v160, %v658
    %v660 = vpop.f32.mrb[0].mxu0
    %661 = vmatprep.mubr.f32.mxu0 0.0
    %662 = vmatmul.mubr.f32.gmra.mrb[0].mxu0 %v242
    %v663 = vpop.f32.mrb[0].mxu0
    %v664 = vadd.f32 %v160, %v663
    %v665 = vpop.f32.mrb[0].mxu0
    %666 = vmatprep.mubr.f32.mxu0 0.0
    %667 = vmatmul.mubr.f32.gmra.mrb[0].mxu0 %v245
    %v668 = vpop.f32.mrb[0].mxu0
    %v669 = vadd.f32 %v160, %v668
    %v670 = vpop.f32.mrb[0].mxu0
    %671 = vmatprep.mubr.f32.mxu0 0.0
    %672 = vmatmul.mubr.f32.gmra.mrb[0].mxu0 %v248
    %v673 = vpop.f32.mrb[0].mxu0
    %v674 = vadd.f32 %v160, %v673
    %v675 = vpop.f32.mrb[0].mxu0
    %676 = vmatprep.mubr.f32.mxu0 0.0
    %677 = vmatmul.mubr.f32.gmra.mrb[0].mxu0 %v251
    %v678 = vpop.f32.mrb[0].mxu0
    %v679 = vadd.f32 %v160, %v678
    %v680 = vpop.f32.mrb[0].mxu0
    %681 = vmatprep.mubr.f32.mxu0 0.0
    %682 = vmatmul.mubr.f32.gmra.mrb[0].mxu0 %v254
    %v683 = vpop.f32.mrb[0].mxu0
    %v684 = vadd.f32 %v160, %v683
    %v685 = vpop.f32.mrb[0].mxu0
    %686 = vmatprep.mubr.f32.mxu0 0.0
    %687 = vmatmul.mubr.f32.gmra.mrb[0].mxu0 %v257
    %v688 = vpop.f32.mrb[0].mxu0
    %v689 = vadd.f32 %v160, %v688
    %v690 = vpop.f32.mrb[0].mxu0
    %691 = vmatprep.mubr.f32.mxu0 0.0
    %692 = vmatmul.mubr.f32.gmra.mrb[0].mxu0 %v260
    %v693 = vpop.f32.mrb[0].mxu0
    %v694 = vadd.f32 %v160, %v693
    %v695 = vpop.f32.mrb[0].mxu0
    %696 = vmatprep.mubr.f32.mxu0 0.0
    %697 = vmatmul.mubr.f32.gmra.mrb[0].mxu0 %v263
    %v698 = vpop.f32.mrb[0].mxu0
    %v699 = vadd.f32 %v160, %v698
    %v700 = vpop.f32.mrb[0].mxu0
    %701 = vmatprep.mubr.f32.mxu0 0.0
    %702 = vmatmul.mubr.f32.gmra.mrb[0].mxu0 %v266
    %v703 = vpop.f32.mrb[0].mxu0
    %v704 = vadd.f32 %v160, %v703
    %v705 = vpop.f32.mrb[0].mxu0
    %706 = vmatprep.mubr.f32.mxu0 0.0
    %707 = vmatmul.mubr.f32.gmra.mrb[0].mxu0 %v269
    %v708 = vpop.f32.mrb[0].mxu0
    %v709 = vadd.f32 %v160, %v708
    %v710 = vpop.f32.mrb[0].mxu0
    %711 = vmatprep.mubr.f32.mxu0 0.0
    %712 = vmatmul.mubr.f32.gmra.mrb[0].mxu0 %v272
    %v713 = vpop.f32.mrb[0].mxu0
    %v714 = vadd.f32 %v160, %v713
    %v715 = vpop.f32.mrb[0].mxu0
    %716 = vmatprep.mubr.f32.mxu0 0.0
    %717 = vmatmul.mubr.f32.gmra.mrb[0].mxu0 %v275
    %v718 = vpop.f32.mrb[0].mxu0
    %v719 = vadd.f32 %v160, %v718
    %v720 = vpop.f32.mrb[0].mxu0
    %721 = vmatprep.mubr.f32.mxu0 0.0
    %722 = vmatmul.mubr.f32.gmra.mrb[0].mxu0 %v278
    %v723 = vpop.f32.mrb[0].mxu0
    %v724 = vadd.f32 %v160, %v723
    %v725 = vpop.f32.mrb[0].mxu0
    %726 = vmatprep.mubr.f32.mxu0 0.0
    %727 = vmatmul.mubr.f32.gmra.mrb[0].mxu0 %v281
    %v728 = vpop.f32.mrb[0].mxu0
    %v729 = vadd.f32 %v160, %v728
    %v730 = vpop.f32.mrb[0].mxu0
    %731 = vmatprep.mubr.f32.mxu0 0.0
    %732 = vmatmul.mubr.f32.gmra.mrb[0].mxu0 %v284
    %v733 = vpop.f32.mrb[0].mxu0
    %v734 = vadd.f32 %v160, %v733
    %v735 = vpop.f32.mrb[0].mxu0
    %736 = vmatprep.mubr.f32.mxu0 0.0
    %737 = vmatmul.mubr.f32.gmra.mrb[0].mxu0 %v287
    %v738 = vpop.f32.mrb[0].mxu0
    %v739 = vadd.f32 %v160, %v738
    %v740 = vpop.f32.mrb[0].mxu0
    %741 = vmatprep.mubr.f32.mxu0 0.0
    %742 = vmatmul.mubr.f32.gmra.mrb[0].mxu0 %v290
    %v743 = vpop.f32.mrb[0].mxu0
    %v744 = vadd.f32 %v160, %v743
    %v745 = vpop.f32.mrb[0].mxu0
    %746 = vmatprep.mubr.f32.mxu0 0.0
    %747 = vmatmul.mubr.f32.gmra.mrb[0].mxu0 %v293
    %v748 = vpop.f32.mrb[0].mxu0
    %v749 = vadd.f32 %v160, %v748
    %v750 = vpop.f32.mrb[0].mxu0
    %751 = vmatprep.mubr.f32.mxu0 0.0
    %752 = vmatmul.mubr.f32.gmra.mrb[0].mxu0 %v296
    %v753 = vpop.f32.mrb[0].mxu0
    %v754 = vadd.f32 %v160, %v753
    %v755 = vpop.f32.mrb[0].mxu0
    %756 = vmatprep.mubr.f32.mxu0 0.0
    %757 = vmatmul.mubr.f32.gmra.mrb[0].mxu0 %v299
    %v758 = vpop.f32.mrb[0].mxu0
    %v759 = vadd.f32 %v160, %v758
    %v760 = vpop.f32.mrb[0].mxu0
    %761 = vmatprep.mubr.f32.mxu0 0.0
    %762 = vmatmul.mubr.f32.gmra.mrb[0].mxu0 %v302
    %v763 = vpop.f32.mrb[0].mxu0
    %v764 = vadd.f32 %v160, %v763
    %v765 = vpop.f32.mrb[0].mxu0
    %766 = vmatprep.mubr.f32.mxu0 0.0
    %767 = vmatmul.mubr.f32.gmra.mrb[0].mxu0 %v305
    %v768 = vpop.f32.mrb[0].mxu0
    %v769 = vadd.f32 %v160, %v768
    %v770 = vpop.f32.mrb[0].mxu0
    %771 = vmatprep.mubr.f32.mxu0 0.0
    %772 = vmatmul.mubr.f32.gmra.mrb[0].mxu0 %v308
    %v773 = vpop.f32.mrb[0].mxu0
    %v774 = vadd.f32 %v160, %v773
    %v775 = vpop.f32.mrb[0].mxu0
    %776 = vmatprep.mubr.f32.mxu0 0.0
    %777 = vmatmul.mubr.f32.gmra.mrb[0].mxu0 %v311
    %v778 = vpop.f32.mrb[0].mxu0
    %v779 = vadd.f32 %v160, %v778
    %v780 = vpop.f32.mrb[0].mxu0
    %781 = vmatprep.mubr.f32.mxu0 0.0
    %782 = vmatmul.mubr.f32.gmra.mrb[0].mxu0 %v314
    %v783 = vpop.f32.mrb[0].mxu0
    %v784 = vadd.f32 %v160, %v783
    %v785 = vpop.f32.mrb[0].mxu0
    %786 = vmatprep.mubr.f32.mxu0 0.0
    %787 = vmatmul.mubr.f32.gmra.mrb[0].mxu0 %v317
    %v788 = vpop.f32.mrb[0].mxu0
    %v789 = vadd.f32 %v160, %v788
    %v790 = vpop.f32.mrb[0].mxu0
    %791 = vmatprep.mubr.f32.mxu0 0.0
    %792 = vmatmul.mubr.f32.gmra.mrb[0].mxu0 %v320
    %v793 = vpop.f32.mrb[0].mxu0
    %v794 = vadd.f32 %v160, %v793
    %v795 = vpop.f32.mrb[0].mxu0
    %796 = vmatprep.mubr.f32.mxu0 0.0
    %797 = vmatmul.mubr.f32.gmra.mrb[0].mxu0 %v323
    %v798 = vpop.f32.mrb[0].mxu0
    %v799 = vadd.f32 %v160, %v798
    %v800 = vpop.f32.mrb[0].mxu0
    %801 = vmatprep.mubr.f32.mxu0 0.0
    %802 = vmatmul.mubr.f32.gmra.mrb[0].mxu0 %v326
    %v803 = vpop.f32.mrb[0].mxu0
    %v804 = vadd.f32 %v160, %v803
    %v805 = vpop.f32.mrb[0].mxu0
    %806 = vmatprep.mubr.f32.mxu0 0.0
    %807 = vmatmul.mubr.f32.gmra.mrb[0].mxu0 %v329
    %v808 = vpop.f32.mrb[0].mxu0
    %v809 = vadd.f32 %v160, %v808
    %v810 = vpop.f32.mrb[0].mxu0
    %811 = vmatprep.mubr.f32.mxu0 0.0
    %812 = vmatmul.mubr.f32.gmra.mrb[0].mxu0 %v332
    %v813 = vpop.f32.mrb[0].mxu0
    %v814 = vadd.f32 %v160, %v813
    %v815 = vpop.f32.mrb[0].mxu0
    %816 = vmatprep.mubr.f32.mxu0 0.0
    %817 = vmatmul.mubr.f32.gmra.mrb[0].mxu0 %v335
    %v818 = vpop.f32.mrb[0].mxu0
    %v819 = vadd.f32 %v160, %v818
    %v820 = vpop.f32.mrb[0].mxu0
    %821 = vmatprep.mubr.f32.mxu0 0.0
    %822 = vmatmul.mubr.f32.gmra.mrb[0].mxu0 %v338
    %v823 = vpop.f32.mrb[0].mxu0
    %v824 = vadd.f32 %v160, %v823
    %v825 = vpop.f32.mrb[0].mxu0
    %826 = vmatprep.mubr.f32.mxu0 0.0
    %827 = vmatmul.mubr.f32.gmra.mrb[0].mxu0 %v341
    %v828 = vpop.f32.mrb[0].mxu0
    %v829 = vadd.f32 %v160, %v828
    %v830 = vpop.f32.mrb[0].mxu0
    %831 = vmatprep.mubr.f32.mxu0 0.0
    %832 = vmatmul.mubr.f32.gmra.mrb[0].mxu0 %v344
    %v833 = vpop.f32.mrb[0].mxu0
    %v834 = vadd.f32 %v160, %v833
    %v835 = vpop.f32.mrb[0].mxu0
    %836 = vmatprep.mubr.f32.mxu0 0.0
    %837 = vmatmul.mubr.f32.gmra.mrb[0].mxu0 %v347
    %v838 = vpop.f32.mrb[0].mxu0
    %v839 = vadd.f32 %v160, %v838
    %v840 = vpop.f32.mrb[0].mxu0
    %841 = vmatprep.mubr.f32.mxu0 0.0
    %842 = vmatmul.mubr.f32.gmra.mrb[0].mxu0 %v350
    %v843 = vpop.f32.mrb[0].mxu0
    %v844 = vadd.f32 %v160, %v843
    %v845 = vpop.f32.mrb[0].mxu0
    %846 = vmatprep.mubr.f32.mxu0 0.0
    %847 = vmatmul.mubr.f32.gmra.mrb[0].mxu0 %v353
    %v848 = vpop.f32.mrb[0].mxu0
    %v849 = vadd.f32 %v160, %v848
    %v850 = vpop.f32.mrb[0].mxu0
    %851 = vmatprep.mubr.f32.mxu0 0.0
    %852 = vmatmul.mubr.f32.gmra.mrb[0].mxu0 %v356
    %v853 = vpop.f32.mrb[0].mxu0
    %v854 = vadd.f32 %v160, %v853
    %v855 = vpop.f32.mrb[0].mxu0
    %856 = vmatprep.mubr.f32.mxu0 0.0
    %857 = vmatmul.mubr.f32.gmra.mrb[0].mxu0 %v359
    %v858 = vpop.f32.mrb[0].mxu0
    %v859 = vadd.f32 %v160, %v858
    %v860 = vpop.f32.mrb[0].mxu0
    %861 = vmatprep.mubr.f32.mxu0 0.0
    %862 = vmatmul.mubr.f32.gmra.mrb[0].mxu0 %v362
    %v863 = vpop.f32.mrb[0].mxu0
    %v864 = vadd.f32 %v160, %v863
    %v865 = vpop.f32.mrb[0].mxu0
    %866 = vmatprep.mubr.f32.mxu0 0.0
    %867 = vmatmul.mubr.f32.gmra.mrb[0].mxu0 %v365
    %v868 = vpop.f32.mrb[0].mxu0
    %v869 = vadd.f32 %v160, %v868
    %v870 = vpop.f32.mrb[0].mxu0
    %871 = vmatprep.mubr.f32.mxu0 0.0
    %872 = vmatmul.mubr.f32.gmra.mrb[0].mxu0 %v368
    %v873 = vpop.f32.mrb[0].mxu0
    %v874 = vadd.f32 %v160, %v873
    %v875 = vpop.f32.mrb[0].mxu0
    %876 = vmatprep.mubr.f32.mxu0 0.0
    %877 = vmatmul.mubr.f32.gmra.mrb[0].mxu0 %v371
    %v878 = vpop.f32.mrb[0].mxu0
    %v879 = vadd.f32 %v160, %v878
    %v880 = vpop.f32.mrb[0].mxu0
    %881 = vmatprep.mubr.f32.mxu0 0.0
    %882 = vmatmul.mubr.f32.gmra.mrb[0].mxu0 %v374
    %v883 = vpop.f32.mrb[0].mxu0
    %v884 = vadd.f32 %v160, %v883
    %v885 = vpop.f32.mrb[0].mxu0
    %886 = vmatprep.mubr.f32.mxu0 0.0
    %887 = vmatmul.mubr.f32.gmra.mrb[0].mxu0 %v377
    %v888 = vpop.f32.mrb[0].mxu0
    %v889 = vadd.f32 %v160, %v888
    %v890 = vpop.f32.mrb[0].mxu0
    %891 = vmatprep.mubr.f32.mxu0 0.0
    %892 = vmatmul.mubr.f32.gmra.mrb[0].mxu0 %v380
    %v893 = vpop.f32.mrb[0].mxu0
    %v894 = vadd.f32 %v160, %v893
    %v895 = vpop.f32.mrb[0].mxu0
    %896 = vmatprep.mubr.f32.mxu0 0.0
    %897 = vmatmul.mubr.f32.gmra.mrb[0].mxu0 %v383
    %v898 = vpop.f32.mrb[0].mxu0
    %v899 = vadd.f32 %v160, %v898
    %v900 = vpop.f32.mrb[0].mxu0
    %901 = vmatprep.mubr.f32.mxu0 0.0
    %902 = vmatmul.mubr.f32.gmra.mrb[0].mxu0 %v386
    %v903 = vpop.f32.mrb[0].mxu0
    %v904 = vadd.f32 %v160, %v903
    %v905 = vpop.f32.mrb[0].mxu0
    %906 = vmatprep.mubr.f32.mxu0 0.0
    %907 = vmatmul.mubr.f32.gmra.mrb[0].mxu0 %v389
    %v908 = vpop.f32.mrb[0].mxu0
    %v909 = vadd.f32 %v160, %v908
    %v910 = vpop.f32.mrb[0].mxu0
    %911 = vmatprep.mubr.f32.mxu0 0.0
    %912 = vmatmul.mubr.f32.gmra.mrb[0].mxu0 %v392
    %v913 = vpop.f32.mrb[0].mxu0
    %v914 = vadd.f32 %v160, %v913
    %v915 = vpop.f32.mrb[0].mxu0
    %916 = vmatprep.mubr.f32.mxu0 0.0
    %917 = vmatmul.mubr.f32.gmra.mrb[0].mxu0 %v395
    %v918 = vpop.f32.mrb[0].mxu0
    %v919 = vadd.f32 %v160, %v918
    %v920 = vpop.f32.mrb[0].mxu0
    %921 = vmatprep.mubr.f32.mxu0 0.0
    %922 = vmatmul.mubr.f32.gmra.mrb[0].mxu0 %v398
    %v923 = vpop.f32.mrb[0].mxu0
    %v924 = vadd.f32 %v160, %v923
    %v925 = vpop.f32.mrb[0].mxu0
    %926 = vmatprep.mubr.f32.mxu0 0.0
    %927 = vmatmul.mubr.f32.gmra.mrb[0].mxu0 %v401
    %v928 = vpop.f32.mrb[0].mxu0
    %v929 = vadd.f32 %v160, %v928
    %v930 = vpop.f32.mrb[0].mxu0
    %931 = vmatprep.mubr.f32.mxu0 0.0
    %932 = vmatmul.mubr.f32.gmra.mrb[0].mxu0 %v404
    %v933 = vpop.f32.mrb[0].mxu0
    %v934 = vadd.f32 %v160, %v933
    %v935 = vpop.f32.mrb[0].mxu0
    %936 = vmatprep.mubr.f32.mxu0 0.0
    %937 = vmatmul.mubr.f32.gmra.mrb[0].mxu0 %v407
    %v938 = vpop.f32.mrb[0].mxu0
    %v939 = vadd.f32 %v160, %v938
    %v940 = vpop.f32.mrb[0].mxu0
    %941 = vmatprep.mubr.f32.mxu0 0.0
    %942 = vmatmul.mubr.f32.gmra.mrb[0].mxu0 %v410
    %v943 = vpop.f32.mrb[0].mxu0
    %v944 = vadd.f32 %v160, %v943
    %v945 = vpop.f32.mrb[0].mxu0
    %946 = vmatprep.mubr.f32.mxu0 0.0
    %947 = vmatmul.mubr.f32.gmra.mrb[0].mxu0 %v413
    %v948 = vpop.f32.mrb[0].mxu0
    %v949 = vadd.f32 %v160, %v948
    %v950 = vpop.f32.mrb[0].mxu0
    %951 = vmatprep.mubr.f32.mxu0 0.0
    %952 = vmatmul.mubr.f32.gmra.mrb[0].mxu0 %v416
    %v953 = vpop.f32.mrb[0].mxu0
    %v954 = vadd.f32 %v160, %v953
    %v955 = vpop.f32.mrb[0].mxu0
    %956 = vmatprep.mubr.f32.mxu0 0.0
    %957 = vmatmul.mubr.f32.gmra.mrb[0].mxu0 %v419
    %v958 = vpop.f32.mrb[0].mxu0
    %v959 = vadd.f32 %v160, %v958
    %v960 = vpop.f32.mrb[0].mxu0
    %961 = vmatprep.mubr.f32.mxu0 0.0
    %962 = vmatmul.mubr.f32.gmra.mrb[0].mxu0 %v422
    %v963 = vpop.f32.mrb[0].mxu0
    %v964 = vadd.f32 %v160, %v963
    %v965 = vpop.f32.mrb[0].mxu0
    %966 = vmatprep.mubr.f32.mxu0 0.0
    %967 = vmatmul.mubr.f32.gmra.mrb[0].mxu0 %v425
    %v968 = vpop.f32.mrb[0].mxu0
    %v969 = vadd.f32 %v160, %v968
    %v970 = vpop.f32.mrb[0].mxu0
    %971 = vmatprep.mubr.f32.mxu0 0.0
    %972 = vmatmul.mubr.f32.gmra.mrb[0].mxu0 %v428
    %v973 = vpop.f32.mrb[0].mxu0
    %v974 = vadd.f32 %v160, %v973
    %v975 = vpop.f32.mrb[0].mxu0
    %976 = vmatprep.mubr.f32.mxu0 0.0
    %977 = vmatmul.mubr.f32.gmra.mrb[0].mxu0 %v431
    %v978 = vpop.f32.mrb[0].mxu0
    %v979 = vadd.f32 %v160, %v978
    %v980 = vpop.f32.mrb[0].mxu0
    %981 = vmatprep.mubr.f32.mxu0 0.0
    %982 = vmatmul.mubr.f32.gmra.mrb[0].mxu0 %v434
    %v983 = vpop.f32.mrb[0].mxu0
    %v984 = vadd.f32 %v160, %v983
    %v985 = vpop.f32.mrb[0].mxu0
    %986 = vmatprep.mubr.f32.mxu0 0.0
    %987 = vmatmul.mubr.f32.gmra.mrb[0].mxu0 %v437
    %v988 = vpop.f32.mrb[0].mxu0
    %v989 = vadd.f32 %v160, %v988
    %v990 = vpop.f32.mrb[0].mxu0
    %991 = vmatprep.mubr.f32.mxu0 0.0
    %992 = vmatmul.mubr.f32.gmra.mrb[0].mxu0 %v440
    %v993 = vpop.f32.mrb[0].mxu0
    %v994 = vadd.f32 %v160, %v993
    %v995 = vpop.f32.mrb[0].mxu0
    %996 = vmatprep.mubr.f32.mxu0 0.0
    %997 = vmatmul.mubr.f32.gmra.mrb[0].mxu0 %v443
    %v998 = vpop.f32.mrb[0].mxu0
    %v999 = vadd.f32 %v160, %v998
    %v1000 = vpop.f32.mrb[0].mxu0
    %1001 = vmatprep.mubr.f32.mxu0 0.0
    %1002 = vmatmul.mubr.f32.gmra.mrb[0].mxu0 %v446
    %v1003 = vpop.f32.mrb[0].mxu0
    %v1004 = vadd.f32 %v160, %v1003
    %v1005 = vpop.f32.mrb[0].mxu0
    %1006 = vmatprep.mubr.f32.mxu0 0.0
    %1007 = vmatmul.mubr.f32.gmra.mrb[0].mxu0 %v449
    %v1008 = vpop.f32.mrb[0].mxu0
    %v1009 = vadd.f32 %v160, %v1008
    %v1010 = vpop.f32.mrb[0].mxu0
    %1011 = vmatprep.mubr.f32.mxu0 0.0
    %1012 = vmatmul.mubr.f32.gmra.mrb[0].mxu0 %v452
    %v1013 = vpop.f32.mrb[0].mxu0
    %v1014 = vadd.f32 %v160, %v1013
    %v1015 = vpop.f32.mrb[0].mxu0
    %1016 = vmatprep.mubr.f32.mxu0 0.0
    %1017 = vmatmul.mubr.f32.gmra.mrb[0].mxu0 %v455
    %v1018 = vpop.f32.mrb[0].mxu0
    %v1019 = vadd.f32 %v160, %v1018
    %v1020 = vpop.f32.mrb[0].mxu0
    %1021 = vmatprep.mubr.f32.mxu0 0.0
    %1022 = vmatmul.mubr.f32.gmra.mrb[0].mxu0 %v458
    %v1023 = vpop.f32.mrb[0].mxu0
    %v1024 = vadd.f32 %v160, %v1023
    %v1025 = vpop.f32.mrb[0].mxu0
    %1026 = vmatprep.mubr.f32.mxu0 0.0
    %1027 = vmatmul.mubr.f32.gmra.mrb[0].mxu0 %v461
    %v1028 = vpop.f32.mrb[0].mxu0
    %v1029 = vadd.f32 %v160, %v1028
    %v1030 = vpop.f32.mrb[0].mxu0
    %1031 = vdwg.mxu0
    %v1032 = vmax.f32 %v534, 0.0
    %v1033 = vmax.f32 %v539, 0.0
    %v1034 = vmax.f32 %v544, 0.0
    %v1035 = vmax.f32 %v549, 0.0
    %v1036 = vmax.f32 %v554, 0.0
    %v1037 = vmax.f32 %v559, 0.0
    %v1038 = vmax.f32 %v564, 0.0
    %v1039 = vmax.f32 %v569, 0.0
    %v1040 = vmax.f32 %v574, 0.0
    %v1041 = vmax.f32 %v579, 0.0
    %v1042 = vmax.f32 %v584, 0.0
    %v1043 = vmax.f32 %v589, 0.0
    %v1044 = vmax.f32 %v594, 0.0
    %v1045 = vmax.f32 %v599, 0.0
    %v1046 = vmax.f32 %v604, 0.0
    %v1047 = vmax.f32 %v609, 0.0
    %v1048 = vmax.f32 %v614, 0.0
    %v1049 = vmax.f32 %v619, 0.0
    %v1050 = vmax.f32 %v624, 0.0
    %v1051 = vmax.f32 %v629, 0.0
    %v1052 = vmax.f32 %v634, 0.0
    %v1053 = vmax.f32 %v639, 0.0
    %v1054 = vmax.f32 %v644, 0.0
    %v1055 = vmax.f32 %v649, 0.0
    %v1056 = vmax.f32 %v654, 0.0
    %v1057 = vmax.f32 %v659, 0.0
    %v1058 = vmax.f32 %v664, 0.0
    %v1059 = vmax.f32 %v669, 0.0
    %v1060 = vmax.f32 %v674, 0.0
    %v1061 = vmax.f32 %v679, 0.0
    %v1062 = vmax.f32 %v684, 0.0
    %v1063 = vmax.f32 %v689, 0.0
    %v1064 = vmax.f32 %v694, 0.0
    %v1065 = vmax.f32 %v699, 0.0
    %v1066 = vmax.f32 %v704, 0.0
    %v1067 = vmax.f32 %v709, 0.0
    %v1068 = vmax.f32 %v714, 0.0
    %v1069 = vmax.f32 %v719, 0.0
    %v1070 = vmax.f32 %v724, 0.0
    %v1071 = vmax.f32 %v729, 0.0
    %v1072 = vmax.f32 %v734, 0.0
    %v1073 = vmax.f32 %v739, 0.0
    %v1074 = vmax.f32 %v744, 0.0
    %v1075 = vmax.f32 %v749, 0.0
    %v1076 = vmax.f32 %v754, 0.0
    %v1077 = vmax.f32 %v759, 0.0
    %v1078 = vmax.f32 %v764, 0.0
    %v1079 = vmax.f32 %v769, 0.0
    %v1080 = vmax.f32 %v774, 0.0
    %v1081 = vmax.f32 %v779, 0.0
    %v1082 = vmax.f32 %v784, 0.0
    %v1083 = vmax.f32 %v789, 0.0
    %v1084 = vmax.f32 %v794, 0.0
    %v1085 = vmax.f32 %v799, 0.0
    %v1086 = vmax.f32 %v804, 0.0
    %v1087 = vmax.f32 %v809, 0.0
    %v1088 = vmax.f32 %v814, 0.0
    %v1089 = vmax.f32 %v819, 0.0
    %v1090 = vmax.f32 %v824, 0.0
    %v1091 = vmax.f32 %v829, 0.0
    %v1092 = vmax.f32 %v834, 0.0
    %v1093 = vmax.f32 %v839, 0.0
    %v1094 = vmax.f32 %v844, 0.0
    %v1095 = vmax.f32 %v849, 0.0
    %v1096 = vmax.f32 %v854, 0.0
    %v1097 = vmax.f32 %v859, 0.0
    %v1098 = vmax.f32 %v864, 0.0
    %v1099 = vmax.f32 %v869, 0.0
    %v1100 = vmax.f32 %v874, 0.0
    %v1101 = vmax.f32 %v879, 0.0
    %v1102 = vmax.f32 %v884, 0.0
    %v1103 = vmax.f32 %v889, 0.0
    %v1104 = vmax.f32 %v894, 0.0
    %v1105 = vmax.f32 %v899, 0.0
    %v1106 = vmax.f32 %v904, 0.0
    %v1107 = vmax.f32 %v909, 0.0
    %v1108 = vmax.f32 %v914, 0.0
    %v1109 = vmax.f32 %v919, 0.0
    %v1110 = vmax.f32 %v924, 0.0
    %v1111 = vmax.f32 %v929, 0.0
    %v1112 = vmax.f32 %v934, 0.0
    %v1113 = vmax.f32 %v939, 0.0
    %v1114 = vmax.f32 %v944, 0.0
    %v1115 = vmax.f32 %v949, 0.0
    %v1116 = vmax.f32 %v954, 0.0
    %v1117 = vmax.f32 %v959, 0.0
    %v1118 = vmax.f32 %v964, 0.0
    %v1119 = vmax.f32 %v969, 0.0
    %v1120 = vmax.f32 %v974, 0.0
    %v1121 = vmax.f32 %v979, 0.0
    %v1122 = vmax.f32 %v984, 0.0
    %v1123 = vmax.f32 %v989, 0.0
    %v1124 = vmax.f32 %v994, 0.0
    %v1125 = vmax.f32 %v999, 0.0
    %v1126 = vmax.f32 %v1004, 0.0
    %v1127 = vmax.f32 %v1009, 0.0
    %v1128 = vmax.f32 %v1014, 0.0
    %v1129 = vmax.f32 %v1019, 0.0
    %v1130 = vmax.f32 %v1024, 0.0
    %v1131 = vmax.f32 %v1029, 0.0
    %v1132 = vld [vmem:[%s10] sm:$0xf]
    %v1133 = vld [vmem:[%s3] sm:$0xff]
    %v1134 = vld [vmem:[%s3 + $0x8] sm:$0xff]
    %v1135 = vld [vmem:[%s3 + $0x10] sm:$0xff]
    %v1136 = vld [vmem:[%s3 + $0x18] sm:$0xff]
    %v1137 = vld [vmem:[%s3 + $0x20] sm:$0xff]
    %v1138 = vld [vmem:[%s3 + $0x28] sm:$0xff]
    %v1139 = vld [vmem:[%s3 + $0x30] sm:$0xff]
    %v1140 = vld [vmem:[%s3 + $0x38] sm:$0xff]
    %v1141 = vld [vmem:[%s3 + $0x40] sm:$0xff]
    %v1142 = vld [vmem:[%s3 + $0x48] sm:$0xff]
    %v1143 = vld [vmem:[%s3 + $0x50] sm:$0xff]
    %v1144 = vld [vmem:[%s3 + $0x58] sm:$0xff]
    %v1145 = vld [vmem:[%s3 + $0x60] sm:$0xff]
    %v1146 = vld [vmem:[%s3 + $0x68] sm:$0xff]
    %v1147 = vld [vmem:[%s3 + $0x70] sm:$0xff]
    %v1148 = vld [vmem:[%s3 + $0x78] sm:$0xff]
    %v1149 = vld [vmem:[%s3 + $0x80] sm:$0xff]
    %v1150 = vld [vmem:[%s3 + $0x88] sm:$0xff]
    %v1151 = vld [vmem:[%s3 + $0x90] sm:$0xff]
    %v1152 = vld [vmem:[%s3 + $0x98] sm:$0xff]
    %v1153 = vld [vmem:[%s3 + $0xa0] sm:$0xff]
    %v1154 = vld [vmem:[%s3 + $0xa8] sm:$0xff]
    %v1155 = vld [vmem:[%s3 + $0xb0] sm:$0xff]
    %v1156 = vld [vmem:[%s3 + $0xb8] sm:$0xff]
    %v1157 = vld [vmem:[%s3 + $0xc0] sm:$0xff]
    %v1158 = vld [vmem:[%s3 + $0xc8] sm:$0xff]
    %v1159 = vld [vmem:[%s3 + $0xd0] sm:$0xff]
    %v1160 = vld [vmem:[%s3 + $0xd8] sm:$0xff]
    %v1161 = vld [vmem:[%s3 + $0xe0] sm:$0xff]
    %v1162 = vld [vmem:[%s3 + $0xe8] sm:$0xff]
    %v1163 = vld [vmem:[%s3 + $0xf0] sm:$0xff]
    %v1164 = vld [vmem:[%s3 + $0xf8] sm:$0xff]
    %v1165 = vld [vmem:[%s3 + $0x100] sm:$0xff]
    %v1166 = vld [vmem:[%s3 + $0x108] sm:$0xff]
    %v1167 = vld [vmem:[%s3 + $0x110] sm:$0xff]
    %v1168 = vld [vmem:[%s3 + $0x118] sm:$0xff]
    %v1169 = vld [vmem:[%s3 + $0x120] sm:$0xff]
    %v1170 = vld [vmem:[%s3 + $0x128] sm:$0xff]
    %v1171 = vld [vmem:[%s3 + $0x130] sm:$0xff]
    %v1172 = vld [vmem:[%s3 + $0x138] sm:$0xff]
    %v1173 = vld [vmem:[%s3 + $0x140] sm:$0xff]
    %v1174 = vld [vmem:[%s3 + $0x148] sm:$0xff]
    %v1175 = vld [vmem:[%s3 + $0x150] sm:$0xff]
    %v1176 = vld [vmem:[%s3 + $0x158] sm:$0xff]
    %v1177 = vld [vmem:[%s3 + $0x160] sm:$0xff]
    %v1178 = vld [vmem:[%s3 + $0x168] sm:$0xff]
    %v1179 = vld [vmem:[%s3 + $0x170] sm:$0xff]
    %v1180 = vld [vmem:[%s3 + $0x178] sm:$0xff]
    %v1181 = vld [vmem:[%s3 + $0x180] sm:$0xf]
    %v1182 = vld [vmem:[%s3 + $0x188] sm:$0xf]
    %v1183 = vld [vmem:[%s3 + $0x190] sm:$0xf]
    %v1184 = vld [vmem:[%s3 + $0x198] sm:$0xf]
    %vm1185 = vcmask 130048
    %v1187 = vsel %vm1185, %v1136, 0
    %v1190 = vsel %vm1185, %v1140, 0
    %v1193 = vsel %vm1185, %v1144, 0
    %v1196 = vsel %vm1185, %v1148, 0
    %v1199 = vsel %vm1185, %v1152, 0
    %v1202 = vsel %vm1185, %v1156, 0
    %v1205 = vsel %vm1185, %v1160, 0
    %v1208 = vsel %vm1185, %v1164, 0
    %v1211 = vsel %vm1185, %v1168, 0
    %v1214 = vsel %vm1185, %v1172, 0
    %v1217 = vsel %vm1185, %v1176, 0
    %v1220 = vsel %vm1185, %v1180, 0
    %v1223 = vsel %vm1185, %v1184, 0
    %1225 = vmatprep.subr.mxu0 0.0
    %1226 = vmatpush1.msra.mxu0 %v1032
    %1227 = vmatprep.subr.mxu0 0.0
    %1228 = vmatpush1.msra.mxu0 %v1033
    %1229 = vmatprep.subr.mxu0 0.0
    %1230 = vmatpush1.msra.mxu0 %v1034
    %1231 = vmatprep.subr.mxu0 0.0
    %1232 = vmatpush1.msra.mxu0 %v1035
    %1233 = vmatprep.subr.mxu0 0.0
    %1234 = vmatpush1.msra.mxu0 %v1036
    %1235 = vmatprep.subr.mxu0 0.0
    %1236 = vmatpush1.msra.mxu0 %v1037
    %1237 = vmatprep.subr.mxu0 0.0
    %1238 = vmatpush1.msra.mxu0 %v1038
    %1239 = vmatprep.subr.mxu0 0.0
    %1240 = vmatpush1.msra.mxu0 %v1039
    %1241 = vmatprep.subr.mxu0 0.0
    %1242 = vmatpush1.msra.mxu0 %v1040
    %1243 = vmatprep.subr.mxu0 0.0
    %1244 = vmatpush1.msra.mxu0 %v1041
    %1245 = vmatprep.subr.mxu0 0.0
    %1246 = vmatpush1.msra.mxu0 %v1042
    %1247 = vmatprep.subr.mxu0 0.0
    %1248 = vmatpush1.msra.mxu0 %v1043
    %1249 = vmatprep.subr.mxu0 0.0
    %1250 = vmatpush1.msra.mxu0 %v1044
    %1251 = vmatprep.subr.mxu0 0.0
    %1252 = vmatpush1.msra.mxu0 %v1045
    %1253 = vmatprep.subr.mxu0 0.0
    %1254 = vmatpush1.msra.mxu0 %v1046
    %1255 = vmatprep.subr.mxu0 0.0
    %1256 = vmatpush1.msra.mxu0 %v1047
    %1257 = vmatprep.subr.mxu0 0.0
    %1258 = vmatpush1.msra.mxu0 %v1048
    %1259 = vmatprep.subr.mxu0 0.0
    %1260 = vmatpush1.msra.mxu0 %v1049
    %1261 = vmatprep.subr.mxu0 0.0
    %1262 = vmatpush1.msra.mxu0 %v1050
    %1263 = vmatprep.subr.mxu0 0.0
    %1264 = vmatpush1.msra.mxu0 %v1051
    %1265 = vmatprep.subr.mxu0 0.0
    %1266 = vmatpush1.msra.mxu0 %v1052
    %1267 = vmatprep.subr.mxu0 0.0
    %1268 = vmatpush1.msra.mxu0 %v1053
    %1269 = vmatprep.subr.mxu0 0.0
    %1270 = vmatpush1.msra.mxu0 %v1054
    %1271 = vmatprep.subr.mxu0 0.0
    %1272 = vmatpush1.msra.mxu0 %v1055
    %1273 = vmatprep.subr.mxu0 0.0
    %1274 = vmatpush1.msra.mxu0 %v1056
    %1275 = vmatprep.subr.mxu0 0.0
    %1276 = vmatpush1.msra.mxu0 %v1057
    %1277 = vmatprep.subr.mxu0 0.0
    %1278 = vmatpush1.msra.mxu0 %v1058
    %1279 = vmatprep.subr.mxu0 0.0
    %1280 = vmatpush1.msra.mxu0 %v1059
    %1281 = vmatprep.subr.mxu0 0.0
    %1282 = vmatpush1.msra.mxu0 %v1060
    %1283 = vmatprep.subr.mxu0 0.0
    %1284 = vmatpush1.msra.mxu0 %v1061
    %1285 = vmatprep.subr.mxu0 0.0
    %1286 = vmatpush1.msra.mxu0 %v1062
    %1287 = vmatprep.subr.mxu0 0.0
    %1288 = vmatpush1.msra.mxu0 %v1063
    %1289 = vmatprep.mubr.f32.mxu0 %v1134
    %1290 = vmatmul.mubr.f32.gmra.mrb[0].mxu0 %v1133
    %v1291 = vpop.f32.mrb[0].mxu0
    %v1292 = vadd.f32 0.0, %v1291
    %v1293 = vpop.f32.mrb[0].mxu0
    %1294 = vmatprep.mubr.f32.mxu0 %v1138
    %1295 = vmatmul.mubr.f32.gmra.mrb[0].mxu0 %v1137
    %v1296 = vpop.f32.mrb[0].mxu0
    %v1297 = vadd.f32 0.0, %v1296
    %v1298 = vpop.f32.mrb[0].mxu0
    %1299 = vmatprep.mubr.f32.mxu0 %v1142
    %1300 = vmatmul.mubr.f32.gmra.mrb[0].mxu0 %v1141
    %v1301 = vpop.f32.mrb[0].mxu0
    %v1302 = vadd.f32 0.0, %v1301
    %v1303 = vpop.f32.mrb[0].mxu0
    %1304 = vmatprep.mubr.f32.mxu0 %v1146
    %1305 = vmatmul.mubr.f32.gmra.mrb[0].mxu0 %v1145
    %v1306 = vpop.f32.mrb[0].mxu0
    %v1307 = vadd.f32 0.0, %v1306
    %v1308 = vpop.f32.mrb[0].mxu0
    %1309 = vmatprep.mubr.f32.mxu0 %v1150
    %1310 = vmatmul.mubr.f32.gmra.mrb[0].mxu0 %v1149
    %v1311 = vpop.f32.mrb[0].mxu0
    %v1312 = vadd.f32 0.0, %v1311
    %v1313 = vpop.f32.mrb[0].mxu0
    %1314 = vmatprep.mubr.f32.mxu0 %v1154
    %1315 = vmatmul.mubr.f32.gmra.mrb[0].mxu0 %v1153
    %v1316 = vpop.f32.mrb[0].mxu0
    %v1317 = vadd.f32 0.0, %v1316
    %v1318 = vpop.f32.mrb[0].mxu0
    %1319 = vmatprep.mubr.f32.mxu0 %v1158
    %1320 = vmatmul.mubr.f32.gmra.mrb[0].mxu0 %v1157
    %v1321 = vpop.f32.mrb[0].mxu0
    %v1322 = vadd.f32 0.0, %v1321
    %v1323 = vpop.f32.mrb[0].mxu0
    %1324 = vmatprep.mubr.f32.mxu0 %v1162
    %1325 = vmatmul.mubr.f32.gmra.mrb[0].mxu0 %v1161
    %v1326 = vpop.f32.mrb[0].mxu0
    %v1327 = vadd.f32 0.0, %v1326
    %v1328 = vpop.f32.mrb[0].mxu0
    %1329 = vmatprep.mubr.f32.mxu0 %v1166
    %1330 = vmatmul.mubr.f32.gmra.mrb[0].mxu0 %v1165
    %v1331 = vpop.f32.mrb[0].mxu0
    %v1332 = vadd.f32 0.0, %v1331
    %v1333 = vpop.f32.mrb[0].mxu0
    %1334 = vmatprep.mubr.f32.mxu0 %v1170
    %1335 = vmatmul.mubr.f32.gmra.mrb[0].mxu0 %v1169
    %v1336 = vpop.f32.mrb[0].mxu0
    %v1337 = vadd.f32 0.0, %v1336
    %v1338 = vpop.f32.mrb[0].mxu0
    %1339 = vmatprep.mubr.f32.mxu0 %v1174
    %1340 = vmatmul.mubr.f32.gmra.mrb[0].mxu0 %v1173
    %v1341 = vpop.f32.mrb[0].mxu0
    %v1342 = vadd.f32 0.0, %v1341
    %v1343 = vpop.f32.mrb[0].mxu0
    %1344 = vmatprep.mubr.f32.mxu0 %v1178
    %1345 = vmatmul.mubr.f32.gmra.mrb[0].mxu0 %v1177
    %v1346 = vpop.f32.mrb[0].mxu0
    %v1347 = vadd.f32 0.0, %v1346
    %v1348 = vpop.f32.mrb[0].mxu0
    %1349 = vmatprep.mubr.f32.mxu0 %v1182
    %1350 = vmatmul.mubr.f32.gmra.mrb[0].mxu0 %v1181
    %v1351 = vpop.f32.mrb[0].mxu0
    %v1352 = vadd.f32 0.0, %v1351
    %v1353 = vpop.f32.mrb[0].mxu0
    %1354 = vdwg.mxu0
    %1355 = vmatprep.subr.mxu0 0.0
    %1356 = vmatpush1.msra.mxu0 %v1064
    %1357 = vmatprep.subr.mxu0 0.0
    %1358 = vmatpush1.msra.mxu0 %v1065
    %1359 = vmatprep.subr.mxu0 0.0
    %1360 = vmatpush1.msra.mxu0 %v1066
    %1361 = vmatprep.subr.mxu0 0.0
    %1362 = vmatpush1.msra.mxu0 %v1067
    %1363 = vmatprep.subr.mxu0 0.0
    %1364 = vmatpush1.msra.mxu0 %v1068
    %1365 = vmatprep.subr.mxu0 0.0
    %1366 = vmatpush1.msra.mxu0 %v1069
    %1367 = vmatprep.subr.mxu0 0.0
    %1368 = vmatpush1.msra.mxu0 %v1070
    %1369 = vmatprep.subr.mxu0 0.0
    %1370 = vmatpush1.msra.mxu0 %v1071
    %1371 = vmatprep.subr.mxu0 0.0
    %1372 = vmatpush1.msra.mxu0 %v1072
    %1373 = vmatprep.subr.mxu0 0.0
    %1374 = vmatpush1.msra.mxu0 %v1073
    %1375 = vmatprep.subr.mxu0 0.0
    %1376 = vmatpush1.msra.mxu0 %v1074
    %1377 = vmatprep.subr.mxu0 0.0
    %1378 = vmatpush1.msra.mxu0 %v1075
    %1379 = vmatprep.subr.mxu0 0.0
    %1380 = vmatpush1.msra.mxu0 %v1076
    %1381 = vmatprep.subr.mxu0 0.0
    %1382 = vmatpush1.msra.mxu0 %v1077
    %1383 = vmatprep.subr.mxu0 0.0
    %1384 = vmatpush1.msra.mxu0 %v1078
    %1385 = vmatprep.subr.mxu0 0.0
    %1386 = vmatpush1.msra.mxu0 %v1079
    %1387 = vmatprep.subr.mxu0 0.0
    %1388 = vmatpush1.msra.mxu0 %v1080
    %1389 = vmatprep.subr.mxu0 0.0
    %1390 = vmatpush1.msra.mxu0 %v1081
    %1391 = vmatprep.subr.mxu0 0.0
    %1392 = vmatpush1.msra.mxu0 0.0
    %1393 = vmatprep.subr.mxu0 0.0
    %1394 = vmatpush1.msra.mxu0 0.0
    %1395 = vmatprep.subr.mxu0 0.0
    %1396 = vmatpush1.msra.mxu0 0.0
    %1397 = vmatprep.subr.mxu0 0.0
    %1398 = vmatpush1.msra.mxu0 0.0
    %1399 = vmatprep.subr.mxu0 0.0
    %1400 = vmatpush1.msra.mxu0 0.0
    %1401 = vmatprep.subr.mxu0 0.0
    %1402 = vmatpush1.msra.mxu0 0.0
    %1403 = vmatprep.subr.mxu0 0.0
    %1404 = vmatpush1.msra.mxu0 0.0
    %1405 = vmatprep.subr.mxu0 0.0
    %1406 = vmatpush1.msra.mxu0 0.0
    %1407 = vmatprep.subr.mxu0 0.0
    %1408 = vmatpush1.msra.mxu0 0.0
    %1409 = vmatprep.subr.mxu0 0.0
    %1410 = vmatpush1.msra.mxu0 0.0
    %1411 = vmatprep.subr.mxu0 0.0
    %1412 = vmatpush1.msra.mxu0 0.0
    %1413 = vmatprep.subr.mxu0 0.0
    %1414 = vmatpush1.msra.mxu0 0.0
    %1415 = vmatprep.subr.mxu0 0.0
    %1416 = vmatpush1.msra.mxu0 0.0
    %1417 = vmatprep.subr.mxu0 0.0
    %1418 = vmatpush1.msra.mxu0 0.0
    %1419 = vmatprep.mubr.f32.mxu0 %v1187
    %1420 = vmatmul.mubr.f32.gmra.mrb[0].mxu0 %v1135
    %v1421 = vpop.f32.mrb[0].mxu0
    %v1422 = vadd.f32 %v1292, %v1421
    %v1423 = vpop.f32.mrb[0].mxu0
    %1424 = vmatprep.mubr.f32.mxu0 %v1190
    %1425 = vmatmul.mubr.f32.gmra.mrb[0].mxu0 %v1139
    %v1426 = vpop.f32.mrb[0].mxu0
    %v1427 = vadd.f32 %v1297, %v1426
    %v1428 = vpop.f32.mrb[0].mxu0
    %1429 = vmatprep.mubr.f32.mxu0 %v1193
    %1430 = vmatmul.mubr.f32.gmra.mrb[0].mxu0 %v1143
    %v1431 = vpop.f32.mrb[0].mxu0
    %v1432 = vadd.f32 %v1302, %v1431
    %v1433 = vpop.f32.mrb[0].mxu0
    %1434 = vmatprep.mubr.f32.mxu0 %v1196
    %1435 = vmatmul.mubr.f32.gmra.mrb[0].mxu0 %v1147
    %v1436 = vpop.f32.mrb[0].mxu0
    %v1437 = vadd.f32 %v1307, %v1436
    %v1438 = vpop.f32.mrb[0].mxu0
    %1439 = vmatprep.mubr.f32.mxu0 %v1199
    %1440 = vmatmul.mubr.f32.gmra.mrb[0].mxu0 %v1151
    %v1441 = vpop.f32.mrb[0].mxu0
    %v1442 = vadd.f32 %v1312, %v1441
    %v1443 = vpop.f32.mrb[0].mxu0
    %1444 = vmatprep.mubr.f32.mxu0 %v1202
    %1445 = vmatmul.mubr.f32.gmra.mrb[0].mxu0 %v1155
    %v1446 = vpop.f32.mrb[0].mxu0
    %v1447 = vadd.f32 %v1317, %v1446
    %v1448 = vpop.f32.mrb[0].mxu0
    %1449 = vmatprep.mubr.f32.mxu0 %v1205
    %1450 = vmatmul.mubr.f32.gmra.mrb[0].mxu0 %v1159
    %v1451 = vpop.f32.mrb[0].mxu0
    %v1452 = vadd.f32 %v1322, %v1451
    %v1453 = vpop.f32.mrb[0].mxu0
    %1454 = vmatprep.mubr.f32.mxu0 %v1208
    %1455 = vmatmul.mubr.f32.gmra.mrb[0].mxu0 %v1163
    %v1456 = vpop.f32.mrb[0].mxu0
    %v1457 = vadd.f32 %v1327, %v1456
    %v1458 = vpop.f32.mrb[0].mxu0
    %1459 = vmatprep.mubr.f32.mxu0 %v1211
    %1460 = vmatmul.mubr.f32.gmra.mrb[0].mxu0 %v1167
    %v1461 = vpop.f32.mrb[0].mxu0
    %v1462 = vadd.f32 %v1332, %v1461
    %v1463 = vpop.f32.mrb[0].mxu0
    %1464 = vmatprep.mubr.f32.mxu0 %v1214
    %1465 = vmatmul.mubr.f32.gmra.mrb[0].mxu0 %v1171
    %v1466 = vpop.f32.mrb[0].mxu0
    %v1467 = vadd.f32 %v1337, %v1466
    %v1468 = vpop.f32.mrb[0].mxu0
    %1469 = vmatprep.mubr.f32.mxu0 %v1217
    %1470 = vmatmul.mubr.f32.gmra.mrb[0].mxu0 %v1175
    %v1471 = vpop.f32.mrb[0].mxu0
    %v1472 = vadd.f32 %v1342, %v1471
    %v1473 = vpop.f32.mrb[0].mxu0
    %1474 = vmatprep.mubr.f32.mxu0 %v1220
    %1475 = vmatmul.mubr.f32.gmra.mrb[0].mxu0 %v1179
    %v1476 = vpop.f32.mrb[0].mxu0
    %v1477 = vadd.f32 %v1347, %v1476
    %v1478 = vpop.f32.mrb[0].mxu0
    %1479 = vmatprep.mubr.f32.mxu0 %v1223
    %1480 = vmatmul.mubr.f32.gmra.mrb[0].mxu0 %v1183
    %v1481 = vpop.f32.mrb[0].mxu0
    %v1482 = vadd.f32 %v1352, %v1481
    %v1483 = vpop.f32.mrb[0].mxu0
    %1484 = vdwg.mxu0
    %v1485 = vld [vmem:[%s4] sm:$0xff]
    %v1486 = vld [vmem:[%s4 + $0x8] sm:$0xff]
    %v1487 = vld [vmem:[%s4 + $0x10] sm:$0xff]
    %v1488 = vld [vmem:[%s4 + $0x18] sm:$0xff]
    %v1489 = vld [vmem:[%s4 + $0x20] sm:$0xff]
    %v1490 = vld [vmem:[%s4 + $0x28] sm:$0xff]
    %v1491 = vld [vmem:[%s4 + $0x30] sm:$0xff]
    %v1492 = vld [vmem:[%s4 + $0x38] sm:$0xff]
    %vm1493 = vcmask 818176
    %v1495 = vsel %vm1493, %v1485, 0
    %v1498 = vsel %vm1493, %v1486, 0
    %v1501 = vsel %vm1493, %v1487, 0
    %v1504 = vsel %vm1493, %v1488, 0
    %v1507 = vsel %vm1493, %v1489, 0
    %v1510 = vsel %vm1493, %v1490, 0
    %v1513 = vsel %vm1493, %v1491, 0
    %v1516 = vsel %vm1493, %v1492, 0
    %vm1518 = vcmask 1043456
    %v1520 = vsel %vm1518, %v1482, 0
    %1522 = vmatprep.subr.mxu0 0.0
    %1523 = vmatpush1.msra.mxu0 %v1422
    %1524 = vmatprep.subr.mxu0 0.0
    %1525 = vmatpush1.msra.mxu0 %v1427
    %1526 = vmatprep.subr.mxu0 0.0
    %1527 = vmatpush1.msra.mxu0 %v1432
    %1528 = vmatprep.subr.mxu0 0.0
    %1529 = vmatpush1.msra.mxu0 %v1437
    %1530 = vmatprep.subr.mxu0 0.0
    %1531 = vmatpush1.msra.mxu0 %v1442
    %1532 = vmatprep.subr.mxu0 0.0
    %1533 = vmatpush1.msra.mxu0 %v1447
    %1534 = vmatprep.subr.mxu0 0.0
    %1535 = vmatpush1.msra.mxu0 %v1452
    %1536 = vmatprep.subr.mxu0 0.0
    %1537 = vmatpush1.msra.mxu0 %v1457
    %1538 = vmatprep.subr.mxu0 0.0
    %1539 = vmatpush1.msra.mxu0 %v1462
    %1540 = vmatprep.subr.mxu0 0.0
    %1541 = vmatpush1.msra.mxu0 %v1467
    %1542 = vmatprep.subr.mxu0 0.0
    %1543 = vmatpush1.msra.mxu0 %v1472
    %1544 = vmatprep.subr.mxu0 0.0
    %1545 = vmatpush1.msra.mxu0 %v1477
    %1546 = vmatprep.subr.mxu0 0.0
    %1547 = vmatpush1.msra.mxu0 %v1520
    %1548 = vmatprep.subr.mxu0 0.0
    %1549 = vmatpush1.msra.mxu0 0.0
    %1550 = vmatprep.subr.mxu0 0.0
    %1551 = vmatpush1.msra.mxu0 0.0
    %1552 = vmatprep.subr.mxu0 0.0
    %1553 = vmatpush1.msra.mxu0 0.0
    %1554 = vmatprep.subr.mxu0 0.0
    %1555 = vmatpush1.msra.mxu0 0.0
    %1556 = vmatprep.subr.mxu0 0.0
    %1557 = vmatpush1.msra.mxu0 0.0
    %1558 = vmatprep.subr.mxu0 0.0
    %1559 = vmatpush1.msra.mxu0 0.0
    %1560 = vmatprep.subr.mxu0 0.0
    %1561 = vmatpush1.msra.mxu0 0.0
    %1562 = vmatprep.subr.mxu0 0.0
    %1563 = vmatpush1.msra.mxu0 0.0
    %1564 = vmatprep.subr.mxu0 0.0
    %1565 = vmatpush1.msra.mxu0 0.0
    %1566 = vmatprep.subr.mxu0 0.0
    %1567 = vmatpush1.msra.mxu0 0.0
    %1568 = vmatprep.subr.mxu0 0.0
    %1569 = vmatpush1.msra.mxu0 0.0
    %1570 = vmatprep.subr.mxu0 0.0
    %1571 = vmatpush1.msra.mxu0 0.0
    %1572 = vmatprep.subr.mxu0 0.0
    %1573 = vmatpush1.msra.mxu0 0.0
    %1574 = vmatprep.subr.mxu0 0.0
    %1575 = vmatpush1.msra.mxu0 0.0
    %1576 = vmatprep.subr.mxu0 0.0
    %1577 = vmatpush1.msra.mxu0 0.0
    %1578 = vmatprep.subr.mxu0 0.0
    %1579 = vmatpush1.msra.mxu0 0.0
    %1580 = vmatprep.subr.mxu0 0.0
    %1581 = vmatpush1.msra.mxu0 0.0
    %1582 = vmatprep.subr.mxu0 0.0
    %1583 = vmatpush1.msra.mxu0 0.0
    %1584 = vmatprep.subr.mxu0 0.0
    %1585 = vmatpush1.msra.mxu0 0.0
    %1586 = vmatprep.mubr.f32.mxu0 0.0
    %1587 = vmatmul.mubr.f32.gmra.mrb[0].mxu0 %v1495
    %v1588 = vpop.f32.mrb[0].mxu0
    %v1589 = vadd.f32 0.0, %v1588
    %v1590 = vpop.f32.mrb[0].mxu0
    %1591 = vmatprep.mubr.f32.mxu0 0.0
    %1592 = vmatmul.mubr.f32.gmra.mrb[0].mxu0 %v1498
    %v1593 = vpop.f32.mrb[0].mxu0
    %v1594 = vadd.f32 0.0, %v1593
    %v1595 = vpop.f32.mrb[0].mxu0
    %1596 = vmatprep.mubr.f32.mxu0 0.0
    %1597 = vmatmul.mubr.f32.gmra.mrb[0].mxu0 %v1501
    %v1598 = vpop.f32.mrb[0].mxu0
    %v1599 = vadd.f32 0.0, %v1598
    %v1600 = vpop.f32.mrb[0].mxu0
    %1601 = vmatprep.mubr.f32.mxu0 0.0
    %1602 = vmatmul.mubr.f32.gmra.mrb[0].mxu0 %v1504
    %v1603 = vpop.f32.mrb[0].mxu0
    %v1604 = vadd.f32 0.0, %v1603
    %v1605 = vpop.f32.mrb[0].mxu0
    %1606 = vmatprep.mubr.f32.mxu0 0.0
    %1607 = vmatmul.mubr.f32.gmra.mrb[0].mxu0 %v1507
    %v1608 = vpop.f32.mrb[0].mxu0
    %v1609 = vadd.f32 0.0, %v1608
    %v1610 = vpop.f32.mrb[0].mxu0
    %1611 = vmatprep.mubr.f32.mxu0 0.0
    %1612 = vmatmul.mubr.f32.gmra.mrb[0].mxu0 %v1510
    %v1613 = vpop.f32.mrb[0].mxu0
    %v1614 = vadd.f32 0.0, %v1613
    %v1615 = vpop.f32.mrb[0].mxu0
    %1616 = vmatprep.mubr.f32.mxu0 0.0
    %1617 = vmatmul.mubr.f32.gmra.mrb[0].mxu0 %v1513
    %v1618 = vpop.f32.mrb[0].mxu0
    %v1619 = vadd.f32 0.0, %v1618
    %v1620 = vpop.f32.mrb[0].mxu0
    %1621 = vmatprep.mubr.f32.mxu0 0.0
    %1622 = vmatmul.mubr.f32.gmra.mrb[0].mxu0 %v1516
    %v1623 = vpop.f32.mrb[0].mxu0
    %v1624 = vadd.f32 0.0, %v1623
    %v1625 = vpop.f32.mrb[0].mxu0
    %1626 = vdwg.mxu0
    %v1627 = vld [vmem:[%s5] sm:$0xf]
    %s1628 = scalar_lea.vmem %s4, 64
    %v1629 = vld [vmem:[%s1628] sm:$0xff]
    %v1630 = vld [vmem:[%s1628 + $0x8] sm:$0xff]
    %v1631 = vld [vmem:[%s1628 + $0x10] sm:$0xff]
    %v1632 = vld [vmem:[%s1628 + $0x18] sm:$0xff]
    %v1633 = vld [vmem:[%s1628 + $0x20] sm:$0xff]
    %v1634 = vld [vmem:[%s1628 + $0x28] sm:$0xff]
    %v1635 = vld [vmem:[%s1628 + $0x30] sm:$0xff]
    %v1636 = vld [vmem:[%s1628 + $0x38] sm:$0xff]
    %v1638 = vsel %vm1493, %v1629, 0
    %v1641 = vsel %vm1493, %v1630, 0
    %v1644 = vsel %vm1493, %v1631, 0
    %v1647 = vsel %vm1493, %v1632, 0
    %v1650 = vsel %vm1493, %v1633, 0
    %v1653 = vsel %vm1493, %v1634, 0
    %v1656 = vsel %vm1493, %v1635, 0
    %v1659 = vsel %vm1493, %v1636, 0
    %1661 = vmatprep.subr.mxu0 0.0
    %1662 = vmatpush1.msra.mxu0 %v1422
    %1663 = vmatprep.subr.mxu0 0.0
    %1664 = vmatpush1.msra.mxu0 %v1427
    %1665 = vmatprep.subr.mxu0 0.0
    %1666 = vmatpush1.msra.mxu0 %v1432
    %1667 = vmatprep.subr.mxu0 0.0
    %1668 = vmatpush1.msra.mxu0 %v1437
    %1669 = vmatprep.subr.mxu0 0.0
    %1670 = vmatpush1.msra.mxu0 %v1442
    %1671 = vmatprep.subr.mxu0 0.0
    %1672 = vmatpush1.msra.mxu0 %v1447
    %1673 = vmatprep.subr.mxu0 0.0
    %1674 = vmatpush1.msra.mxu0 %v1452
    %1675 = vmatprep.subr.mxu0 0.0
    %1676 = vmatpush1.msra.mxu0 %v1457
    %1677 = vmatprep.subr.mxu0 0.0
    %1678 = vmatpush1.msra.mxu0 %v1462
    %1679 = vmatprep.subr.mxu0 0.0
    %1680 = vmatpush1.msra.mxu0 %v1467
    %1681 = vmatprep.subr.mxu0 0.0
    %1682 = vmatpush1.msra.mxu0 %v1472
    %1683 = vmatprep.subr.mxu0 0.0
    %1684 = vmatpush1.msra.mxu0 %v1477
    %1685 = vmatprep.subr.mxu0 0.0
    %1686 = vmatpush1.msra.mxu0 %v1520
    %1687 = vmatprep.subr.mxu0 0.0
    %1688 = vmatpush1.msra.mxu0 0.0
    %1689 = vmatprep.subr.mxu0 0.0
    %1690 = vmatpush1.msra.mxu0 0.0
    %1691 = vmatprep.subr.mxu0 0.0
    %1692 = vmatpush1.msra.mxu0 0.0
    %1693 = vmatprep.subr.mxu0 0.0
    %1694 = vmatpush1.msra.mxu0 0.0
    %1695 = vmatprep.subr.mxu0 0.0
    %1696 = vmatpush1.msra.mxu0 0.0
    %1697 = vmatprep.subr.mxu0 0.0
    %1698 = vmatpush1.msra.mxu0 0.0
    %1699 = vmatprep.subr.mxu0 0.0
    %1700 = vmatpush1.msra.mxu0 0.0
    %1701 = vmatprep.subr.mxu0 0.0
    %1702 = vmatpush1.msra.mxu0 0.0
    %1703 = vmatprep.subr.mxu0 0.0
    %1704 = vmatpush1.msra.mxu0 0.0
    %1705 = vmatprep.subr.mxu0 0.0
    %1706 = vmatpush1.msra.mxu0 0.0
    %1707 = vmatprep.subr.mxu0 0.0
    %1708 = vmatpush1.msra.mxu0 0.0
    %1709 = vmatprep.subr.mxu0 0.0
    %1710 = vmatpush1.msra.mxu0 0.0
    %1711 = vmatprep.subr.mxu0 0.0
    %1712 = vmatpush1.msra.mxu0 0.0
    %1713 = vmatprep.subr.mxu0 0.0
    %1714 = vmatpush1.msra.mxu0 0.0
    %1715 = vmatprep.subr.mxu0 0.0
    %1716 = vmatpush1.msra.mxu0 0.0
    %1717 = vmatprep.subr.mxu0 0.0
    %1718 = vmatpush1.msra.mxu0 0.0
    %1719 = vmatprep.subr.mxu0 0.0
    %1720 = vmatpush1.msra.mxu0 0.0
    %1721 = vmatprep.subr.mxu0 0.0
    %1722 = vmatpush1.msra.mxu0 0.0
    %1723 = vmatprep.subr.mxu0 0.0
    %1724 = vmatpush1.msra.mxu0 0.0
    %1725 = vmatprep.mubr.f32.mxu0 0.0
    %1726 = vmatmul.mubr.f32.gmra.mrb[0].mxu0 %v1638
    %v1727 = vpop.f32.mrb[0].mxu0
    %v1728 = vadd.f32 0.0, %v1727
    %v1729 = vpop.f32.mrb[0].mxu0
    %1730 = vmatprep.mubr.f32.mxu0 0.0
    %1731 = vmatmul.mubr.f32.gmra.mrb[0].mxu0 %v1641
    %v1732 = vpop.f32.mrb[0].mxu0
    %v1733 = vadd.f32 0.0, %v1732
    %v1734 = vpop.f32.mrb[0].mxu0
    %1735 = vmatprep.mubr.f32.mxu0 0.0
    %1736 = vmatmul.mubr.f32.gmra.mrb[0].mxu0 %v1644
    %v1737 = vpop.f32.mrb[0].mxu0
    %v1738 = vadd.f32 0.0, %v1737
    %v1739 = vpop.f32.mrb[0].mxu0
    %1740 = vmatprep.mubr.f32.mxu0 0.0
    %1741 = vmatmul.mubr.f32.gmra.mrb[0].mxu0 %v1647
    %v1742 = vpop.f32.mrb[0].mxu0
    %v1743 = vadd.f32 0.0, %v1742
    %v1744 = vpop.f32.mrb[0].mxu0
    %1745 = vmatprep.mubr.f32.mxu0 0.0
    %1746 = vmatmul.mubr.f32.gmra.mrb[0].mxu0 %v1650
    %v1747 = vpop.f32.mrb[0].mxu0
    %v1748 = vadd.f32 0.0, %v1747
    %v1749 = vpop.f32.mrb[0].mxu0
    %1750 = vmatprep.mubr.f32.mxu0 0.0
    %1751 = vmatmul.mubr.f32.gmra.mrb[0].mxu0 %v1653
    %v1752 = vpop.f32.mrb[0].mxu0
    %v1753 = vadd.f32 0.0, %v1752
    %v1754 = vpop.f32.mrb[0].mxu0
    %1755 = vmatprep.mubr.f32.mxu0 0.0
    %1756 = vmatmul.mubr.f32.gmra.mrb[0].mxu0 %v1656
    %v1757 = vpop.f32.mrb[0].mxu0
    %v1758 = vadd.f32 0.0, %v1757
    %v1759 = vpop.f32.mrb[0].mxu0
    %1760 = vmatprep.mubr.f32.mxu0 0.0
    %1761 = vmatmul.mubr.f32.gmra.mrb[0].mxu0 %v1659
    %v1762 = vpop.f32.mrb[0].mxu0
    %v1763 = vadd.f32 0.0, %v1762
    %v1764 = vpop.f32.mrb[0].mxu0
    %1765 = vdwg.mxu0
    %s1766 = scalar_lea.vmem %s5, 4
    %v1767 = vld [vmem:[%s1766] sm:$0xf]
    %vm1768 = vcmask 31744
    %v1770 = vsel %vm1768, %v1728, 0
    %v1773 = vsel %vm1768, %v1733, 0
    %v1776 = vsel %vm1768, %v1738, 0
    %v1779 = vsel %vm1768, %v1743, 0
    %v1782 = vsel %vm1768, %v1748, 0
    %v1785 = vsel %vm1768, %v1753, 0
    %v1788 = vsel %vm1768, %v1758, 0
    %v1791 = vsel %vm1768, %v1763, 0
    %v1794 = vsel %vm1518, %v1767, 0
    %1796 = vmatprep.subr.mxu0 0.0
    %1797 = vmatpush1.msra.mxu0 %v1794
    %1798 = vmatprep.subr.mxu0 0.0
    %1799 = vmatpush1.msra.mxu0 0.0
    %1800 = vmatprep.subr.mxu0 0.0
    %1801 = vmatpush1.msra.mxu0 0.0
    %1802 = vmatprep.subr.mxu0 0.0
    %1803 = vmatpush1.msra.mxu0 0.0
    %1804 = vmatprep.subr.mxu0 0.0
    %1805 = vmatpush1.msra.mxu0 0.0
    %1806 = vmatprep.subr.mxu0 0.0
    %1807 = vmatpush1.msra.mxu0 0.0
    %1808 = vmatprep.subr.mxu0 0.0
    %1809 = vmatpush1.msra.mxu0 0.0
    %1810 = vmatprep.subr.mxu0 0.0
    %1811 = vmatpush1.msra.mxu0 0.0
    %1812 = vmatprep.subr.mxu0 0.0
    %1813 = vmatpush1.msra.mxu0 0.0
    %1814 = vmatprep.subr.mxu0 0.0
    %1815 = vmatpush1.msra.mxu0 0.0
    %1816 = vmatprep.subr.mxu0 0.0
    %1817 = vmatpush1.msra.mxu0 0.0
    %1818 = vmatprep.subr.mxu0 0.0
    %1819 = vmatpush1.msra.mxu0 0.0
    %1820 = vmatprep.subr.mxu0 0.0
    %1821 = vmatpush1.msra.mxu0 0.0
    %1822 = vmatprep.subr.mxu0 0.0
    %1823 = vmatpush1.msra.mxu0 0.0
    %1824 = vmatprep.subr.mxu0 0.0
    %1825 = vmatpush1.msra.mxu0 0.0
    %1826 = vmatprep.subr.mxu0 0.0
    %1827 = vmatpush1.msra.mxu0 0.0
    %1828 = vmatprep.subr.mxu0 0.0
    %1829 = vmatpush1.msra.mxu0 0.0
    %1830 = vmatprep.subr.mxu0 0.0
    %1831 = vmatpush1.msra.mxu0 0.0
    %1832 = vmatprep.subr.mxu0 0.0
    %1833 = vmatpush1.msra.mxu0 0.0
    %1834 = vmatprep.subr.mxu0 0.0
    %1835 = vmatpush1.msra.mxu0 0.0
    %1836 = vmatprep.subr.mxu0 0.0
    %1837 = vmatpush1.msra.mxu0 0.0
    %1838 = vmatprep.subr.mxu0 0.0
    %1839 = vmatpush1.msra.mxu0 0.0
    %1840 = vmatprep.subr.mxu0 0.0
    %1841 = vmatpush1.msra.mxu0 0.0
    %1842 = vmatprep.subr.mxu0 0.0
    %1843 = vmatpush1.msra.mxu0 0.0
    %1844 = vmatprep.subr.mxu0 0.0
    %1845 = vmatpush1.msra.mxu0 0.0
    %1846 = vmatprep.subr.mxu0 0.0
    %1847 = vmatpush1.msra.mxu0 0.0
    %1848 = vmatprep.subr.mxu0 0.0
    %1849 = vmatpush1.msra.mxu0 0.0
    %1850 = vmatprep.subr.mxu0 0.0
    %1851 = vmatpush1.msra.mxu0 0.0
    %1852 = vmatprep.subr.mxu0 0.0
    %1853 = vmatpush1.msra.mxu0 0.0
    %1854 = vmatprep.subr.mxu0 0.0
    %1855 = vmatpush1.msra.mxu0 0.0
    %1856 = vmatprep.subr.mxu0 0.0
    %1857 = vmatpush1.msra.mxu0 0.0
    %1858 = vmatprep.subr.mxu0 0.0
    %1859 = vmatpush1.msra.mxu0 0.0
    %1860 = vmatprep.mubr.f32.mxu0 0.0
    %1861 = vmatmul.mubr.f32.gmra.mrb[0].mxu0 %v1770
    %v1862 = vpop.f32.mrb[0].mxu0
    %v1863 = vadd.f32 0.0, %v1862
    %v1864 = vpop.f32.mrb[0].mxu0
    %1865 = vmatprep.mubr.f32.mxu0 0.0
    %1866 = vmatmul.mubr.f32.gmra.mrb[0].mxu0 %v1773
    %v1867 = vpop.f32.mrb[0].mxu0
    %v1868 = vadd.f32 0.0, %v1867
    %v1869 = vpop.f32.mrb[0].mxu0
    %1870 = vmatprep.mubr.f32.mxu0 0.0
    %1871 = vmatmul.mubr.f32.gmra.mrb[0].mxu0 %v1776
    %v1872 = vpop.f32.mrb[0].mxu0
    %v1873 = vadd.f32 0.0, %v1872
    %v1874 = vpop.f32.mrb[0].mxu0
    %1875 = vmatprep.mubr.f32.mxu0 0.0
    %1876 = vmatmul.mubr.f32.gmra.mrb[0].mxu0 %v1779
    %v1877 = vpop.f32.mrb[0].mxu0
    %v1878 = vadd.f32 0.0, %v1877
    %v1879 = vpop.f32.mrb[0].mxu0
    %1880 = vmatprep.mubr.f32.mxu0 0.0
    %1881 = vmatmul.mubr.f32.gmra.mrb[0].mxu0 %v1782
    %v1882 = vpop.f32.mrb[0].mxu0
    %v1883 = vadd.f32 0.0, %v1882
    %v1884 = vpop.f32.mrb[0].mxu0
    %1885 = vmatprep.mubr.f32.mxu0 0.0
    %1886 = vmatmul.mubr.f32.gmra.mrb[0].mxu0 %v1785
    %v1887 = vpop.f32.mrb[0].mxu0
    %v1888 = vadd.f32 0.0, %v1887
    %v1889 = vpop.f32.mrb[0].mxu0
    %1890 = vmatprep.mubr.f32.mxu0 0.0
    %1891 = vmatmul.mubr.f32.gmra.mrb[0].mxu0 %v1788
    %v1892 = vpop.f32.mrb[0].mxu0
    %v1893 = vadd.f32 0.0, %v1892
    %v1894 = vpop.f32.mrb[0].mxu0
    %1895 = vmatprep.mubr.f32.mxu0 0.0
    %1896 = vmatmul.mubr.f32.gmra.mrb[0].mxu0 %v1791
    %v1897 = vpop.f32.mrb[0].mxu0
    %v1898 = vadd.f32 0.0, %v1897
    %v1899 = vpop.f32.mrb[0].mxu0
    %1900 = vdwg.mxu0
    %v1902 = vsel %vm1768, %v1589, 0
    %v1905 = vsel %vm1768, %v1594, 0
    %v1908 = vsel %vm1768, %v1599, 0
    %v1911 = vsel %vm1768, %v1604, 0
    %v1914 = vsel %vm1768, %v1609, 0
    %v1917 = vsel %vm1768, %v1614, 0
    %v1920 = vsel %vm1768, %v1619, 0
    %v1923 = vsel %vm1768, %v1624, 0
    %v1926 = vsel %vm1518, %v1627, 0
    %1928 = vmatprep.subr.mxu0 0.0
    %1929 = vmatpush1.msra.mxu0 %v1926
    %1930 = vmatprep.subr.mxu0 0.0
    %1931 = vmatpush1.msra.mxu0 0.0
    %1932 = vmatprep.subr.mxu0 0.0
    %1933 = vmatpush1.msra.mxu0 0.0
    %1934 = vmatprep.subr.mxu0 0.0
    %1935 = vmatpush1.msra.mxu0 0.0
    %1936 = vmatprep.subr.mxu0 0.0
    %1937 = vmatpush1.msra.mxu0 0.0
    %1938 = vmatprep.subr.mxu0 0.0
    %1939 = vmatpush1.msra.mxu0 0.0
    %1940 = vmatprep.subr.mxu0 0.0
    %1941 = vmatpush1.msra.mxu0 0.0
    %1942 = vmatprep.subr.mxu0 0.0
    %1943 = vmatpush1.msra.mxu0 0.0
    %1944 = vmatprep.subr.mxu0 0.0
    %1945 = vmatpush1.msra.mxu0 0.0
    %1946 = vmatprep.subr.mxu0 0.0
    %1947 = vmatpush1.msra.mxu0 0.0
    %1948 = vmatprep.subr.mxu0 0.0
    %1949 = vmatpush1.msra.mxu0 0.0
    %1950 = vmatprep.subr.mxu0 0.0
    %1951 = vmatpush1.msra.mxu0 0.0
    %1952 = vmatprep.subr.mxu0 0.0
    %1953 = vmatpush1.msra.mxu0 0.0
    %1954 = vmatprep.subr.mxu0 0.0
    %1955 = vmatpush1.msra.mxu0 0.0
    %1956 = vmatprep.subr.mxu0 0.0
    %1957 = vmatpush1.msra.mxu0 0.0
    %1958 = vmatprep.subr.mxu0 0.0
    %1959 = vmatpush1.msra.mxu0 0.0
    %1960 = vmatprep.subr.mxu0 0.0
    %1961 = vmatpush1.msra.mxu0 0.0
    %1962 = vmatprep.subr.mxu0 0.0
    %1963 = vmatpush1.msra.mxu0 0.0
    %1964 = vmatprep.subr.mxu0 0.0
    %1965 = vmatpush1.msra.mxu0 0.0
    %1966 = vmatprep.subr.mxu0 0.0
    %1967 = vmatpush1.msra.mxu0 0.0
    %1968 = vmatprep.subr.mxu0 0.0
    %1969 = vmatpush1.msra.mxu0 0.0
    %1970 = vmatprep.subr.mxu0 0.0
    %1971 = vmatpush1.msra.mxu0 0.0
    %1972 = vmatprep.subr.mxu0 0.0
    %1973 = vmatpush1.msra.mxu0 0.0
    %1974 = vmatprep.subr.mxu0 0.0
    %1975 = vmatpush1.msra.mxu0 0.0
    %1976 = vmatprep.subr.mxu0 0.0
    %1977 = vmatpush1.msra.mxu0 0.0
    %1978 = vmatprep.subr.mxu0 0.0
    %1979 = vmatpush1.msra.mxu0 0.0
    %1980 = vmatprep.subr.mxu0 0.0
    %1981 = vmatpush1.msra.mxu0 0.0
    %1982 = vmatprep.subr.mxu0 0.0
    %1983 = vmatpush1.msra.mxu0 0.0
    %1984 = vmatprep.subr.mxu0 0.0
    %1985 = vmatpush1.msra.mxu0 0.0
    %1986 = vmatprep.subr.mxu0 0.0
    %1987 = vmatpush1.msra.mxu0 0.0
    %1988 = vmatprep.subr.mxu0 0.0
    %1989 = vmatpush1.msra.mxu0 0.0
    %1990 = vmatprep.subr.mxu0 0.0
    %1991 = vmatpush1.msra.mxu0 0.0
    %1992 = vmatprep.mubr.f32.mxu0 0.0
    %1993 = vmatmul.mubr.f32.gmra.mrb[0].mxu0 %v1902
    %v1994 = vpop.f32.mrb[0].mxu0
    %v1995 = vadd.f32 %v1863, %v1994
    %v1996 = vpop.f32.mrb[0].mxu0
    %1997 = vmatprep.mubr.f32.mxu0 0.0
    %1998 = vmatmul.mubr.f32.gmra.mrb[0].mxu0 %v1905
    %v1999 = vpop.f32.mrb[0].mxu0
    %v2000 = vadd.f32 %v1868, %v1999
    %v2001 = vpop.f32.mrb[0].mxu0
    %2002 = vmatprep.mubr.f32.mxu0 0.0
    %2003 = vmatmul.mubr.f32.gmra.mrb[0].mxu0 %v1908
    %v2004 = vpop.f32.mrb[0].mxu0
    %v2005 = vadd.f32 %v1873, %v2004
    %v2006 = vpop.f32.mrb[0].mxu0
    %2007 = vmatprep.mubr.f32.mxu0 0.0
    %2008 = vmatmul.mubr.f32.gmra.mrb[0].mxu0 %v1911
    %v2009 = vpop.f32.mrb[0].mxu0
    %v2010 = vadd.f32 %v1878, %v2009
    %v2011 = vpop.f32.mrb[0].mxu0
    %2012 = vmatprep.mubr.f32.mxu0 0.0
    %2013 = vmatmul.mubr.f32.gmra.mrb[0].mxu0 %v1914
    %v2014 = vpop.f32.mrb[0].mxu0
    %v2015 = vadd.f32 %v1883, %v2014
    %v2016 = vpop.f32.mrb[0].mxu0
    %2017 = vmatprep.mubr.f32.mxu0 0.0
    %2018 = vmatmul.mubr.f32.gmra.mrb[0].mxu0 %v1917
    %v2019 = vpop.f32.mrb[0].mxu0
    %v2020 = vadd.f32 %v1888, %v2019
    %v2021 = vpop.f32.mrb[0].mxu0
    %2022 = vmatprep.mubr.f32.mxu0 0.0
    %2023 = vmatmul.mubr.f32.gmra.mrb[0].mxu0 %v1920
    %v2024 = vpop.f32.mrb[0].mxu0
    %v2025 = vadd.f32 %v1893, %v2024
    %v2026 = vpop.f32.mrb[0].mxu0
    %2027 = vmatprep.mubr.f32.mxu0 0.0
    %2028 = vmatmul.mubr.f32.gmra.mrb[0].mxu0 %v1923
    %v2029 = vpop.f32.mrb[0].mxu0
    %v2030 = vadd.f32 %v1898, %v2029
    %v2031 = vpop.f32.mrb[0].mxu0
    %2032 = vdwg.mxu0
    %s2033 = scalar_lea.vmem %s4, 128
    %v2034 = vld [vmem:[%s2033] sm:$0xff]
    %v2035 = vld [vmem:[%s2033 + $0x8] sm:$0xff]
    %v2036 = vld [vmem:[%s2033 + $0x10] sm:$0xff]
    %v2037 = vld [vmem:[%s2033 + $0x18] sm:$0xff]
    %v2038 = vld [vmem:[%s2033 + $0x20] sm:$0xff]
    %v2039 = vld [vmem:[%s2033 + $0x28] sm:$0xff]
    %v2040 = vld [vmem:[%s2033 + $0x30] sm:$0xff]
    %v2041 = vld [vmem:[%s2033 + $0x38] sm:$0xff]
    %v2043 = vsel %vm1493, %v2034, 0
    %v2046 = vsel %vm1493, %v2035, 0
    %v2049 = vsel %vm1493, %v2036, 0
    %v2052 = vsel %vm1493, %v2037, 0
    %v2055 = vsel %vm1493, %v2038, 0
    %v2058 = vsel %vm1493, %v2039, 0
    %v2061 = vsel %vm1493, %v2040, 0
    %v2064 = vsel %vm1493, %v2041, 0
    %2066 = vmatprep.subr.mxu0 0.0
    %2067 = vmatpush1.msra.mxu0 %v1422
    %2068 = vmatprep.subr.mxu0 0.0
    %2069 = vmatpush1.msra.mxu0 %v1427
    %2070 = vmatprep.subr.mxu0 0.0
    %2071 = vmatpush1.msra.mxu0 %v1432
    %2072 = vmatprep.subr.mxu0 0.0
    %2073 = vmatpush1.msra.mxu0 %v1437
    %2074 = vmatprep.subr.mxu0 0.0
    %2075 = vmatpush1.msra.mxu0 %v1442
    %2076 = vmatprep.subr.mxu0 0.0
    %2077 = vmatpush1.msra.mxu0 %v1447
    %2078 = vmatprep.subr.mxu0 0.0
    %2079 = vmatpush1.msra.mxu0 %v1452
    %2080 = vmatprep.subr.mxu0 0.0
    %2081 = vmatpush1.msra.mxu0 %v1457
    %2082 = vmatprep.subr.mxu0 0.0
    %2083 = vmatpush1.msra.mxu0 %v1462
    %2084 = vmatprep.subr.mxu0 0.0
    %2085 = vmatpush1.msra.mxu0 %v1467
    %2086 = vmatprep.subr.mxu0 0.0
    %2087 = vmatpush1.msra.mxu0 %v1472
    %2088 = vmatprep.subr.mxu0 0.0
    %2089 = vmatpush1.msra.mxu0 %v1477
    %2090 = vmatprep.subr.mxu0 0.0
    %2091 = vmatpush1.msra.mxu0 %v1520
    %2092 = vmatprep.subr.mxu0 0.0
    %2093 = vmatpush1.msra.mxu0 0.0
    %2094 = vmatprep.subr.mxu0 0.0
    %2095 = vmatpush1.msra.mxu0 0.0
    %2096 = vmatprep.subr.mxu0 0.0
    %2097 = vmatpush1.msra.mxu0 0.0
    %2098 = vmatprep.subr.mxu0 0.0
    %2099 = vmatpush1.msra.mxu0 0.0
    %2100 = vmatprep.subr.mxu0 0.0
    %2101 = vmatpush1.msra.mxu0 0.0
    %2102 = vmatprep.subr.mxu0 0.0
    %2103 = vmatpush1.msra.mxu0 0.0
    %2104 = vmatprep.subr.mxu0 0.0
    %2105 = vmatpush1.msra.mxu0 0.0
    %2106 = vmatprep.subr.mxu0 0.0
    %2107 = vmatpush1.msra.mxu0 0.0
    %2108 = vmatprep.subr.mxu0 0.0
    %2109 = vmatpush1.msra.mxu0 0.0
    %2110 = vmatprep.subr.mxu0 0.0
    %2111 = vmatpush1.msra.mxu0 0.0
    %2112 = vmatprep.subr.mxu0 0.0
    %2113 = vmatpush1.msra.mxu0 0.0
    %2114 = vmatprep.subr.mxu0 0.0
    %2115 = vmatpush1.msra.mxu0 0.0
    %2116 = vmatprep.subr.mxu0 0.0
    %2117 = vmatpush1.msra.mxu0 0.0
    %2118 = vmatprep.subr.mxu0 0.0
    %2119 = vmatpush1.msra.mxu0 0.0
    %2120 = vmatprep.subr.mxu0 0.0
    %2121 = vmatpush1.msra.mxu0 0.0
    %2122 = vmatprep.subr.mxu0 0.0
    %2123 = vmatpush1.msra.mxu0 0.0
    %2124 = vmatprep.subr.mxu0 0.0
    %2125 = vmatpush1.msra.mxu0 0.0
    %2126 = vmatprep.subr.mxu0 0.0
    %2127 = vmatpush1.msra.mxu0 0.0
    %2128 = vmatprep.subr.mxu0 0.0
    %2129 = vmatpush1.msra.mxu0 0.0
    %2130 = vmatprep.mubr.f32.mxu0 0.0
    %2131 = vmatmul.mubr.f32.gmra.mrb[0].mxu0 %v2043
    %v2132 = vpop.f32.mrb[0].mxu0
    %v2133 = vadd.f32 0.0, %v2132
    %v2134 = vpop.f32.mrb[0].mxu0
    %2135 = vmatprep.mubr.f32.mxu0 0.0
    %2136 = vmatmul.mubr.f32.gmra.mrb[0].mxu0 %v2046
    %v2137 = vpop.f32.mrb[0].mxu0
    %v2138 = vadd.f32 0.0, %v2137
    %v2139 = vpop.f32.mrb[0].mxu0
    %2140 = vmatprep.mubr.f32.mxu0 0.0
    %2141 = vmatmul.mubr.f32.gmra.mrb[0].mxu0 %v2049
    %v2142 = vpop.f32.mrb[0].mxu0
    %v2143 = vadd.f32 0.0, %v2142
    %v2144 = vpop.f32.mrb[0].mxu0
    %2145 = vmatprep.mubr.f32.mxu0 0.0
    %2146 = vmatmul.mubr.f32.gmra.mrb[0].mxu0 %v2052
    %v2147 = vpop.f32.mrb[0].mxu0
    %v2148 = vadd.f32 0.0, %v2147
    %v2149 = vpop.f32.mrb[0].mxu0
    %2150 = vmatprep.mubr.f32.mxu0 0.0
    %2151 = vmatmul.mubr.f32.gmra.mrb[0].mxu0 %v2055
    %v2152 = vpop.f32.mrb[0].mxu0
    %v2153 = vadd.f32 0.0, %v2152
    %v2154 = vpop.f32.mrb[0].mxu0
    %2155 = vmatprep.mubr.f32.mxu0 0.0
    %2156 = vmatmul.mubr.f32.gmra.mrb[0].mxu0 %v2058
    %v2157 = vpop.f32.mrb[0].mxu0
    %v2158 = vadd.f32 0.0, %v2157
    %v2159 = vpop.f32.mrb[0].mxu0
    %2160 = vmatprep.mubr.f32.mxu0 0.0
    %2161 = vmatmul.mubr.f32.gmra.mrb[0].mxu0 %v2061
    %v2162 = vpop.f32.mrb[0].mxu0
    %v2163 = vadd.f32 0.0, %v2162
    %v2164 = vpop.f32.mrb[0].mxu0
    %2165 = vmatprep.mubr.f32.mxu0 0.0
    %2166 = vmatmul.mubr.f32.gmra.mrb[0].mxu0 %v2064
    %v2167 = vpop.f32.mrb[0].mxu0
    %v2168 = vadd.f32 0.0, %v2167
    %v2169 = vpop.f32.mrb[0].mxu0
    %2170 = vdwg.mxu0
    %s2171 = scalar_lea.vmem %s5, 8
    %v2172 = vld [vmem:[%s2171] sm:$0xf]
    %v2174 = vsel %vm1768, %v2133, 0
    %v2177 = vsel %vm1768, %v2138, 0
    %v2180 = vsel %vm1768, %v2143, 0
    %v2183 = vsel %vm1768, %v2148, 0
    %v2186 = vsel %vm1768, %v2153, 0
    %v2189 = vsel %vm1768, %v2158, 0
    %v2192 = vsel %vm1768, %v2163, 0
    %v2195 = vsel %vm1768, %v2168, 0
    %v2198 = vsel %vm1518, %v2172, 0
    %2200 = vmatprep.subr.mxu0 0.0
    %2201 = vmatpush1.msra.mxu0 %v2198
    %2202 = vmatprep.subr.mxu0 0.0
    %2203 = vmatpush1.msra.mxu0 0.0
    %2204 = vmatprep.subr.mxu0 0.0
    %2205 = vmatpush1.msra.mxu0 0.0
    %2206 = vmatprep.subr.mxu0 0.0
    %2207 = vmatpush1.msra.mxu0 0.0
    %2208 = vmatprep.subr.mxu0 0.0
    %2209 = vmatpush1.msra.mxu0 0.0
    %2210 = vmatprep.subr.mxu0 0.0
    %2211 = vmatpush1.msra.mxu0 0.0
    %2212 = vmatprep.subr.mxu0 0.0
    %2213 = vmatpush1.msra.mxu0 0.0
    %2214 = vmatprep.subr.mxu0 0.0
    %2215 = vmatpush1.msra.mxu0 0.0
    %2216 = vmatprep.subr.mxu0 0.0
    %2217 = vmatpush1.msra.mxu0 0.0
    %2218 = vmatprep.subr.mxu0 0.0
    %2219 = vmatpush1.msra.mxu0 0.0
    %2220 = vmatprep.subr.mxu0 0.0
    %2221 = vmatpush1.msra.mxu0 0.0
    %2222 = vmatprep.subr.mxu0 0.0
    %2223 = vmatpush1.msra.mxu0 0.0
    %2224 = vmatprep.subr.mxu0 0.0
    %2225 = vmatpush1.msra.mxu0 0.0
    %2226 = vmatprep.subr.mxu0 0.0
    %2227 = vmatpush1.msra.mxu0 0.0
    %2228 = vmatprep.subr.mxu0 0.0
    %2229 = vmatpush1.msra.mxu0 0.0
    %2230 = vmatprep.subr.mxu0 0.0
    %2231 = vmatpush1.msra.mxu0 0.0
    %2232 = vmatprep.subr.mxu0 0.0
    %2233 = vmatpush1.msra.mxu0 0.0
    %2234 = vmatprep.subr.mxu0 0.0
    %2235 = vmatpush1.msra.mxu0 0.0
    %2236 = vmatprep.subr.mxu0 0.0
    %2237 = vmatpush1.msra.mxu0 0.0
    %2238 = vmatprep.subr.mxu0 0.0
    %2239 = vmatpush1.msra.mxu0 0.0
    %2240 = vmatprep.subr.mxu0 0.0
    %2241 = vmatpush1.msra.mxu0 0.0
    %2242 = vmatprep.subr.mxu0 0.0
    %2243 = vmatpush1.msra.mxu0 0.0
    %2244 = vmatprep.subr.mxu0 0.0
    %2245 = vmatpush1.msra.mxu0 0.0
    %2246 = vmatprep.subr.mxu0 0.0
    %2247 = vmatpush1.msra.mxu0 0.0
    %2248 = vmatprep.subr.mxu0 0.0
    %2249 = vmatpush1.msra.mxu0 0.0
    %2250 = vmatprep.subr.mxu0 0.0
    %2251 = vmatpush1.msra.mxu0 0.0
    %2252 = vmatprep.subr.mxu0 0.0
    %2253 = vmatpush1.msra.mxu0 0.0
    %2254 = vmatprep.subr.mxu0 0.0
    %2255 = vmatpush1.msra.mxu0 0.0
    %2256 = vmatprep.subr.mxu0 0.0
    %2257 = vmatpush1.msra.mxu0 0.0
    %2258 = vmatprep.subr.mxu0 0.0
    %2259 = vmatpush1.msra.mxu0 0.0
    %2260 = vmatprep.subr.mxu0 0.0
    %2261 = vmatpush1.msra.mxu0 0.0
    %2262 = vmatprep.subr.mxu0 0.0
    %2263 = vmatpush1.msra.mxu0 0.0
    %2264 = vmatprep.mubr.f32.mxu0 0.0
    %2265 = vmatmul.mubr.f32.gmra.mrb[0].mxu0 %v2174
    %v2266 = vpop.f32.mrb[0].mxu0
    %v2267 = vadd.f32 0.0, %v2266
    %v2268 = vpop.f32.mrb[0].mxu0
    %2269 = vmatprep.mubr.f32.mxu0 0.0
    %2270 = vmatmul.mubr.f32.gmra.mrb[0].mxu0 %v2177
    %v2271 = vpop.f32.mrb[0].mxu0
    %v2272 = vadd.f32 0.0, %v2271
    %v2273 = vpop.f32.mrb[0].mxu0
    %2274 = vmatprep.mubr.f32.mxu0 0.0
    %2275 = vmatmul.mubr.f32.gmra.mrb[0].mxu0 %v2180
    %v2276 = vpop.f32.mrb[0].mxu0
    %v2277 = vadd.f32 0.0, %v2276
    %v2278 = vpop.f32.mrb[0].mxu0
    %2279 = vmatprep.mubr.f32.mxu0 0.0
    %2280 = vmatmul.mubr.f32.gmra.mrb[0].mxu0 %v2183
    %v2281 = vpop.f32.mrb[0].mxu0
    %v2282 = vadd.f32 0.0, %v2281
    %v2283 = vpop.f32.mrb[0].mxu0
    %2284 = vmatprep.mubr.f32.mxu0 0.0
    %2285 = vmatmul.mubr.f32.gmra.mrb[0].mxu0 %v2186
    %v2286 = vpop.f32.mrb[0].mxu0
    %v2287 = vadd.f32 0.0, %v2286
    %v2288 = vpop.f32.mrb[0].mxu0
    %2289 = vmatprep.mubr.f32.mxu0 0.0
    %2290 = vmatmul.mubr.f32.gmra.mrb[0].mxu0 %v2189
    %v2291 = vpop.f32.mrb[0].mxu0
    %v2292 = vadd.f32 0.0, %v2291
    %v2293 = vpop.f32.mrb[0].mxu0
    %2294 = vmatprep.mubr.f32.mxu0 0.0
    %2295 = vmatmul.mubr.f32.gmra.mrb[0].mxu0 %v2192
    %v2296 = vpop.f32.mrb[0].mxu0
    %v2297 = vadd.f32 0.0, %v2296
    %v2298 = vpop.f32.mrb[0].mxu0
    %2299 = vmatprep.mubr.f32.mxu0 0.0
    %2300 = vmatmul.mubr.f32.gmra.mrb[0].mxu0 %v2195
    %v2301 = vpop.f32.mrb[0].mxu0
    %v2302 = vadd.f32 0.0, %v2301
    %v2303 = vpop.f32.mrb[0].mxu0
    %2304 = vdwg.mxu0
    %v2305 = vadd.f32 %v1995, %v2267
    %v2306 = vadd.f32 %v2000, %v2272
    %v2307 = vadd.f32 %v2005, %v2277
    %v2308 = vadd.f32 %v2010, %v2282
    %v2309 = vadd.f32 %v2015, %v2287
    %v2310 = vadd.f32 %v2020, %v2292
    %v2311 = vadd.f32 %v2025, %v2297
    %v2312 = vadd.f32 %v2030, %v2302
    %s2313 = scalar_lea.vmem %s4, 192
    %v2314 = vld [vmem:[%s2313] sm:$0xff]
    %v2315 = vld [vmem:[%s2313 + $0x8] sm:$0xff]
    %v2316 = vld [vmem:[%s2313 + $0x10] sm:$0xff]
    %v2317 = vld [vmem:[%s2313 + $0x18] sm:$0xff]
    %v2318 = vld [vmem:[%s2313 + $0x20] sm:$0xff]
    %v2319 = vld [vmem:[%s2313 + $0x28] sm:$0xff]
    %v2320 = vld [vmem:[%s2313 + $0x30] sm:$0xff]
    %v2321 = vld [vmem:[%s2313 + $0x38] sm:$0xff]
    %v2323 = vsel %vm1493, %v2314, 0
    %v2326 = vsel %vm1493, %v2315, 0
    %v2329 = vsel %vm1493, %v2316, 0
    %v2332 = vsel %vm1493, %v2317, 0
    %v2335 = vsel %vm1493, %v2318, 0
    %v2338 = vsel %vm1493, %v2319, 0
    %v2341 = vsel %vm1493, %v2320, 0
    %v2344 = vsel %vm1493, %v2321, 0
    %2346 = vmatprep.subr.mxu0 0.0
    %2347 = vmatpush1.msra.mxu0 %v1422
    %2348 = vmatprep.subr.mxu0 0.0
    %2349 = vmatpush1.msra.mxu0 %v1427
    %2350 = vmatprep.subr.mxu0 0.0
    %2351 = vmatpush1.msra.mxu0 %v1432
    %2352 = vmatprep.subr.mxu0 0.0
    %2353 = vmatpush1.msra.mxu0 %v1437
    %2354 = vmatprep.subr.mxu0 0.0
    %2355 = vmatpush1.msra.mxu0 %v1442
    %2356 = vmatprep.subr.mxu0 0.0
    %2357 = vmatpush1.msra.mxu0 %v1447
    %2358 = vmatprep.subr.mxu0 0.0
    %2359 = vmatpush1.msra.mxu0 %v1452
    %2360 = vmatprep.subr.mxu0 0.0
    %2361 = vmatpush1.msra.mxu0 %v1457
    %2362 = vmatprep.subr.mxu0 0.0
    %2363 = vmatpush1.msra.mxu0 %v1462
    %2364 = vmatprep.subr.mxu0 0.0
    %2365 = vmatpush1.msra.mxu0 %v1467
    %2366 = vmatprep.subr.mxu0 0.0
    %2367 = vmatpush1.msra.mxu0 %v1472
    %2368 = vmatprep.subr.mxu0 0.0
    %2369 = vmatpush1.msra.mxu0 %v1477
    %2370 = vmatprep.subr.mxu0 0.0
    %2371 = vmatpush1.msra.mxu0 %v1520
    %2372 = vmatprep.subr.mxu0 0.0
    %2373 = vmatpush1.msra.mxu0 0.0
    %2374 = vmatprep.subr.mxu0 0.0
    %2375 = vmatpush1.msra.mxu0 0.0
    %2376 = vmatprep.subr.mxu0 0.0
    %2377 = vmatpush1.msra.mxu0 0.0
    %2378 = vmatprep.subr.mxu0 0.0
    %2379 = vmatpush1.msra.mxu0 0.0
    %2380 = vmatprep.subr.mxu0 0.0
    %2381 = vmatpush1.msra.mxu0 0.0
    %2382 = vmatprep.subr.mxu0 0.0
    %2383 = vmatpush1.msra.mxu0 0.0
    %2384 = vmatprep.subr.mxu0 0.0
    %2385 = vmatpush1.msra.mxu0 0.0
    %2386 = vmatprep.subr.mxu0 0.0
    %2387 = vmatpush1.msra.mxu0 0.0
    %2388 = vmatprep.subr.mxu0 0.0
    %2389 = vmatpush1.msra.mxu0 0.0
    %2390 = vmatprep.subr.mxu0 0.0
    %2391 = vmatpush1.msra.mxu0 0.0
    %2392 = vmatprep.subr.mxu0 0.0
    %2393 = vmatpush1.msra.mxu0 0.0
    %2394 = vmatprep.subr.mxu0 0.0
    %2395 = vmatpush1.msra.mxu0 0.0
    %2396 = vmatprep.subr.mxu0 0.0
    %2397 = vmatpush1.msra.mxu0 0.0
    %2398 = vmatprep.subr.mxu0 0.0
    %2399 = vmatpush1.msra.mxu0 0.0
    %2400 = vmatprep.subr.mxu0 0.0
    %2401 = vmatpush1.msra.mxu0 0.0
    %2402 = vmatprep.subr.mxu0 0.0
    %2403 = vmatpush1.msra.mxu0 0.0
    %2404 = vmatprep.subr.mxu0 0.0
    %2405 = vmatpush1.msra.mxu0 0.0
    %2406 = vmatprep.subr.mxu0 0.0
    %2407 = vmatpush1.msra.mxu0 0.0
    %2408 = vmatprep.subr.mxu0 0.0
    %2409 = vmatpush1.msra.mxu0 0.0
    %2410 = vmatprep.mubr.f32.mxu0 0.0
    %2411 = vmatmul.mubr.f32.gmra.mrb[0].mxu0 %v2323
    %v2412 = vpop.f32.mrb[0].mxu0
    %v2413 = vadd.f32 0.0, %v2412
    %v2414 = vpop.f32.mrb[0].mxu0
    %2415 = vmatprep.mubr.f32.mxu0 0.0
    %2416 = vmatmul.mubr.f32.gmra.mrb[0].mxu0 %v2326
    %v2417 = vpop.f32.mrb[0].mxu0
    %v2418 = vadd.f32 0.0, %v2417
    %v2419 = vpop.f32.mrb[0].mxu0
    %2420 = vmatprep.mubr.f32.mxu0 0.0
    %2421 = vmatmul.mubr.f32.gmra.mrb[0].mxu0 %v2329
    %v2422 = vpop.f32.mrb[0].mxu0
    %v2423 = vadd.f32 0.0, %v2422
    %v2424 = vpop.f32.mrb[0].mxu0
    %2425 = vmatprep.mubr.f32.mxu0 0.0
    %2426 = vmatmul.mubr.f32.gmra.mrb[0].mxu0 %v2332
    %v2427 = vpop.f32.mrb[0].mxu0
    %v2428 = vadd.f32 0.0, %v2427
    %v2429 = vpop.f32.mrb[0].mxu0
    %2430 = vmatprep.mubr.f32.mxu0 0.0
    %2431 = vmatmul.mubr.f32.gmra.mrb[0].mxu0 %v2335
    %v2432 = vpop.f32.mrb[0].mxu0
    %v2433 = vadd.f32 0.0, %v2432
    %v2434 = vpop.f32.mrb[0].mxu0
    %2435 = vmatprep.mubr.f32.mxu0 0.0
    %2436 = vmatmul.mubr.f32.gmra.mrb[0].mxu0 %v2338
    %v2437 = vpop.f32.mrb[0].mxu0
    %v2438 = vadd.f32 0.0, %v2437
    %v2439 = vpop.f32.mrb[0].mxu0
    %2440 = vmatprep.mubr.f32.mxu0 0.0
    %2441 = vmatmul.mubr.f32.gmra.mrb[0].mxu0 %v2341
    %v2442 = vpop.f32.mrb[0].mxu0
    %v2443 = vadd.f32 0.0, %v2442
    %v2444 = vpop.f32.mrb[0].mxu0
    %2445 = vmatprep.mubr.f32.mxu0 0.0
    %2446 = vmatmul.mubr.f32.gmra.mrb[0].mxu0 %v2344
    %v2447 = vpop.f32.mrb[0].mxu0
    %v2448 = vadd.f32 0.0, %v2447
    %v2449 = vpop.f32.mrb[0].mxu0
    %2450 = vdwg.mxu0
    %s2451 = scalar_lea.vmem %s5, 12
    %v2452 = vld [vmem:[%s2451] sm:$0xf]
    %v2454 = vsel %vm1768, %v2413, 0
    %v2457 = vsel %vm1768, %v2418, 0
    %v2460 = vsel %vm1768, %v2423, 0
    %v2463 = vsel %vm1768, %v2428, 0
    %v2466 = vsel %vm1768, %v2433, 0
    %v2469 = vsel %vm1768, %v2438, 0
    %v2472 = vsel %vm1768, %v2443, 0
    %v2475 = vsel %vm1768, %v2448, 0
    %v2478 = vsel %vm1518, %v2452, 0
    %2480 = vmatprep.subr.mxu0 0.0
    %2481 = vmatpush1.msra.mxu0 %v2478
    %2482 = vmatprep.subr.mxu0 0.0
    %2483 = vmatpush1.msra.mxu0 0.0
    %2484 = vmatprep.subr.mxu0 0.0
    %2485 = vmatpush1.msra.mxu0 0.0
    %2486 = vmatprep.subr.mxu0 0.0
    %2487 = vmatpush1.msra.mxu0 0.0
    %2488 = vmatprep.subr.mxu0 0.0
    %2489 = vmatpush1.msra.mxu0 0.0
    %2490 = vmatprep.subr.mxu0 0.0
    %2491 = vmatpush1.msra.mxu0 0.0
    %2492 = vmatprep.subr.mxu0 0.0
    %2493 = vmatpush1.msra.mxu0 0.0
    %2494 = vmatprep.subr.mxu0 0.0
    %2495 = vmatpush1.msra.mxu0 0.0
    %2496 = vmatprep.subr.mxu0 0.0
    %2497 = vmatpush1.msra.mxu0 0.0
    %2498 = vmatprep.subr.mxu0 0.0
    %2499 = vmatpush1.msra.mxu0 0.0
    %2500 = vmatprep.subr.mxu0 0.0
    %2501 = vmatpush1.msra.mxu0 0.0
    %2502 = vmatprep.subr.mxu0 0.0
    %2503 = vmatpush1.msra.mxu0 0.0
    %2504 = vmatprep.subr.mxu0 0.0
    %2505 = vmatpush1.msra.mxu0 0.0
    %2506 = vmatprep.subr.mxu0 0.0
    %2507 = vmatpush1.msra.mxu0 0.0
    %2508 = vmatprep.subr.mxu0 0.0
    %2509 = vmatpush1.msra.mxu0 0.0
    %2510 = vmatprep.subr.mxu0 0.0
    %2511 = vmatpush1.msra.mxu0 0.0
    %2512 = vmatprep.subr.mxu0 0.0
    %2513 = vmatpush1.msra.mxu0 0.0
    %2514 = vmatprep.subr.mxu0 0.0
    %2515 = vmatpush1.msra.mxu0 0.0
    %2516 = vmatprep.subr.mxu0 0.0
    %2517 = vmatpush1.msra.mxu0 0.0
    %2518 = vmatprep.subr.mxu0 0.0
    %2519 = vmatpush1.msra.mxu0 0.0
    %2520 = vmatprep.subr.mxu0 0.0
    %2521 = vmatpush1.msra.mxu0 0.0
    %2522 = vmatprep.subr.mxu0 0.0
    %2523 = vmatpush1.msra.mxu0 0.0
    %2524 = vmatprep.subr.mxu0 0.0
    %2525 = vmatpush1.msra.mxu0 0.0
    %2526 = vmatprep.subr.mxu0 0.0
    %2527 = vmatpush1.msra.mxu0 0.0
    %2528 = vmatprep.subr.mxu0 0.0
    %2529 = vmatpush1.msra.mxu0 0.0
    %2530 = vmatprep.subr.mxu0 0.0
    %2531 = vmatpush1.msra.mxu0 0.0
    %2532 = vmatprep.subr.mxu0 0.0
    %2533 = vmatpush1.msra.mxu0 0.0
    %2534 = vmatprep.subr.mxu0 0.0
    %2535 = vmatpush1.msra.mxu0 0.0
    %2536 = vmatprep.subr.mxu0 0.0
    %2537 = vmatpush1.msra.mxu0 0.0
    %2538 = vmatprep.subr.mxu0 0.0
    %2539 = vmatpush1.msra.mxu0 0.0
    %2540 = vmatprep.subr.mxu0 0.0
    %2541 = vmatpush1.msra.mxu0 0.0
    %2542 = vmatprep.subr.mxu0 0.0
    %2543 = vmatpush1.msra.mxu0 0.0
    %2544 = vmatprep.mubr.f32.mxu0 0.0
    %2545 = vmatmul.mubr.f32.gmra.mrb[0].mxu0 %v2454
    %v2546 = vpop.f32.mrb[0].mxu0
    %v2547 = vadd.f32 0.0, %v2546
    %v2548 = vpop.f32.mrb[0].mxu0
    %2549 = vmatprep.mubr.f32.mxu0 0.0
    %2550 = vmatmul.mubr.f32.gmra.mrb[0].mxu0 %v2457
    %v2551 = vpop.f32.mrb[0].mxu0
    %v2552 = vadd.f32 0.0, %v2551
    %v2553 = vpop.f32.mrb[0].mxu0
    %2554 = vmatprep.mubr.f32.mxu0 0.0
    %2555 = vmatmul.mubr.f32.gmra.mrb[0].mxu0 %v2460
    %v2556 = vpop.f32.mrb[0].mxu0
    %v2557 = vadd.f32 0.0, %v2556
    %v2558 = vpop.f32.mrb[0].mxu0
    %2559 = vmatprep.mubr.f32.mxu0 0.0
    %2560 = vmatmul.mubr.f32.gmra.mrb[0].mxu0 %v2463
    %v2561 = vpop.f32.mrb[0].mxu0
    %v2562 = vadd.f32 0.0, %v2561
    %v2563 = vpop.f32.mrb[0].mxu0
    %2564 = vmatprep.mubr.f32.mxu0 0.0
    %2565 = vmatmul.mubr.f32.gmra.mrb[0].mxu0 %v2466
    %v2566 = vpop.f32.mrb[0].mxu0
    %v2567 = vadd.f32 0.0, %v2566
    %v2568 = vpop.f32.mrb[0].mxu0
    %2569 = vmatprep.mubr.f32.mxu0 0.0
    %2570 = vmatmul.mubr.f32.gmra.mrb[0].mxu0 %v2469
    %v2571 = vpop.f32.mrb[0].mxu0
    %v2572 = vadd.f32 0.0, %v2571
    %v2573 = vpop.f32.mrb[0].mxu0
    %2574 = vmatprep.mubr.f32.mxu0 0.0
    %2575 = vmatmul.mubr.f32.gmra.mrb[0].mxu0 %v2472
    %v2576 = vpop.f32.mrb[0].mxu0
    %v2577 = vadd.f32 0.0, %v2576
    %v2578 = vpop.f32.mrb[0].mxu0
    %2579 = vmatprep.mubr.f32.mxu0 0.0
    %2580 = vmatmul.mubr.f32.gmra.mrb[0].mxu0 %v2475
    %v2581 = vpop.f32.mrb[0].mxu0
    %v2582 = vadd.f32 0.0, %v2581
    %v2583 = vpop.f32.mrb[0].mxu0
    %2584 = vdwg.mxu0
    %v2585 = vadd.f32 %v2305, %v2547
    %v2586 = vadd.f32 %v2306, %v2552
    %v2587 = vadd.f32 %v2307, %v2557
    %v2588 = vadd.f32 %v2308, %v2562
    %v2589 = vadd.f32 %v2309, %v2567
    %v2590 = vadd.f32 %v2310, %v2572
    %v2591 = vadd.f32 %v2311, %v2577
    %v2592 = vadd.f32 %v2312, %v2582
    %s2593 = scalar_lea.vmem %s4, 256
    %v2594 = vld [vmem:[%s2593] sm:$0xff]
    %v2595 = vld [vmem:[%s2593 + $0x8] sm:$0xff]
    %v2596 = vld [vmem:[%s2593 + $0x10] sm:$0xff]
    %v2597 = vld [vmem:[%s2593 + $0x18] sm:$0xff]
    %v2598 = vld [vmem:[%s2593 + $0x20] sm:$0xff]
    %v2599 = vld [vmem:[%s2593 + $0x28] sm:$0xff]
    %v2600 = vld [vmem:[%s2593 + $0x30] sm:$0xff]
    %v2601 = vld [vmem:[%s2593 + $0x38] sm:$0xff]
    %v2603 = vsel %vm1493, %v2594, 0
    %v2606 = vsel %vm1493, %v2595, 0
    %v2609 = vsel %vm1493, %v2596, 0
    %v2612 = vsel %vm1493, %v2597, 0
    %v2615 = vsel %vm1493, %v2598, 0
    %v2618 = vsel %vm1493, %v2599, 0
    %v2621 = vsel %vm1493, %v2600, 0
    %v2624 = vsel %vm1493, %v2601, 0
    %2626 = vmatprep.subr.mxu0 0.0
    %2627 = vmatpush1.msra.mxu0 %v1422
    %2628 = vmatprep.subr.mxu0 0.0
    %2629 = vmatpush1.msra.mxu0 %v1427
    %2630 = vmatprep.subr.mxu0 0.0
    %2631 = vmatpush1.msra.mxu0 %v1432
    %2632 = vmatprep.subr.mxu0 0.0
    %2633 = vmatpush1.msra.mxu0 %v1437
    %2634 = vmatprep.subr.mxu0 0.0
    %2635 = vmatpush1.msra.mxu0 %v1442
    %2636 = vmatprep.subr.mxu0 0.0
    %2637 = vmatpush1.msra.mxu0 %v1447
    %2638 = vmatprep.subr.mxu0 0.0
    %2639 = vmatpush1.msra.mxu0 %v1452
    %2640 = vmatprep.subr.mxu0 0.0
    %2641 = vmatpush1.msra.mxu0 %v1457
    %2642 = vmatprep.subr.mxu0 0.0
    %2643 = vmatpush1.msra.mxu0 %v1462
    %2644 = vmatprep.subr.mxu0 0.0
    %2645 = vmatpush1.msra.mxu0 %v1467
    %2646 = vmatprep.subr.mxu0 0.0
    %2647 = vmatpush1.msra.mxu0 %v1472
    %2648 = vmatprep.subr.mxu0 0.0
    %2649 = vmatpush1.msra.mxu0 %v1477
    %2650 = vmatprep.subr.mxu0 0.0
    %2651 = vmatpush1.msra.mxu0 %v1520
    %2652 = vmatprep.subr.mxu0 0.0
    %2653 = vmatpush1.msra.mxu0 0.0
    %2654 = vmatprep.subr.mxu0 0.0
    %2655 = vmatpush1.msra.mxu0 0.0
    %2656 = vmatprep.subr.mxu0 0.0
    %2657 = vmatpush1.msra.mxu0 0.0
    %2658 = vmatprep.subr.mxu0 0.0
    %2659 = vmatpush1.msra.mxu0 0.0
    %2660 = vmatprep.subr.mxu0 0.0
    %2661 = vmatpush1.msra.mxu0 0.0
    %2662 = vmatprep.subr.mxu0 0.0
    %2663 = vmatpush1.msra.mxu0 0.0
    %2664 = vmatprep.subr.mxu0 0.0
    %2665 = vmatpush1.msra.mxu0 0.0
    %2666 = vmatprep.subr.mxu0 0.0
    %2667 = vmatpush1.msra.mxu0 0.0
    %2668 = vmatprep.subr.mxu0 0.0
    %2669 = vmatpush1.msra.mxu0 0.0
    %2670 = vmatprep.subr.mxu0 0.0
    %2671 = vmatpush1.msra.mxu0 0.0
    %2672 = vmatprep.subr.mxu0 0.0
    %2673 = vmatpush1.msra.mxu0 0.0
    %2674 = vmatprep.subr.mxu0 0.0
    %2675 = vmatpush1.msra.mxu0 0.0
    %2676 = vmatprep.subr.mxu0 0.0
    %2677 = vmatpush1.msra.mxu0 0.0
    %2678 = vmatprep.subr.mxu0 0.0
    %2679 = vmatpush1.msra.mxu0 0.0
    %2680 = vmatprep.subr.mxu0 0.0
    %2681 = vmatpush1.msra.mxu0 0.0
    %2682 = vmatprep.subr.mxu0 0.0
    %2683 = vmatpush1.msra.mxu0 0.0
    %2684 = vmatprep.subr.mxu0 0.0
    %2685 = vmatpush1.msra.mxu0 0.0
    %2686 = vmatprep.subr.mxu0 0.0
    %2687 = vmatpush1.msra.mxu0 0.0
    %2688 = vmatprep.subr.mxu0 0.0
    %2689 = vmatpush1.msra.mxu0 0.0
    %2690 = vmatprep.mubr.f32.mxu0 0.0
    %2691 = vmatmul.mubr.f32.gmra.mrb[0].mxu0 %v2603
    %v2692 = vpop.f32.mrb[0].mxu0
    %v2693 = vadd.f32 0.0, %v2692
    %v2694 = vpop.f32.mrb[0].mxu0
    %2695 = vmatprep.mubr.f32.mxu0 0.0
    %2696 = vmatmul.mubr.f32.gmra.mrb[0].mxu0 %v2606
    %v2697 = vpop.f32.mrb[0].mxu0
    %v2698 = vadd.f32 0.0, %v2697
    %v2699 = vpop.f32.mrb[0].mxu0
    %2700 = vmatprep.mubr.f32.mxu0 0.0
    %2701 = vmatmul.mubr.f32.gmra.mrb[0].mxu0 %v2609
    %v2702 = vpop.f32.mrb[0].mxu0
    %v2703 = vadd.f32 0.0, %v2702
    %v2704 = vpop.f32.mrb[0].mxu0
    %2705 = vmatprep.mubr.f32.mxu0 0.0
    %2706 = vmatmul.mubr.f32.gmra.mrb[0].mxu0 %v2612
    %v2707 = vpop.f32.mrb[0].mxu0
    %v2708 = vadd.f32 0.0, %v2707
    %v2709 = vpop.f32.mrb[0].mxu0
    %2710 = vmatprep.mubr.f32.mxu0 0.0
    %2711 = vmatmul.mubr.f32.gmra.mrb[0].mxu0 %v2615
    %v2712 = vpop.f32.mrb[0].mxu0
    %v2713 = vadd.f32 0.0, %v2712
    %v2714 = vpop.f32.mrb[0].mxu0
    %2715 = vmatprep.mubr.f32.mxu0 0.0
    %2716 = vmatmul.mubr.f32.gmra.mrb[0].mxu0 %v2618
    %v2717 = vpop.f32.mrb[0].mxu0
    %v2718 = vadd.f32 0.0, %v2717
    %v2719 = vpop.f32.mrb[0].mxu0
    %2720 = vmatprep.mubr.f32.mxu0 0.0
    %2721 = vmatmul.mubr.f32.gmra.mrb[0].mxu0 %v2621
    %v2722 = vpop.f32.mrb[0].mxu0
    %v2723 = vadd.f32 0.0, %v2722
    %v2724 = vpop.f32.mrb[0].mxu0
    %2725 = vmatprep.mubr.f32.mxu0 0.0
    %2726 = vmatmul.mubr.f32.gmra.mrb[0].mxu0 %v2624
    %v2727 = vpop.f32.mrb[0].mxu0
    %v2728 = vadd.f32 0.0, %v2727
    %v2729 = vpop.f32.mrb[0].mxu0
    %2730 = vdwg.mxu0
    %s2731 = scalar_lea.vmem %s5, 16
    %v2732 = vld [vmem:[%s2731] sm:$0xf]
    %v2734 = vsel %vm1768, %v2693, 0
    %v2737 = vsel %vm1768, %v2698, 0
    %v2740 = vsel %vm1768, %v2703, 0
    %v2743 = vsel %vm1768, %v2708, 0
    %v2746 = vsel %vm1768, %v2713, 0
    %v2749 = vsel %vm1768, %v2718, 0
    %v2752 = vsel %vm1768, %v2723, 0
    %v2755 = vsel %vm1768, %v2728, 0
    %v2758 = vsel %vm1518, %v2732, 0
    %2760 = vmatprep.subr.mxu0 0.0
    %2761 = vmatpush1.msra.mxu0 %v2758
    %2762 = vmatprep.subr.mxu0 0.0
    %2763 = vmatpush1.msra.mxu0 0.0
    %2764 = vmatprep.subr.mxu0 0.0
    %2765 = vmatpush1.msra.mxu0 0.0
    %2766 = vmatprep.subr.mxu0 0.0
    %2767 = vmatpush1.msra.mxu0 0.0
    %2768 = vmatprep.subr.mxu0 0.0
    %2769 = vmatpush1.msra.mxu0 0.0
    %2770 = vmatprep.subr.mxu0 0.0
    %2771 = vmatpush1.msra.mxu0 0.0
    %2772 = vmatprep.subr.mxu0 0.0
    %2773 = vmatpush1.msra.mxu0 0.0
    %2774 = vmatprep.subr.mxu0 0.0
    %2775 = vmatpush1.msra.mxu0 0.0
    %2776 = vmatprep.subr.mxu0 0.0
    %2777 = vmatpush1.msra.mxu0 0.0
    %2778 = vmatprep.subr.mxu0 0.0
    %2779 = vmatpush1.msra.mxu0 0.0
    %2780 = vmatprep.subr.mxu0 0.0
    %2781 = vmatpush1.msra.mxu0 0.0
    %2782 = vmatprep.subr.mxu0 0.0
    %2783 = vmatpush1.msra.mxu0 0.0
    %2784 = vmatprep.subr.mxu0 0.0
    %2785 = vmatpush1.msra.mxu0 0.0
    %2786 = vmatprep.subr.mxu0 0.0
    %2787 = vmatpush1.msra.mxu0 0.0
    %2788 = vmatprep.subr.mxu0 0.0
    %2789 = vmatpush1.msra.mxu0 0.0
    %2790 = vmatprep.subr.mxu0 0.0
    %2791 = vmatpush1.msra.mxu0 0.0
    %2792 = vmatprep.subr.mxu0 0.0
    %2793 = vmatpush1.msra.mxu0 0.0
    %2794 = vmatprep.subr.mxu0 0.0
    %2795 = vmatpush1.msra.mxu0 0.0
    %2796 = vmatprep.subr.mxu0 0.0
    %2797 = vmatpush1.msra.mxu0 0.0
    %2798 = vmatprep.subr.mxu0 0.0
    %2799 = vmatpush1.msra.mxu0 0.0
    %2800 = vmatprep.subr.mxu0 0.0
    %2801 = vmatpush1.msra.mxu0 0.0
    %2802 = vmatprep.subr.mxu0 0.0
    %2803 = vmatpush1.msra.mxu0 0.0
    %2804 = vmatprep.subr.mxu0 0.0
    %2805 = vmatpush1.msra.mxu0 0.0
    %2806 = vmatprep.subr.mxu0 0.0
    %2807 = vmatpush1.msra.mxu0 0.0
    %2808 = vmatprep.subr.mxu0 0.0
    %2809 = vmatpush1.msra.mxu0 0.0
    %2810 = vmatprep.subr.mxu0 0.0
    %2811 = vmatpush1.msra.mxu0 0.0
    %2812 = vmatprep.subr.mxu0 0.0
    %2813 = vmatpush1.msra.mxu0 0.0
    %2814 = vmatprep.subr.mxu0 0.0
    %2815 = vmatpush1.msra.mxu0 0.0
    %2816 = vmatprep.subr.mxu0 0.0
    %2817 = vmatpush1.msra.mxu0 0.0
    %2818 = vmatprep.subr.mxu0 0.0
    %2819 = vmatpush1.msra.mxu0 0.0
    %2820 = vmatprep.subr.mxu0 0.0
    %2821 = vmatpush1.msra.mxu0 0.0
    %2822 = vmatprep.subr.mxu0 0.0
    %2823 = vmatpush1.msra.mxu0 0.0
    %2824 = vmatprep.mubr.f32.mxu0 0.0
    %2825 = vmatmul.mubr.f32.gmra.mrb[0].mxu0 %v2734
    %v2826 = vpop.f32.mrb[0].mxu0
    %v2827 = vadd.f32 0.0, %v2826
    %v2828 = vpop.f32.mrb[0].mxu0
    %2829 = vmatprep.mubr.f32.mxu0 0.0
    %2830 = vmatmul.mubr.f32.gmra.mrb[0].mxu0 %v2737
    %v2831 = vpop.f32.mrb[0].mxu0
    %v2832 = vadd.f32 0.0, %v2831
    %v2833 = vpop.f32.mrb[0].mxu0
    %2834 = vmatprep.mubr.f32.mxu0 0.0
    %2835 = vmatmul.mubr.f32.gmra.mrb[0].mxu0 %v2740
    %v2836 = vpop.f32.mrb[0].mxu0
    %v2837 = vadd.f32 0.0, %v2836
    %v2838 = vpop.f32.mrb[0].mxu0
    %2839 = vmatprep.mubr.f32.mxu0 0.0
    %2840 = vmatmul.mubr.f32.gmra.mrb[0].mxu0 %v2743
    %v2841 = vpop.f32.mrb[0].mxu0
    %v2842 = vadd.f32 0.0, %v2841
    %v2843 = vpop.f32.mrb[0].mxu0
    %2844 = vmatprep.mubr.f32.mxu0 0.0
    %2845 = vmatmul.mubr.f32.gmra.mrb[0].mxu0 %v2746
    %v2846 = vpop.f32.mrb[0].mxu0
    %v2847 = vadd.f32 0.0, %v2846
    %v2848 = vpop.f32.mrb[0].mxu0
    %2849 = vmatprep.mubr.f32.mxu0 0.0
    %2850 = vmatmul.mubr.f32.gmra.mrb[0].mxu0 %v2749
    %v2851 = vpop.f32.mrb[0].mxu0
    %v2852 = vadd.f32 0.0, %v2851
    %v2853 = vpop.f32.mrb[0].mxu0
    %2854 = vmatprep.mubr.f32.mxu0 0.0
    %2855 = vmatmul.mubr.f32.gmra.mrb[0].mxu0 %v2752
    %v2856 = vpop.f32.mrb[0].mxu0
    %v2857 = vadd.f32 0.0, %v2856
    %v2858 = vpop.f32.mrb[0].mxu0
    %2859 = vmatprep.mubr.f32.mxu0 0.0
    %2860 = vmatmul.mubr.f32.gmra.mrb[0].mxu0 %v2755
    %v2861 = vpop.f32.mrb[0].mxu0
    %v2862 = vadd.f32 0.0, %v2861
    %v2863 = vpop.f32.mrb[0].mxu0
    %2864 = vdwg.mxu0
    %v2865 = vadd.f32 %v2585, %v2827
    %v2866 = vadd.f32 %v2586, %v2832
    %v2867 = vadd.f32 %v2587, %v2837
    %v2868 = vadd.f32 %v2588, %v2842
    %v2869 = vadd.f32 %v2589, %v2847
    %v2870 = vadd.f32 %v2590, %v2852
    %v2871 = vadd.f32 %v2591, %v2857
    %v2872 = vadd.f32 %v2592, %v2862
    %s2873 = scalar_lea.vmem %s4, 320
    %v2874 = vld [vmem:[%s2873] sm:$0xff]
    %v2875 = vld [vmem:[%s2873 + $0x8] sm:$0xff]
    %v2876 = vld [vmem:[%s2873 + $0x10] sm:$0xff]
    %v2877 = vld [vmem:[%s2873 + $0x18] sm:$0xff]
    %v2878 = vld [vmem:[%s2873 + $0x20] sm:$0xff]
    %v2879 = vld [vmem:[%s2873 + $0x28] sm:$0xff]
    %v2880 = vld [vmem:[%s2873 + $0x30] sm:$0xff]
    %v2881 = vld [vmem:[%s2873 + $0x38] sm:$0xff]
    %v2883 = vsel %vm1493, %v2874, 0
    %v2886 = vsel %vm1493, %v2875, 0
    %v2889 = vsel %vm1493, %v2876, 0
    %v2892 = vsel %vm1493, %v2877, 0
    %v2895 = vsel %vm1493, %v2878, 0
    %v2898 = vsel %vm1493, %v2879, 0
    %v2901 = vsel %vm1493, %v2880, 0
    %v2904 = vsel %vm1493, %v2881, 0
    %2906 = vmatprep.subr.mxu0 0.0
    %2907 = vmatpush1.msra.mxu0 %v1422
    %2908 = vmatprep.subr.mxu0 0.0
    %2909 = vmatpush1.msra.mxu0 %v1427
    %2910 = vmatprep.subr.mxu0 0.0
    %2911 = vmatpush1.msra.mxu0 %v1432
    %2912 = vmatprep.subr.mxu0 0.0
    %2913 = vmatpush1.msra.mxu0 %v1437
    %2914 = vmatprep.subr.mxu0 0.0
    %2915 = vmatpush1.msra.mxu0 %v1442
    %2916 = vmatprep.subr.mxu0 0.0
    %2917 = vmatpush1.msra.mxu0 %v1447
    %2918 = vmatprep.subr.mxu0 0.0
    %2919 = vmatpush1.msra.mxu0 %v1452
    %2920 = vmatprep.subr.mxu0 0.0
    %2921 = vmatpush1.msra.mxu0 %v1457
    %2922 = vmatprep.subr.mxu0 0.0
    %2923 = vmatpush1.msra.mxu0 %v1462
    %2924 = vmatprep.subr.mxu0 0.0
    %2925 = vmatpush1.msra.mxu0 %v1467
    %2926 = vmatprep.subr.mxu0 0.0
    %2927 = vmatpush1.msra.mxu0 %v1472
    %2928 = vmatprep.subr.mxu0 0.0
    %2929 = vmatpush1.msra.mxu0 %v1477
    %2930 = vmatprep.subr.mxu0 0.0
    %2931 = vmatpush1.msra.mxu0 %v1520
    %2932 = vmatprep.subr.mxu0 0.0
    %2933 = vmatpush1.msra.mxu0 0.0
    %2934 = vmatprep.subr.mxu0 0.0
    %2935 = vmatpush1.msra.mxu0 0.0
    %2936 = vmatprep.subr.mxu0 0.0
    %2937 = vmatpush1.msra.mxu0 0.0
    %2938 = vmatprep.subr.mxu0 0.0
    %2939 = vmatpush1.msra.mxu0 0.0
    %2940 = vmatprep.subr.mxu0 0.0
    %2941 = vmatpush1.msra.mxu0 0.0
    %2942 = vmatprep.subr.mxu0 0.0
    %2943 = vmatpush1.msra.mxu0 0.0
    %2944 = vmatprep.subr.mxu0 0.0
    %2945 = vmatpush1.msra.mxu0 0.0
    %2946 = vmatprep.subr.mxu0 0.0
    %2947 = vmatpush1.msra.mxu0 0.0
    %2948 = vmatprep.subr.mxu0 0.0
    %2949 = vmatpush1.msra.mxu0 0.0
    %2950 = vmatprep.subr.mxu0 0.0
    %2951 = vmatpush1.msra.mxu0 0.0
    %2952 = vmatprep.subr.mxu0 0.0
    %2953 = vmatpush1.msra.mxu0 0.0
    %2954 = vmatprep.subr.mxu0 0.0
    %2955 = vmatpush1.msra.mxu0 0.0
    %2956 = vmatprep.subr.mxu0 0.0
    %2957 = vmatpush1.msra.mxu0 0.0
    %2958 = vmatprep.subr.mxu0 0.0
    %2959 = vmatpush1.msra.mxu0 0.0
    %2960 = vmatprep.subr.mxu0 0.0
    %2961 = vmatpush1.msra.mxu0 0.0
    %2962 = vmatprep.subr.mxu0 0.0
    %2963 = vmatpush1.msra.mxu0 0.0
    %2964 = vmatprep.subr.mxu0 0.0
    %2965 = vmatpush1.msra.mxu0 0.0
    %2966 = vmatprep.subr.mxu0 0.0
    %2967 = vmatpush1.msra.mxu0 0.0
    %2968 = vmatprep.subr.mxu0 0.0
    %2969 = vmatpush1.msra.mxu0 0.0
    %2970 = vmatprep.mubr.f32.mxu0 0.0
    %2971 = vmatmul.mubr.f32.gmra.mrb[0].mxu0 %v2883
    %v2972 = vpop.f32.mrb[0].mxu0
    %v2973 = vadd.f32 0.0, %v2972
    %v2974 = vpop.f32.mrb[0].mxu0
    %2975 = vmatprep.mubr.f32.mxu0 0.0
    %2976 = vmatmul.mubr.f32.gmra.mrb[0].mxu0 %v2886
    %v2977 = vpop.f32.mrb[0].mxu0
    %v2978 = vadd.f32 0.0, %v2977
    %v2979 = vpop.f32.mrb[0].mxu0
    %2980 = vmatprep.mubr.f32.mxu0 0.0
    %2981 = vmatmul.mubr.f32.gmra.mrb[0].mxu0 %v2889
    %v2982 = vpop.f32.mrb[0].mxu0
    %v2983 = vadd.f32 0.0, %v2982
    %v2984 = vpop.f32.mrb[0].mxu0
    %2985 = vmatprep.mubr.f32.mxu0 0.0
    %2986 = vmatmul.mubr.f32.gmra.mrb[0].mxu0 %v2892
    %v2987 = vpop.f32.mrb[0].mxu0
    %v2988 = vadd.f32 0.0, %v2987
    %v2989 = vpop.f32.mrb[0].mxu0
    %2990 = vmatprep.mubr.f32.mxu0 0.0
    %2991 = vmatmul.mubr.f32.gmra.mrb[0].mxu0 %v2895
    %v2992 = vpop.f32.mrb[0].mxu0
    %v2993 = vadd.f32 0.0, %v2992
    %v2994 = vpop.f32.mrb[0].mxu0
    %2995 = vmatprep.mubr.f32.mxu0 0.0
    %2996 = vmatmul.mubr.f32.gmra.mrb[0].mxu0 %v2898
    %v2997 = vpop.f32.mrb[0].mxu0
    %v2998 = vadd.f32 0.0, %v2997
    %v2999 = vpop.f32.mrb[0].mxu0
    %3000 = vmatprep.mubr.f32.mxu0 0.0
    %3001 = vmatmul.mubr.f32.gmra.mrb[0].mxu0 %v2901
    %v3002 = vpop.f32.mrb[0].mxu0
    %v3003 = vadd.f32 0.0, %v3002
    %v3004 = vpop.f32.mrb[0].mxu0
    %3005 = vmatprep.mubr.f32.mxu0 0.0
    %3006 = vmatmul.mubr.f32.gmra.mrb[0].mxu0 %v2904
    %v3007 = vpop.f32.mrb[0].mxu0
    %v3008 = vadd.f32 0.0, %v3007
    %v3009 = vpop.f32.mrb[0].mxu0
    %3010 = vdwg.mxu0
    %s3011 = scalar_lea.vmem %s5, 20
    %v3012 = vld [vmem:[%s3011] sm:$0xf]
    %v3014 = vsel %vm1768, %v2973, 0
    %v3017 = vsel %vm1768, %v2978, 0
    %v3020 = vsel %vm1768, %v2983, 0
    %v3023 = vsel %vm1768, %v2988, 0
    %v3026 = vsel %vm1768, %v2993, 0
    %v3029 = vsel %vm1768, %v2998, 0
    %v3032 = vsel %vm1768, %v3003, 0
    %v3035 = vsel %vm1768, %v3008, 0
    %v3038 = vsel %vm1518, %v3012, 0
    %3040 = vmatprep.subr.mxu0 0.0
    %3041 = vmatpush1.msra.mxu0 %v3038
    %3042 = vmatprep.subr.mxu0 0.0
    %3043 = vmatpush1.msra.mxu0 0.0
    %3044 = vmatprep.subr.mxu0 0.0
    %3045 = vmatpush1.msra.mxu0 0.0
    %3046 = vmatprep.subr.mxu0 0.0
    %3047 = vmatpush1.msra.mxu0 0.0
    %3048 = vmatprep.subr.mxu0 0.0
    %3049 = vmatpush1.msra.mxu0 0.0
    %3050 = vmatprep.subr.mxu0 0.0
    %3051 = vmatpush1.msra.mxu0 0.0
    %3052 = vmatprep.subr.mxu0 0.0
    %3053 = vmatpush1.msra.mxu0 0.0
    %3054 = vmatprep.subr.mxu0 0.0
    %3055 = vmatpush1.msra.mxu0 0.0
    %3056 = vmatprep.subr.mxu0 0.0
    %3057 = vmatpush1.msra.mxu0 0.0
    %3058 = vmatprep.subr.mxu0 0.0
    %3059 = vmatpush1.msra.mxu0 0.0
    %3060 = vmatprep.subr.mxu0 0.0
    %3061 = vmatpush1.msra.mxu0 0.0
    %3062 = vmatprep.subr.mxu0 0.0
    %3063 = vmatpush1.msra.mxu0 0.0
    %3064 = vmatprep.subr.mxu0 0.0
    %3065 = vmatpush1.msra.mxu0 0.0
    %3066 = vmatprep.subr.mxu0 0.0
    %3067 = vmatpush1.msra.mxu0 0.0
    %3068 = vmatprep.subr.mxu0 0.0
    %3069 = vmatpush1.msra.mxu0 0.0
    %3070 = vmatprep.subr.mxu0 0.0
    %3071 = vmatpush1.msra.mxu0 0.0
    %3072 = vmatprep.subr.mxu0 0.0
    %3073 = vmatpush1.msra.mxu0 0.0
    %3074 = vmatprep.subr.mxu0 0.0
    %3075 = vmatpush1.msra.mxu0 0.0
    %3076 = vmatprep.subr.mxu0 0.0
    %3077 = vmatpush1.msra.mxu0 0.0
    %3078 = vmatprep.subr.mxu0 0.0
    %3079 = vmatpush1.msra.mxu0 0.0
    %3080 = vmatprep.subr.mxu0 0.0
    %3081 = vmatpush1.msra.mxu0 0.0
    %3082 = vmatprep.subr.mxu0 0.0
    %3083 = vmatpush1.msra.mxu0 0.0
    %3084 = vmatprep.subr.mxu0 0.0
    %3085 = vmatpush1.msra.mxu0 0.0
    %3086 = vmatprep.subr.mxu0 0.0
    %3087 = vmatpush1.msra.mxu0 0.0
    %3088 = vmatprep.subr.mxu0 0.0
    %3089 = vmatpush1.msra.mxu0 0.0
    %3090 = vmatprep.subr.mxu0 0.0
    %3091 = vmatpush1.msra.mxu0 0.0
    %3092 = vmatprep.subr.mxu0 0.0
    %3093 = vmatpush1.msra.mxu0 0.0
    %3094 = vmatprep.subr.mxu0 0.0
    %3095 = vmatpush1.msra.mxu0 0.0
    %3096 = vmatprep.subr.mxu0 0.0
    %3097 = vmatpush1.msra.mxu0 0.0
    %3098 = vmatprep.subr.mxu0 0.0
    %3099 = vmatpush1.msra.mxu0 0.0
    %3100 = vmatprep.subr.mxu0 0.0
    %3101 = vmatpush1.msra.mxu0 0.0
    %3102 = vmatprep.subr.mxu0 0.0
    %3103 = vmatpush1.msra.mxu0 0.0
    %3104 = vmatprep.mubr.f32.mxu0 0.0
    %3105 = vmatmul.mubr.f32.gmra.mrb[0].mxu0 %v3014
    %v3106 = vpop.f32.mrb[0].mxu0
    %v3107 = vadd.f32 0.0, %v3106
    %v3108 = vpop.f32.mrb[0].mxu0
    %3109 = vmatprep.mubr.f32.mxu0 0.0
    %3110 = vmatmul.mubr.f32.gmra.mrb[0].mxu0 %v3017
    %v3111 = vpop.f32.mrb[0].mxu0
    %v3112 = vadd.f32 0.0, %v3111
    %v3113 = vpop.f32.mrb[0].mxu0
    %3114 = vmatprep.mubr.f32.mxu0 0.0
    %3115 = vmatmul.mubr.f32.gmra.mrb[0].mxu0 %v3020
    %v3116 = vpop.f32.mrb[0].mxu0
    %v3117 = vadd.f32 0.0, %v3116
    %v3118 = vpop.f32.mrb[0].mxu0
    %3119 = vmatprep.mubr.f32.mxu0 0.0
    %3120 = vmatmul.mubr.f32.gmra.mrb[0].mxu0 %v3023
    %v3121 = vpop.f32.mrb[0].mxu0
    %v3122 = vadd.f32 0.0, %v3121
    %v3123 = vpop.f32.mrb[0].mxu0
    %3124 = vmatprep.mubr.f32.mxu0 0.0
    %3125 = vmatmul.mubr.f32.gmra.mrb[0].mxu0 %v3026
    %v3126 = vpop.f32.mrb[0].mxu0
    %v3127 = vadd.f32 0.0, %v3126
    %v3128 = vpop.f32.mrb[0].mxu0
    %3129 = vmatprep.mubr.f32.mxu0 0.0
    %3130 = vmatmul.mubr.f32.gmra.mrb[0].mxu0 %v3029
    %v3131 = vpop.f32.mrb[0].mxu0
    %v3132 = vadd.f32 0.0, %v3131
    %v3133 = vpop.f32.mrb[0].mxu0
    %3134 = vmatprep.mubr.f32.mxu0 0.0
    %3135 = vmatmul.mubr.f32.gmra.mrb[0].mxu0 %v3032
    %v3136 = vpop.f32.mrb[0].mxu0
    %v3137 = vadd.f32 0.0, %v3136
    %v3138 = vpop.f32.mrb[0].mxu0
    %3139 = vmatprep.mubr.f32.mxu0 0.0
    %3140 = vmatmul.mubr.f32.gmra.mrb[0].mxu0 %v3035
    %v3141 = vpop.f32.mrb[0].mxu0
    %v3142 = vadd.f32 0.0, %v3141
    %v3143 = vpop.f32.mrb[0].mxu0
    %3144 = vdwg.mxu0
    %v3145 = vadd.f32 %v2865, %v3107
    %v3146 = vadd.f32 %v2866, %v3112
    %v3147 = vadd.f32 %v2867, %v3117
    %v3148 = vadd.f32 %v2868, %v3122
    %v3149 = vadd.f32 %v2869, %v3127
    %v3150 = vadd.f32 %v2870, %v3132
    %v3151 = vadd.f32 %v2871, %v3137
    %v3152 = vadd.f32 %v2872, %v3142
    %s3153 = scalar_lea.vmem %s4, 384
    %v3154 = vld [vmem:[%s3153] sm:$0xff]
    %v3155 = vld [vmem:[%s3153 + $0x8] sm:$0xff]
    %v3156 = vld [vmem:[%s3153 + $0x10] sm:$0xff]
    %v3157 = vld [vmem:[%s3153 + $0x18] sm:$0xff]
    %v3158 = vld [vmem:[%s3153 + $0x20] sm:$0xff]
    %v3159 = vld [vmem:[%s3153 + $0x28] sm:$0xff]
    %v3160 = vld [vmem:[%s3153 + $0x30] sm:$0xff]
    %v3161 = vld [vmem:[%s3153 + $0x38] sm:$0xff]
    %v3163 = vsel %vm1493, %v3154, 0
    %v3166 = vsel %vm1493, %v3155, 0
    %v3169 = vsel %vm1493, %v3156, 0
    %v3172 = vsel %vm1493, %v3157, 0
    %v3175 = vsel %vm1493, %v3158, 0
    %v3178 = vsel %vm1493, %v3159, 0
    %v3181 = vsel %vm1493, %v3160, 0
    %v3184 = vsel %vm1493, %v3161, 0
    %3186 = vmatprep.subr.mxu0 0.0
    %3187 = vmatpush1.msra.mxu0 %v1422
    %3188 = vmatprep.subr.mxu0 0.0
    %3189 = vmatpush1.msra.mxu0 %v1427
    %3190 = vmatprep.subr.mxu0 0.0
    %3191 = vmatpush1.msra.mxu0 %v1432
    %3192 = vmatprep.subr.mxu0 0.0
    %3193 = vmatpush1.msra.mxu0 %v1437
    %3194 = vmatprep.subr.mxu0 0.0
    %3195 = vmatpush1.msra.mxu0 %v1442
    %3196 = vmatprep.subr.mxu0 0.0
    %3197 = vmatpush1.msra.mxu0 %v1447
    %3198 = vmatprep.subr.mxu0 0.0
    %3199 = vmatpush1.msra.mxu0 %v1452
    %3200 = vmatprep.subr.mxu0 0.0
    %3201 = vmatpush1.msra.mxu0 %v1457
    %3202 = vmatprep.subr.mxu0 0.0
    %3203 = vmatpush1.msra.mxu0 %v1462
    %3204 = vmatprep.subr.mxu0 0.0
    %3205 = vmatpush1.msra.mxu0 %v1467
    %3206 = vmatprep.subr.mxu0 0.0
    %3207 = vmatpush1.msra.mxu0 %v1472
    %3208 = vmatprep.subr.mxu0 0.0
    %3209 = vmatpush1.msra.mxu0 %v1477
    %3210 = vmatprep.subr.mxu0 0.0
    %3211 = vmatpush1.msra.mxu0 %v1520
    %3212 = vmatprep.subr.mxu0 0.0
    %3213 = vmatpush1.msra.mxu0 0.0
    %3214 = vmatprep.subr.mxu0 0.0
    %3215 = vmatpush1.msra.mxu0 0.0
    %3216 = vmatprep.subr.mxu0 0.0
    %3217 = vmatpush1.msra.mxu0 0.0
    %3218 = vmatprep.subr.mxu0 0.0
    %3219 = vmatpush1.msra.mxu0 0.0
    %3220 = vmatprep.subr.mxu0 0.0
    %3221 = vmatpush1.msra.mxu0 0.0
    %3222 = vmatprep.subr.mxu0 0.0
    %3223 = vmatpush1.msra.mxu0 0.0
    %3224 = vmatprep.subr.mxu0 0.0
    %3225 = vmatpush1.msra.mxu0 0.0
    %3226 = vmatprep.subr.mxu0 0.0
    %3227 = vmatpush1.msra.mxu0 0.0
    %3228 = vmatprep.subr.mxu0 0.0
    %3229 = vmatpush1.msra.mxu0 0.0
    %3230 = vmatprep.subr.mxu0 0.0
    %3231 = vmatpush1.msra.mxu0 0.0
    %3232 = vmatprep.subr.mxu0 0.0
    %3233 = vmatpush1.msra.mxu0 0.0
    %3234 = vmatprep.subr.mxu0 0.0
    %3235 = vmatpush1.msra.mxu0 0.0
    %3236 = vmatprep.subr.mxu0 0.0
    %3237 = vmatpush1.msra.mxu0 0.0
    %3238 = vmatprep.subr.mxu0 0.0
    %3239 = vmatpush1.msra.mxu0 0.0
    %3240 = vmatprep.subr.mxu0 0.0
    %3241 = vmatpush1.msra.mxu0 0.0
    %3242 = vmatprep.subr.mxu0 0.0
    %3243 = vmatpush1.msra.mxu0 0.0
    %3244 = vmatprep.subr.mxu0 0.0
    %3245 = vmatpush1.msra.mxu0 0.0
    %3246 = vmatprep.subr.mxu0 0.0
    %3247 = vmatpush1.msra.mxu0 0.0
    %3248 = vmatprep.subr.mxu0 0.0
    %3249 = vmatpush1.msra.mxu0 0.0
    %3250 = vmatprep.mubr.f32.mxu0 0.0
    %3251 = vmatmul.mubr.f32.gmra.mrb[0].mxu0 %v3163
    %v3252 = vpop.f32.mrb[0].mxu0
    %v3253 = vadd.f32 0.0, %v3252
    %v3254 = vpop.f32.mrb[0].mxu0
    %3255 = vmatprep.mubr.f32.mxu0 0.0
    %3256 = vmatmul.mubr.f32.gmra.mrb[0].mxu0 %v3166
    %v3257 = vpop.f32.mrb[0].mxu0
    %v3258 = vadd.f32 0.0, %v3257
    %v3259 = vpop.f32.mrb[0].mxu0
    %3260 = vmatprep.mubr.f32.mxu0 0.0
    %3261 = vmatmul.mubr.f32.gmra.mrb[0].mxu0 %v3169
    %v3262 = vpop.f32.mrb[0].mxu0
    %v3263 = vadd.f32 0.0, %v3262
    %v3264 = vpop.f32.mrb[0].mxu0
    %3265 = vmatprep.mubr.f32.mxu0 0.0
    %3266 = vmatmul.mubr.f32.gmra.mrb[0].mxu0 %v3172
    %v3267 = vpop.f32.mrb[0].mxu0
    %v3268 = vadd.f32 0.0, %v3267
    %v3269 = vpop.f32.mrb[0].mxu0
    %3270 = vmatprep.mubr.f32.mxu0 0.0
    %3271 = vmatmul.mubr.f32.gmra.mrb[0].mxu0 %v3175
    %v3272 = vpop.f32.mrb[0].mxu0
    %v3273 = vadd.f32 0.0, %v3272
    %v3274 = vpop.f32.mrb[0].mxu0
    %3275 = vmatprep.mubr.f32.mxu0 0.0
    %3276 = vmatmul.mubr.f32.gmra.mrb[0].mxu0 %v3178
    %v3277 = vpop.f32.mrb[0].mxu0
    %v3278 = vadd.f32 0.0, %v3277
    %v3279 = vpop.f32.mrb[0].mxu0
    %3280 = vmatprep.mubr.f32.mxu0 0.0
    %3281 = vmatmul.mubr.f32.gmra.mrb[0].mxu0 %v3181
    %v3282 = vpop.f32.mrb[0].mxu0
    %v3283 = vadd.f32 0.0, %v3282
    %v3284 = vpop.f32.mrb[0].mxu0
    %3285 = vmatprep.mubr.f32.mxu0 0.0
    %3286 = vmatmul.mubr.f32.gmra.mrb[0].mxu0 %v3184
    %v3287 = vpop.f32.mrb[0].mxu0
    %v3288 = vadd.f32 0.0, %v3287
    %v3289 = vpop.f32.mrb[0].mxu0
    %3290 = vdwg.mxu0
    %s3291 = scalar_lea.vmem %s5, 24
    %v3292 = vld [vmem:[%s3291] sm:$0xf]
    %v3294 = vsel %vm1768, %v3253, 0
    %v3297 = vsel %vm1768, %v3258, 0
    %v3300 = vsel %vm1768, %v3263, 0
    %v3303 = vsel %vm1768, %v3268, 0
    %v3306 = vsel %vm1768, %v3273, 0
    %v3309 = vsel %vm1768, %v3278, 0
    %v3312 = vsel %vm1768, %v3283, 0
    %v3315 = vsel %vm1768, %v3288, 0
    %v3318 = vsel %vm1518, %v3292, 0
    %3320 = vmatprep.subr.mxu0 0.0
    %3321 = vmatpush1.msra.mxu0 %v3318
    %3322 = vmatprep.subr.mxu0 0.0
    %3323 = vmatpush1.msra.mxu0 0.0
    %3324 = vmatprep.subr.mxu0 0.0
    %3325 = vmatpush1.msra.mxu0 0.0
    %3326 = vmatprep.subr.mxu0 0.0
    %3327 = vmatpush1.msra.mxu0 0.0
    %3328 = vmatprep.subr.mxu0 0.0
    %3329 = vmatpush1.msra.mxu0 0.0
    %3330 = vmatprep.subr.mxu0 0.0
    %3331 = vmatpush1.msra.mxu0 0.0
    %3332 = vmatprep.subr.mxu0 0.0
    %3333 = vmatpush1.msra.mxu0 0.0
    %3334 = vmatprep.subr.mxu0 0.0
    %3335 = vmatpush1.msra.mxu0 0.0
    %3336 = vmatprep.subr.mxu0 0.0
    %3337 = vmatpush1.msra.mxu0 0.0
    %3338 = vmatprep.subr.mxu0 0.0
    %3339 = vmatpush1.msra.mxu0 0.0
    %3340 = vmatprep.subr.mxu0 0.0
    %3341 = vmatpush1.msra.mxu0 0.0
    %3342 = vmatprep.subr.mxu0 0.0
    %3343 = vmatpush1.msra.mxu0 0.0
    %3344 = vmatprep.subr.mxu0 0.0
    %3345 = vmatpush1.msra.mxu0 0.0
    %3346 = vmatprep.subr.mxu0 0.0
    %3347 = vmatpush1.msra.mxu0 0.0
    %3348 = vmatprep.subr.mxu0 0.0
    %3349 = vmatpush1.msra.mxu0 0.0
    %3350 = vmatprep.subr.mxu0 0.0
    %3351 = vmatpush1.msra.mxu0 0.0
    %3352 = vmatprep.subr.mxu0 0.0
    %3353 = vmatpush1.msra.mxu0 0.0
    %3354 = vmatprep.subr.mxu0 0.0
    %3355 = vmatpush1.msra.mxu0 0.0
    %3356 = vmatprep.subr.mxu0 0.0
    %3357 = vmatpush1.msra.mxu0 0.0
    %3358 = vmatprep.subr.mxu0 0.0
    %3359 = vmatpush1.msra.mxu0 0.0
    %3360 = vmatprep.subr.mxu0 0.0
    %3361 = vmatpush1.msra.mxu0 0.0
    %3362 = vmatprep.subr.mxu0 0.0
    %3363 = vmatpush1.msra.mxu0 0.0
    %3364 = vmatprep.subr.mxu0 0.0
    %3365 = vmatpush1.msra.mxu0 0.0
    %3366 = vmatprep.subr.mxu0 0.0
    %3367 = vmatpush1.msra.mxu0 0.0
    %3368 = vmatprep.subr.mxu0 0.0
    %3369 = vmatpush1.msra.mxu0 0.0
    %3370 = vmatprep.subr.mxu0 0.0
    %3371 = vmatpush1.msra.mxu0 0.0
    %3372 = vmatprep.subr.mxu0 0.0
    %3373 = vmatpush1.msra.mxu0 0.0
    %3374 = vmatprep.subr.mxu0 0.0
    %3375 = vmatpush1.msra.mxu0 0.0
    %3376 = vmatprep.subr.mxu0 0.0
    %3377 = vmatpush1.msra.mxu0 0.0
    %3378 = vmatprep.subr.mxu0 0.0
    %3379 = vmatpush1.msra.mxu0 0.0
    %3380 = vmatprep.subr.mxu0 0.0
    %3381 = vmatpush1.msra.mxu0 0.0
    %3382 = vmatprep.subr.mxu0 0.0
    %3383 = vmatpush1.msra.mxu0 0.0
    %3384 = vmatprep.mubr.f32.mxu0 0.0
    %3385 = vmatmul.mubr.f32.gmra.mrb[0].mxu0 %v3294
    %v3386 = vpop.f32.mrb[0].mxu0
    %v3387 = vadd.f32 0.0, %v3386
    %v3388 = vpop.f32.mrb[0].mxu0
    %3389 = vmatprep.mubr.f32.mxu0 0.0
    %3390 = vmatmul.mubr.f32.gmra.mrb[0].mxu0 %v3297
    %v3391 = vpop.f32.mrb[0].mxu0
    %v3392 = vadd.f32 0.0, %v3391
    %v3393 = vpop.f32.mrb[0].mxu0
    %3394 = vmatprep.mubr.f32.mxu0 0.0
    %3395 = vmatmul.mubr.f32.gmra.mrb[0].mxu0 %v3300
    %v3396 = vpop.f32.mrb[0].mxu0
    %v3397 = vadd.f32 0.0, %v3396
    %v3398 = vpop.f32.mrb[0].mxu0
    %3399 = vmatprep.mubr.f32.mxu0 0.0
    %3400 = vmatmul.mubr.f32.gmra.mrb[0].mxu0 %v3303
    %v3401 = vpop.f32.mrb[0].mxu0
    %v3402 = vadd.f32 0.0, %v3401
    %v3403 = vpop.f32.mrb[0].mxu0
    %3404 = vmatprep.mubr.f32.mxu0 0.0
    %3405 = vmatmul.mubr.f32.gmra.mrb[0].mxu0 %v3306
    %v3406 = vpop.f32.mrb[0].mxu0
    %v3407 = vadd.f32 0.0, %v3406
    %v3408 = vpop.f32.mrb[0].mxu0
    %3409 = vmatprep.mubr.f32.mxu0 0.0
    %3410 = vmatmul.mubr.f32.gmra.mrb[0].mxu0 %v3309
    %v3411 = vpop.f32.mrb[0].mxu0
    %v3412 = vadd.f32 0.0, %v3411
    %v3413 = vpop.f32.mrb[0].mxu0
    %3414 = vmatprep.mubr.f32.mxu0 0.0
    %3415 = vmatmul.mubr.f32.gmra.mrb[0].mxu0 %v3312
    %v3416 = vpop.f32.mrb[0].mxu0
    %v3417 = vadd.f32 0.0, %v3416
    %v3418 = vpop.f32.mrb[0].mxu0
    %3419 = vmatprep.mubr.f32.mxu0 0.0
    %3420 = vmatmul.mubr.f32.gmra.mrb[0].mxu0 %v3315
    %v3421 = vpop.f32.mrb[0].mxu0
    %v3422 = vadd.f32 0.0, %v3421
    %v3423 = vpop.f32.mrb[0].mxu0
    %3424 = vdwg.mxu0
    %v3425 = vadd.f32 %v3145, %v3387
    %v3426 = vadd.f32 %v3146, %v3392
    %v3427 = vadd.f32 %v3147, %v3397
    %v3428 = vadd.f32 %v3148, %v3402
    %v3429 = vadd.f32 %v3149, %v3407
    %v3430 = vadd.f32 %v3150, %v3412
    %v3431 = vadd.f32 %v3151, %v3417
    %v3432 = vadd.f32 %v3152, %v3422
    %s3433 = scalar_lea.vmem %s4, 448
    %v3434 = vld [vmem:[%s3433] sm:$0xff]
    %v3435 = vld [vmem:[%s3433 + $0x8] sm:$0xff]
    %v3436 = vld [vmem:[%s3433 + $0x10] sm:$0xff]
    %v3437 = vld [vmem:[%s3433 + $0x18] sm:$0xff]
    %v3438 = vld [vmem:[%s3433 + $0x20] sm:$0xff]
    %v3439 = vld [vmem:[%s3433 + $0x28] sm:$0xff]
    %v3440 = vld [vmem:[%s3433 + $0x30] sm:$0xff]
    %v3441 = vld [vmem:[%s3433 + $0x38] sm:$0xff]
    %v3443 = vsel %vm1493, %v3434, 0
    %v3446 = vsel %vm1493, %v3435, 0
    %v3449 = vsel %vm1493, %v3436, 0
    %v3452 = vsel %vm1493, %v3437, 0
    %v3455 = vsel %vm1493, %v3438, 0
    %v3458 = vsel %vm1493, %v3439, 0
    %v3461 = vsel %vm1493, %v3440, 0
    %v3464 = vsel %vm1493, %v3441, 0
    %3466 = vmatprep.subr.mxu0 0.0
    %3467 = vmatpush1.msra.mxu0 %v1422
    %3468 = vmatprep.subr.mxu0 0.0
    %3469 = vmatpush1.msra.mxu0 %v1427
    %3470 = vmatprep.subr.mxu0 0.0
    %3471 = vmatpush1.msra.mxu0 %v1432
    %3472 = vmatprep.subr.mxu0 0.0
    %3473 = vmatpush1.msra.mxu0 %v1437
    %3474 = vmatprep.subr.mxu0 0.0
    %3475 = vmatpush1.msra.mxu0 %v1442
    %3476 = vmatprep.subr.mxu0 0.0
    %3477 = vmatpush1.msra.mxu0 %v1447
    %3478 = vmatprep.subr.mxu0 0.0
    %3479 = vmatpush1.msra.mxu0 %v1452
    %3480 = vmatprep.subr.mxu0 0.0
    %3481 = vmatpush1.msra.mxu0 %v1457
    %3482 = vmatprep.subr.mxu0 0.0
    %3483 = vmatpush1.msra.mxu0 %v1462
    %3484 = vmatprep.subr.mxu0 0.0
    %3485 = vmatpush1.msra.mxu0 %v1467
    %3486 = vmatprep.subr.mxu0 0.0
    %3487 = vmatpush1.msra.mxu0 %v1472
    %3488 = vmatprep.subr.mxu0 0.0
    %3489 = vmatpush1.msra.mxu0 %v1477
    %3490 = vmatprep.subr.mxu0 0.0
    %3491 = vmatpush1.msra.mxu0 %v1520
    %3492 = vmatprep.subr.mxu0 0.0
    %3493 = vmatpush1.msra.mxu0 0.0
    %3494 = vmatprep.subr.mxu0 0.0
    %3495 = vmatpush1.msra.mxu0 0.0
    %3496 = vmatprep.subr.mxu0 0.0
    %3497 = vmatpush1.msra.mxu0 0.0
    %3498 = vmatprep.subr.mxu0 0.0
    %3499 = vmatpush1.msra.mxu0 0.0
    %3500 = vmatprep.subr.mxu0 0.0
    %3501 = vmatpush1.msra.mxu0 0.0
    %3502 = vmatprep.subr.mxu0 0.0
    %3503 = vmatpush1.msra.mxu0 0.0
    %3504 = vmatprep.subr.mxu0 0.0
    %3505 = vmatpush1.msra.mxu0 0.0
    %3506 = vmatprep.subr.mxu0 0.0
    %3507 = vmatpush1.msra.mxu0 0.0
    %3508 = vmatprep.subr.mxu0 0.0
    %3509 = vmatpush1.msra.mxu0 0.0
    %3510 = vmatprep.subr.mxu0 0.0
    %3511 = vmatpush1.msra.mxu0 0.0
    %3512 = vmatprep.subr.mxu0 0.0
    %3513 = vmatpush1.msra.mxu0 0.0
    %3514 = vmatprep.subr.mxu0 0.0
    %3515 = vmatpush1.msra.mxu0 0.0
    %3516 = vmatprep.subr.mxu0 0.0
    %3517 = vmatpush1.msra.mxu0 0.0
    %3518 = vmatprep.subr.mxu0 0.0
    %3519 = vmatpush1.msra.mxu0 0.0
    %3520 = vmatprep.subr.mxu0 0.0
    %3521 = vmatpush1.msra.mxu0 0.0
    %3522 = vmatprep.subr.mxu0 0.0
    %3523 = vmatpush1.msra.mxu0 0.0
    %3524 = vmatprep.subr.mxu0 0.0
    %3525 = vmatpush1.msra.mxu0 0.0
    %3526 = vmatprep.subr.mxu0 0.0
    %3527 = vmatpush1.msra.mxu0 0.0
    %3528 = vmatprep.subr.mxu0 0.0
    %3529 = vmatpush1.msra.mxu0 0.0
    %3530 = vmatprep.mubr.f32.mxu0 0.0
    %3531 = vmatmul.mubr.f32.gmra.mrb[0].mxu0 %v3443
    %v3532 = vpop.f32.mrb[0].mxu0
    %v3533 = vadd.f32 0.0, %v3532
    %v3534 = vpop.f32.mrb[0].mxu0
    %3535 = vmatprep.mubr.f32.mxu0 0.0
    %3536 = vmatmul.mubr.f32.gmra.mrb[0].mxu0 %v3446
    %v3537 = vpop.f32.mrb[0].mxu0
    %v3538 = vadd.f32 0.0, %v3537
    %v3539 = vpop.f32.mrb[0].mxu0
    %3540 = vmatprep.mubr.f32.mxu0 0.0
    %3541 = vmatmul.mubr.f32.gmra.mrb[0].mxu0 %v3449
    %v3542 = vpop.f32.mrb[0].mxu0
    %v3543 = vadd.f32 0.0, %v3542
    %v3544 = vpop.f32.mrb[0].mxu0
    %3545 = vmatprep.mubr.f32.mxu0 0.0
    %3546 = vmatmul.mubr.f32.gmra.mrb[0].mxu0 %v3452
    %v3547 = vpop.f32.mrb[0].mxu0
    %v3548 = vadd.f32 0.0, %v3547
    %v3549 = vpop.f32.mrb[0].mxu0
    %3550 = vmatprep.mubr.f32.mxu0 0.0
    %3551 = vmatmul.mubr.f32.gmra.mrb[0].mxu0 %v3455
    %v3552 = vpop.f32.mrb[0].mxu0
    %v3553 = vadd.f32 0.0, %v3552
    %v3554 = vpop.f32.mrb[0].mxu0
    %3555 = vmatprep.mubr.f32.mxu0 0.0
    %3556 = vmatmul.mubr.f32.gmra.mrb[0].mxu0 %v3458
    %v3557 = vpop.f32.mrb[0].mxu0
    %v3558 = vadd.f32 0.0, %v3557
    %v3559 = vpop.f32.mrb[0].mxu0
    %3560 = vmatprep.mubr.f32.mxu0 0.0
    %3561 = vmatmul.mubr.f32.gmra.mrb[0].mxu0 %v3461
    %v3562 = vpop.f32.mrb[0].mxu0
    %v3563 = vadd.f32 0.0, %v3562
    %v3564 = vpop.f32.mrb[0].mxu0
    %3565 = vmatprep.mubr.f32.mxu0 0.0
    %3566 = vmatmul.mubr.f32.gmra.mrb[0].mxu0 %v3464
    %v3567 = vpop.f32.mrb[0].mxu0
    %v3568 = vadd.f32 0.0, %v3567
    %v3569 = vpop.f32.mrb[0].mxu0
    %3570 = vdwg.mxu0
    %s3571 = scalar_lea.vmem %s5, 28
    %v3572 = vld [vmem:[%s3571] sm:$0xf]
    %v3574 = vsel %vm1768, %v3533, 0
    %v3577 = vsel %vm1768, %v3538, 0
    %v3580 = vsel %vm1768, %v3543, 0
    %v3583 = vsel %vm1768, %v3548, 0
    %v3586 = vsel %vm1768, %v3553, 0
    %v3589 = vsel %vm1768, %v3558, 0
    %v3592 = vsel %vm1768, %v3563, 0
    %v3595 = vsel %vm1768, %v3568, 0
    %v3598 = vsel %vm1518, %v3572, 0
    %3600 = vmatprep.subr.mxu0 0.0
    %3601 = vmatpush1.msra.mxu0 %v3598
    %3602 = vmatprep.subr.mxu0 0.0
    %3603 = vmatpush1.msra.mxu0 0.0
    %3604 = vmatprep.subr.mxu0 0.0
    %3605 = vmatpush1.msra.mxu0 0.0
    %3606 = vmatprep.subr.mxu0 0.0
    %3607 = vmatpush1.msra.mxu0 0.0
    %3608 = vmatprep.subr.mxu0 0.0
    %3609 = vmatpush1.msra.mxu0 0.0
    %3610 = vmatprep.subr.mxu0 0.0
    %3611 = vmatpush1.msra.mxu0 0.0
    %3612 = vmatprep.subr.mxu0 0.0
    %3613 = vmatpush1.msra.mxu0 0.0
    %3614 = vmatprep.subr.mxu0 0.0
    %3615 = vmatpush1.msra.mxu0 0.0
    %3616 = vmatprep.subr.mxu0 0.0
    %3617 = vmatpush1.msra.mxu0 0.0
    %3618 = vmatprep.subr.mxu0 0.0
    %3619 = vmatpush1.msra.mxu0 0.0
    %3620 = vmatprep.subr.mxu0 0.0
    %3621 = vmatpush1.msra.mxu0 0.0
    %3622 = vmatprep.subr.mxu0 0.0
    %3623 = vmatpush1.msra.mxu0 0.0
    %3624 = vmatprep.subr.mxu0 0.0
    %3625 = vmatpush1.msra.mxu0 0.0
    %3626 = vmatprep.subr.mxu0 0.0
    %3627 = vmatpush1.msra.mxu0 0.0
    %3628 = vmatprep.subr.mxu0 0.0
    %3629 = vmatpush1.msra.mxu0 0.0
    %3630 = vmatprep.subr.mxu0 0.0
    %3631 = vmatpush1.msra.mxu0 0.0
    %3632 = vmatprep.subr.mxu0 0.0
    %3633 = vmatpush1.msra.mxu0 0.0
    %3634 = vmatprep.subr.mxu0 0.0
    %3635 = vmatpush1.msra.mxu0 0.0
    %3636 = vmatprep.subr.mxu0 0.0
    %3637 = vmatpush1.msra.mxu0 0.0
    %3638 = vmatprep.subr.mxu0 0.0
    %3639 = vmatpush1.msra.mxu0 0.0
    %3640 = vmatprep.subr.mxu0 0.0
    %3641 = vmatpush1.msra.mxu0 0.0
    %3642 = vmatprep.subr.mxu0 0.0
    %3643 = vmatpush1.msra.mxu0 0.0
    %3644 = vmatprep.subr.mxu0 0.0
    %3645 = vmatpush1.msra.mxu0 0.0
    %3646 = vmatprep.subr.mxu0 0.0
    %3647 = vmatpush1.msra.mxu0 0.0
    %3648 = vmatprep.subr.mxu0 0.0
    %3649 = vmatpush1.msra.mxu0 0.0
    %3650 = vmatprep.subr.mxu0 0.0
    %3651 = vmatpush1.msra.mxu0 0.0
    %3652 = vmatprep.subr.mxu0 0.0
    %3653 = vmatpush1.msra.mxu0 0.0
    %3654 = vmatprep.subr.mxu0 0.0
    %3655 = vmatpush1.msra.mxu0 0.0
    %3656 = vmatprep.subr.mxu0 0.0
    %3657 = vmatpush1.msra.mxu0 0.0
    %3658 = vmatprep.subr.mxu0 0.0
    %3659 = vmatpush1.msra.mxu0 0.0
    %3660 = vmatprep.subr.mxu0 0.0
    %3661 = vmatpush1.msra.mxu0 0.0
    %3662 = vmatprep.subr.mxu0 0.0
    %3663 = vmatpush1.msra.mxu0 0.0
    %3664 = vmatprep.mubr.f32.mxu0 0.0
    %3665 = vmatmul.mubr.f32.gmra.mrb[0].mxu0 %v3574
    %v3666 = vpop.f32.mrb[0].mxu0
    %v3667 = vadd.f32 0.0, %v3666
    %v3668 = vpop.f32.mrb[0].mxu0
    %3669 = vmatprep.mubr.f32.mxu0 0.0
    %3670 = vmatmul.mubr.f32.gmra.mrb[0].mxu0 %v3577
    %v3671 = vpop.f32.mrb[0].mxu0
    %v3672 = vadd.f32 0.0, %v3671
    %v3673 = vpop.f32.mrb[0].mxu0
    %3674 = vmatprep.mubr.f32.mxu0 0.0
    %3675 = vmatmul.mubr.f32.gmra.mrb[0].mxu0 %v3580
    %v3676 = vpop.f32.mrb[0].mxu0
    %v3677 = vadd.f32 0.0, %v3676
    %v3678 = vpop.f32.mrb[0].mxu0
    %3679 = vmatprep.mubr.f32.mxu0 0.0
    %3680 = vmatmul.mubr.f32.gmra.mrb[0].mxu0 %v3583
    %v3681 = vpop.f32.mrb[0].mxu0
    %v3682 = vadd.f32 0.0, %v3681
    %v3683 = vpop.f32.mrb[0].mxu0
    %3684 = vmatprep.mubr.f32.mxu0 0.0
    %3685 = vmatmul.mubr.f32.gmra.mrb[0].mxu0 %v3586
    %v3686 = vpop.f32.mrb[0].mxu0
    %v3687 = vadd.f32 0.0, %v3686
    %v3688 = vpop.f32.mrb[0].mxu0
    %3689 = vmatprep.mubr.f32.mxu0 0.0
    %3690 = vmatmul.mubr.f32.gmra.mrb[0].mxu0 %v3589
    %v3691 = vpop.f32.mrb[0].mxu0
    %v3692 = vadd.f32 0.0, %v3691
    %v3693 = vpop.f32.mrb[0].mxu0
    %3694 = vmatprep.mubr.f32.mxu0 0.0
    %3695 = vmatmul.mubr.f32.gmra.mrb[0].mxu0 %v3592
    %v3696 = vpop.f32.mrb[0].mxu0
    %v3697 = vadd.f32 0.0, %v3696
    %v3698 = vpop.f32.mrb[0].mxu0
    %3699 = vmatprep.mubr.f32.mxu0 0.0
    %3700 = vmatmul.mubr.f32.gmra.mrb[0].mxu0 %v3595
    %v3701 = vpop.f32.mrb[0].mxu0
    %v3702 = vadd.f32 0.0, %v3701
    %v3703 = vpop.f32.mrb[0].mxu0
    %3704 = vdwg.mxu0
    %v3705 = vadd.f32 %v3425, %v3667
    %v3706 = vadd.f32 %v3426, %v3672
    %v3707 = vadd.f32 %v3427, %v3677
    %v3708 = vadd.f32 %v3428, %v3682
    %v3709 = vadd.f32 %v3429, %v3687
    %v3710 = vadd.f32 %v3430, %v3692
    %v3711 = vadd.f32 %v3431, %v3697
    %v3712 = vadd.f32 %v3432, %v3702
    %s3713 = scalar_lea.vmem %s4, 512
    %v3714 = vld [vmem:[%s3713] sm:$0xff]
    %v3715 = vld [vmem:[%s3713 + $0x8] sm:$0xff]
    %v3716 = vld [vmem:[%s3713 + $0x10] sm:$0xff]
    %v3717 = vld [vmem:[%s3713 + $0x18] sm:$0xff]
    %v3718 = vld [vmem:[%s3713 + $0x20] sm:$0xff]
    %v3719 = vld [vmem:[%s3713 + $0x28] sm:$0xff]
    %v3720 = vld [vmem:[%s3713 + $0x30] sm:$0xff]
    %v3721 = vld [vmem:[%s3713 + $0x38] sm:$0xff]
    %v3723 = vsel %vm1493, %v3714, 0
    %v3726 = vsel %vm1493, %v3715, 0
    %v3729 = vsel %vm1493, %v3716, 0
    %v3732 = vsel %vm1493, %v3717, 0
    %v3735 = vsel %vm1493, %v3718, 0
    %v3738 = vsel %vm1493, %v3719, 0
    %v3741 = vsel %vm1493, %v3720, 0
    %v3744 = vsel %vm1493, %v3721, 0
    %3746 = vmatprep.subr.mxu0 0.0
    %3747 = vmatpush1.msra.mxu0 %v1422
    %3748 = vmatprep.subr.mxu0 0.0
    %3749 = vmatpush1.msra.mxu0 %v1427
    %3750 = vmatprep.subr.mxu0 0.0
    %3751 = vmatpush1.msra.mxu0 %v1432
    %3752 = vmatprep.subr.mxu0 0.0
    %3753 = vmatpush1.msra.mxu0 %v1437
    %3754 = vmatprep.subr.mxu0 0.0
    %3755 = vmatpush1.msra.mxu0 %v1442
    %3756 = vmatprep.subr.mxu0 0.0
    %3757 = vmatpush1.msra.mxu0 %v1447
    %3758 = vmatprep.subr.mxu0 0.0
    %3759 = vmatpush1.msra.mxu0 %v1452
    %3760 = vmatprep.subr.mxu0 0.0
    %3761 = vmatpush1.msra.mxu0 %v1457
    %3762 = vmatprep.subr.mxu0 0.0
    %3763 = vmatpush1.msra.mxu0 %v1462
    %3764 = vmatprep.subr.mxu0 0.0
    %3765 = vmatpush1.msra.mxu0 %v1467
    %3766 = vmatprep.subr.mxu0 0.0
    %3767 = vmatpush1.msra.mxu0 %v1472
    %3768 = vmatprep.subr.mxu0 0.0
    %3769 = vmatpush1.msra.mxu0 %v1477
    %3770 = vmatprep.subr.mxu0 0.0
    %3771 = vmatpush1.msra.mxu0 %v1520
    %3772 = vmatprep.subr.mxu0 0.0
    %3773 = vmatpush1.msra.mxu0 0.0
    %3774 = vmatprep.subr.mxu0 0.0
    %3775 = vmatpush1.msra.mxu0 0.0
    %3776 = vmatprep.subr.mxu0 0.0
    %3777 = vmatpush1.msra.mxu0 0.0
    %3778 = vmatprep.subr.mxu0 0.0
    %3779 = vmatpush1.msra.mxu0 0.0
    %3780 = vmatprep.subr.mxu0 0.0
    %3781 = vmatpush1.msra.mxu0 0.0
    %3782 = vmatprep.subr.mxu0 0.0
    %3783 = vmatpush1.msra.mxu0 0.0
    %3784 = vmatprep.subr.mxu0 0.0
    %3785 = vmatpush1.msra.mxu0 0.0
    %3786 = vmatprep.subr.mxu0 0.0
    %3787 = vmatpush1.msra.mxu0 0.0
    %3788 = vmatprep.subr.mxu0 0.0
    %3789 = vmatpush1.msra.mxu0 0.0
    %3790 = vmatprep.subr.mxu0 0.0
    %3791 = vmatpush1.msra.mxu0 0.0
    %3792 = vmatprep.subr.mxu0 0.0
    %3793 = vmatpush1.msra.mxu0 0.0
    %3794 = vmatprep.subr.mxu0 0.0
    %3795 = vmatpush1.msra.mxu0 0.0
    %3796 = vmatprep.subr.mxu0 0.0
    %3797 = vmatpush1.msra.mxu0 0.0
    %3798 = vmatprep.subr.mxu0 0.0
    %3799 = vmatpush1.msra.mxu0 0.0
    %3800 = vmatprep.subr.mxu0 0.0
    %3801 = vmatpush1.msra.mxu0 0.0
    %3802 = vmatprep.subr.mxu0 0.0
    %3803 = vmatpush1.msra.mxu0 0.0
    %3804 = vmatprep.subr.mxu0 0.0
    %3805 = vmatpush1.msra.mxu0 0.0
    %3806 = vmatprep.subr.mxu0 0.0
    %3807 = vmatpush1.msra.mxu0 0.0
    %3808 = vmatprep.subr.mxu0 0.0
    %3809 = vmatpush1.msra.mxu0 0.0
    %3810 = vmatprep.mubr.f32.mxu0 0.0
    %3811 = vmatmul.mubr.f32.gmra.mrb[0].mxu0 %v3723
    %v3812 = vpop.f32.mrb[0].mxu0
    %v3813 = vadd.f32 0.0, %v3812
    %v3814 = vpop.f32.mrb[0].mxu0
    %3815 = vmatprep.mubr.f32.mxu0 0.0
    %3816 = vmatmul.mubr.f32.gmra.mrb[0].mxu0 %v3726
    %v3817 = vpop.f32.mrb[0].mxu0
    %v3818 = vadd.f32 0.0, %v3817
    %v3819 = vpop.f32.mrb[0].mxu0
    %3820 = vmatprep.mubr.f32.mxu0 0.0
    %3821 = vmatmul.mubr.f32.gmra.mrb[0].mxu0 %v3729
    %v3822 = vpop.f32.mrb[0].mxu0
    %v3823 = vadd.f32 0.0, %v3822
    %v3824 = vpop.f32.mrb[0].mxu0
    %3825 = vmatprep.mubr.f32.mxu0 0.0
    %3826 = vmatmul.mubr.f32.gmra.mrb[0].mxu0 %v3732
    %v3827 = vpop.f32.mrb[0].mxu0
    %v3828 = vadd.f32 0.0, %v3827
    %v3829 = vpop.f32.mrb[0].mxu0
    %3830 = vmatprep.mubr.f32.mxu0 0.0
    %3831 = vmatmul.mubr.f32.gmra.mrb[0].mxu0 %v3735
    %v3832 = vpop.f32.mrb[0].mxu0
    %v3833 = vadd.f32 0.0, %v3832
    %v3834 = vpop.f32.mrb[0].mxu0
    %3835 = vmatprep.mubr.f32.mxu0 0.0
    %3836 = vmatmul.mubr.f32.gmra.mrb[0].mxu0 %v3738
    %v3837 = vpop.f32.mrb[0].mxu0
    %v3838 = vadd.f32 0.0, %v3837
    %v3839 = vpop.f32.mrb[0].mxu0
    %3840 = vmatprep.mubr.f32.mxu0 0.0
    %3841 = vmatmul.mubr.f32.gmra.mrb[0].mxu0 %v3741
    %v3842 = vpop.f32.mrb[0].mxu0
    %v3843 = vadd.f32 0.0, %v3842
    %v3844 = vpop.f32.mrb[0].mxu0
    %3845 = vmatprep.mubr.f32.mxu0 0.0
    %3846 = vmatmul.mubr.f32.gmra.mrb[0].mxu0 %v3744
    %v3847 = vpop.f32.mrb[0].mxu0
    %v3848 = vadd.f32 0.0, %v3847
    %v3849 = vpop.f32.mrb[0].mxu0
    %3850 = vdwg.mxu0
    %s3851 = scalar_lea.vmem %s5, 32
    %v3852 = vld [vmem:[%s3851] sm:$0xf]
    %v3854 = vsel %vm1768, %v3813, 0
    %v3857 = vsel %vm1768, %v3818, 0
    %v3860 = vsel %vm1768, %v3823, 0
    %v3863 = vsel %vm1768, %v3828, 0
    %v3866 = vsel %vm1768, %v3833, 0
    %v3869 = vsel %vm1768, %v3838, 0
    %v3872 = vsel %vm1768, %v3843, 0
    %v3875 = vsel %vm1768, %v3848, 0
    %v3878 = vsel %vm1518, %v3852, 0
    %3880 = vmatprep.subr.mxu0 0.0
    %3881 = vmatpush1.msra.mxu0 %v3878
    %3882 = vmatprep.subr.mxu0 0.0
    %3883 = vmatpush1.msra.mxu0 0.0
    %3884 = vmatprep.subr.mxu0 0.0
    %3885 = vmatpush1.msra.mxu0 0.0
    %3886 = vmatprep.subr.mxu0 0.0
    %3887 = vmatpush1.msra.mxu0 0.0
    %3888 = vmatprep.subr.mxu0 0.0
    %3889 = vmatpush1.msra.mxu0 0.0
    %3890 = vmatprep.subr.mxu0 0.0
    %3891 = vmatpush1.msra.mxu0 0.0
    %3892 = vmatprep.subr.mxu0 0.0
    %3893 = vmatpush1.msra.mxu0 0.0
    %3894 = vmatprep.subr.mxu0 0.0
    %3895 = vmatpush1.msra.mxu0 0.0
    %3896 = vmatprep.subr.mxu0 0.0
    %3897 = vmatpush1.msra.mxu0 0.0
    %3898 = vmatprep.subr.mxu0 0.0
    %3899 = vmatpush1.msra.mxu0 0.0
    %3900 = vmatprep.subr.mxu0 0.0
    %3901 = vmatpush1.msra.mxu0 0.0
    %3902 = vmatprep.subr.mxu0 0.0
    %3903 = vmatpush1.msra.mxu0 0.0
    %3904 = vmatprep.subr.mxu0 0.0
    %3905 = vmatpush1.msra.mxu0 0.0
    %3906 = vmatprep.subr.mxu0 0.0
    %3907 = vmatpush1.msra.mxu0 0.0
    %3908 = vmatprep.subr.mxu0 0.0
    %3909 = vmatpush1.msra.mxu0 0.0
    %3910 = vmatprep.subr.mxu0 0.0
    %3911 = vmatpush1.msra.mxu0 0.0
    %3912 = vmatprep.subr.mxu0 0.0
    %3913 = vmatpush1.msra.mxu0 0.0
    %3914 = vmatprep.subr.mxu0 0.0
    %3915 = vmatpush1.msra.mxu0 0.0
    %3916 = vmatprep.subr.mxu0 0.0
    %3917 = vmatpush1.msra.mxu0 0.0
    %3918 = vmatprep.subr.mxu0 0.0
    %3919 = vmatpush1.msra.mxu0 0.0
    %3920 = vmatprep.subr.mxu0 0.0
    %3921 = vmatpush1.msra.mxu0 0.0
    %3922 = vmatprep.subr.mxu0 0.0
    %3923 = vmatpush1.msra.mxu0 0.0
    %3924 = vmatprep.subr.mxu0 0.0
    %3925 = vmatpush1.msra.mxu0 0.0
    %3926 = vmatprep.subr.mxu0 0.0
    %3927 = vmatpush1.msra.mxu0 0.0
    %3928 = vmatprep.subr.mxu0 0.0
    %3929 = vmatpush1.msra.mxu0 0.0
    %3930 = vmatprep.subr.mxu0 0.0
    %3931 = vmatpush1.msra.mxu0 0.0
    %3932 = vmatprep.subr.mxu0 0.0
    %3933 = vmatpush1.msra.mxu0 0.0
    %3934 = vmatprep.subr.mxu0 0.0
    %3935 = vmatpush1.msra.mxu0 0.0
    %3936 = vmatprep.subr.mxu0 0.0
    %3937 = vmatpush1.msra.mxu0 0.0
    %3938 = vmatprep.subr.mxu0 0.0
    %3939 = vmatpush1.msra.mxu0 0.0
    %3940 = vmatprep.subr.mxu0 0.0
    %3941 = vmatpush1.msra.mxu0 0.0
    %3942 = vmatprep.subr.mxu0 0.0
    %3943 = vmatpush1.msra.mxu0 0.0
    %3944 = vmatprep.mubr.f32.mxu0 0.0
    %3945 = vmatmul.mubr.f32.gmra.mrb[0].mxu0 %v3854
    %v3946 = vpop.f32.mrb[0].mxu0
    %v3947 = vadd.f32 0.0, %v3946
    %v3948 = vpop.f32.mrb[0].mxu0
    %3949 = vmatprep.mubr.f32.mxu0 0.0
    %3950 = vmatmul.mubr.f32.gmra.mrb[0].mxu0 %v3857
    %v3951 = vpop.f32.mrb[0].mxu0
    %v3952 = vadd.f32 0.0, %v3951
    %v3953 = vpop.f32.mrb[0].mxu0
    %3954 = vmatprep.mubr.f32.mxu0 0.0
    %3955 = vmatmul.mubr.f32.gmra.mrb[0].mxu0 %v3860
    %v3956 = vpop.f32.mrb[0].mxu0
    %v3957 = vadd.f32 0.0, %v3956
    %v3958 = vpop.f32.mrb[0].mxu0
    %3959 = vmatprep.mubr.f32.mxu0 0.0
    %3960 = vmatmul.mubr.f32.gmra.mrb[0].mxu0 %v3863
    %v3961 = vpop.f32.mrb[0].mxu0
    %v3962 = vadd.f32 0.0, %v3961
    %v3963 = vpop.f32.mrb[0].mxu0
    %3964 = vmatprep.mubr.f32.mxu0 0.0
    %3965 = vmatmul.mubr.f32.gmra.mrb[0].mxu0 %v3866
    %v3966 = vpop.f32.mrb[0].mxu0
    %v3967 = vadd.f32 0.0, %v3966
    %v3968 = vpop.f32.mrb[0].mxu0
    %3969 = vmatprep.mubr.f32.mxu0 0.0
    %3970 = vmatmul.mubr.f32.gmra.mrb[0].mxu0 %v3869
    %v3971 = vpop.f32.mrb[0].mxu0
    %v3972 = vadd.f32 0.0, %v3971
    %v3973 = vpop.f32.mrb[0].mxu0
    %3974 = vmatprep.mubr.f32.mxu0 0.0
    %3975 = vmatmul.mubr.f32.gmra.mrb[0].mxu0 %v3872
    %v3976 = vpop.f32.mrb[0].mxu0
    %v3977 = vadd.f32 0.0, %v3976
    %v3978 = vpop.f32.mrb[0].mxu0
    %3979 = vmatprep.mubr.f32.mxu0 0.0
    %3980 = vmatmul.mubr.f32.gmra.mrb[0].mxu0 %v3875
    %v3981 = vpop.f32.mrb[0].mxu0
    %v3982 = vadd.f32 0.0, %v3981
    %v3983 = vpop.f32.mrb[0].mxu0
    %3984 = vdwg.mxu0
    %v3985 = vadd.f32 %v3705, %v3947
    %v3986 = vadd.f32 %v3706, %v3952
    %v3987 = vadd.f32 %v3707, %v3957
    %v3988 = vadd.f32 %v3708, %v3962
    %v3989 = vadd.f32 %v3709, %v3967
    %v3990 = vadd.f32 %v3710, %v3972
    %v3991 = vadd.f32 %v3711, %v3977
    %v3992 = vadd.f32 %v3712, %v3982
    %v3993 = vld [vmem:[%s6] sm:$0x1]
    %v3995 = vlaneseq
    %v3996 = vshrl.u32 %v3995, 7
    %v3997 = vsub.s32 0, %v3996
    %v3998 = vrot.slane %v3993, %v3997
    %v4000 = vadd.f32 %v3985, %v3998
    %v4001 = vadd.f32 %v3986, %v3998
    %v4002 = vadd.f32 %v3987, %v3998
    %v4003 = vadd.f32 %v3988, %v3998
    %v4004 = vadd.f32 %v3989, %v3998
    %v4005 = vadd.f32 %v3990, %v3998
    %v4006 = vadd.f32 %v3991, %v3998
    %v4007 = vadd.f32 %v3992, %v3998
    %v4008 = vmax.f32 %v4000, 0.0
    %v4009 = vmax.f32 %v4001, 0.0
    %v4010 = vmax.f32 %v4002, 0.0
    %v4011 = vmax.f32 %v4003, 0.0
    %v4012 = vmax.f32 %v4004, 0.0
    %v4013 = vmax.f32 %v4005, 0.0
    %v4014 = vmax.f32 %v4006, 0.0
    %v4015 = vmax.f32 %v4007, 0.0
    %v4016 = vld [vmem:[%s7] sm:$0xff]
    %v4017 = vld [vmem:[%s7 + $0x8] sm:$0xff]
    %vm4018 = vcmask 523264
    %v4020 = vsel %vm4018, %v4016, 0
    %v4023 = vsel %vm4018, %v4017, 0
    %4025 = vmatprep.subr.mxu0 0.0
    %4026 = vmatpush1.msra.mxu0 %v4008
    %4027 = vmatprep.subr.mxu0 0.0
    %4028 = vmatpush1.msra.mxu0 %v4009
    %4029 = vmatprep.subr.mxu0 0.0
    %4030 = vmatpush1.msra.mxu0 %v4010
    %4031 = vmatprep.subr.mxu0 0.0
    %4032 = vmatpush1.msra.mxu0 %v4011
    %4033 = vmatprep.subr.mxu0 0.0
    %4034 = vmatpush1.msra.mxu0 %v4012
    %4035 = vmatprep.subr.mxu0 0.0
    %4036 = vmatpush1.msra.mxu0 %v4013
    %4037 = vmatprep.subr.mxu0 0.0
    %4038 = vmatpush1.msra.mxu0 %v4014
    %4039 = vmatprep.subr.mxu0 0.0
    %4040 = vmatpush1.msra.mxu0 %v4015
    %4041 = vmatprep.subr.mxu0 0.0
    %4042 = vmatpush1.msra.mxu0 0.0
    %4043 = vmatprep.subr.mxu0 0.0
    %4044 = vmatpush1.msra.mxu0 0.0
    %4045 = vmatprep.subr.mxu0 0.0
    %4046 = vmatpush1.msra.mxu0 0.0
    %4047 = vmatprep.subr.mxu0 0.0
    %4048 = vmatpush1.msra.mxu0 0.0
    %4049 = vmatprep.subr.mxu0 0.0
    %4050 = vmatpush1.msra.mxu0 0.0
    %4051 = vmatprep.subr.mxu0 0.0
    %4052 = vmatpush1.msra.mxu0 0.0
    %4053 = vmatprep.subr.mxu0 0.0
    %4054 = vmatpush1.msra.mxu0 0.0
    %4055 = vmatprep.subr.mxu0 0.0
    %4056 = vmatpush1.msra.mxu0 0.0
    %4057 = vmatprep.subr.mxu0 0.0
    %4058 = vmatpush1.msra.mxu0 0.0
    %4059 = vmatprep.subr.mxu0 0.0
    %4060 = vmatpush1.msra.mxu0 0.0
    %4061 = vmatprep.subr.mxu0 0.0
    %4062 = vmatpush1.msra.mxu0 0.0
    %4063 = vmatprep.subr.mxu0 0.0
    %4064 = vmatpush1.msra.mxu0 0.0
    %4065 = vmatprep.subr.mxu0 0.0
    %4066 = vmatpush1.msra.mxu0 0.0
    %4067 = vmatprep.subr.mxu0 0.0
    %4068 = vmatpush1.msra.mxu0 0.0
    %4069 = vmatprep.subr.mxu0 0.0
    %4070 = vmatpush1.msra.mxu0 0.0
    %4071 = vmatprep.subr.mxu0 0.0
    %4072 = vmatpush1.msra.mxu0 0.0
    %4073 = vmatprep.subr.mxu0 0.0
    %4074 = vmatpush1.msra.mxu0 0.0
    %4075 = vmatprep.subr.mxu0 0.0
    %4076 = vmatpush1.msra.mxu0 0.0
    %4077 = vmatprep.subr.mxu0 0.0
    %4078 = vmatpush1.msra.mxu0 0.0
    %4079 = vmatprep.subr.mxu0 0.0
    %4080 = vmatpush1.msra.mxu0 0.0
    %4081 = vmatprep.subr.mxu0 0.0
    %4082 = vmatpush1.msra.mxu0 0.0
    %4083 = vmatprep.subr.mxu0 0.0
    %4084 = vmatpush1.msra.mxu0 0.0
    %4085 = vmatprep.subr.mxu0 0.0
    %4086 = vmatpush1.msra.mxu0 0.0
    %4087 = vmatprep.subr.mxu0 0.0
    %4088 = vmatpush1.msra.mxu0 0.0
    %4089 = vmatprep.mubr.f32.mxu0 0.0
    %4090 = vmatmul.mubr.f32.gmra.mrb[0].mxu0 %v4020
    %v4091 = vpop.f32.mrb[0].mxu0
    %v4092 = vadd.f32 0.0, %v4091
    %v4093 = vpop.f32.mrb[0].mxu0
    %4094 = vmatprep.mubr.f32.mxu0 0.0
    %4095 = vmatmul.mubr.f32.gmra.mrb[0].mxu0 %v4023
    %v4096 = vpop.f32.mrb[0].mxu0
    %v4097 = vadd.f32 0.0, %v4096
    %v4098 = vpop.f32.mrb[0].mxu0
    %4099 = vdwg.mxu0
    %4100 = vmatprep.subr.mxu0 0.0
    %4101 = vmatpush1.msra.mxu0 %v1082
    %4102 = vmatprep.subr.mxu0 0.0
    %4103 = vmatpush1.msra.mxu0 %v1083
    %4104 = vmatprep.subr.mxu0 0.0
    %4105 = vmatpush1.msra.mxu0 %v1084
    %4106 = vmatprep.subr.mxu0 0.0
    %4107 = vmatpush1.msra.mxu0 %v1085
    %4108 = vmatprep.subr.mxu0 0.0
    %4109 = vmatpush1.msra.mxu0 %v1086
    %4110 = vmatprep.subr.mxu0 0.0
    %4111 = vmatpush1.msra.mxu0 %v1087
    %4112 = vmatprep.subr.mxu0 0.0
    %4113 = vmatpush1.msra.mxu0 %v1088
    %4114 = vmatprep.subr.mxu0 0.0
    %4115 = vmatpush1.msra.mxu0 %v1089
    %4116 = vmatprep.subr.mxu0 0.0
    %4117 = vmatpush1.msra.mxu0 %v1090
    %4118 = vmatprep.subr.mxu0 0.0
    %4119 = vmatpush1.msra.mxu0 %v1091
    %4120 = vmatprep.subr.mxu0 0.0
    %4121 = vmatpush1.msra.mxu0 %v1092
    %4122 = vmatprep.subr.mxu0 0.0
    %4123 = vmatpush1.msra.mxu0 %v1093
    %4124 = vmatprep.subr.mxu0 0.0
    %4125 = vmatpush1.msra.mxu0 %v1094
    %4126 = vmatprep.subr.mxu0 0.0
    %4127 = vmatpush1.msra.mxu0 %v1095
    %4128 = vmatprep.subr.mxu0 0.0
    %4129 = vmatpush1.msra.mxu0 %v1096
    %4130 = vmatprep.subr.mxu0 0.0
    %4131 = vmatpush1.msra.mxu0 %v1097
    %4132 = vmatprep.subr.mxu0 0.0
    %4133 = vmatpush1.msra.mxu0 %v1098
    %4134 = vmatprep.subr.mxu0 0.0
    %4135 = vmatpush1.msra.mxu0 %v1099
    %4136 = vmatprep.subr.mxu0 0.0
    %4137 = vmatpush1.msra.mxu0 %v1100
    %4138 = vmatprep.subr.mxu0 0.0
    %4139 = vmatpush1.msra.mxu0 %v1101
    %4140 = vmatprep.subr.mxu0 0.0
    %4141 = vmatpush1.msra.mxu0 %v1102
    %4142 = vmatprep.subr.mxu0 0.0
    %4143 = vmatpush1.msra.mxu0 %v1103
    %4144 = vmatprep.subr.mxu0 0.0
    %4145 = vmatpush1.msra.mxu0 %v1104
    %4146 = vmatprep.subr.mxu0 0.0
    %4147 = vmatpush1.msra.mxu0 %v1105
    %4148 = vmatprep.subr.mxu0 0.0
    %4149 = vmatpush1.msra.mxu0 %v1106
    %4150 = vmatprep.subr.mxu0 0.0
    %4151 = vmatpush1.msra.mxu0 %v1107
    %4152 = vmatprep.subr.mxu0 0.0
    %4153 = vmatpush1.msra.mxu0 %v1108
    %4154 = vmatprep.subr.mxu0 0.0
    %4155 = vmatpush1.msra.mxu0 %v1109
    %4156 = vmatprep.subr.mxu0 0.0
    %4157 = vmatpush1.msra.mxu0 %v1110
    %4158 = vmatprep.subr.mxu0 0.0
    %4159 = vmatpush1.msra.mxu0 %v1111
    %4160 = vmatprep.subr.mxu0 0.0
    %4161 = vmatpush1.msra.mxu0 %v1112
    %4162 = vmatprep.subr.mxu0 0.0
    %4163 = vmatpush1.msra.mxu0 %v1113
    %4164 = vmatprep.mubr.f32.mxu0 %v1134
    %4165 = vmatmul.mubr.f32.gmra.mrb[0].mxu0 %v1133
    %v4166 = vpop.f32.mrb[0].mxu0
    %v4167 = vadd.f32 0.0, %v4166
    %v4168 = vpop.f32.mrb[0].mxu0
    %4169 = vmatprep.mubr.f32.mxu0 %v1138
    %4170 = vmatmul.mubr.f32.gmra.mrb[0].mxu0 %v1137
    %v4171 = vpop.f32.mrb[0].mxu0
    %v4172 = vadd.f32 0.0, %v4171
    %v4173 = vpop.f32.mrb[0].mxu0
    %4174 = vmatprep.mubr.f32.mxu0 %v1142
    %4175 = vmatmul.mubr.f32.gmra.mrb[0].mxu0 %v1141
    %v4176 = vpop.f32.mrb[0].mxu0
    %v4177 = vadd.f32 0.0, %v4176
    %v4178 = vpop.f32.mrb[0].mxu0
    %4179 = vmatprep.mubr.f32.mxu0 %v1146
    %4180 = vmatmul.mubr.f32.gmra.mrb[0].mxu0 %v1145
    %v4181 = vpop.f32.mrb[0].mxu0
    %v4182 = vadd.f32 0.0, %v4181
    %v4183 = vpop.f32.mrb[0].mxu0
    %4184 = vmatprep.mubr.f32.mxu0 %v1150
    %4185 = vmatmul.mubr.f32.gmra.mrb[0].mxu0 %v1149
    %v4186 = vpop.f32.mrb[0].mxu0
    %v4187 = vadd.f32 0.0, %v4186
    %v4188 = vpop.f32.mrb[0].mxu0
    %4189 = vmatprep.mubr.f32.mxu0 %v1154
    %4190 = vmatmul.mubr.f32.gmra.mrb[0].mxu0 %v1153
    %v4191 = vpop.f32.mrb[0].mxu0
    %v4192 = vadd.f32 0.0, %v4191
    %v4193 = vpop.f32.mrb[0].mxu0
    %4194 = vmatprep.mubr.f32.mxu0 %v1158
    %4195 = vmatmul.mubr.f32.gmra.mrb[0].mxu0 %v1157
    %v4196 = vpop.f32.mrb[0].mxu0
    %v4197 = vadd.f32 0.0, %v4196
    %v4198 = vpop.f32.mrb[0].mxu0
    %4199 = vmatprep.mubr.f32.mxu0 %v1162
    %4200 = vmatmul.mubr.f32.gmra.mrb[0].mxu0 %v1161
    %v4201 = vpop.f32.mrb[0].mxu0
    %v4202 = vadd.f32 0.0, %v4201
    %v4203 = vpop.f32.mrb[0].mxu0
    %4204 = vmatprep.mubr.f32.mxu0 %v1166
    %4205 = vmatmul.mubr.f32.gmra.mrb[0].mxu0 %v1165
    %v4206 = vpop.f32.mrb[0].mxu0
    %v4207 = vadd.f32 0.0, %v4206
    %v4208 = vpop.f32.mrb[0].mxu0
    %4209 = vmatprep.mubr.f32.mxu0 %v1170
    %4210 = vmatmul.mubr.f32.gmra.mrb[0].mxu0 %v1169
    %v4211 = vpop.f32.mrb[0].mxu0
    %v4212 = vadd.f32 0.0, %v4211
    %v4213 = vpop.f32.mrb[0].mxu0
    %4214 = vmatprep.mubr.f32.mxu0 %v1174
    %4215 = vmatmul.mubr.f32.gmra.mrb[0].mxu0 %v1173
    %v4216 = vpop.f32.mrb[0].mxu0
    %v4217 = vadd.f32 0.0, %v4216
    %v4218 = vpop.f32.mrb[0].mxu0
    %4219 = vmatprep.mubr.f32.mxu0 %v1178
    %4220 = vmatmul.mubr.f32.gmra.mrb[0].mxu0 %v1177
    %v4221 = vpop.f32.mrb[0].mxu0
    %v4222 = vadd.f32 0.0, %v4221
    %v4223 = vpop.f32.mrb[0].mxu0
    %4224 = vmatprep.mubr.f32.mxu0 %v1182
    %4225 = vmatmul.mubr.f32.gmra.mrb[0].mxu0 %v1181
    %v4226 = vpop.f32.mrb[0].mxu0
    %v4227 = vadd.f32 0.0, %v4226
    %v4228 = vpop.f32.mrb[0].mxu0
    %4229 = vdwg.mxu0
    %4230 = vmatprep.subr.mxu0 0.0
    %4231 = vmatpush1.msra.mxu0 %v1114
    %4232 = vmatprep.subr.mxu0 0.0
    %4233 = vmatpush1.msra.mxu0 %v1115
    %4234 = vmatprep.subr.mxu0 0.0
    %4235 = vmatpush1.msra.mxu0 %v1116
    %4236 = vmatprep.subr.mxu0 0.0
    %4237 = vmatpush1.msra.mxu0 %v1117
    %4238 = vmatprep.subr.mxu0 0.0
    %4239 = vmatpush1.msra.mxu0 %v1118
    %4240 = vmatprep.subr.mxu0 0.0
    %4241 = vmatpush1.msra.mxu0 %v1119
    %4242 = vmatprep.subr.mxu0 0.0
    %4243 = vmatpush1.msra.mxu0 %v1120
    %4244 = vmatprep.subr.mxu0 0.0
    %4245 = vmatpush1.msra.mxu0 %v1121
    %4246 = vmatprep.subr.mxu0 0.0
    %4247 = vmatpush1.msra.mxu0 %v1122
    %4248 = vmatprep.subr.mxu0 0.0
    %4249 = vmatpush1.msra.mxu0 %v1123
    %4250 = vmatprep.subr.mxu0 0.0
    %4251 = vmatpush1.msra.mxu0 %v1124
    %4252 = vmatprep.subr.mxu0 0.0
    %4253 = vmatpush1.msra.mxu0 %v1125
    %4254 = vmatprep.subr.mxu0 0.0
    %4255 = vmatpush1.msra.mxu0 %v1126
    %4256 = vmatprep.subr.mxu0 0.0
    %4257 = vmatpush1.msra.mxu0 %v1127
    %4258 = vmatprep.subr.mxu0 0.0
    %4259 = vmatpush1.msra.mxu0 %v1128
    %4260 = vmatprep.subr.mxu0 0.0
    %4261 = vmatpush1.msra.mxu0 %v1129
    %4262 = vmatprep.subr.mxu0 0.0
    %4263 = vmatpush1.msra.mxu0 %v1130
    %4264 = vmatprep.subr.mxu0 0.0
    %4265 = vmatpush1.msra.mxu0 %v1131
    %4266 = vmatprep.subr.mxu0 0.0
    %4267 = vmatpush1.msra.mxu0 0.0
    %4268 = vmatprep.subr.mxu0 0.0
    %4269 = vmatpush1.msra.mxu0 0.0
    %4270 = vmatprep.subr.mxu0 0.0
    %4271 = vmatpush1.msra.mxu0 0.0
    %4272 = vmatprep.subr.mxu0 0.0
    %4273 = vmatpush1.msra.mxu0 0.0
    %4274 = vmatprep.subr.mxu0 0.0
    %4275 = vmatpush1.msra.mxu0 0.0
    %4276 = vmatprep.subr.mxu0 0.0
    %4277 = vmatpush1.msra.mxu0 0.0
    %4278 = vmatprep.subr.mxu0 0.0
    %4279 = vmatpush1.msra.mxu0 0.0
    %4280 = vmatprep.subr.mxu0 0.0
    %4281 = vmatpush1.msra.mxu0 0.0
    %4282 = vmatprep.subr.mxu0 0.0
    %4283 = vmatpush1.msra.mxu0 0.0
    %4284 = vmatprep.subr.mxu0 0.0
    %4285 = vmatpush1.msra.mxu0 0.0
    %4286 = vmatprep.subr.mxu0 0.0
    %4287 = vmatpush1.msra.mxu0 0.0
    %4288 = vmatprep.subr.mxu0 0.0
    %4289 = vmatpush1.msra.mxu0 0.0
    %4290 = vmatprep.subr.mxu0 0.0
    %4291 = vmatpush1.msra.mxu0 0.0
    %4292 = vmatprep.subr.mxu0 0.0
    %4293 = vmatpush1.msra.mxu0 0.0
    %4294 = vmatprep.mubr.f32.mxu0 %v1187
    %4295 = vmatmul.mubr.f32.gmra.mrb[0].mxu0 %v1135
    %v4296 = vpop.f32.mrb[0].mxu0
    %v4297 = vadd.f32 %v4167, %v4296
    %v4298 = vpop.f32.mrb[0].mxu0
    %4299 = vmatprep.mubr.f32.mxu0 %v1190
    %4300 = vmatmul.mubr.f32.gmra.mrb[0].mxu0 %v1139
    %v4301 = vpop.f32.mrb[0].mxu0
    %v4302 = vadd.f32 %v4172, %v4301
    %v4303 = vpop.f32.mrb[0].mxu0
    %4304 = vmatprep.mubr.f32.mxu0 %v1193
    %4305 = vmatmul.mubr.f32.gmra.mrb[0].mxu0 %v1143
    %v4306 = vpop.f32.mrb[0].mxu0
    %v4307 = vadd.f32 %v4177, %v4306
    %v4308 = vpop.f32.mrb[0].mxu0
    %4309 = vmatprep.mubr.f32.mxu0 %v1196
    %4310 = vmatmul.mubr.f32.gmra.mrb[0].mxu0 %v1147
    %v4311 = vpop.f32.mrb[0].mxu0
    %v4312 = vadd.f32 %v4182, %v4311
    %v4313 = vpop.f32.mrb[0].mxu0
    %4314 = vmatprep.mubr.f32.mxu0 %v1199
    %4315 = vmatmul.mubr.f32.gmra.mrb[0].mxu0 %v1151
    %v4316 = vpop.f32.mrb[0].mxu0
    %v4317 = vadd.f32 %v4187, %v4316
    %v4318 = vpop.f32.mrb[0].mxu0
    %4319 = vmatprep.mubr.f32.mxu0 %v1202
    %4320 = vmatmul.mubr.f32.gmra.mrb[0].mxu0 %v1155
    %v4321 = vpop.f32.mrb[0].mxu0
    %v4322 = vadd.f32 %v4192, %v4321
    %v4323 = vpop.f32.mrb[0].mxu0
    %4324 = vmatprep.mubr.f32.mxu0 %v1205
    %4325 = vmatmul.mubr.f32.gmra.mrb[0].mxu0 %v1159
    %v4326 = vpop.f32.mrb[0].mxu0
    %v4327 = vadd.f32 %v4197, %v4326
    %v4328 = vpop.f32.mrb[0].mxu0
    %4329 = vmatprep.mubr.f32.mxu0 %v1208
    %4330 = vmatmul.mubr.f32.gmra.mrb[0].mxu0 %v1163
    %v4331 = vpop.f32.mrb[0].mxu0
    %v4332 = vadd.f32 %v4202, %v4331
    %v4333 = vpop.f32.mrb[0].mxu0
    %4334 = vmatprep.mubr.f32.mxu0 %v1211
    %4335 = vmatmul.mubr.f32.gmra.mrb[0].mxu0 %v1167
    %v4336 = vpop.f32.mrb[0].mxu0
    %v4337 = vadd.f32 %v4207, %v4336
    %v4338 = vpop.f32.mrb[0].mxu0
    %4339 = vmatprep.mubr.f32.mxu0 %v1214
    %4340 = vmatmul.mubr.f32.gmra.mrb[0].mxu0 %v1171
    %v4341 = vpop.f32.mrb[0].mxu0
    %v4342 = vadd.f32 %v4212, %v4341
    %v4343 = vpop.f32.mrb[0].mxu0
    %4344 = vmatprep.mubr.f32.mxu0 %v1217
    %4345 = vmatmul.mubr.f32.gmra.mrb[0].mxu0 %v1175
    %v4346 = vpop.f32.mrb[0].mxu0
    %v4347 = vadd.f32 %v4217, %v4346
    %v4348 = vpop.f32.mrb[0].mxu0
    %4349 = vmatprep.mubr.f32.mxu0 %v1220
    %4350 = vmatmul.mubr.f32.gmra.mrb[0].mxu0 %v1179
    %v4351 = vpop.f32.mrb[0].mxu0
    %v4352 = vadd.f32 %v4222, %v4351
    %v4353 = vpop.f32.mrb[0].mxu0
    %4354 = vmatprep.mubr.f32.mxu0 %v1223
    %4355 = vmatmul.mubr.f32.gmra.mrb[0].mxu0 %v1183
    %v4356 = vpop.f32.mrb[0].mxu0
    %v4357 = vadd.f32 %v4227, %v4356
    %v4358 = vpop.f32.mrb[0].mxu0
    %4359 = vdwg.mxu0
    %v4361 = vsel %vm1518, %v4357, 0
    %4363 = vmatprep.subr.mxu0 0.0
    %4364 = vmatpush1.msra.mxu0 %v4297
    %4365 = vmatprep.subr.mxu0 0.0
    %4366 = vmatpush1.msra.mxu0 %v4302
    %4367 = vmatprep.subr.mxu0 0.0
    %4368 = vmatpush1.msra.mxu0 %v4307
    %4369 = vmatprep.subr.mxu0 0.0
    %4370 = vmatpush1.msra.mxu0 %v4312
    %4371 = vmatprep.subr.mxu0 0.0
    %4372 = vmatpush1.msra.mxu0 %v4317
    %4373 = vmatprep.subr.mxu0 0.0
    %4374 = vmatpush1.msra.mxu0 %v4322
    %4375 = vmatprep.subr.mxu0 0.0
    %4376 = vmatpush1.msra.mxu0 %v4327
    %4377 = vmatprep.subr.mxu0 0.0
    %4378 = vmatpush1.msra.mxu0 %v4332
    %4379 = vmatprep.subr.mxu0 0.0
    %4380 = vmatpush1.msra.mxu0 %v4337
    %4381 = vmatprep.subr.mxu0 0.0
    %4382 = vmatpush1.msra.mxu0 %v4342
    %4383 = vmatprep.subr.mxu0 0.0
    %4384 = vmatpush1.msra.mxu0 %v4347
    %4385 = vmatprep.subr.mxu0 0.0
    %4386 = vmatpush1.msra.mxu0 %v4352
    %4387 = vmatprep.subr.mxu0 0.0
    %4388 = vmatpush1.msra.mxu0 %v4361
    %4389 = vmatprep.subr.mxu0 0.0
    %4390 = vmatpush1.msra.mxu0 0.0
    %4391 = vmatprep.subr.mxu0 0.0
    %4392 = vmatpush1.msra.mxu0 0.0
    %4393 = vmatprep.subr.mxu0 0.0
    %4394 = vmatpush1.msra.mxu0 0.0
    %4395 = vmatprep.subr.mxu0 0.0
    %4396 = vmatpush1.msra.mxu0 0.0
    %4397 = vmatprep.subr.mxu0 0.0
    %4398 = vmatpush1.msra.mxu0 0.0
    %4399 = vmatprep.subr.mxu0 0.0
    %4400 = vmatpush1.msra.mxu0 0.0
    %4401 = vmatprep.subr.mxu0 0.0
    %4402 = vmatpush1.msra.mxu0 0.0
    %4403 = vmatprep.subr.mxu0 0.0
    %4404 = vmatpush1.msra.mxu0 0.0
    %4405 = vmatprep.subr.mxu0 0.0
    %4406 = vmatpush1.msra.mxu0 0.0
    %4407 = vmatprep.subr.mxu0 0.0
    %4408 = vmatpush1.msra.mxu0 0.0
    %4409 = vmatprep.subr.mxu0 0.0
    %4410 = vmatpush1.msra.mxu0 0.0
    %4411 = vmatprep.subr.mxu0 0.0
    %4412 = vmatpush1.msra.mxu0 0.0
    %4413 = vmatprep.subr.mxu0 0.0
    %4414 = vmatpush1.msra.mxu0 0.0
    %4415 = vmatprep.subr.mxu0 0.0
    %4416 = vmatpush1.msra.mxu0 0.0
    %4417 = vmatprep.subr.mxu0 0.0
    %4418 = vmatpush1.msra.mxu0 0.0
    %4419 = vmatprep.subr.mxu0 0.0
    %4420 = vmatpush1.msra.mxu0 0.0
    %4421 = vmatprep.subr.mxu0 0.0
    %4422 = vmatpush1.msra.mxu0 0.0
    %4423 = vmatprep.subr.mxu0 0.0
    %4424 = vmatpush1.msra.mxu0 0.0
    %4425 = vmatprep.subr.mxu0 0.0
    %4426 = vmatpush1.msra.mxu0 0.0
    %4427 = vmatprep.mubr.f32.mxu0 0.0
    %4428 = vmatmul.mubr.f32.gmra.mrb[0].mxu0 %v1495
    %v4429 = vpop.f32.mrb[0].mxu0
    %v4430 = vadd.f32 0.0, %v4429
    %v4431 = vpop.f32.mrb[0].mxu0
    %4432 = vmatprep.mubr.f32.mxu0 0.0
    %4433 = vmatmul.mubr.f32.gmra.mrb[0].mxu0 %v1498
    %v4434 = vpop.f32.mrb[0].mxu0
    %v4435 = vadd.f32 0.0, %v4434
    %v4436 = vpop.f32.mrb[0].mxu0
    %4437 = vmatprep.mubr.f32.mxu0 0.0
    %4438 = vmatmul.mubr.f32.gmra.mrb[0].mxu0 %v1501
    %v4439 = vpop.f32.mrb[0].mxu0
    %v4440 = vadd.f32 0.0, %v4439
    %v4441 = vpop.f32.mrb[0].mxu0
    %4442 = vmatprep.mubr.f32.mxu0 0.0
    %4443 = vmatmul.mubr.f32.gmra.mrb[0].mxu0 %v1504
    %v4444 = vpop.f32.mrb[0].mxu0
    %v4445 = vadd.f32 0.0, %v4444
    %v4446 = vpop.f32.mrb[0].mxu0
    %4447 = vmatprep.mubr.f32.mxu0 0.0
    %4448 = vmatmul.mubr.f32.gmra.mrb[0].mxu0 %v1507
    %v4449 = vpop.f32.mrb[0].mxu0
    %v4450 = vadd.f32 0.0, %v4449
    %v4451 = vpop.f32.mrb[0].mxu0
    %4452 = vmatprep.mubr.f32.mxu0 0.0
    %4453 = vmatmul.mubr.f32.gmra.mrb[0].mxu0 %v1510
    %v4454 = vpop.f32.mrb[0].mxu0
    %v4455 = vadd.f32 0.0, %v4454
    %v4456 = vpop.f32.mrb[0].mxu0
    %4457 = vmatprep.mubr.f32.mxu0 0.0
    %4458 = vmatmul.mubr.f32.gmra.mrb[0].mxu0 %v1513
    %v4459 = vpop.f32.mrb[0].mxu0
    %v4460 = vadd.f32 0.0, %v4459
    %v4461 = vpop.f32.mrb[0].mxu0
    %4462 = vmatprep.mubr.f32.mxu0 0.0
    %4463 = vmatmul.mubr.f32.gmra.mrb[0].mxu0 %v1516
    %v4464 = vpop.f32.mrb[0].mxu0
    %v4465 = vadd.f32 0.0, %v4464
    %v4466 = vpop.f32.mrb[0].mxu0
    %4467 = vdwg.mxu0
    %4468 = vmatprep.subr.mxu0 0.0
    %4469 = vmatpush1.msra.mxu0 %v4297
    %4470 = vmatprep.subr.mxu0 0.0
    %4471 = vmatpush1.msra.mxu0 %v4302
    %4472 = vmatprep.subr.mxu0 0.0
    %4473 = vmatpush1.msra.mxu0 %v4307
    %4474 = vmatprep.subr.mxu0 0.0
    %4475 = vmatpush1.msra.mxu0 %v4312
    %4476 = vmatprep.subr.mxu0 0.0
    %4477 = vmatpush1.msra.mxu0 %v4317
    %4478 = vmatprep.subr.mxu0 0.0
    %4479 = vmatpush1.msra.mxu0 %v4322
    %4480 = vmatprep.subr.mxu0 0.0
    %4481 = vmatpush1.msra.mxu0 %v4327
    %4482 = vmatprep.subr.mxu0 0.0
    %4483 = vmatpush1.msra.mxu0 %v4332
    %4484 = vmatprep.subr.mxu0 0.0
    %4485 = vmatpush1.msra.mxu0 %v4337
    %4486 = vmatprep.subr.mxu0 0.0
    %4487 = vmatpush1.msra.mxu0 %v4342
    %4488 = vmatprep.subr.mxu0 0.0
    %4489 = vmatpush1.msra.mxu0 %v4347
    %4490 = vmatprep.subr.mxu0 0.0
    %4491 = vmatpush1.msra.mxu0 %v4352
    %4492 = vmatprep.subr.mxu0 0.0
    %4493 = vmatpush1.msra.mxu0 %v4361
    %4494 = vmatprep.subr.mxu0 0.0
    %4495 = vmatpush1.msra.mxu0 0.0
    %4496 = vmatprep.subr.mxu0 0.0
    %4497 = vmatpush1.msra.mxu0 0.0
    %4498 = vmatprep.subr.mxu0 0.0
    %4499 = vmatpush1.msra.mxu0 0.0
    %4500 = vmatprep.subr.mxu0 0.0
    %4501 = vmatpush1.msra.mxu0 0.0
    %4502 = vmatprep.subr.mxu0 0.0
    %4503 = vmatpush1.msra.mxu0 0.0
    %4504 = vmatprep.subr.mxu0 0.0
    %4505 = vmatpush1.msra.mxu0 0.0
    %4506 = vmatprep.subr.mxu0 0.0
    %4507 = vmatpush1.msra.mxu0 0.0
    %4508 = vmatprep.subr.mxu0 0.0
    %4509 = vmatpush1.msra.mxu0 0.0
    %4510 = vmatprep.subr.mxu0 0.0
    %4511 = vmatpush1.msra.mxu0 0.0
    %4512 = vmatprep.subr.mxu0 0.0
    %4513 = vmatpush1.msra.mxu0 0.0
    %4514 = vmatprep.subr.mxu0 0.0
    %4515 = vmatpush1.msra.mxu0 0.0
    %4516 = vmatprep.subr.mxu0 0.0
    %4517 = vmatpush1.msra.mxu0 0.0
    %4518 = vmatprep.subr.mxu0 0.0
    %4519 = vmatpush1.msra.mxu0 0.0
    %4520 = vmatprep.subr.mxu0 0.0
    %4521 = vmatpush1.msra.mxu0 0.0
    %4522 = vmatprep.subr.mxu0 0.0
    %4523 = vmatpush1.msra.mxu0 0.0
    %4524 = vmatprep.subr.mxu0 0.0
    %4525 = vmatpush1.msra.mxu0 0.0
    %4526 = vmatprep.subr.mxu0 0.0
    %4527 = vmatpush1.msra.mxu0 0.0
    %4528 = vmatprep.subr.mxu0 0.0
    %4529 = vmatpush1.msra.mxu0 0.0
    %4530 = vmatprep.subr.mxu0 0.0
    %4531 = vmatpush1.msra.mxu0 0.0
    %4532 = vmatprep.mubr.f32.mxu0 0.0
    %4533 = vmatmul.mubr.f32.gmra.mrb[0].mxu0 %v1638
    %v4534 = vpop.f32.mrb[0].mxu0
    %v4535 = vadd.f32 0.0, %v4534
    %v4536 = vpop.f32.mrb[0].mxu0
    %4537 = vmatprep.mubr.f32.mxu0 0.0
    %4538 = vmatmul.mubr.f32.gmra.mrb[0].mxu0 %v1641
    %v4539 = vpop.f32.mrb[0].mxu0
    %v4540 = vadd.f32 0.0, %v4539
    %v4541 = vpop.f32.mrb[0].mxu0
    %4542 = vmatprep.mubr.f32.mxu0 0.0
    %4543 = vmatmul.mubr.f32.gmra.mrb[0].mxu0 %v1644
    %v4544 = vpop.f32.mrb[0].mxu0
    %v4545 = vadd.f32 0.0, %v4544
    %v4546 = vpop.f32.mrb[0].mxu0
    %4547 = vmatprep.mubr.f32.mxu0 0.0
    %4548 = vmatmul.mubr.f32.gmra.mrb[0].mxu0 %v1647
    %v4549 = vpop.f32.mrb[0].mxu0
    %v4550 = vadd.f32 0.0, %v4549
    %v4551 = vpop.f32.mrb[0].mxu0
    %4552 = vmatprep.mubr.f32.mxu0 0.0
    %4553 = vmatmul.mubr.f32.gmra.mrb[0].mxu0 %v1650
    %v4554 = vpop.f32.mrb[0].mxu0
    %v4555 = vadd.f32 0.0, %v4554
    %v4556 = vpop.f32.mrb[0].mxu0
    %4557 = vmatprep.mubr.f32.mxu0 0.0
    %4558 = vmatmul.mubr.f32.gmra.mrb[0].mxu0 %v1653
    %v4559 = vpop.f32.mrb[0].mxu0
    %v4560 = vadd.f32 0.0, %v4559
    %v4561 = vpop.f32.mrb[0].mxu0
    %4562 = vmatprep.mubr.f32.mxu0 0.0
    %4563 = vmatmul.mubr.f32.gmra.mrb[0].mxu0 %v1656
    %v4564 = vpop.f32.mrb[0].mxu0
    %v4565 = vadd.f32 0.0, %v4564
    %v4566 = vpop.f32.mrb[0].mxu0
    %4567 = vmatprep.mubr.f32.mxu0 0.0
    %4568 = vmatmul.mubr.f32.gmra.mrb[0].mxu0 %v1659
    %v4569 = vpop.f32.mrb[0].mxu0
    %v4570 = vadd.f32 0.0, %v4569
    %v4571 = vpop.f32.mrb[0].mxu0
    %4572 = vdwg.mxu0
    %v4574 = vsel %vm1768, %v4535, 0
    %v4577 = vsel %vm1768, %v4540, 0
    %v4580 = vsel %vm1768, %v4545, 0
    %v4583 = vsel %vm1768, %v4550, 0
    %v4586 = vsel %vm1768, %v4555, 0
    %v4589 = vsel %vm1768, %v4560, 0
    %v4592 = vsel %vm1768, %v4565, 0
    %v4595 = vsel %vm1768, %v4570, 0
    %4597 = vmatprep.subr.mxu0 0.0
    %4598 = vmatpush1.msra.mxu0 %v1794
    %4599 = vmatprep.subr.mxu0 0.0
    %4600 = vmatpush1.msra.mxu0 0.0
    %4601 = vmatprep.subr.mxu0 0.0
    %4602 = vmatpush1.msra.mxu0 0.0
    %4603 = vmatprep.subr.mxu0 0.0
    %4604 = vmatpush1.msra.mxu0 0.0
    %4605 = vmatprep.subr.mxu0 0.0
    %4606 = vmatpush1.msra.mxu0 0.0
    %4607 = vmatprep.subr.mxu0 0.0
    %4608 = vmatpush1.msra.mxu0 0.0
    %4609 = vmatprep.subr.mxu0 0.0
    %4610 = vmatpush1.msra.mxu0 0.0
    %4611 = vmatprep.subr.mxu0 0.0
    %4612 = vmatpush1.msra.mxu0 0.0
    %4613 = vmatprep.subr.mxu0 0.0
    %4614 = vmatpush1.msra.mxu0 0.0
    %4615 = vmatprep.subr.mxu0 0.0
    %4616 = vmatpush1.msra.mxu0 0.0
    %4617 = vmatprep.subr.mxu0 0.0
    %4618 = vmatpush1.msra.mxu0 0.0
    %4619 = vmatprep.subr.mxu0 0.0
    %4620 = vmatpush1.msra.mxu0 0.0
    %4621 = vmatprep.subr.mxu0 0.0
    %4622 = vmatpush1.msra.mxu0 0.0
    %4623 = vmatprep.subr.mxu0 0.0
    %4624 = vmatpush1.msra.mxu0 0.0
    %4625 = vmatprep.subr.mxu0 0.0
    %4626 = vmatpush1.msra.mxu0 0.0
    %4627 = vmatprep.subr.mxu0 0.0
    %4628 = vmatpush1.msra.mxu0 0.0
    %4629 = vmatprep.subr.mxu0 0.0
    %4630 = vmatpush1.msra.mxu0 0.0
    %4631 = vmatprep.subr.mxu0 0.0
    %4632 = vmatpush1.msra.mxu0 0.0
    %4633 = vmatprep.subr.mxu0 0.0
    %4634 = vmatpush1.msra.mxu0 0.0
    %4635 = vmatprep.subr.mxu0 0.0
    %4636 = vmatpush1.msra.mxu0 0.0
    %4637 = vmatprep.subr.mxu0 0.0
    %4638 = vmatpush1.msra.mxu0 0.0
    %4639 = vmatprep.subr.mxu0 0.0
    %4640 = vmatpush1.msra.mxu0 0.0
    %4641 = vmatprep.subr.mxu0 0.0
    %4642 = vmatpush1.msra.mxu0 0.0
    %4643 = vmatprep.subr.mxu0 0.0
    %4644 = vmatpush1.msra.mxu0 0.0
    %4645 = vmatprep.subr.mxu0 0.0
    %4646 = vmatpush1.msra.mxu0 0.0
    %4647 = vmatprep.subr.mxu0 0.0
    %4648 = vmatpush1.msra.mxu0 0.0
    %4649 = vmatprep.subr.mxu0 0.0
    %4650 = vmatpush1.msra.mxu0 0.0
    %4651 = vmatprep.subr.mxu0 0.0
    %4652 = vmatpush1.msra.mxu0 0.0
    %4653 = vmatprep.subr.mxu0 0.0
    %4654 = vmatpush1.msra.mxu0 0.0
    %4655 = vmatprep.subr.mxu0 0.0
    %4656 = vmatpush1.msra.mxu0 0.0
    %4657 = vmatprep.subr.mxu0 0.0
    %4658 = vmatpush1.msra.mxu0 0.0
    %4659 = vmatprep.subr.mxu0 0.0
    %4660 = vmatpush1.msra.mxu0 0.0
    %4661 = vmatprep.mubr.f32.mxu0 0.0
    %4662 = vmatmul.mubr.f32.gmra.mrb[0].mxu0 %v4574
    %v4663 = vpop.f32.mrb[0].mxu0
    %v4664 = vadd.f32 0.0, %v4663
    %v4665 = vpop.f32.mrb[0].mxu0
    %4666 = vmatprep.mubr.f32.mxu0 0.0
    %4667 = vmatmul.mubr.f32.gmra.mrb[0].mxu0 %v4577
    %v4668 = vpop.f32.mrb[0].mxu0
    %v4669 = vadd.f32 0.0, %v4668
    %v4670 = vpop.f32.mrb[0].mxu0
    %4671 = vmatprep.mubr.f32.mxu0 0.0
    %4672 = vmatmul.mubr.f32.gmra.mrb[0].mxu0 %v4580
    %v4673 = vpop.f32.mrb[0].mxu0
    %v4674 = vadd.f32 0.0, %v4673
    %v4675 = vpop.f32.mrb[0].mxu0
    %4676 = vmatprep.mubr.f32.mxu0 0.0
    %4677 = vmatmul.mubr.f32.gmra.mrb[0].mxu0 %v4583
    %v4678 = vpop.f32.mrb[0].mxu0
    %v4679 = vadd.f32 0.0, %v4678
    %v4680 = vpop.f32.mrb[0].mxu0
    %4681 = vmatprep.mubr.f32.mxu0 0.0
    %4682 = vmatmul.mubr.f32.gmra.mrb[0].mxu0 %v4586
    %v4683 = vpop.f32.mrb[0].mxu0
    %v4684 = vadd.f32 0.0, %v4683
    %v4685 = vpop.f32.mrb[0].mxu0
    %4686 = vmatprep.mubr.f32.mxu0 0.0
    %4687 = vmatmul.mubr.f32.gmra.mrb[0].mxu0 %v4589
    %v4688 = vpop.f32.mrb[0].mxu0
    %v4689 = vadd.f32 0.0, %v4688
    %v4690 = vpop.f32.mrb[0].mxu0
    %4691 = vmatprep.mubr.f32.mxu0 0.0
    %4692 = vmatmul.mubr.f32.gmra.mrb[0].mxu0 %v4592
    %v4693 = vpop.f32.mrb[0].mxu0
    %v4694 = vadd.f32 0.0, %v4693
    %v4695 = vpop.f32.mrb[0].mxu0
    %4696 = vmatprep.mubr.f32.mxu0 0.0
    %4697 = vmatmul.mubr.f32.gmra.mrb[0].mxu0 %v4595
    %v4698 = vpop.f32.mrb[0].mxu0
    %v4699 = vadd.f32 0.0, %v4698
    %v4700 = vpop.f32.mrb[0].mxu0
    %4701 = vdwg.mxu0
    %v4703 = vsel %vm1768, %v4430, 0
    %v4706 = vsel %vm1768, %v4435, 0
    %v4709 = vsel %vm1768, %v4440, 0
    %v4712 = vsel %vm1768, %v4445, 0
    %v4715 = vsel %vm1768, %v4450, 0
    %v4718 = vsel %vm1768, %v4455, 0
    %v4721 = vsel %vm1768, %v4460, 0
    %v4724 = vsel %vm1768, %v4465, 0
    %4726 = vmatprep.subr.mxu0 0.0
    %4727 = vmatpush1.msra.mxu0 %v1926
    %4728 = vmatprep.subr.mxu0 0.0
    %4729 = vmatpush1.msra.mxu0 0.0
    %4730 = vmatprep.subr.mxu0 0.0
    %4731 = vmatpush1.msra.mxu0 0.0
    %4732 = vmatprep.subr.mxu0 0.0
    %4733 = vmatpush1.msra.mxu0 0.0
    %4734 = vmatprep.subr.mxu0 0.0
    %4735 = vmatpush1.msra.mxu0 0.0
    %4736 = vmatprep.subr.mxu0 0.0
    %4737 = vmatpush1.msra.mxu0 0.0
    %4738 = vmatprep.subr.mxu0 0.0
    %4739 = vmatpush1.msra.mxu0 0.0
    %4740 = vmatprep.subr.mxu0 0.0
    %4741 = vmatpush1.msra.mxu0 0.0
    %4742 = vmatprep.subr.mxu0 0.0
    %4743 = vmatpush1.msra.mxu0 0.0
    %4744 = vmatprep.subr.mxu0 0.0
    %4745 = vmatpush1.msra.mxu0 0.0
    %4746 = vmatprep.subr.mxu0 0.0
    %4747 = vmatpush1.msra.mxu0 0.0
    %4748 = vmatprep.subr.mxu0 0.0
    %4749 = vmatpush1.msra.mxu0 0.0
    %4750 = vmatprep.subr.mxu0 0.0
    %4751 = vmatpush1.msra.mxu0 0.0
    %4752 = vmatprep.subr.mxu0 0.0
    %4753 = vmatpush1.msra.mxu0 0.0
    %4754 = vmatprep.subr.mxu0 0.0
    %4755 = vmatpush1.msra.mxu0 0.0
    %4756 = vmatprep.subr.mxu0 0.0
    %4757 = vmatpush1.msra.mxu0 0.0
    %4758 = vmatprep.subr.mxu0 0.0
    %4759 = vmatpush1.msra.mxu0 0.0
    %4760 = vmatprep.subr.mxu0 0.0
    %4761 = vmatpush1.msra.mxu0 0.0
    %4762 = vmatprep.subr.mxu0 0.0
    %4763 = vmatpush1.msra.mxu0 0.0
    %4764 = vmatprep.subr.mxu0 0.0
    %4765 = vmatpush1.msra.mxu0 0.0
    %4766 = vmatprep.subr.mxu0 0.0
    %4767 = vmatpush1.msra.mxu0 0.0
    %4768 = vmatprep.subr.mxu0 0.0
    %4769 = vmatpush1.msra.mxu0 0.0
    %4770 = vmatprep.subr.mxu0 0.0
    %4771 = vmatpush1.msra.mxu0 0.0
    %4772 = vmatprep.subr.mxu0 0.0
    %4773 = vmatpush1.msra.mxu0 0.0
    %4774 = vmatprep.subr.mxu0 0.0
    %4775 = vmatpush1.msra.mxu0 0.0
    %4776 = vmatprep.subr.mxu0 0.0
    %4777 = vmatpush1.msra.mxu0 0.0
    %4778 = vmatprep.subr.mxu0 0.0
    %4779 = vmatpush1.msra.mxu0 0.0
    %4780 = vmatprep.subr.mxu0 0.0
    %4781 = vmatpush1.msra.mxu0 0.0
    %4782 = vmatprep.subr.mxu0 0.0
    %4783 = vmatpush1.msra.mxu0 0.0
    %4784 = vmatprep.subr.mxu0 0.0
    %4785 = vmatpush1.msra.mxu0 0.0
    %4786 = vmatprep.subr.mxu0 0.0
    %4787 = vmatpush1.msra.mxu0 0.0
    %4788 = vmatprep.subr.mxu0 0.0
    %4789 = vmatpush1.msra.mxu0 0.0
    %4790 = vmatprep.mubr.f32.mxu0 0.0
    %4791 = vmatmul.mubr.f32.gmra.mrb[0].mxu0 %v4703
    %v4792 = vpop.f32.mrb[0].mxu0
    %v4793 = vadd.f32 %v4664, %v4792
    %v4794 = vpop.f32.mrb[0].mxu0
    %4795 = vmatprep.mubr.f32.mxu0 0.0
    %4796 = vmatmul.mubr.f32.gmra.mrb[0].mxu0 %v4706
    %v4797 = vpop.f32.mrb[0].mxu0
    %v4798 = vadd.f32 %v4669, %v4797
    %v4799 = vpop.f32.mrb[0].mxu0
    %4800 = vmatprep.mubr.f32.mxu0 0.0
    %4801 = vmatmul.mubr.f32.gmra.mrb[0].mxu0 %v4709
    %v4802 = vpop.f32.mrb[0].mxu0
    %v4803 = vadd.f32 %v4674, %v4802
    %v4804 = vpop.f32.mrb[0].mxu0
    %4805 = vmatprep.mubr.f32.mxu0 0.0
    %4806 = vmatmul.mubr.f32.gmra.mrb[0].mxu0 %v4712
    %v4807 = vpop.f32.mrb[0].mxu0
    %v4808 = vadd.f32 %v4679, %v4807
    %v4809 = vpop.f32.mrb[0].mxu0
    %4810 = vmatprep.mubr.f32.mxu0 0.0
    %4811 = vmatmul.mubr.f32.gmra.mrb[0].mxu0 %v4715
    %v4812 = vpop.f32.mrb[0].mxu0
    %v4813 = vadd.f32 %v4684, %v4812
    %v4814 = vpop.f32.mrb[0].mxu0
    %4815 = vmatprep.mubr.f32.mxu0 0.0
    %4816 = vmatmul.mubr.f32.gmra.mrb[0].mxu0 %v4718
    %v4817 = vpop.f32.mrb[0].mxu0
    %v4818 = vadd.f32 %v4689, %v4817
    %v4819 = vpop.f32.mrb[0].mxu0
    %4820 = vmatprep.mubr.f32.mxu0 0.0
    %4821 = vmatmul.mubr.f32.gmra.mrb[0].mxu0 %v4721
    %v4822 = vpop.f32.mrb[0].mxu0
    %v4823 = vadd.f32 %v4694, %v4822
    %v4824 = vpop.f32.mrb[0].mxu0
    %4825 = vmatprep.mubr.f32.mxu0 0.0
    %4826 = vmatmul.mubr.f32.gmra.mrb[0].mxu0 %v4724
    %v4827 = vpop.f32.mrb[0].mxu0
    %v4828 = vadd.f32 %v4699, %v4827
    %v4829 = vpop.f32.mrb[0].mxu0
    %4830 = vdwg.mxu0
    %4831 = vmatprep.subr.mxu0 0.0
    %4832 = vmatpush1.msra.mxu0 %v4297
    %4833 = vmatprep.subr.mxu0 0.0
    %4834 = vmatpush1.msra.mxu0 %v4302
    %4835 = vmatprep.subr.mxu0 0.0
    %4836 = vmatpush1.msra.mxu0 %v4307
    %4837 = vmatprep.subr.mxu0 0.0
    %4838 = vmatpush1.msra.mxu0 %v4312
    %4839 = vmatprep.subr.mxu0 0.0
    %4840 = vmatpush1.msra.mxu0 %v4317
    %4841 = vmatprep.subr.mxu0 0.0
    %4842 = vmatpush1.msra.mxu0 %v4322
    %4843 = vmatprep.subr.mxu0 0.0
    %4844 = vmatpush1.msra.mxu0 %v4327
    %4845 = vmatprep.subr.mxu0 0.0
    %4846 = vmatpush1.msra.mxu0 %v4332
    %4847 = vmatprep.subr.mxu0 0.0
    %4848 = vmatpush1.msra.mxu0 %v4337
    %4849 = vmatprep.subr.mxu0 0.0
    %4850 = vmatpush1.msra.mxu0 %v4342
    %4851 = vmatprep.subr.mxu0 0.0
    %4852 = vmatpush1.msra.mxu0 %v4347
    %4853 = vmatprep.subr.mxu0 0.0
    %4854 = vmatpush1.msra.mxu0 %v4352
    %4855 = vmatprep.subr.mxu0 0.0
    %4856 = vmatpush1.msra.mxu0 %v4361
    %4857 = vmatprep.subr.mxu0 0.0
    %4858 = vmatpush1.msra.mxu0 0.0
    %4859 = vmatprep.subr.mxu0 0.0
    %4860 = vmatpush1.msra.mxu0 0.0
    %4861 = vmatprep.subr.mxu0 0.0
    %4862 = vmatpush1.msra.mxu0 0.0
    %4863 = vmatprep.subr.mxu0 0.0
    %4864 = vmatpush1.msra.mxu0 0.0
    %4865 = vmatprep.subr.mxu0 0.0
    %4866 = vmatpush1.msra.mxu0 0.0
    %4867 = vmatprep.subr.mxu0 0.0
    %4868 = vmatpush1.msra.mxu0 0.0
    %4869 = vmatprep.subr.mxu0 0.0
    %4870 = vmatpush1.msra.mxu0 0.0
    %4871 = vmatprep.subr.mxu0 0.0
    %4872 = vmatpush1.msra.mxu0 0.0
    %4873 = vmatprep.subr.mxu0 0.0
    %4874 = vmatpush1.msra.mxu0 0.0
    %4875 = vmatprep.subr.mxu0 0.0
    %4876 = vmatpush1.msra.mxu0 0.0
    %4877 = vmatprep.subr.mxu0 0.0
    %4878 = vmatpush1.msra.mxu0 0.0
    %4879 = vmatprep.subr.mxu0 0.0
    %4880 = vmatpush1.msra.mxu0 0.0
    %4881 = vmatprep.subr.mxu0 0.0
    %4882 = vmatpush1.msra.mxu0 0.0
    %4883 = vmatprep.subr.mxu0 0.0
    %4884 = vmatpush1.msra.mxu0 0.0
    %4885 = vmatprep.subr.mxu0 0.0
    %4886 = vmatpush1.msra.mxu0 0.0
    %4887 = vmatprep.subr.mxu0 0.0
    %4888 = vmatpush1.msra.mxu0 0.0
    %4889 = vmatprep.subr.mxu0 0.0
    %4890 = vmatpush1.msra.mxu0 0.0
    %4891 = vmatprep.subr.mxu0 0.0
    %4892 = vmatpush1.msra.mxu0 0.0
    %4893 = vmatprep.subr.mxu0 0.0
    %4894 = vmatpush1.msra.mxu0 0.0
    %4895 = vmatprep.mubr.f32.mxu0 0.0
    %4896 = vmatmul.mubr.f32.gmra.mrb[0].mxu0 %v2043
    %v4897 = vpop.f32.mrb[0].mxu0
    %v4898 = vadd.f32 0.0, %v4897
    %v4899 = vpop.f32.mrb[0].mxu0
    %4900 = vmatprep.mubr.f32.mxu0 0.0
    %4901 = vmatmul.mubr.f32.gmra.mrb[0].mxu0 %v2046
    %v4902 = vpop.f32.mrb[0].mxu0
    %v4903 = vadd.f32 0.0, %v4902
    %v4904 = vpop.f32.mrb[0].mxu0
    %4905 = vmatprep.mubr.f32.mxu0 0.0
    %4906 = vmatmul.mubr.f32.gmra.mrb[0].mxu0 %v2049
    %v4907 = vpop.f32.mrb[0].mxu0
    %v4908 = vadd.f32 0.0, %v4907
    %v4909 = vpop.f32.mrb[0].mxu0
    %4910 = vmatprep.mubr.f32.mxu0 0.0
    %4911 = vmatmul.mubr.f32.gmra.mrb[0].mxu0 %v2052
    %v4912 = vpop.f32.mrb[0].mxu0
    %v4913 = vadd.f32 0.0, %v4912
    %v4914 = vpop.f32.mrb[0].mxu0
    %4915 = vmatprep.mubr.f32.mxu0 0.0
    %4916 = vmatmul.mubr.f32.gmra.mrb[0].mxu0 %v2055
    %v4917 = vpop.f32.mrb[0].mxu0
    %v4918 = vadd.f32 0.0, %v4917
    %v4919 = vpop.f32.mrb[0].mxu0
    %4920 = vmatprep.mubr.f32.mxu0 0.0
    %4921 = vmatmul.mubr.f32.gmra.mrb[0].mxu0 %v2058
    %v4922 = vpop.f32.mrb[0].mxu0
    %v4923 = vadd.f32 0.0, %v4922
    %v4924 = vpop.f32.mrb[0].mxu0
    %4925 = vmatprep.mubr.f32.mxu0 0.0
    %4926 = vmatmul.mubr.f32.gmra.mrb[0].mxu0 %v2061
    %v4927 = vpop.f32.mrb[0].mxu0
    %v4928 = vadd.f32 0.0, %v4927
    %v4929 = vpop.f32.mrb[0].mxu0
    %4930 = vmatprep.mubr.f32.mxu0 0.0
    %4931 = vmatmul.mubr.f32.gmra.mrb[0].mxu0 %v2064
    %v4932 = vpop.f32.mrb[0].mxu0
    %v4933 = vadd.f32 0.0, %v4932
    %v4934 = vpop.f32.mrb[0].mxu0
    %4935 = vdwg.mxu0
    %v4937 = vsel %vm1768, %v4898, 0
    %v4940 = vsel %vm1768, %v4903, 0
    %v4943 = vsel %vm1768, %v4908, 0
    %v4946 = vsel %vm1768, %v4913, 0
    %v4949 = vsel %vm1768, %v4918, 0
    %v4952 = vsel %vm1768, %v4923, 0
    %v4955 = vsel %vm1768, %v4928, 0
    %v4958 = vsel %vm1768, %v4933, 0
    %4960 = vmatprep.subr.mxu0 0.0
    %4961 = vmatpush1.msra.mxu0 %v2198
    %4962 = vmatprep.subr.mxu0 0.0
    %4963 = vmatpush1.msra.mxu0 0.0
    %4964 = vmatprep.subr.mxu0 0.0
    %4965 = vmatpush1.msra.mxu0 0.0
    %4966 = vmatprep.subr.mxu0 0.0
    %4967 = vmatpush1.msra.mxu0 0.0
    %4968 = vmatprep.subr.mxu0 0.0
    %4969 = vmatpush1.msra.mxu0 0.0
    %4970 = vmatprep.subr.mxu0 0.0
    %4971 = vmatpush1.msra.mxu0 0.0
    %4972 = vmatprep.subr.mxu0 0.0
    %4973 = vmatpush1.msra.mxu0 0.0
    %4974 = vmatprep.subr.mxu0 0.0
    %4975 = vmatpush1.msra.mxu0 0.0
    %4976 = vmatprep.subr.mxu0 0.0
    %4977 = vmatpush1.msra.mxu0 0.0
    %4978 = vmatprep.subr.mxu0 0.0
    %4979 = vmatpush1.msra.mxu0 0.0
    %4980 = vmatprep.subr.mxu0 0.0
    %4981 = vmatpush1.msra.mxu0 0.0
    %4982 = vmatprep.subr.mxu0 0.0
    %4983 = vmatpush1.msra.mxu0 0.0
    %4984 = vmatprep.subr.mxu0 0.0
    %4985 = vmatpush1.msra.mxu0 0.0
    %4986 = vmatprep.subr.mxu0 0.0
    %4987 = vmatpush1.msra.mxu0 0.0
    %4988 = vmatprep.subr.mxu0 0.0
    %4989 = vmatpush1.msra.mxu0 0.0
    %4990 = vmatprep.subr.mxu0 0.0
    %4991 = vmatpush1.msra.mxu0 0.0
    %4992 = vmatprep.subr.mxu0 0.0
    %4993 = vmatpush1.msra.mxu0 0.0
    %4994 = vmatprep.subr.mxu0 0.0
    %4995 = vmatpush1.msra.mxu0 0.0
    %4996 = vmatprep.subr.mxu0 0.0
    %4997 = vmatpush1.msra.mxu0 0.0
    %4998 = vmatprep.subr.mxu0 0.0
    %4999 = vmatpush1.msra.mxu0 0.0
    %5000 = vmatprep.subr.mxu0 0.0
    %5001 = vmatpush1.msra.mxu0 0.0
    %5002 = vmatprep.subr.mxu0 0.0
    %5003 = vmatpush1.msra.mxu0 0.0
    %5004 = vmatprep.subr.mxu0 0.0
    %5005 = vmatpush1.msra.mxu0 0.0
    %5006 = vmatprep.subr.mxu0 0.0
    %5007 = vmatpush1.msra.mxu0 0.0
    %5008 = vmatprep.subr.mxu0 0.0
    %5009 = vmatpush1.msra.mxu0 0.0
    %5010 = vmatprep.subr.mxu0 0.0
    %5011 = vmatpush1.msra.mxu0 0.0
    %5012 = vmatprep.subr.mxu0 0.0
    %5013 = vmatpush1.msra.mxu0 0.0
    %5014 = vmatprep.subr.mxu0 0.0
    %5015 = vmatpush1.msra.mxu0 0.0
    %5016 = vmatprep.subr.mxu0 0.0
    %5017 = vmatpush1.msra.mxu0 0.0
    %5018 = vmatprep.subr.mxu0 0.0
    %5019 = vmatpush1.msra.mxu0 0.0
    %5020 = vmatprep.subr.mxu0 0.0
    %5021 = vmatpush1.msra.mxu0 0.0
    %5022 = vmatprep.subr.mxu0 0.0
    %5023 = vmatpush1.msra.mxu0 0.0
    %5024 = vmatprep.mubr.f32.mxu0 0.0
    %5025 = vmatmul.mubr.f32.gmra.mrb[0].mxu0 %v4937
    %v5026 = vpop.f32.mrb[0].mxu0
    %v5027 = vadd.f32 0.0, %v5026
    %v5028 = vpop.f32.mrb[0].mxu0
    %5029 = vmatprep.mubr.f32.mxu0 0.0
    %5030 = vmatmul.mubr.f32.gmra.mrb[0].mxu0 %v4940
    %v5031 = vpop.f32.mrb[0].mxu0
    %v5032 = vadd.f32 0.0, %v5031
    %v5033 = vpop.f32.mrb[0].mxu0
    %5034 = vmatprep.mubr.f32.mxu0 0.0
    %5035 = vmatmul.mubr.f32.gmra.mrb[0].mxu0 %v4943
    %v5036 = vpop.f32.mrb[0].mxu0
    %v5037 = vadd.f32 0.0, %v5036
    %v5038 = vpop.f32.mrb[0].mxu0
    %5039 = vmatprep.mubr.f32.mxu0 0.0
    %5040 = vmatmul.mubr.f32.gmra.mrb[0].mxu0 %v4946
    %v5041 = vpop.f32.mrb[0].mxu0
    %v5042 = vadd.f32 0.0, %v5041
    %v5043 = vpop.f32.mrb[0].mxu0
    %5044 = vmatprep.mubr.f32.mxu0 0.0
    %5045 = vmatmul.mubr.f32.gmra.mrb[0].mxu0 %v4949
    %v5046 = vpop.f32.mrb[0].mxu0
    %v5047 = vadd.f32 0.0, %v5046
    %v5048 = vpop.f32.mrb[0].mxu0
    %5049 = vmatprep.mubr.f32.mxu0 0.0
    %5050 = vmatmul.mubr.f32.gmra.mrb[0].mxu0 %v4952
    %v5051 = vpop.f32.mrb[0].mxu0
    %v5052 = vadd.f32 0.0, %v5051
    %v5053 = vpop.f32.mrb[0].mxu0
    %5054 = vmatprep.mubr.f32.mxu0 0.0
    %5055 = vmatmul.mubr.f32.gmra.mrb[0].mxu0 %v4955
    %v5056 = vpop.f32.mrb[0].mxu0
    %v5057 = vadd.f32 0.0, %v5056
    %v5058 = vpop.f32.mrb[0].mxu0
    %5059 = vmatprep.mubr.f32.mxu0 0.0
    %5060 = vmatmul.mubr.f32.gmra.mrb[0].mxu0 %v4958
    %v5061 = vpop.f32.mrb[0].mxu0
    %v5062 = vadd.f32 0.0, %v5061
    %v5063 = vpop.f32.mrb[0].mxu0
    %5064 = vdwg.mxu0
    %v5065 = vadd.f32 %v4793, %v5027
    %v5066 = vadd.f32 %v4798, %v5032
    %v5067 = vadd.f32 %v4803, %v5037
    %v5068 = vadd.f32 %v4808, %v5042
    %v5069 = vadd.f32 %v4813, %v5047
    %v5070 = vadd.f32 %v4818, %v5052
    %v5071 = vadd.f32 %v4823, %v5057
    %v5072 = vadd.f32 %v4828, %v5062
    %5073 = vmatprep.subr.mxu0 0.0
    %5074 = vmatpush1.msra.mxu0 %v4297
    %5075 = vmatprep.subr.mxu0 0.0
    %5076 = vmatpush1.msra.mxu0 %v4302
    %5077 = vmatprep.subr.mxu0 0.0
    %5078 = vmatpush1.msra.mxu0 %v4307
    %5079 = vmatprep.subr.mxu0 0.0
    %5080 = vmatpush1.msra.mxu0 %v4312
    %5081 = vmatprep.subr.mxu0 0.0
    %5082 = vmatpush1.msra.mxu0 %v4317
    %5083 = vmatprep.subr.mxu0 0.0
    %5084 = vmatpush1.msra.mxu0 %v4322
    %5085 = vmatprep.subr.mxu0 0.0
    %5086 = vmatpush1.msra.mxu0 %v4327
    %5087 = vmatprep.subr.mxu0 0.0
    %5088 = vmatpush1.msra.mxu0 %v4332
    %5089 = vmatprep.subr.mxu0 0.0
    %5090 = vmatpush1.msra.mxu0 %v4337
    %5091 = vmatprep.subr.mxu0 0.0
    %5092 = vmatpush1.msra.mxu0 %v4342
    %5093 = vmatprep.subr.mxu0 0.0
    %5094 = vmatpush1.msra.mxu0 %v4347
    %5095 = vmatprep.subr.mxu0 0.0
    %5096 = vmatpush1.msra.mxu0 %v4352
    %5097 = vmatprep.subr.mxu0 0.0
    %5098 = vmatpush1.msra.mxu0 %v4361
    %5099 = vmatprep.subr.mxu0 0.0
    %5100 = vmatpush1.msra.mxu0 0.0
    %5101 = vmatprep.subr.mxu0 0.0
    %5102 = vmatpush1.msra.mxu0 0.0
    %5103 = vmatprep.subr.mxu0 0.0
    %5104 = vmatpush1.msra.mxu0 0.0
    %5105 = vmatprep.subr.mxu0 0.0
    %5106 = vmatpush1.msra.mxu0 0.0
    %5107 = vmatprep.subr.mxu0 0.0
    %5108 = vmatpush1.msra.mxu0 0.0
    %5109 = vmatprep.subr.mxu0 0.0
    %5110 = vmatpush1.msra.mxu0 0.0
    %5111 = vmatprep.subr.mxu0 0.0
    %5112 = vmatpush1.msra.mxu0 0.0
    %5113 = vmatprep.subr.mxu0 0.0
    %5114 = vmatpush1.msra.mxu0 0.0
    %5115 = vmatprep.subr.mxu0 0.0
    %5116 = vmatpush1.msra.mxu0 0.0
    %5117 = vmatprep.subr.mxu0 0.0
    %5118 = vmatpush1.msra.mxu0 0.0
    %5119 = vmatprep.subr.mxu0 0.0
    %5120 = vmatpush1.msra.mxu0 0.0
    %5121 = vmatprep.subr.mxu0 0.0
    %5122 = vmatpush1.msra.mxu0 0.0
    %5123 = vmatprep.subr.mxu0 0.0
    %5124 = vmatpush1.msra.mxu0 0.0
    %5125 = vmatprep.subr.mxu0 0.0
    %5126 = vmatpush1.msra.mxu0 0.0
    %5127 = vmatprep.subr.mxu0 0.0
    %5128 = vmatpush1.msra.mxu0 0.0
    %5129 = vmatprep.subr.mxu0 0.0
    %5130 = vmatpush1.msra.mxu0 0.0
    %5131 = vmatprep.subr.mxu0 0.0
    %5132 = vmatpush1.msra.mxu0 0.0
    %5133 = vmatprep.subr.mxu0 0.0
    %5134 = vmatpush1.msra.mxu0 0.0
    %5135 = vmatprep.subr.mxu0 0.0
    %5136 = vmatpush1.msra.mxu0 0.0
    %5137 = vmatprep.mubr.f32.mxu0 0.0
    %5138 = vmatmul.mubr.f32.gmra.mrb[0].mxu0 %v2323
    %v5139 = vpop.f32.mrb[0].mxu0
    %v5140 = vadd.f32 0.0, %v5139
    %v5141 = vpop.f32.mrb[0].mxu0
    %5142 = vmatprep.mubr.f32.mxu0 0.0
    %5143 = vmatmul.mubr.f32.gmra.mrb[0].mxu0 %v2326
    %v5144 = vpop.f32.mrb[0].mxu0
    %v5145 = vadd.f32 0.0, %v5144
    %v5146 = vpop.f32.mrb[0].mxu0
    %5147 = vmatprep.mubr.f32.mxu0 0.0
    %5148 = vmatmul.mubr.f32.gmra.mrb[0].mxu0 %v2329
    %v5149 = vpop.f32.mrb[0].mxu0
    %v5150 = vadd.f32 0.0, %v5149
    %v5151 = vpop.f32.mrb[0].mxu0
    %5152 = vmatprep.mubr.f32.mxu0 0.0
    %5153 = vmatmul.mubr.f32.gmra.mrb[0].mxu0 %v2332
    %v5154 = vpop.f32.mrb[0].mxu0
    %v5155 = vadd.f32 0.0, %v5154
    %v5156 = vpop.f32.mrb[0].mxu0
    %5157 = vmatprep.mubr.f32.mxu0 0.0
    %5158 = vmatmul.mubr.f32.gmra.mrb[0].mxu0 %v2335
    %v5159 = vpop.f32.mrb[0].mxu0
    %v5160 = vadd.f32 0.0, %v5159
    %v5161 = vpop.f32.mrb[0].mxu0
    %5162 = vmatprep.mubr.f32.mxu0 0.0
    %5163 = vmatmul.mubr.f32.gmra.mrb[0].mxu0 %v2338
    %v5164 = vpop.f32.mrb[0].mxu0
    %v5165 = vadd.f32 0.0, %v5164
    %v5166 = vpop.f32.mrb[0].mxu0
    %5167 = vmatprep.mubr.f32.mxu0 0.0
    %5168 = vmatmul.mubr.f32.gmra.mrb[0].mxu0 %v2341
    %v5169 = vpop.f32.mrb[0].mxu0
    %v5170 = vadd.f32 0.0, %v5169
    %v5171 = vpop.f32.mrb[0].mxu0
    %5172 = vmatprep.mubr.f32.mxu0 0.0
    %5173 = vmatmul.mubr.f32.gmra.mrb[0].mxu0 %v2344
    %v5174 = vpop.f32.mrb[0].mxu0
    %v5175 = vadd.f32 0.0, %v5174
    %v5176 = vpop.f32.mrb[0].mxu0
    %5177 = vdwg.mxu0
    %v5179 = vsel %vm1768, %v5140, 0
    %v5182 = vsel %vm1768, %v5145, 0
    %v5185 = vsel %vm1768, %v5150, 0
    %v5188 = vsel %vm1768, %v5155, 0
    %v5191 = vsel %vm1768, %v5160, 0
    %v5194 = vsel %vm1768, %v5165, 0
    %v5197 = vsel %vm1768, %v5170, 0
    %v5200 = vsel %vm1768, %v5175, 0
    %5202 = vmatprep.subr.mxu0 0.0
    %5203 = vmatpush1.msra.mxu0 %v2478
    %5204 = vmatprep.subr.mxu0 0.0
    %5205 = vmatpush1.msra.mxu0 0.0
    %5206 = vmatprep.subr.mxu0 0.0
    %5207 = vmatpush1.msra.mxu0 0.0
    %5208 = vmatprep.subr.mxu0 0.0
    %5209 = vmatpush1.msra.mxu0 0.0
    %5210 = vmatprep.subr.mxu0 0.0
    %5211 = vmatpush1.msra.mxu0 0.0
    %5212 = vmatprep.subr.mxu0 0.0
    %5213 = vmatpush1.msra.mxu0 0.0
    %5214 = vmatprep.subr.mxu0 0.0
    %5215 = vmatpush1.msra.mxu0 0.0
    %5216 = vmatprep.subr.mxu0 0.0
    %5217 = vmatpush1.msra.mxu0 0.0
    %5218 = vmatprep.subr.mxu0 0.0
    %5219 = vmatpush1.msra.mxu0 0.0
    %5220 = vmatprep.subr.mxu0 0.0
    %5221 = vmatpush1.msra.mxu0 0.0
    %5222 = vmatprep.subr.mxu0 0.0
    %5223 = vmatpush1.msra.mxu0 0.0
    %5224 = vmatprep.subr.mxu0 0.0
    %5225 = vmatpush1.msra.mxu0 0.0
    %5226 = vmatprep.subr.mxu0 0.0
    %5227 = vmatpush1.msra.mxu0 0.0
    %5228 = vmatprep.subr.mxu0 0.0
    %5229 = vmatpush1.msra.mxu0 0.0
    %5230 = vmatprep.subr.mxu0 0.0
    %5231 = vmatpush1.msra.mxu0 0.0
    %5232 = vmatprep.subr.mxu0 0.0
    %5233 = vmatpush1.msra.mxu0 0.0
    %5234 = vmatprep.subr.mxu0 0.0
    %5235 = vmatpush1.msra.mxu0 0.0
    %5236 = vmatprep.subr.mxu0 0.0
    %5237 = vmatpush1.msra.mxu0 0.0
    %5238 = vmatprep.subr.mxu0 0.0
    %5239 = vmatpush1.msra.mxu0 0.0
    %5240 = vmatprep.subr.mxu0 0.0
    %5241 = vmatpush1.msra.mxu0 0.0
    %5242 = vmatprep.subr.mxu0 0.0
    %5243 = vmatpush1.msra.mxu0 0.0
    %5244 = vmatprep.subr.mxu0 0.0
    %5245 = vmatpush1.msra.mxu0 0.0
    %5246 = vmatprep.subr.mxu0 0.0
    %5247 = vmatpush1.msra.mxu0 0.0
    %5248 = vmatprep.subr.mxu0 0.0
    %5249 = vmatpush1.msra.mxu0 0.0
    %5250 = vmatprep.subr.mxu0 0.0
    %5251 = vmatpush1.msra.mxu0 0.0
    %5252 = vmatprep.subr.mxu0 0.0
    %5253 = vmatpush1.msra.mxu0 0.0
    %5254 = vmatprep.subr.mxu0 0.0
    %5255 = vmatpush1.msra.mxu0 0.0
    %5256 = vmatprep.subr.mxu0 0.0
    %5257 = vmatpush1.msra.mxu0 0.0
    %5258 = vmatprep.subr.mxu0 0.0
    %5259 = vmatpush1.msra.mxu0 0.0
    %5260 = vmatprep.subr.mxu0 0.0
    %5261 = vmatpush1.msra.mxu0 0.0
    %5262 = vmatprep.subr.mxu0 0.0
    %5263 = vmatpush1.msra.mxu0 0.0
    %5264 = vmatprep.subr.mxu0 0.0
    %5265 = vmatpush1.msra.mxu0 0.0
    %5266 = vmatprep.mubr.f32.mxu0 0.0
    %5267 = vmatmul.mubr.f32.gmra.mrb[0].mxu0 %v5179
    %v5268 = vpop.f32.mrb[0].mxu0
    %v5269 = vadd.f32 0.0, %v5268
    %v5270 = vpop.f32.mrb[0].mxu0
    %5271 = vmatprep.mubr.f32.mxu0 0.0
    %5272 = vmatmul.mubr.f32.gmra.mrb[0].mxu0 %v5182
    %v5273 = vpop.f32.mrb[0].mxu0
    %v5274 = vadd.f32 0.0, %v5273
    %v5275 = vpop.f32.mrb[0].mxu0
    %5276 = vmatprep.mubr.f32.mxu0 0.0
    %5277 = vmatmul.mubr.f32.gmra.mrb[0].mxu0 %v5185
    %v5278 = vpop.f32.mrb[0].mxu0
    %v5279 = vadd.f32 0.0, %v5278
    %v5280 = vpop.f32.mrb[0].mxu0
    %5281 = vmatprep.mubr.f32.mxu0 0.0
    %5282 = vmatmul.mubr.f32.gmra.mrb[0].mxu0 %v5188
    %v5283 = vpop.f32.mrb[0].mxu0
    %v5284 = vadd.f32 0.0, %v5283
    %v5285 = vpop.f32.mrb[0].mxu0
    %5286 = vmatprep.mubr.f32.mxu0 0.0
    %5287 = vmatmul.mubr.f32.gmra.mrb[0].mxu0 %v5191
    %v5288 = vpop.f32.mrb[0].mxu0
    %v5289 = vadd.f32 0.0, %v5288
    %v5290 = vpop.f32.mrb[0].mxu0
    %5291 = vmatprep.mubr.f32.mxu0 0.0
    %5292 = vmatmul.mubr.f32.gmra.mrb[0].mxu0 %v5194
    %v5293 = vpop.f32.mrb[0].mxu0
    %v5294 = vadd.f32 0.0, %v5293
    %v5295 = vpop.f32.mrb[0].mxu0
    %5296 = vmatprep.mubr.f32.mxu0 0.0
    %5297 = vmatmul.mubr.f32.gmra.mrb[0].mxu0 %v5197
    %v5298 = vpop.f32.mrb[0].mxu0
    %v5299 = vadd.f32 0.0, %v5298
    %v5300 = vpop.f32.mrb[0].mxu0
    %5301 = vmatprep.mubr.f32.mxu0 0.0
    %5302 = vmatmul.mubr.f32.gmra.mrb[0].mxu0 %v5200
    %v5303 = vpop.f32.mrb[0].mxu0
    %v5304 = vadd.f32 0.0, %v5303
    %v5305 = vpop.f32.mrb[0].mxu0
    %5306 = vdwg.mxu0
    %v5307 = vadd.f32 %v5065, %v5269
    %v5308 = vadd.f32 %v5066, %v5274
    %v5309 = vadd.f32 %v5067, %v5279
    %v5310 = vadd.f32 %v5068, %v5284
    %v5311 = vadd.f32 %v5069, %v5289
    %v5312 = vadd.f32 %v5070, %v5294
    %v5313 = vadd.f32 %v5071, %v5299
    %v5314 = vadd.f32 %v5072, %v5304
    %5315 = vmatprep.subr.mxu0 0.0
    %5316 = vmatpush1.msra.mxu0 %v4297
    %5317 = vmatprep.subr.mxu0 0.0
    %5318 = vmatpush1.msra.mxu0 %v4302
    %5319 = vmatprep.subr.mxu0 0.0
    %5320 = vmatpush1.msra.mxu0 %v4307
    %5321 = vmatprep.subr.mxu0 0.0
    %5322 = vmatpush1.msra.mxu0 %v4312
    %5323 = vmatprep.subr.mxu0 0.0
    %5324 = vmatpush1.msra.mxu0 %v4317
    %5325 = vmatprep.subr.mxu0 0.0
    %5326 = vmatpush1.msra.mxu0 %v4322
    %5327 = vmatprep.subr.mxu0 0.0
    %5328 = vmatpush1.msra.mxu0 %v4327
    %5329 = vmatprep.subr.mxu0 0.0
    %5330 = vmatpush1.msra.mxu0 %v4332
    %5331 = vmatprep.subr.mxu0 0.0
    %5332 = vmatpush1.msra.mxu0 %v4337
    %5333 = vmatprep.subr.mxu0 0.0
    %5334 = vmatpush1.msra.mxu0 %v4342
    %5335 = vmatprep.subr.mxu0 0.0
    %5336 = vmatpush1.msra.mxu0 %v4347
    %5337 = vmatprep.subr.mxu0 0.0
    %5338 = vmatpush1.msra.mxu0 %v4352
    %5339 = vmatprep.subr.mxu0 0.0
    %5340 = vmatpush1.msra.mxu0 %v4361
    %5341 = vmatprep.subr.mxu0 0.0
    %5342 = vmatpush1.msra.mxu0 0.0
    %5343 = vmatprep.subr.mxu0 0.0
    %5344 = vmatpush1.msra.mxu0 0.0
    %5345 = vmatprep.subr.mxu0 0.0
    %5346 = vmatpush1.msra.mxu0 0.0
    %5347 = vmatprep.subr.mxu0 0.0
    %5348 = vmatpush1.msra.mxu0 0.0
    %5349 = vmatprep.subr.mxu0 0.0
    %5350 = vmatpush1.msra.mxu0 0.0
    %5351 = vmatprep.subr.mxu0 0.0
    %5352 = vmatpush1.msra.mxu0 0.0
    %5353 = vmatprep.subr.mxu0 0.0
    %5354 = vmatpush1.msra.mxu0 0.0
    %5355 = vmatprep.subr.mxu0 0.0
    %5356 = vmatpush1.msra.mxu0 0.0
    %5357 = vmatprep.subr.mxu0 0.0
    %5358 = vmatpush1.msra.mxu0 0.0
    %5359 = vmatprep.subr.mxu0 0.0
    %5360 = vmatpush1.msra.mxu0 0.0
    %5361 = vmatprep.subr.mxu0 0.0
    %5362 = vmatpush1.msra.mxu0 0.0
    %5363 = vmatprep.subr.mxu0 0.0
    %5364 = vmatpush1.msra.mxu0 0.0
    %5365 = vmatprep.subr.mxu0 0.0
    %5366 = vmatpush1.msra.mxu0 0.0
    %5367 = vmatprep.subr.mxu0 0.0
    %5368 = vmatpush1.msra.mxu0 0.0
    %5369 = vmatprep.subr.mxu0 0.0
    %5370 = vmatpush1.msra.mxu0 0.0
    %5371 = vmatprep.subr.mxu0 0.0
    %5372 = vmatpush1.msra.mxu0 0.0
    %5373 = vmatprep.subr.mxu0 0.0
    %5374 = vmatpush1.msra.mxu0 0.0
    %5375 = vmatprep.subr.mxu0 0.0
    %5376 = vmatpush1.msra.mxu0 0.0
    %5377 = vmatprep.subr.mxu0 0.0
    %5378 = vmatpush1.msra.mxu0 0.0
    %5379 = vmatprep.mubr.f32.mxu0 0.0
    %5380 = vmatmul.mubr.f32.gmra.mrb[0].mxu0 %v2603
    %v5381 = vpop.f32.mrb[0].mxu0
    %v5382 = vadd.f32 0.0, %v5381
    %v5383 = vpop.f32.mrb[0].mxu0
    %5384 = vmatprep.mubr.f32.mxu0 0.0
    %5385 = vmatmul.mubr.f32.gmra.mrb[0].mxu0 %v2606
    %v5386 = vpop.f32.mrb[0].mxu0
    %v5387 = vadd.f32 0.0, %v5386
    %v5388 = vpop.f32.mrb[0].mxu0
    %5389 = vmatprep.mubr.f32.mxu0 0.0
    %5390 = vmatmul.mubr.f32.gmra.mrb[0].mxu0 %v2609
    %v5391 = vpop.f32.mrb[0].mxu0
    %v5392 = vadd.f32 0.0, %v5391
    %v5393 = vpop.f32.mrb[0].mxu0
    %5394 = vmatprep.mubr.f32.mxu0 0.0
    %5395 = vmatmul.mubr.f32.gmra.mrb[0].mxu0 %v2612
    %v5396 = vpop.f32.mrb[0].mxu0
    %v5397 = vadd.f32 0.0, %v5396
    %v5398 = vpop.f32.mrb[0].mxu0
    %5399 = vmatprep.mubr.f32.mxu0 0.0
    %5400 = vmatmul.mubr.f32.gmra.mrb[0].mxu0 %v2615
    %v5401 = vpop.f32.mrb[0].mxu0
    %v5402 = vadd.f32 0.0, %v5401
    %v5403 = vpop.f32.mrb[0].mxu0
    %5404 = vmatprep.mubr.f32.mxu0 0.0
    %5405 = vmatmul.mubr.f32.gmra.mrb[0].mxu0 %v2618
    %v5406 = vpop.f32.mrb[0].mxu0
    %v5407 = vadd.f32 0.0, %v5406
    %v5408 = vpop.f32.mrb[0].mxu0
    %5409 = vmatprep.mubr.f32.mxu0 0.0
    %5410 = vmatmul.mubr.f32.gmra.mrb[0].mxu0 %v2621
    %v5411 = vpop.f32.mrb[0].mxu0
    %v5412 = vadd.f32 0.0, %v5411
    %v5413 = vpop.f32.mrb[0].mxu0
    %5414 = vmatprep.mubr.f32.mxu0 0.0
    %5415 = vmatmul.mubr.f32.gmra.mrb[0].mxu0 %v2624
    %v5416 = vpop.f32.mrb[0].mxu0
    %v5417 = vadd.f32 0.0, %v5416
    %v5418 = vpop.f32.mrb[0].mxu0
    %5419 = vdwg.mxu0
    %v5421 = vsel %vm1768, %v5382, 0
    %v5424 = vsel %vm1768, %v5387, 0
    %v5427 = vsel %vm1768, %v5392, 0
    %v5430 = vsel %vm1768, %v5397, 0
    %v5433 = vsel %vm1768, %v5402, 0
    %v5436 = vsel %vm1768, %v5407, 0
    %v5439 = vsel %vm1768, %v5412, 0
    %v5442 = vsel %vm1768, %v5417, 0
    %5444 = vmatprep.subr.mxu0 0.0
    %5445 = vmatpush1.msra.mxu0 %v2758
    %5446 = vmatprep.subr.mxu0 0.0
    %5447 = vmatpush1.msra.mxu0 0.0
    %5448 = vmatprep.subr.mxu0 0.0
    %5449 = vmatpush1.msra.mxu0 0.0
    %5450 = vmatprep.subr.mxu0 0.0
    %5451 = vmatpush1.msra.mxu0 0.0
    %5452 = vmatprep.subr.mxu0 0.0
    %5453 = vmatpush1.msra.mxu0 0.0
    %5454 = vmatprep.subr.mxu0 0.0
    %5455 = vmatpush1.msra.mxu0 0.0
    %5456 = vmatprep.subr.mxu0 0.0
    %5457 = vmatpush1.msra.mxu0 0.0
    %5458 = vmatprep.subr.mxu0 0.0
    %5459 = vmatpush1.msra.mxu0 0.0
    %5460 = vmatprep.subr.mxu0 0.0
    %5461 = vmatpush1.msra.mxu0 0.0
    %5462 = vmatprep.subr.mxu0 0.0
    %5463 = vmatpush1.msra.mxu0 0.0
    %5464 = vmatprep.subr.mxu0 0.0
    %5465 = vmatpush1.msra.mxu0 0.0
    %5466 = vmatprep.subr.mxu0 0.0
    %5467 = vmatpush1.msra.mxu0 0.0
    %5468 = vmatprep.subr.mxu0 0.0
    %5469 = vmatpush1.msra.mxu0 0.0
    %5470 = vmatprep.subr.mxu0 0.0
    %5471 = vmatpush1.msra.mxu0 0.0
    %5472 = vmatprep.subr.mxu0 0.0
    %5473 = vmatpush1.msra.mxu0 0.0
    %5474 = vmatprep.subr.mxu0 0.0
    %5475 = vmatpush1.msra.mxu0 0.0
    %5476 = vmatprep.subr.mxu0 0.0
    %5477 = vmatpush1.msra.mxu0 0.0
    %5478 = vmatprep.subr.mxu0 0.0
    %5479 = vmatpush1.msra.mxu0 0.0
    %5480 = vmatprep.subr.mxu0 0.0
    %5481 = vmatpush1.msra.mxu0 0.0
    %5482 = vmatprep.subr.mxu0 0.0
    %5483 = vmatpush1.msra.mxu0 0.0
    %5484 = vmatprep.subr.mxu0 0.0
    %5485 = vmatpush1.msra.mxu0 0.0
    %5486 = vmatprep.subr.mxu0 0.0
    %5487 = vmatpush1.msra.mxu0 0.0
    %5488 = vmatprep.subr.mxu0 0.0
    %5489 = vmatpush1.msra.mxu0 0.0
    %5490 = vmatprep.subr.mxu0 0.0
    %5491 = vmatpush1.msra.mxu0 0.0
    %5492 = vmatprep.subr.mxu0 0.0
    %5493 = vmatpush1.msra.mxu0 0.0
    %5494 = vmatprep.subr.mxu0 0.0
    %5495 = vmatpush1.msra.mxu0 0.0
    %5496 = vmatprep.subr.mxu0 0.0
    %5497 = vmatpush1.msra.mxu0 0.0
    %5498 = vmatprep.subr.mxu0 0.0
    %5499 = vmatpush1.msra.mxu0 0.0
    %5500 = vmatprep.subr.mxu0 0.0
    %5501 = vmatpush1.msra.mxu0 0.0
    %5502 = vmatprep.subr.mxu0 0.0
    %5503 = vmatpush1.msra.mxu0 0.0
    %5504 = vmatprep.subr.mxu0 0.0
    %5505 = vmatpush1.msra.mxu0 0.0
    %5506 = vmatprep.subr.mxu0 0.0
    %5507 = vmatpush1.msra.mxu0 0.0
    %5508 = vmatprep.mubr.f32.mxu0 0.0
    %5509 = vmatmul.mubr.f32.gmra.mrb[0].mxu0 %v5421
    %v5510 = vpop.f32.mrb[0].mxu0
    %v5511 = vadd.f32 0.0, %v5510
    %v5512 = vpop.f32.mrb[0].mxu0
    %5513 = vmatprep.mubr.f32.mxu0 0.0
    %5514 = vmatmul.mubr.f32.gmra.mrb[0].mxu0 %v5424
    %v5515 = vpop.f32.mrb[0].mxu0
    %v5516 = vadd.f32 0.0, %v5515
    %v5517 = vpop.f32.mrb[0].mxu0
    %5518 = vmatprep.mubr.f32.mxu0 0.0
    %5519 = vmatmul.mubr.f32.gmra.mrb[0].mxu0 %v5427
    %v5520 = vpop.f32.mrb[0].mxu0
    %v5521 = vadd.f32 0.0, %v5520
    %v5522 = vpop.f32.mrb[0].mxu0
    %5523 = vmatprep.mubr.f32.mxu0 0.0
    %5524 = vmatmul.mubr.f32.gmra.mrb[0].mxu0 %v5430
    %v5525 = vpop.f32.mrb[0].mxu0
    %v5526 = vadd.f32 0.0, %v5525
    %v5527 = vpop.f32.mrb[0].mxu0
    %5528 = vmatprep.mubr.f32.mxu0 0.0
    %5529 = vmatmul.mubr.f32.gmra.mrb[0].mxu0 %v5433
    %v5530 = vpop.f32.mrb[0].mxu0
    %v5531 = vadd.f32 0.0, %v5530
    %v5532 = vpop.f32.mrb[0].mxu0
    %5533 = vmatprep.mubr.f32.mxu0 0.0
    %5534 = vmatmul.mubr.f32.gmra.mrb[0].mxu0 %v5436
    %v5535 = vpop.f32.mrb[0].mxu0
    %v5536 = vadd.f32 0.0, %v5535
    %v5537 = vpop.f32.mrb[0].mxu0
    %5538 = vmatprep.mubr.f32.mxu0 0.0
    %5539 = vmatmul.mubr.f32.gmra.mrb[0].mxu0 %v5439
    %v5540 = vpop.f32.mrb[0].mxu0
    %v5541 = vadd.f32 0.0, %v5540
    %v5542 = vpop.f32.mrb[0].mxu0
    %5543 = vmatprep.mubr.f32.mxu0 0.0
    %5544 = vmatmul.mubr.f32.gmra.mrb[0].mxu0 %v5442
    %v5545 = vpop.f32.mrb[0].mxu0
    %v5546 = vadd.f32 0.0, %v5545
    %v5547 = vpop.f32.mrb[0].mxu0
    %5548 = vdwg.mxu0
    %v5549 = vadd.f32 %v5307, %v5511
    %v5550 = vadd.f32 %v5308, %v5516
    %v5551 = vadd.f32 %v5309, %v5521
    %v5552 = vadd.f32 %v5310, %v5526
    %v5553 = vadd.f32 %v5311, %v5531
    %v5554 = vadd.f32 %v5312, %v5536
    %v5555 = vadd.f32 %v5313, %v5541
    %v5556 = vadd.f32 %v5314, %v5546
    %5557 = vmatprep.subr.mxu0 0.0
    %5558 = vmatpush1.msra.mxu0 %v4297
    %5559 = vmatprep.subr.mxu0 0.0
    %5560 = vmatpush1.msra.mxu0 %v4302
    %5561 = vmatprep.subr.mxu0 0.0
    %5562 = vmatpush1.msra.mxu0 %v4307
    %5563 = vmatprep.subr.mxu0 0.0
    %5564 = vmatpush1.msra.mxu0 %v4312
    %5565 = vmatprep.subr.mxu0 0.0
    %5566 = vmatpush1.msra.mxu0 %v4317
    %5567 = vmatprep.subr.mxu0 0.0
    %5568 = vmatpush1.msra.mxu0 %v4322
    %5569 = vmatprep.subr.mxu0 0.0
    %5570 = vmatpush1.msra.mxu0 %v4327
    %5571 = vmatprep.subr.mxu0 0.0
    %5572 = vmatpush1.msra.mxu0 %v4332
    %5573 = vmatprep.subr.mxu0 0.0
    %5574 = vmatpush1.msra.mxu0 %v4337
    %5575 = vmatprep.subr.mxu0 0.0
    %5576 = vmatpush1.msra.mxu0 %v4342
    %5577 = vmatprep.subr.mxu0 0.0
    %5578 = vmatpush1.msra.mxu0 %v4347
    %5579 = vmatprep.subr.mxu0 0.0
    %5580 = vmatpush1.msra.mxu0 %v4352
    %5581 = vmatprep.subr.mxu0 0.0
    %5582 = vmatpush1.msra.mxu0 %v4361
    %5583 = vmatprep.subr.mxu0 0.0
    %5584 = vmatpush1.msra.mxu0 0.0
    %5585 = vmatprep.subr.mxu0 0.0
    %5586 = vmatpush1.msra.mxu0 0.0
    %5587 = vmatprep.subr.mxu0 0.0
    %5588 = vmatpush1.msra.mxu0 0.0
    %5589 = vmatprep.subr.mxu0 0.0
    %5590 = vmatpush1.msra.mxu0 0.0
    %5591 = vmatprep.subr.mxu0 0.0
    %5592 = vmatpush1.msra.mxu0 0.0
    %5593 = vmatprep.subr.mxu0 0.0
    %5594 = vmatpush1.msra.mxu0 0.0
    %5595 = vmatprep.subr.mxu0 0.0
    %5596 = vmatpush1.msra.mxu0 0.0
    %5597 = vmatprep.subr.mxu0 0.0
    %5598 = vmatpush1.msra.mxu0 0.0
    %5599 = vmatprep.subr.mxu0 0.0
    %5600 = vmatpush1.msra.mxu0 0.0
    %5601 = vmatprep.subr.mxu0 0.0
    %5602 = vmatpush1.msra.mxu0 0.0
    %5603 = vmatprep.subr.mxu0 0.0
    %5604 = vmatpush1.msra.mxu0 0.0
    %5605 = vmatprep.subr.mxu0 0.0
    %5606 = vmatpush1.msra.mxu0 0.0
    %5607 = vmatprep.subr.mxu0 0.0
    %5608 = vmatpush1.msra.mxu0 0.0
    %5609 = vmatprep.subr.mxu0 0.0
    %5610 = vmatpush1.msra.mxu0 0.0
    %5611 = vmatprep.subr.mxu0 0.0
    %5612 = vmatpush1.msra.mxu0 0.0
    %5613 = vmatprep.subr.mxu0 0.0
    %5614 = vmatpush1.msra.mxu0 0.0
    %5615 = vmatprep.subr.mxu0 0.0
    %5616 = vmatpush1.msra.mxu0 0.0
    %5617 = vmatprep.subr.mxu0 0.0
    %5618 = vmatpush1.msra.mxu0 0.0
    %5619 = vmatprep.subr.mxu0 0.0
    %5620 = vmatpush1.msra.mxu0 0.0
    %5621 = vmatprep.mubr.f32.mxu0 0.0
    %5622 = vmatmul.mubr.f32.gmra.mrb[0].mxu0 %v2883
    %v5623 = vpop.f32.mrb[0].mxu0
    %v5624 = vadd.f32 0.0, %v5623
    %v5625 = vpop.f32.mrb[0].mxu0
    %5626 = vmatprep.mubr.f32.mxu0 0.0
    %5627 = vmatmul.mubr.f32.gmra.mrb[0].mxu0 %v2886
    %v5628 = vpop.f32.mrb[0].mxu0
    %v5629 = vadd.f32 0.0, %v5628
    %v5630 = vpop.f32.mrb[0].mxu0
    %5631 = vmatprep.mubr.f32.mxu0 0.0
    %5632 = vmatmul.mubr.f32.gmra.mrb[0].mxu0 %v2889
    %v5633 = vpop.f32.mrb[0].mxu0
    %v5634 = vadd.f32 0.0, %v5633
    %v5635 = vpop.f32.mrb[0].mxu0
    %5636 = vmatprep.mubr.f32.mxu0 0.0
    %5637 = vmatmul.mubr.f32.gmra.mrb[0].mxu0 %v2892
    %v5638 = vpop.f32.mrb[0].mxu0
    %v5639 = vadd.f32 0.0, %v5638
    %v5640 = vpop.f32.mrb[0].mxu0
    %5641 = vmatprep.mubr.f32.mxu0 0.0
    %5642 = vmatmul.mubr.f32.gmra.mrb[0].mxu0 %v2895
    %v5643 = vpop.f32.mrb[0].mxu0
    %v5644 = vadd.f32 0.0, %v5643
    %v5645 = vpop.f32.mrb[0].mxu0
    %5646 = vmatprep.mubr.f32.mxu0 0.0
    %5647 = vmatmul.mubr.f32.gmra.mrb[0].mxu0 %v2898
    %v5648 = vpop.f32.mrb[0].mxu0
    %v5649 = vadd.f32 0.0, %v5648
    %v5650 = vpop.f32.mrb[0].mxu0
    %5651 = vmatprep.mubr.f32.mxu0 0.0
    %5652 = vmatmul.mubr.f32.gmra.mrb[0].mxu0 %v2901
    %v5653 = vpop.f32.mrb[0].mxu0
    %v5654 = vadd.f32 0.0, %v5653
    %v5655 = vpop.f32.mrb[0].mxu0
    %5656 = vmatprep.mubr.f32.mxu0 0.0
    %5657 = vmatmul.mubr.f32.gmra.mrb[0].mxu0 %v2904
    %v5658 = vpop.f32.mrb[0].mxu0
    %v5659 = vadd.f32 0.0, %v5658
    %v5660 = vpop.f32.mrb[0].mxu0
    %5661 = vdwg.mxu0
    %v5663 = vsel %vm1768, %v5624, 0
    %v5666 = vsel %vm1768, %v5629, 0
    %v5669 = vsel %vm1768, %v5634, 0
    %v5672 = vsel %vm1768, %v5639, 0
    %v5675 = vsel %vm1768, %v5644, 0
    %v5678 = vsel %vm1768, %v5649, 0
    %v5681 = vsel %vm1768, %v5654, 0
    %v5684 = vsel %vm1768, %v5659, 0
    %5686 = vmatprep.subr.mxu0 0.0
    %5687 = vmatpush1.msra.mxu0 %v3038
    %5688 = vmatprep.subr.mxu0 0.0
    %5689 = vmatpush1.msra.mxu0 0.0
    %5690 = vmatprep.subr.mxu0 0.0
    %5691 = vmatpush1.msra.mxu0 0.0
    %5692 = vmatprep.subr.mxu0 0.0
    %5693 = vmatpush1.msra.mxu0 0.0
    %5694 = vmatprep.subr.mxu0 0.0
    %5695 = vmatpush1.msra.mxu0 0.0
    %5696 = vmatprep.subr.mxu0 0.0
    %5697 = vmatpush1.msra.mxu0 0.0
    %5698 = vmatprep.subr.mxu0 0.0
    %5699 = vmatpush1.msra.mxu0 0.0
    %5700 = vmatprep.subr.mxu0 0.0
    %5701 = vmatpush1.msra.mxu0 0.0
    %5702 = vmatprep.subr.mxu0 0.0
    %5703 = vmatpush1.msra.mxu0 0.0
    %5704 = vmatprep.subr.mxu0 0.0
    %5705 = vmatpush1.msra.mxu0 0.0
    %5706 = vmatprep.subr.mxu0 0.0
    %5707 = vmatpush1.msra.mxu0 0.0
    %5708 = vmatprep.subr.mxu0 0.0
    %5709 = vmatpush1.msra.mxu0 0.0
    %5710 = vmatprep.subr.mxu0 0.0
    %5711 = vmatpush1.msra.mxu0 0.0
    %5712 = vmatprep.subr.mxu0 0.0
    %5713 = vmatpush1.msra.mxu0 0.0
    %5714 = vmatprep.subr.mxu0 0.0
    %5715 = vmatpush1.msra.mxu0 0.0
    %5716 = vmatprep.subr.mxu0 0.0
    %5717 = vmatpush1.msra.mxu0 0.0
    %5718 = vmatprep.subr.mxu0 0.0
    %5719 = vmatpush1.msra.mxu0 0.0
    %5720 = vmatprep.subr.mxu0 0.0
    %5721 = vmatpush1.msra.mxu0 0.0
    %5722 = vmatprep.subr.mxu0 0.0
    %5723 = vmatpush1.msra.mxu0 0.0
    %5724 = vmatprep.subr.mxu0 0.0
    %5725 = vmatpush1.msra.mxu0 0.0
    %5726 = vmatprep.subr.mxu0 0.0
    %5727 = vmatpush1.msra.mxu0 0.0
    %5728 = vmatprep.subr.mxu0 0.0
    %5729 = vmatpush1.msra.mxu0 0.0
    %5730 = vmatprep.subr.mxu0 0.0
    %5731 = vmatpush1.msra.mxu0 0.0
    %5732 = vmatprep.subr.mxu0 0.0
    %5733 = vmatpush1.msra.mxu0 0.0
    %5734 = vmatprep.subr.mxu0 0.0
    %5735 = vmatpush1.msra.mxu0 0.0
    %5736 = vmatprep.subr.mxu0 0.0
    %5737 = vmatpush1.msra.mxu0 0.0
    %5738 = vmatprep.subr.mxu0 0.0
    %5739 = vmatpush1.msra.mxu0 0.0
    %5740 = vmatprep.subr.mxu0 0.0
    %5741 = vmatpush1.msra.mxu0 0.0
    %5742 = vmatprep.subr.mxu0 0.0
    %5743 = vmatpush1.msra.mxu0 0.0
    %5744 = vmatprep.subr.mxu0 0.0
    %5745 = vmatpush1.msra.mxu0 0.0
    %5746 = vmatprep.subr.mxu0 0.0
    %5747 = vmatpush1.msra.mxu0 0.0
    %5748 = vmatprep.subr.mxu0 0.0
    %5749 = vmatpush1.msra.mxu0 0.0
    %5750 = vmatprep.mubr.f32.mxu0 0.0
    %5751 = vmatmul.mubr.f32.gmra.mrb[0].mxu0 %v5663
    %v5752 = vpop.f32.mrb[0].mxu0
    %v5753 = vadd.f32 0.0, %v5752
    %v5754 = vpop.f32.mrb[0].mxu0
    %5755 = vmatprep.mubr.f32.mxu0 0.0
    %5756 = vmatmul.mubr.f32.gmra.mrb[0].mxu0 %v5666
    %v5757 = vpop.f32.mrb[0].mxu0
    %v5758 = vadd.f32 0.0, %v5757
    %v5759 = vpop.f32.mrb[0].mxu0
    %5760 = vmatprep.mubr.f32.mxu0 0.0
    %5761 = vmatmul.mubr.f32.gmra.mrb[0].mxu0 %v5669
    %v5762 = vpop.f32.mrb[0].mxu0
    %v5763 = vadd.f32 0.0, %v5762
    %v5764 = vpop.f32.mrb[0].mxu0
    %5765 = vmatprep.mubr.f32.mxu0 0.0
    %5766 = vmatmul.mubr.f32.gmra.mrb[0].mxu0 %v5672
    %v5767 = vpop.f32.mrb[0].mxu0
    %v5768 = vadd.f32 0.0, %v5767
    %v5769 = vpop.f32.mrb[0].mxu0
    %5770 = vmatprep.mubr.f32.mxu0 0.0
    %5771 = vmatmul.mubr.f32.gmra.mrb[0].mxu0 %v5675
    %v5772 = vpop.f32.mrb[0].mxu0
    %v5773 = vadd.f32 0.0, %v5772
    %v5774 = vpop.f32.mrb[0].mxu0
    %5775 = vmatprep.mubr.f32.mxu0 0.0
    %5776 = vmatmul.mubr.f32.gmra.mrb[0].mxu0 %v5678
    %v5777 = vpop.f32.mrb[0].mxu0
    %v5778 = vadd.f32 0.0, %v5777
    %v5779 = vpop.f32.mrb[0].mxu0
    %5780 = vmatprep.mubr.f32.mxu0 0.0
    %5781 = vmatmul.mubr.f32.gmra.mrb[0].mxu0 %v5681
    %v5782 = vpop.f32.mrb[0].mxu0
    %v5783 = vadd.f32 0.0, %v5782
    %v5784 = vpop.f32.mrb[0].mxu0
    %5785 = vmatprep.mubr.f32.mxu0 0.0
    %5786 = vmatmul.mubr.f32.gmra.mrb[0].mxu0 %v5684
    %v5787 = vpop.f32.mrb[0].mxu0
    %v5788 = vadd.f32 0.0, %v5787
    %v5789 = vpop.f32.mrb[0].mxu0
    %5790 = vdwg.mxu0
    %v5791 = vadd.f32 %v5549, %v5753
    %v5792 = vadd.f32 %v5550, %v5758
    %v5793 = vadd.f32 %v5551, %v5763
    %v5794 = vadd.f32 %v5552, %v5768
    %v5795 = vadd.f32 %v5553, %v5773
    %v5796 = vadd.f32 %v5554, %v5778
    %v5797 = vadd.f32 %v5555, %v5783
    %v5798 = vadd.f32 %v5556, %v5788
    %5799 = vmatprep.subr.mxu0 0.0
    %5800 = vmatpush1.msra.mxu0 %v4297
    %5801 = vmatprep.subr.mxu0 0.0
    %5802 = vmatpush1.msra.mxu0 %v4302
    %5803 = vmatprep.subr.mxu0 0.0
    %5804 = vmatpush1.msra.mxu0 %v4307
    %5805 = vmatprep.subr.mxu0 0.0
    %5806 = vmatpush1.msra.mxu0 %v4312
    %5807 = vmatprep.subr.mxu0 0.0
    %5808 = vmatpush1.msra.mxu0 %v4317
    %5809 = vmatprep.subr.mxu0 0.0
    %5810 = vmatpush1.msra.mxu0 %v4322
    %5811 = vmatprep.subr.mxu0 0.0
    %5812 = vmatpush1.msra.mxu0 %v4327
    %5813 = vmatprep.subr.mxu0 0.0
    %5814 = vmatpush1.msra.mxu0 %v4332
    %5815 = vmatprep.subr.mxu0 0.0
    %5816 = vmatpush1.msra.mxu0 %v4337
    %5817 = vmatprep.subr.mxu0 0.0
    %5818 = vmatpush1.msra.mxu0 %v4342
    %5819 = vmatprep.subr.mxu0 0.0
    %5820 = vmatpush1.msra.mxu0 %v4347
    %5821 = vmatprep.subr.mxu0 0.0
    %5822 = vmatpush1.msra.mxu0 %v4352
    %5823 = vmatprep.subr.mxu0 0.0
    %5824 = vmatpush1.msra.mxu0 %v4361
    %5825 = vmatprep.subr.mxu0 0.0
    %5826 = vmatpush1.msra.mxu0 0.0
    %5827 = vmatprep.subr.mxu0 0.0
    %5828 = vmatpush1.msra.mxu0 0.0
    %5829 = vmatprep.subr.mxu0 0.0
    %5830 = vmatpush1.msra.mxu0 0.0
    %5831 = vmatprep.subr.mxu0 0.0
    %5832 = vmatpush1.msra.mxu0 0.0
    %5833 = vmatprep.subr.mxu0 0.0
    %5834 = vmatpush1.msra.mxu0 0.0
    %5835 = vmatprep.subr.mxu0 0.0
    %5836 = vmatpush1.msra.mxu0 0.0
    %5837 = vmatprep.subr.mxu0 0.0
    %5838 = vmatpush1.msra.mxu0 0.0
    %5839 = vmatprep.subr.mxu0 0.0
    %5840 = vmatpush1.msra.mxu0 0.0
    %5841 = vmatprep.subr.mxu0 0.0
    %5842 = vmatpush1.msra.mxu0 0.0
    %5843 = vmatprep.subr.mxu0 0.0
    %5844 = vmatpush1.msra.mxu0 0.0
    %5845 = vmatprep.subr.mxu0 0.0
    %5846 = vmatpush1.msra.mxu0 0.0
    %5847 = vmatprep.subr.mxu0 0.0
    %5848 = vmatpush1.msra.mxu0 0.0
    %5849 = vmatprep.subr.mxu0 0.0
    %5850 = vmatpush1.msra.mxu0 0.0
    %5851 = vmatprep.subr.mxu0 0.0
    %5852 = vmatpush1.msra.mxu0 0.0
    %5853 = vmatprep.subr.mxu0 0.0
    %5854 = vmatpush1.msra.mxu0 0.0
    %5855 = vmatprep.subr.mxu0 0.0
    %5856 = vmatpush1.msra.mxu0 0.0
    %5857 = vmatprep.subr.mxu0 0.0
    %5858 = vmatpush1.msra.mxu0 0.0
    %5859 = vmatprep.subr.mxu0 0.0
    %5860 = vmatpush1.msra.mxu0 0.0
    %5861 = vmatprep.subr.mxu0 0.0
    %5862 = vmatpush1.msra.mxu0 0.0
    %5863 = vmatprep.mubr.f32.mxu0 0.0
    %5864 = vmatmul.mubr.f32.gmra.mrb[0].mxu0 %v3163
    %v5865 = vpop.f32.mrb[0].mxu0
    %v5866 = vadd.f32 0.0, %v5865
    %v5867 = vpop.f32.mrb[0].mxu0
    %5868 = vmatprep.mubr.f32.mxu0 0.0
    %5869 = vmatmul.mubr.f32.gmra.mrb[0].mxu0 %v3166
    %v5870 = vpop.f32.mrb[0].mxu0
    %v5871 = vadd.f32 0.0, %v5870
    %v5872 = vpop.f32.mrb[0].mxu0
    %5873 = vmatprep.mubr.f32.mxu0 0.0
    %5874 = vmatmul.mubr.f32.gmra.mrb[0].mxu0 %v3169
    %v5875 = vpop.f32.mrb[0].mxu0
    %v5876 = vadd.f32 0.0, %v5875
    %v5877 = vpop.f32.mrb[0].mxu0
    %5878 = vmatprep.mubr.f32.mxu0 0.0
    %5879 = vmatmul.mubr.f32.gmra.mrb[0].mxu0 %v3172
    %v5880 = vpop.f32.mrb[0].mxu0
    %v5881 = vadd.f32 0.0, %v5880
    %v5882 = vpop.f32.mrb[0].mxu0
    %5883 = vmatprep.mubr.f32.mxu0 0.0
    %5884 = vmatmul.mubr.f32.gmra.mrb[0].mxu0 %v3175
    %v5885 = vpop.f32.mrb[0].mxu0
    %v5886 = vadd.f32 0.0, %v5885
    %v5887 = vpop.f32.mrb[0].mxu0
    %5888 = vmatprep.mubr.f32.mxu0 0.0
    %5889 = vmatmul.mubr.f32.gmra.mrb[0].mxu0 %v3178
    %v5890 = vpop.f32.mrb[0].mxu0
    %v5891 = vadd.f32 0.0, %v5890
    %v5892 = vpop.f32.mrb[0].mxu0
    %5893 = vmatprep.mubr.f32.mxu0 0.0
    %5894 = vmatmul.mubr.f32.gmra.mrb[0].mxu0 %v3181
    %v5895 = vpop.f32.mrb[0].mxu0
    %v5896 = vadd.f32 0.0, %v5895
    %v5897 = vpop.f32.mrb[0].mxu0
    %5898 = vmatprep.mubr.f32.mxu0 0.0
    %5899 = vmatmul.mubr.f32.gmra.mrb[0].mxu0 %v3184
    %v5900 = vpop.f32.mrb[0].mxu0
    %v5901 = vadd.f32 0.0, %v5900
    %v5902 = vpop.f32.mrb[0].mxu0
    %5903 = vdwg.mxu0
    %v5905 = vsel %vm1768, %v5866, 0
    %v5908 = vsel %vm1768, %v5871, 0
    %v5911 = vsel %vm1768, %v5876, 0
    %v5914 = vsel %vm1768, %v5881, 0
    %v5917 = vsel %vm1768, %v5886, 0
    %v5920 = vsel %vm1768, %v5891, 0
    %v5923 = vsel %vm1768, %v5896, 0
    %v5926 = vsel %vm1768, %v5901, 0
    %5928 = vmatprep.subr.mxu0 0.0
    %5929 = vmatpush1.msra.mxu0 %v3318
    %5930 = vmatprep.subr.mxu0 0.0
    %5931 = vmatpush1.msra.mxu0 0.0
    %5932 = vmatprep.subr.mxu0 0.0
    %5933 = vmatpush1.msra.mxu0 0.0
    %5934 = vmatprep.subr.mxu0 0.0
    %5935 = vmatpush1.msra.mxu0 0.0
    %5936 = vmatprep.subr.mxu0 0.0
    %5937 = vmatpush1.msra.mxu0 0.0
    %5938 = vmatprep.subr.mxu0 0.0
    %5939 = vmatpush1.msra.mxu0 0.0
    %5940 = vmatprep.subr.mxu0 0.0
    %5941 = vmatpush1.msra.mxu0 0.0
    %5942 = vmatprep.subr.mxu0 0.0
    %5943 = vmatpush1.msra.mxu0 0.0
    %5944 = vmatprep.subr.mxu0 0.0
    %5945 = vmatpush1.msra.mxu0 0.0
    %5946 = vmatprep.subr.mxu0 0.0
    %5947 = vmatpush1.msra.mxu0 0.0
    %5948 = vmatprep.subr.mxu0 0.0
    %5949 = vmatpush1.msra.mxu0 0.0
    %5950 = vmatprep.subr.mxu0 0.0
    %5951 = vmatpush1.msra.mxu0 0.0
    %5952 = vmatprep.subr.mxu0 0.0
    %5953 = vmatpush1.msra.mxu0 0.0
    %5954 = vmatprep.subr.mxu0 0.0
    %5955 = vmatpush1.msra.mxu0 0.0
    %5956 = vmatprep.subr.mxu0 0.0
    %5957 = vmatpush1.msra.mxu0 0.0
    %5958 = vmatprep.subr.mxu0 0.0
    %5959 = vmatpush1.msra.mxu0 0.0
    %5960 = vmatprep.subr.mxu0 0.0
    %5961 = vmatpush1.msra.mxu0 0.0
    %5962 = vmatprep.subr.mxu0 0.0
    %5963 = vmatpush1.msra.mxu0 0.0
    %5964 = vmatprep.subr.mxu0 0.0
    %5965 = vmatpush1.msra.mxu0 0.0
    %5966 = vmatprep.subr.mxu0 0.0
    %5967 = vmatpush1.msra.mxu0 0.0
    %5968 = vmatprep.subr.mxu0 0.0
    %5969 = vmatpush1.msra.mxu0 0.0
    %5970 = vmatprep.subr.mxu0 0.0
    %5971 = vmatpush1.msra.mxu0 0.0
    %5972 = vmatprep.subr.mxu0 0.0
    %5973 = vmatpush1.msra.mxu0 0.0
    %5974 = vmatprep.subr.mxu0 0.0
    %5975 = vmatpush1.msra.mxu0 0.0
    %5976 = vmatprep.subr.mxu0 0.0
    %5977 = vmatpush1.msra.mxu0 0.0
    %5978 = vmatprep.subr.mxu0 0.0
    %5979 = vmatpush1.msra.mxu0 0.0
    %5980 = vmatprep.subr.mxu0 0.0
    %5981 = vmatpush1.msra.mxu0 0.0
    %5982 = vmatprep.subr.mxu0 0.0
    %5983 = vmatpush1.msra.mxu0 0.0
    %5984 = vmatprep.subr.mxu0 0.0
    %5985 = vmatpush1.msra.mxu0 0.0
    %5986 = vmatprep.subr.mxu0 0.0
    %5987 = vmatpush1.msra.mxu0 0.0
    %5988 = vmatprep.subr.mxu0 0.0
    %5989 = vmatpush1.msra.mxu0 0.0
    %5990 = vmatprep.subr.mxu0 0.0
    %5991 = vmatpush1.msra.mxu0 0.0
    %5992 = vmatprep.mubr.f32.mxu0 0.0
    %5993 = vmatmul.mubr.f32.gmra.mrb[0].mxu0 %v5905
    %v5994 = vpop.f32.mrb[0].mxu0
    %v5995 = vadd.f32 0.0, %v5994
    %v5996 = vpop.f32.mrb[0].mxu0
    %5997 = vmatprep.mubr.f32.mxu0 0.0
    %5998 = vmatmul.mubr.f32.gmra.mrb[0].mxu0 %v5908
    %v5999 = vpop.f32.mrb[0].mxu0
    %v6000 = vadd.f32 0.0, %v5999
    %v6001 = vpop.f32.mrb[0].mxu0
    %6002 = vmatprep.mubr.f32.mxu0 0.0
    %6003 = vmatmul.mubr.f32.gmra.mrb[0].mxu0 %v5911
    %v6004 = vpop.f32.mrb[0].mxu0
    %v6005 = vadd.f32 0.0, %v6004
    %v6006 = vpop.f32.mrb[0].mxu0
    %6007 = vmatprep.mubr.f32.mxu0 0.0
    %6008 = vmatmul.mubr.f32.gmra.mrb[0].mxu0 %v5914
    %v6009 = vpop.f32.mrb[0].mxu0
    %v6010 = vadd.f32 0.0, %v6009
    %v6011 = vpop.f32.mrb[0].mxu0
    %6012 = vmatprep.mubr.f32.mxu0 0.0
    %6013 = vmatmul.mubr.f32.gmra.mrb[0].mxu0 %v5917
    %v6014 = vpop.f32.mrb[0].mxu0
    %v6015 = vadd.f32 0.0, %v6014
    %v6016 = vpop.f32.mrb[0].mxu0
    %6017 = vmatprep.mubr.f32.mxu0 0.0
    %6018 = vmatmul.mubr.f32.gmra.mrb[0].mxu0 %v5920
    %v6019 = vpop.f32.mrb[0].mxu0
    %v6020 = vadd.f32 0.0, %v6019
    %v6021 = vpop.f32.mrb[0].mxu0
    %6022 = vmatprep.mubr.f32.mxu0 0.0
    %6023 = vmatmul.mubr.f32.gmra.mrb[0].mxu0 %v5923
    %v6024 = vpop.f32.mrb[0].mxu0
    %v6025 = vadd.f32 0.0, %v6024
    %v6026 = vpop.f32.mrb[0].mxu0
    %6027 = vmatprep.mubr.f32.mxu0 0.0
    %6028 = vmatmul.mubr.f32.gmra.mrb[0].mxu0 %v5926
    %v6029 = vpop.f32.mrb[0].mxu0
    %v6030 = vadd.f32 0.0, %v6029
    %v6031 = vpop.f32.mrb[0].mxu0
    %6032 = vdwg.mxu0
    %v6033 = vadd.f32 %v5791, %v5995
    %v6034 = vadd.f32 %v5792, %v6000
    %v6035 = vadd.f32 %v5793, %v6005
    %v6036 = vadd.f32 %v5794, %v6010
    %v6037 = vadd.f32 %v5795, %v6015
    %v6038 = vadd.f32 %v5796, %v6020
    %v6039 = vadd.f32 %v5797, %v6025
    %v6040 = vadd.f32 %v5798, %v6030
    %6041 = vmatprep.subr.mxu0 0.0
    %6042 = vmatpush1.msra.mxu0 %v4297
    %6043 = vmatprep.subr.mxu0 0.0
    %6044 = vmatpush1.msra.mxu0 %v4302
    %6045 = vmatprep.subr.mxu0 0.0
    %6046 = vmatpush1.msra.mxu0 %v4307
    %6047 = vmatprep.subr.mxu0 0.0
    %6048 = vmatpush1.msra.mxu0 %v4312
    %6049 = vmatprep.subr.mxu0 0.0
    %6050 = vmatpush1.msra.mxu0 %v4317
    %6051 = vmatprep.subr.mxu0 0.0
    %6052 = vmatpush1.msra.mxu0 %v4322
    %6053 = vmatprep.subr.mxu0 0.0
    %6054 = vmatpush1.msra.mxu0 %v4327
    %6055 = vmatprep.subr.mxu0 0.0
    %6056 = vmatpush1.msra.mxu0 %v4332
    %6057 = vmatprep.subr.mxu0 0.0
    %6058 = vmatpush1.msra.mxu0 %v4337
    %6059 = vmatprep.subr.mxu0 0.0
    %6060 = vmatpush1.msra.mxu0 %v4342
    %6061 = vmatprep.subr.mxu0 0.0
    %6062 = vmatpush1.msra.mxu0 %v4347
    %6063 = vmatprep.subr.mxu0 0.0
    %6064 = vmatpush1.msra.mxu0 %v4352
    %6065 = vmatprep.subr.mxu0 0.0
    %6066 = vmatpush1.msra.mxu0 %v4361
    %6067 = vmatprep.subr.mxu0 0.0
    %6068 = vmatpush1.msra.mxu0 0.0
    %6069 = vmatprep.subr.mxu0 0.0
    %6070 = vmatpush1.msra.mxu0 0.0
    %6071 = vmatprep.subr.mxu0 0.0
    %6072 = vmatpush1.msra.mxu0 0.0
    %6073 = vmatprep.subr.mxu0 0.0
    %6074 = vmatpush1.msra.mxu0 0.0
    %6075 = vmatprep.subr.mxu0 0.0
    %6076 = vmatpush1.msra.mxu0 0.0
    %6077 = vmatprep.subr.mxu0 0.0
    %6078 = vmatpush1.msra.mxu0 0.0
    %6079 = vmatprep.subr.mxu0 0.0
    %6080 = vmatpush1.msra.mxu0 0.0
    %6081 = vmatprep.subr.mxu0 0.0
    %6082 = vmatpush1.msra.mxu0 0.0
    %6083 = vmatprep.subr.mxu0 0.0
    %6084 = vmatpush1.msra.mxu0 0.0
    %6085 = vmatprep.subr.mxu0 0.0
    %6086 = vmatpush1.msra.mxu0 0.0
    %6087 = vmatprep.subr.mxu0 0.0
    %6088 = vmatpush1.msra.mxu0 0.0
    %6089 = vmatprep.subr.mxu0 0.0
    %6090 = vmatpush1.msra.mxu0 0.0
    %6091 = vmatprep.subr.mxu0 0.0
    %6092 = vmatpush1.msra.mxu0 0.0
    %6093 = vmatprep.subr.mxu0 0.0
    %6094 = vmatpush1.msra.mxu0 0.0
    %6095 = vmatprep.subr.mxu0 0.0
    %6096 = vmatpush1.msra.mxu0 0.0
    %6097 = vmatprep.subr.mxu0 0.0
    %6098 = vmatpush1.msra.mxu0 0.0
    %6099 = vmatprep.subr.mxu0 0.0
    %6100 = vmatpush1.msra.mxu0 0.0
    %6101 = vmatprep.subr.mxu0 0.0
    %6102 = vmatpush1.msra.mxu0 0.0
    %6103 = vmatprep.subr.mxu0 0.0
    %6104 = vmatpush1.msra.mxu0 0.0
    %6105 = vmatprep.mubr.f32.mxu0 0.0
    %6106 = vmatmul.mubr.f32.gmra.mrb[0].mxu0 %v3443
    %v6107 = vpop.f32.mrb[0].mxu0
    %v6108 = vadd.f32 0.0, %v6107
    %v6109 = vpop.f32.mrb[0].mxu0
    %6110 = vmatprep.mubr.f32.mxu0 0.0
    %6111 = vmatmul.mubr.f32.gmra.mrb[0].mxu0 %v3446
    %v6112 = vpop.f32.mrb[0].mxu0
    %v6113 = vadd.f32 0.0, %v6112
    %v6114 = vpop.f32.mrb[0].mxu0
    %6115 = vmatprep.mubr.f32.mxu0 0.0
    %6116 = vmatmul.mubr.f32.gmra.mrb[0].mxu0 %v3449
    %v6117 = vpop.f32.mrb[0].mxu0
    %v6118 = vadd.f32 0.0, %v6117
    %v6119 = vpop.f32.mrb[0].mxu0
    %6120 = vmatprep.mubr.f32.mxu0 0.0
    %6121 = vmatmul.mubr.f32.gmra.mrb[0].mxu0 %v3452
    %v6122 = vpop.f32.mrb[0].mxu0
    %v6123 = vadd.f32 0.0, %v6122
    %v6124 = vpop.f32.mrb[0].mxu0
    %6125 = vmatprep.mubr.f32.mxu0 0.0
    %6126 = vmatmul.mubr.f32.gmra.mrb[0].mxu0 %v3455
    %v6127 = vpop.f32.mrb[0].mxu0
    %v6128 = vadd.f32 0.0, %v6127
    %v6129 = vpop.f32.mrb[0].mxu0
    %6130 = vmatprep.mubr.f32.mxu0 0.0
    %6131 = vmatmul.mubr.f32.gmra.mrb[0].mxu0 %v3458
    %v6132 = vpop.f32.mrb[0].mxu0
    %v6133 = vadd.f32 0.0, %v6132
    %v6134 = vpop.f32.mrb[0].mxu0
    %6135 = vmatprep.mubr.f32.mxu0 0.0
    %6136 = vmatmul.mubr.f32.gmra.mrb[0].mxu0 %v3461
    %v6137 = vpop.f32.mrb[0].mxu0
    %v6138 = vadd.f32 0.0, %v6137
    %v6139 = vpop.f32.mrb[0].mxu0
    %6140 = vmatprep.mubr.f32.mxu0 0.0
    %6141 = vmatmul.mubr.f32.gmra.mrb[0].mxu0 %v3464
    %v6142 = vpop.f32.mrb[0].mxu0
    %v6143 = vadd.f32 0.0, %v6142
    %v6144 = vpop.f32.mrb[0].mxu0
    %6145 = vdwg.mxu0
    %v6147 = vsel %vm1768, %v6108, 0
    %v6150 = vsel %vm1768, %v6113, 0
    %v6153 = vsel %vm1768, %v6118, 0
    %v6156 = vsel %vm1768, %v6123, 0
    %v6159 = vsel %vm1768, %v6128, 0
    %v6162 = vsel %vm1768, %v6133, 0
    %v6165 = vsel %vm1768, %v6138, 0
    %v6168 = vsel %vm1768, %v6143, 0
    %6170 = vmatprep.subr.mxu0 0.0
    %6171 = vmatpush1.msra.mxu0 %v3598
    %6172 = vmatprep.subr.mxu0 0.0
    %6173 = vmatpush1.msra.mxu0 0.0
    %6174 = vmatprep.subr.mxu0 0.0
    %6175 = vmatpush1.msra.mxu0 0.0
    %6176 = vmatprep.subr.mxu0 0.0
    %6177 = vmatpush1.msra.mxu0 0.0
    %6178 = vmatprep.subr.mxu0 0.0
    %6179 = vmatpush1.msra.mxu0 0.0
    %6180 = vmatprep.subr.mxu0 0.0
    %6181 = vmatpush1.msra.mxu0 0.0
    %6182 = vmatprep.subr.mxu0 0.0
    %6183 = vmatpush1.msra.mxu0 0.0
    %6184 = vmatprep.subr.mxu0 0.0
    %6185 = vmatpush1.msra.mxu0 0.0
    %6186 = vmatprep.subr.mxu0 0.0
    %6187 = vmatpush1.msra.mxu0 0.0
    %6188 = vmatprep.subr.mxu0 0.0
    %6189 = vmatpush1.msra.mxu0 0.0
    %6190 = vmatprep.subr.mxu0 0.0
    %6191 = vmatpush1.msra.mxu0 0.0
    %6192 = vmatprep.subr.mxu0 0.0
    %6193 = vmatpush1.msra.mxu0 0.0
    %6194 = vmatprep.subr.mxu0 0.0
    %6195 = vmatpush1.msra.mxu0 0.0
    %6196 = vmatprep.subr.mxu0 0.0
    %6197 = vmatpush1.msra.mxu0 0.0
    %6198 = vmatprep.subr.mxu0 0.0
    %6199 = vmatpush1.msra.mxu0 0.0
    %6200 = vmatprep.subr.mxu0 0.0
    %6201 = vmatpush1.msra.mxu0 0.0
    %6202 = vmatprep.subr.mxu0 0.0
    %6203 = vmatpush1.msra.mxu0 0.0
    %6204 = vmatprep.subr.mxu0 0.0
    %6205 = vmatpush1.msra.mxu0 0.0
    %6206 = vmatprep.subr.mxu0 0.0
    %6207 = vmatpush1.msra.mxu0 0.0
    %6208 = vmatprep.subr.mxu0 0.0
    %6209 = vmatpush1.msra.mxu0 0.0
    %6210 = vmatprep.subr.mxu0 0.0
    %6211 = vmatpush1.msra.mxu0 0.0
    %6212 = vmatprep.subr.mxu0 0.0
    %6213 = vmatpush1.msra.mxu0 0.0
    %6214 = vmatprep.subr.mxu0 0.0
    %6215 = vmatpush1.msra.mxu0 0.0
    %6216 = vmatprep.subr.mxu0 0.0
    %6217 = vmatpush1.msra.mxu0 0.0
    %6218 = vmatprep.subr.mxu0 0.0
    %6219 = vmatpush1.msra.mxu0 0.0
    %6220 = vmatprep.subr.mxu0 0.0
    %6221 = vmatpush1.msra.mxu0 0.0
    %6222 = vmatprep.subr.mxu0 0.0
    %6223 = vmatpush1.msra.mxu0 0.0
    %6224 = vmatprep.subr.mxu0 0.0
    %6225 = vmatpush1.msra.mxu0 0.0
    %6226 = vmatprep.subr.mxu0 0.0
    %6227 = vmatpush1.msra.mxu0 0.0
    %6228 = vmatprep.subr.mxu0 0.0
    %6229 = vmatpush1.msra.mxu0 0.0
    %6230 = vmatprep.subr.mxu0 0.0
    %6231 = vmatpush1.msra.mxu0 0.0
    %6232 = vmatprep.subr.mxu0 0.0
    %6233 = vmatpush1.msra.mxu0 0.0
    %6234 = vmatprep.mubr.f32.mxu0 0.0
    %6235 = vmatmul.mubr.f32.gmra.mrb[0].mxu0 %v6147
    %v6236 = vpop.f32.mrb[0].mxu0
    %v6237 = vadd.f32 0.0, %v6236
    %v6238 = vpop.f32.mrb[0].mxu0
    %6239 = vmatprep.mubr.f32.mxu0 0.0
    %6240 = vmatmul.mubr.f32.gmra.mrb[0].mxu0 %v6150
    %v6241 = vpop.f32.mrb[0].mxu0
    %v6242 = vadd.f32 0.0, %v6241
    %v6243 = vpop.f32.mrb[0].mxu0
    %6244 = vmatprep.mubr.f32.mxu0 0.0
    %6245 = vmatmul.mubr.f32.gmra.mrb[0].mxu0 %v6153
    %v6246 = vpop.f32.mrb[0].mxu0
    %v6247 = vadd.f32 0.0, %v6246
    %v6248 = vpop.f32.mrb[0].mxu0
    %6249 = vmatprep.mubr.f32.mxu0 0.0
    %6250 = vmatmul.mubr.f32.gmra.mrb[0].mxu0 %v6156
    %v6251 = vpop.f32.mrb[0].mxu0
    %v6252 = vadd.f32 0.0, %v6251
    %v6253 = vpop.f32.mrb[0].mxu0
    %6254 = vmatprep.mubr.f32.mxu0 0.0
    %6255 = vmatmul.mubr.f32.gmra.mrb[0].mxu0 %v6159
    %v6256 = vpop.f32.mrb[0].mxu0
    %v6257 = vadd.f32 0.0, %v6256
    %v6258 = vpop.f32.mrb[0].mxu0
    %6259 = vmatprep.mubr.f32.mxu0 0.0
    %6260 = vmatmul.mubr.f32.gmra.mrb[0].mxu0 %v6162
    %v6261 = vpop.f32.mrb[0].mxu0
    %v6262 = vadd.f32 0.0, %v6261
    %v6263 = vpop.f32.mrb[0].mxu0
    %6264 = vmatprep.mubr.f32.mxu0 0.0
    %6265 = vmatmul.mubr.f32.gmra.mrb[0].mxu0 %v6165
    %v6266 = vpop.f32.mrb[0].mxu0
    %v6267 = vadd.f32 0.0, %v6266
    %v6268 = vpop.f32.mrb[0].mxu0
    %6269 = vmatprep.mubr.f32.mxu0 0.0
    %6270 = vmatmul.mubr.f32.gmra.mrb[0].mxu0 %v6168
    %v6271 = vpop.f32.mrb[0].mxu0
    %v6272 = vadd.f32 0.0, %v6271
    %v6273 = vpop.f32.mrb[0].mxu0
    %6274 = vdwg.mxu0
    %v6275 = vadd.f32 %v6033, %v6237
    %v6276 = vadd.f32 %v6034, %v6242
    %v6277 = vadd.f32 %v6035, %v6247
    %v6278 = vadd.f32 %v6036, %v6252
    %v6279 = vadd.f32 %v6037, %v6257
    %v6280 = vadd.f32 %v6038, %v6262
    %v6281 = vadd.f32 %v6039, %v6267
    %v6282 = vadd.f32 %v6040, %v6272
    %6283 = vmatprep.subr.mxu0 0.0
    %6284 = vmatpush1.msra.mxu0 %v4297
    %6285 = vmatprep.subr.mxu0 0.0
    %6286 = vmatpush1.msra.mxu0 %v4302
    %6287 = vmatprep.subr.mxu0 0.0
    %6288 = vmatpush1.msra.mxu0 %v4307
    %6289 = vmatprep.subr.mxu0 0.0
    %6290 = vmatpush1.msra.mxu0 %v4312
    %6291 = vmatprep.subr.mxu0 0.0
    %6292 = vmatpush1.msra.mxu0 %v4317
    %6293 = vmatprep.subr.mxu0 0.0
    %6294 = vmatpush1.msra.mxu0 %v4322
    %6295 = vmatprep.subr.mxu0 0.0
    %6296 = vmatpush1.msra.mxu0 %v4327
    %6297 = vmatprep.subr.mxu0 0.0
    %6298 = vmatpush1.msra.mxu0 %v4332
    %6299 = vmatprep.subr.mxu0 0.0
    %6300 = vmatpush1.msra.mxu0 %v4337
    %6301 = vmatprep.subr.mxu0 0.0
    %6302 = vmatpush1.msra.mxu0 %v4342
    %6303 = vmatprep.subr.mxu0 0.0
    %6304 = vmatpush1.msra.mxu0 %v4347
    %6305 = vmatprep.subr.mxu0 0.0
    %6306 = vmatpush1.msra.mxu0 %v4352
    %6307 = vmatprep.subr.mxu0 0.0
    %6308 = vmatpush1.msra.mxu0 %v4361
    %6309 = vmatprep.subr.mxu0 0.0
    %6310 = vmatpush1.msra.mxu0 0.0
    %6311 = vmatprep.subr.mxu0 0.0
    %6312 = vmatpush1.msra.mxu0 0.0
    %6313 = vmatprep.subr.mxu0 0.0
    %6314 = vmatpush1.msra.mxu0 0.0
    %6315 = vmatprep.subr.mxu0 0.0
    %6316 = vmatpush1.msra.mxu0 0.0
    %6317 = vmatprep.subr.mxu0 0.0
    %6318 = vmatpush1.msra.mxu0 0.0
    %6319 = vmatprep.subr.mxu0 0.0
    %6320 = vmatpush1.msra.mxu0 0.0
    %6321 = vmatprep.subr.mxu0 0.0
    %6322 = vmatpush1.msra.mxu0 0.0
    %6323 = vmatprep.subr.mxu0 0.0
    %6324 = vmatpush1.msra.mxu0 0.0
    %6325 = vmatprep.subr.mxu0 0.0
    %6326 = vmatpush1.msra.mxu0 0.0
    %6327 = vmatprep.subr.mxu0 0.0
    %6328 = vmatpush1.msra.mxu0 0.0
    %6329 = vmatprep.subr.mxu0 0.0
    %6330 = vmatpush1.msra.mxu0 0.0
    %6331 = vmatprep.subr.mxu0 0.0
    %6332 = vmatpush1.msra.mxu0 0.0
    %6333 = vmatprep.subr.mxu0 0.0
    %6334 = vmatpush1.msra.mxu0 0.0
    %6335 = vmatprep.subr.mxu0 0.0
    %6336 = vmatpush1.msra.mxu0 0.0
    %6337 = vmatprep.subr.mxu0 0.0
    %6338 = vmatpush1.msra.mxu0 0.0
    %6339 = vmatprep.subr.mxu0 0.0
    %6340 = vmatpush1.msra.mxu0 0.0
    %6341 = vmatprep.subr.mxu0 0.0
    %6342 = vmatpush1.msra.mxu0 0.0
    %6343 = vmatprep.subr.mxu0 0.0
    %6344 = vmatpush1.msra.mxu0 0.0
    %6345 = vmatprep.subr.mxu0 0.0
    %6346 = vmatpush1.msra.mxu0 0.0
    %6347 = vmatprep.mubr.f32.mxu0 0.0
    %6348 = vmatmul.mubr.f32.gmra.mrb[0].mxu0 %v3723
    %v6349 = vpop.f32.mrb[0].mxu0
    %v6350 = vadd.f32 0.0, %v6349
    %v6351 = vpop.f32.mrb[0].mxu0
    %6352 = vmatprep.mubr.f32.mxu0 0.0
    %6353 = vmatmul.mubr.f32.gmra.mrb[0].mxu0 %v3726
    %v6354 = vpop.f32.mrb[0].mxu0
    %v6355 = vadd.f32 0.0, %v6354
    %v6356 = vpop.f32.mrb[0].mxu0
    %6357 = vmatprep.mubr.f32.mxu0 0.0
    %6358 = vmatmul.mubr.f32.gmra.mrb[0].mxu0 %v3729
    %v6359 = vpop.f32.mrb[0].mxu0
    %v6360 = vadd.f32 0.0, %v6359
    %v6361 = vpop.f32.mrb[0].mxu0
    %6362 = vmatprep.mubr.f32.mxu0 0.0
    %6363 = vmatmul.mubr.f32.gmra.mrb[0].mxu0 %v3732
    %v6364 = vpop.f32.mrb[0].mxu0
    %v6365 = vadd.f32 0.0, %v6364
    %v6366 = vpop.f32.mrb[0].mxu0
    %6367 = vmatprep.mubr.f32.mxu0 0.0
    %6368 = vmatmul.mubr.f32.gmra.mrb[0].mxu0 %v3735
    %v6369 = vpop.f32.mrb[0].mxu0
    %v6370 = vadd.f32 0.0, %v6369
    %v6371 = vpop.f32.mrb[0].mxu0
    %6372 = vmatprep.mubr.f32.mxu0 0.0
    %6373 = vmatmul.mubr.f32.gmra.mrb[0].mxu0 %v3738
    %v6374 = vpop.f32.mrb[0].mxu0
    %v6375 = vadd.f32 0.0, %v6374
    %v6376 = vpop.f32.mrb[0].mxu0
    %6377 = vmatprep.mubr.f32.mxu0 0.0
    %6378 = vmatmul.mubr.f32.gmra.mrb[0].mxu0 %v3741
    %v6379 = vpop.f32.mrb[0].mxu0
    %v6380 = vadd.f32 0.0, %v6379
    %v6381 = vpop.f32.mrb[0].mxu0
    %6382 = vmatprep.mubr.f32.mxu0 0.0
    %6383 = vmatmul.mubr.f32.gmra.mrb[0].mxu0 %v3744
    %v6384 = vpop.f32.mrb[0].mxu0
    %v6385 = vadd.f32 0.0, %v6384
    %v6386 = vpop.f32.mrb[0].mxu0
    %6387 = vdwg.mxu0
    %v6389 = vsel %vm1768, %v6350, 0
    %v6392 = vsel %vm1768, %v6355, 0
    %v6395 = vsel %vm1768, %v6360, 0
    %v6398 = vsel %vm1768, %v6365, 0
    %v6401 = vsel %vm1768, %v6370, 0
    %v6404 = vsel %vm1768, %v6375, 0
    %v6407 = vsel %vm1768, %v6380, 0
    %v6410 = vsel %vm1768, %v6385, 0
    %6412 = vmatprep.subr.mxu0 0.0
    %6413 = vmatpush1.msra.mxu0 %v3878
    %6414 = vmatprep.subr.mxu0 0.0
    %6415 = vmatpush1.msra.mxu0 0.0
    %6416 = vmatprep.subr.mxu0 0.0
    %6417 = vmatpush1.msra.mxu0 0.0
    %6418 = vmatprep.subr.mxu0 0.0
    %6419 = vmatpush1.msra.mxu0 0.0
    %6420 = vmatprep.subr.mxu0 0.0
    %6421 = vmatpush1.msra.mxu0 0.0
    %6422 = vmatprep.subr.mxu0 0.0
    %6423 = vmatpush1.msra.mxu0 0.0
    %6424 = vmatprep.subr.mxu0 0.0
    %6425 = vmatpush1.msra.mxu0 0.0
    %6426 = vmatprep.subr.mxu0 0.0
    %6427 = vmatpush1.msra.mxu0 0.0
    %6428 = vmatprep.subr.mxu0 0.0
    %6429 = vmatpush1.msra.mxu0 0.0
    %6430 = vmatprep.subr.mxu0 0.0
    %6431 = vmatpush1.msra.mxu0 0.0
    %6432 = vmatprep.subr.mxu0 0.0
    %6433 = vmatpush1.msra.mxu0 0.0
    %6434 = vmatprep.subr.mxu0 0.0
    %6435 = vmatpush1.msra.mxu0 0.0
    %6436 = vmatprep.subr.mxu0 0.0
    %6437 = vmatpush1.msra.mxu0 0.0
    %6438 = vmatprep.subr.mxu0 0.0
    %6439 = vmatpush1.msra.mxu0 0.0
    %6440 = vmatprep.subr.mxu0 0.0
    %6441 = vmatpush1.msra.mxu0 0.0
    %6442 = vmatprep.subr.mxu0 0.0
    %6443 = vmatpush1.msra.mxu0 0.0
    %6444 = vmatprep.subr.mxu0 0.0
    %6445 = vmatpush1.msra.mxu0 0.0
    %6446 = vmatprep.subr.mxu0 0.0
    %6447 = vmatpush1.msra.mxu0 0.0
    %6448 = vmatprep.subr.mxu0 0.0
    %6449 = vmatpush1.msra.mxu0 0.0
    %6450 = vmatprep.subr.mxu0 0.0
    %6451 = vmatpush1.msra.mxu0 0.0
    %6452 = vmatprep.subr.mxu0 0.0
    %6453 = vmatpush1.msra.mxu0 0.0
    %6454 = vmatprep.subr.mxu0 0.0
    %6455 = vmatpush1.msra.mxu0 0.0
    %6456 = vmatprep.subr.mxu0 0.0
    %6457 = vmatpush1.msra.mxu0 0.0
    %6458 = vmatprep.subr.mxu0 0.0
    %6459 = vmatpush1.msra.mxu0 0.0
    %6460 = vmatprep.subr.mxu0 0.0
    %6461 = vmatpush1.msra.mxu0 0.0
    %6462 = vmatprep.subr.mxu0 0.0
    %6463 = vmatpush1.msra.mxu0 0.0
    %6464 = vmatprep.subr.mxu0 0.0
    %6465 = vmatpush1.msra.mxu0 0.0
    %6466 = vmatprep.subr.mxu0 0.0
    %6467 = vmatpush1.msra.mxu0 0.0
    %6468 = vmatprep.subr.mxu0 0.0
    %6469 = vmatpush1.msra.mxu0 0.0
    %6470 = vmatprep.subr.mxu0 0.0
    %6471 = vmatpush1.msra.mxu0 0.0
    %6472 = vmatprep.subr.mxu0 0.0
    %6473 = vmatpush1.msra.mxu0 0.0
    %6474 = vmatprep.subr.mxu0 0.0
    %6475 = vmatpush1.msra.mxu0 0.0
    %6476 = vmatprep.mubr.f32.mxu0 0.0
    %6477 = vmatmul.mubr.f32.gmra.mrb[0].mxu0 %v6389
    %v6478 = vpop.f32.mrb[0].mxu0
    %v6479 = vadd.f32 0.0, %v6478
    %v6480 = vpop.f32.mrb[0].mxu0
    %6481 = vmatprep.mubr.f32.mxu0 0.0
    %6482 = vmatmul.mubr.f32.gmra.mrb[0].mxu0 %v6392
    %v6483 = vpop.f32.mrb[0].mxu0
    %v6484 = vadd.f32 0.0, %v6483
    %v6485 = vpop.f32.mrb[0].mxu0
    %6486 = vmatprep.mubr.f32.mxu0 0.0
    %6487 = vmatmul.mubr.f32.gmra.mrb[0].mxu0 %v6395
    %v6488 = vpop.f32.mrb[0].mxu0
    %v6489 = vadd.f32 0.0, %v6488
    %v6490 = vpop.f32.mrb[0].mxu0
    %6491 = vmatprep.mubr.f32.mxu0 0.0
    %6492 = vmatmul.mubr.f32.gmra.mrb[0].mxu0 %v6398
    %v6493 = vpop.f32.mrb[0].mxu0
    %v6494 = vadd.f32 0.0, %v6493
    %v6495 = vpop.f32.mrb[0].mxu0
    %6496 = vmatprep.mubr.f32.mxu0 0.0
    %6497 = vmatmul.mubr.f32.gmra.mrb[0].mxu0 %v6401
    %v6498 = vpop.f32.mrb[0].mxu0
    %v6499 = vadd.f32 0.0, %v6498
    %v6500 = vpop.f32.mrb[0].mxu0
    %6501 = vmatprep.mubr.f32.mxu0 0.0
    %6502 = vmatmul.mubr.f32.gmra.mrb[0].mxu0 %v6404
    %v6503 = vpop.f32.mrb[0].mxu0
    %v6504 = vadd.f32 0.0, %v6503
    %v6505 = vpop.f32.mrb[0].mxu0
    %6506 = vmatprep.mubr.f32.mxu0 0.0
    %6507 = vmatmul.mubr.f32.gmra.mrb[0].mxu0 %v6407
    %v6508 = vpop.f32.mrb[0].mxu0
    %v6509 = vadd.f32 0.0, %v6508
    %v6510 = vpop.f32.mrb[0].mxu0
    %6511 = vmatprep.mubr.f32.mxu0 0.0
    %6512 = vmatmul.mubr.f32.gmra.mrb[0].mxu0 %v6410
    %v6513 = vpop.f32.mrb[0].mxu0
    %v6514 = vadd.f32 0.0, %v6513
    %v6515 = vpop.f32.mrb[0].mxu0
    %6516 = vdwg.mxu0
    %v6517 = vadd.f32 %v6275, %v6479
    %v6518 = vadd.f32 %v6276, %v6484
    %v6519 = vadd.f32 %v6277, %v6489
    %v6520 = vadd.f32 %v6278, %v6494
    %v6521 = vadd.f32 %v6279, %v6499
    %v6522 = vadd.f32 %v6280, %v6504
    %v6523 = vadd.f32 %v6281, %v6509
    %v6524 = vadd.f32 %v6282, %v6514
    %v6525 = vadd.f32 %v6517, %v3998
    %v6526 = vadd.f32 %v6518, %v3998
    %v6527 = vadd.f32 %v6519, %v3998
    %v6528 = vadd.f32 %v6520, %v3998
    %v6529 = vadd.f32 %v6521, %v3998
    %v6530 = vadd.f32 %v6522, %v3998
    %v6531 = vadd.f32 %v6523, %v3998
    %v6532 = vadd.f32 %v6524, %v3998
    %v6533 = vmax.f32 %v6525, 0.0
    %v6534 = vmax.f32 %v6526, 0.0
    %v6535 = vmax.f32 %v6527, 0.0
    %v6536 = vmax.f32 %v6528, 0.0
    %v6537 = vmax.f32 %v6529, 0.0
    %v6538 = vmax.f32 %v6530, 0.0
    %v6539 = vmax.f32 %v6531, 0.0
    %v6540 = vmax.f32 %v6532, 0.0
    %6541 = vmatprep.subr.mxu0 0.0
    %6542 = vmatpush1.msra.mxu0 %v6533
    %6543 = vmatprep.subr.mxu0 0.0
    %6544 = vmatpush1.msra.mxu0 %v6534
    %6545 = vmatprep.subr.mxu0 0.0
    %6546 = vmatpush1.msra.mxu0 %v6535
    %6547 = vmatprep.subr.mxu0 0.0
    %6548 = vmatpush1.msra.mxu0 %v6536
    %6549 = vmatprep.subr.mxu0 0.0
    %6550 = vmatpush1.msra.mxu0 %v6537
    %6551 = vmatprep.subr.mxu0 0.0
    %6552 = vmatpush1.msra.mxu0 %v6538
    %6553 = vmatprep.subr.mxu0 0.0
    %6554 = vmatpush1.msra.mxu0 %v6539
    %6555 = vmatprep.subr.mxu0 0.0
    %6556 = vmatpush1.msra.mxu0 %v6540
    %6557 = vmatprep.subr.mxu0 0.0
    %6558 = vmatpush1.msra.mxu0 0.0
    %6559 = vmatprep.subr.mxu0 0.0
    %6560 = vmatpush1.msra.mxu0 0.0
    %6561 = vmatprep.subr.mxu0 0.0
    %6562 = vmatpush1.msra.mxu0 0.0
    %6563 = vmatprep.subr.mxu0 0.0
    %6564 = vmatpush1.msra.mxu0 0.0
    %6565 = vmatprep.subr.mxu0 0.0
    %6566 = vmatpush1.msra.mxu0 0.0
    %6567 = vmatprep.subr.mxu0 0.0
    %6568 = vmatpush1.msra.mxu0 0.0
    %6569 = vmatprep.subr.mxu0 0.0
    %6570 = vmatpush1.msra.mxu0 0.0
    %6571 = vmatprep.subr.mxu0 0.0
    %6572 = vmatpush1.msra.mxu0 0.0
    %6573 = vmatprep.subr.mxu0 0.0
    %6574 = vmatpush1.msra.mxu0 0.0
    %6575 = vmatprep.subr.mxu0 0.0
    %6576 = vmatpush1.msra.mxu0 0.0
    %6577 = vmatprep.subr.mxu0 0.0
    %6578 = vmatpush1.msra.mxu0 0.0
    %6579 = vmatprep.subr.mxu0 0.0
    %6580 = vmatpush1.msra.mxu0 0.0
    %6581 = vmatprep.subr.mxu0 0.0
    %6582 = vmatpush1.msra.mxu0 0.0
    %6583 = vmatprep.subr.mxu0 0.0
    %6584 = vmatpush1.msra.mxu0 0.0
    %6585 = vmatprep.subr.mxu0 0.0
    %6586 = vmatpush1.msra.mxu0 0.0
    %6587 = vmatprep.subr.mxu0 0.0
    %6588 = vmatpush1.msra.mxu0 0.0
    %6589 = vmatprep.subr.mxu0 0.0
    %6590 = vmatpush1.msra.mxu0 0.0
    %6591 = vmatprep.subr.mxu0 0.0
    %6592 = vmatpush1.msra.mxu0 0.0
    %6593 = vmatprep.subr.mxu0 0.0
    %6594 = vmatpush1.msra.mxu0 0.0
    %6595 = vmatprep.subr.mxu0 0.0
    %6596 = vmatpush1.msra.mxu0 0.0
    %6597 = vmatprep.subr.mxu0 0.0
    %6598 = vmatpush1.msra.mxu0 0.0
    %6599 = vmatprep.subr.mxu0 0.0
    %6600 = vmatpush1.msra.mxu0 0.0
    %6601 = vmatprep.subr.mxu0 0.0
    %6602 = vmatpush1.msra.mxu0 0.0
    %6603 = vmatprep.subr.mxu0 0.0
    %6604 = vmatpush1.msra.mxu0 0.0
    %6605 = vmatprep.mubr.f32.mxu0 0.0
    %6606 = vmatmul.mubr.f32.gmra.mrb[0].mxu0 %v4020
    %v6607 = vpop.f32.mrb[0].mxu0
    %v6608 = vadd.f32 0.0, %v6607
    %v6609 = vpop.f32.mrb[0].mxu0
    %6610 = vmatprep.mubr.f32.mxu0 0.0
    %6611 = vmatmul.mubr.f32.gmra.mrb[0].mxu0 %v4023
    %v6612 = vpop.f32.mrb[0].mxu0
    %v6613 = vadd.f32 0.0, %v6612
    %v6614 = vpop.f32.mrb[0].mxu0
    %6615 = vdwg.mxu0
    %v6616 = vmul.f32 %v4092, %v4092
    %v6617 = vmul.f32 %v4097, %v4097
    %v6618 = vmul.f32 %v6608, %v6608
    %v6619 = vmul.f32 %v6613, %v6613
    %v6620 = vsel %vm1185, %v6616, 0.0
    %6621 = vadd.xlane.f32.xlu0 %v6620
    %v6622 = vpop.xlane.xlu0 %6621
    %v6623 = vsel %vm1185, %v6617, 0.0
    %6624 = vadd.xlane.f32.xlu0 %v6623
    %v6625 = vpop.xlane.xlu0 %6624
    %v6626 = vsel %vm1185, %v6618, 0.0
    %6627 = vadd.xlane.f32.xlu0 %v6626
    %v6628 = vpop.xlane.xlu0 %6627
    %v6629 = vsel %vm1185, %v6619, 0.0
    %6630 = vadd.xlane.f32.xlu0 %v6629
    %v6631 = vpop.xlane.xlu0 %6630
    %v6632 = vadd.f32 %v6622, 1e-12
    %v6633 = vadd.f32 %v6625, 1e-12
    %v6634 = vadd.f32 %v6628, 1e-12
    %v6635 = vadd.f32 %v6631, 1e-12
    %v6636 = vrsqrt.pop %v6632
    %v6637 = vrsqrt.pop %v6633
    %v6638 = vrsqrt.pop %v6634
    %v6639 = vrsqrt.pop %v6635
    %v6640 = vmul.f32 %v4092, %v6636
    %v6641 = vmul.f32 %v4097, %v6637
    %v6642 = vmul.f32 %v6608, %v6638
    %v6643 = vmul.f32 %v6613, %v6639
    %v6644 = vld [vmem:[%s8] sm:$0xff]
    %v6645 = vld [vmem:[%s8 + $0x8] sm:$0xff]
    %v6646 = vld [vmem:[%s9] sm:$0x1]
    %v6648 = vlaneseq
    %v6649 = vshrl.u32 %v6648, 7
    %v6650 = vsub.s32 0, %v6649
    %v6651 = vrot.slane %v6646, %v6650
    %v6654 = vsel %vm1185, %v6640, 0
    %v6657 = vsel %vm1185, %v6641, 0
    %v6660 = vsel %vm1185, %v6642, 0
    %v6663 = vsel %vm1185, %v6643, 0
    %6665 = vmatprep.subr.mxu0 0.0
    %6666 = vmatpush1.msra.mxu0 %v6644
    %6667 = vmatprep.subr.mxu0 0.0
    %6668 = vmatpush1.msra.mxu0 %v6645
    %6669 = vmatprep.subr.mxu0 0.0
    %6670 = vmatpush1.msra.mxu0 0.0
    %6671 = vmatprep.subr.mxu0 0.0
    %6672 = vmatpush1.msra.mxu0 0.0
    %6673 = vmatprep.subr.mxu0 0.0
    %6674 = vmatpush1.msra.mxu0 0.0
    %6675 = vmatprep.subr.mxu0 0.0
    %6676 = vmatpush1.msra.mxu0 0.0
    %6677 = vmatprep.subr.mxu0 0.0
    %6678 = vmatpush1.msra.mxu0 0.0
    %6679 = vmatprep.subr.mxu0 0.0
    %6680 = vmatpush1.msra.mxu0 0.0
    %6681 = vmatprep.subr.mxu0 0.0
    %6682 = vmatpush1.msra.mxu0 0.0
    %6683 = vmatprep.subr.mxu0 0.0
    %6684 = vmatpush1.msra.mxu0 0.0
    %6685 = vmatprep.subr.mxu0 0.0
    %6686 = vmatpush1.msra.mxu0 0.0
    %6687 = vmatprep.subr.mxu0 0.0
    %6688 = vmatpush1.msra.mxu0 0.0
    %6689 = vmatprep.subr.mxu0 0.0
    %6690 = vmatpush1.msra.mxu0 0.0
    %6691 = vmatprep.subr.mxu0 0.0
    %6692 = vmatpush1.msra.mxu0 0.0
    %6693 = vmatprep.subr.mxu0 0.0
    %6694 = vmatpush1.msra.mxu0 0.0
    %6695 = vmatprep.subr.mxu0 0.0
    %6696 = vmatpush1.msra.mxu0 0.0
    %6697 = vmatprep.subr.mxu0 0.0
    %6698 = vmatpush1.msra.mxu0 0.0
    %6699 = vmatprep.subr.mxu0 0.0
    %6700 = vmatpush1.msra.mxu0 0.0
    %6701 = vmatprep.subr.mxu0 0.0
    %6702 = vmatpush1.msra.mxu0 0.0
    %6703 = vmatprep.subr.mxu0 0.0
    %6704 = vmatpush1.msra.mxu0 0.0
    %6705 = vmatprep.subr.mxu0 0.0
    %6706 = vmatpush1.msra.mxu0 0.0
    %6707 = vmatprep.subr.mxu0 0.0
    %6708 = vmatpush1.msra.mxu0 0.0
    %6709 = vmatprep.subr.mxu0 0.0
    %6710 = vmatpush1.msra.mxu0 0.0
    %6711 = vmatprep.subr.mxu0 0.0
    %6712 = vmatpush1.msra.mxu0 0.0
    %6713 = vmatprep.subr.mxu0 0.0
    %6714 = vmatpush1.msra.mxu0 0.0
    %6715 = vmatprep.subr.mxu0 0.0
    %6716 = vmatpush1.msra.mxu0 0.0
    %6717 = vmatprep.subr.mxu0 0.0
    %6718 = vmatpush1.msra.mxu0 0.0
    %6719 = vmatprep.subr.mxu0 0.0
    %6720 = vmatpush1.msra.mxu0 0.0
    %6721 = vmatprep.subr.mxu0 0.0
    %6722 = vmatpush1.msra.mxu0 0.0
    %6723 = vmatprep.subr.mxu0 0.0
    %6724 = vmatpush1.msra.mxu0 0.0
    %6725 = vmatprep.subr.mxu0 0.0
    %6726 = vmatpush1.msra.mxu0 0.0
    %6727 = vmatprep.subr.mxu0 0.0
    %6728 = vmatpush1.msra.mxu0 0.0
    %6729 = vmatprep.mubr.f32.mxu0 0.0
    %6730 = vmatmul.mubr.f32.gmra.mrb[0].mxu0 %v6654
    %v6731 = vpop.f32.mrb[0].mxu0
    %v6732 = vadd.f32 %v6651, %v6731
    %v6733 = vpop.f32.mrb[0].mxu0
    %6734 = vmatprep.mubr.f32.mxu0 0.0
    %6735 = vmatmul.mubr.f32.gmra.mrb[0].mxu0 %v6657
    %v6736 = vpop.f32.mrb[0].mxu0
    %v6737 = vadd.f32 %v6651, %v6736
    %v6738 = vpop.f32.mrb[0].mxu0
    %6739 = vmatprep.mubr.f32.mxu0 0.0
    %6740 = vmatmul.mubr.f32.gmra.mrb[0].mxu0 %v6660
    %v6741 = vpop.f32.mrb[0].mxu0
    %v6742 = vadd.f32 %v6651, %v6741
    %v6743 = vpop.f32.mrb[0].mxu0
    %6744 = vmatprep.mubr.f32.mxu0 0.0
    %6745 = vmatmul.mubr.f32.gmra.mrb[0].mxu0 %v6663
    %v6746 = vpop.f32.mrb[0].mxu0
    %v6747 = vadd.f32 %v6651, %v6746
    %v6748 = vpop.f32.mrb[0].mxu0
    %6749 = vdwg.mxu0
    %v6750 = vsel %vm1768, %v6732, -inf
    %6751 = vmax.xlane.f32.xlu0 %v6750
    %v6752 = vpop.xlane.xlu0 %6751
    %v6753 = vsel %vm1768, %v6737, -inf
    %6754 = vmax.xlane.f32.xlu0 %v6753
    %v6755 = vpop.xlane.xlu0 %6754
    %v6756 = vsel %vm1768, %v6742, -inf
    %6757 = vmax.xlane.f32.xlu0 %v6756
    %v6758 = vpop.xlane.xlu0 %6757
    %v6759 = vsel %vm1768, %v6747, -inf
    %6760 = vmax.xlane.f32.xlu0 %v6759
    %v6761 = vpop.xlane.xlu0 %6760
    %v6762 = vsub.f32 %v6732, %v6752
    %v6763 = vsub.f32 %v6737, %v6755
    %v6764 = vsub.f32 %v6742, %v6758
    %v6765 = vsub.f32 %v6747, %v6761
    %v6766 = vmul.f32 %v6762, 1.442695
    %v6767 = vpow.pop %v6766
    %v6768 = vmul.f32 %v6763, 1.442695
    %v6769 = vpow.pop %v6768
    %v6770 = vmul.f32 %v6764, 1.442695
    %v6771 = vpow.pop %v6770
    %v6772 = vmul.f32 %v6765, 1.442695
    %v6773 = vpow.pop %v6772
    %v6774 = vsel %vm1768, %v6767, 0.0
    %6775 = vadd.xlane.f32.xlu0 %v6774
    %v6776 = vpop.xlane.xlu0 %6775
    %v6777 = vsel %vm1768, %v6769, 0.0
    %6778 = vadd.xlane.f32.xlu0 %v6777
    %v6779 = vpop.xlane.xlu0 %6778
    %v6780 = vsel %vm1768, %v6771, 0.0
    %6781 = vadd.xlane.f32.xlu0 %v6780
    %v6782 = vpop.xlane.xlu0 %6781
    %v6783 = vsel %vm1768, %v6773, 0.0
    %6784 = vadd.xlane.f32.xlu0 %v6783
    %v6785 = vpop.xlane.xlu0 %6784
    %v6786 = vrcp.pop %v6776
    %v6787 = vmul.f32 %v6767, %v6786
    %v6788 = vrcp.pop %v6779
    %v6789 = vmul.f32 %v6769, %v6788
    %v6790 = vrcp.pop %v6782
    %v6791 = vmul.f32 %v6771, %v6790
    %v6792 = vrcp.pop %v6785
    %v6793 = vmul.f32 %v6773, %v6792
    %6794 = vxpose.xlu0.b32.start [1/16] %v6787, 128
    %6795 = vxpose.xlu0.b32.cont [2/16] %v6789, 128
    %6796 = vxpose.xlu0.b32.cont [3/16] 0.0, 128
    %6797 = vxpose.xlu0.b32.cont [4/16] 0.0, 128
    %6798 = vxpose.xlu0.b32.cont [5/16] 0.0, 128
    %6799 = vxpose.xlu0.b32.cont [6/16] 0.0, 128
    %6800 = vxpose.xlu0.b32.cont [7/16] 0.0, 128
    %6801 = vxpose.xlu0.b32.cont [8/16] 0.0, 128
    %6802 = vxpose.xlu0.b32.cont [9/16] 0.0, 128
    %6803 = vxpose.xlu0.b32.cont [10/16] 0.0, 128
    %6804 = vxpose.xlu0.b32.cont [11/16] 0.0, 128
    %6805 = vxpose.xlu0.b32.cont [12/16] 0.0, 128
    %6806 = vxpose.xlu0.b32.cont [13/16] 0.0, 128
    %6807 = vxpose.xlu0.b32.cont [14/16] 0.0, 128
    %6808 = vxpose.xlu0.b32.cont [15/16] 0.0, 128
    %6809 = vxpose.xlu0.b32.end [16/16] 0.0, 128
    %v6810 = vpop.trf.xlu0
    %v6811 = vpop.trf.xlu0
    %v6812 = vpop.trf.xlu0
    %v6813 = vpop.trf.xlu0
    %v6814 = vpop.trf.xlu0
    %v6815 = vpop.trf.xlu0
    %v6816 = vpop.trf.xlu0
    %v6817 = vpop.trf.xlu0
    %v6818 = vpop.trf.xlu0
    %v6819 = vpop.trf.xlu0
    %v6820 = vpop.trf.xlu0
    %v6821 = vpop.trf.xlu0
    %v6822 = vpop.trf.xlu0
    %v6823 = vpop.trf.xlu0
    %v6824 = vpop.trf.xlu0
    %v6825 = vpop.trf.xlu0
    %v6827 = vsel %vm1185, %v6810, 0
    %6829 = vmatprep.subr.mxu0 0.0
    %6830 = vmatpush1.msra.mxu0 %v6640
    %6831 = vmatprep.subr.mxu0 0.0
    %6832 = vmatpush1.msra.mxu0 %v6641
    %6833 = vmatprep.subr.mxu0 0.0
    %6834 = vmatpush1.msra.mxu0 0.0
    %6835 = vmatprep.subr.mxu0 0.0
    %6836 = vmatpush1.msra.mxu0 0.0
    %6837 = vmatprep.subr.mxu0 0.0
    %6838 = vmatpush1.msra.mxu0 0.0
    %6839 = vmatprep.subr.mxu0 0.0
    %6840 = vmatpush1.msra.mxu0 0.0
    %6841 = vmatprep.subr.mxu0 0.0
    %6842 = vmatpush1.msra.mxu0 0.0
    %6843 = vmatprep.subr.mxu0 0.0
    %6844 = vmatpush1.msra.mxu0 0.0
    %6845 = vmatprep.subr.mxu0 0.0
    %6846 = vmatpush1.msra.mxu0 0.0
    %6847 = vmatprep.subr.mxu0 0.0
    %6848 = vmatpush1.msra.mxu0 0.0
    %6849 = vmatprep.subr.mxu0 0.0
    %6850 = vmatpush1.msra.mxu0 0.0
    %6851 = vmatprep.subr.mxu0 0.0
    %6852 = vmatpush1.msra.mxu0 0.0
    %6853 = vmatprep.subr.mxu0 0.0
    %6854 = vmatpush1.msra.mxu0 0.0
    %6855 = vmatprep.subr.mxu0 0.0
    %6856 = vmatpush1.msra.mxu0 0.0
    %6857 = vmatprep.subr.mxu0 0.0
    %6858 = vmatpush1.msra.mxu0 0.0
    %6859 = vmatprep.subr.mxu0 0.0
    %6860 = vmatpush1.msra.mxu0 0.0
    %6861 = vmatprep.subr.mxu0 0.0
    %6862 = vmatpush1.msra.mxu0 0.0
    %6863 = vmatprep.subr.mxu0 0.0
    %6864 = vmatpush1.msra.mxu0 0.0
    %6865 = vmatprep.subr.mxu0 0.0
    %6866 = vmatpush1.msra.mxu0 0.0
    %6867 = vmatprep.subr.mxu0 0.0
    %6868 = vmatpush1.msra.mxu0 0.0
    %6869 = vmatprep.subr.mxu0 0.0
    %6870 = vmatpush1.msra.mxu0 0.0
    %6871 = vmatprep.subr.mxu0 0.0
    %6872 = vmatpush1.msra.mxu0 0.0
    %6873 = vmatprep.subr.mxu0 0.0
    %6874 = vmatpush1.msra.mxu0 0.0
    %6875 = vmatprep.subr.mxu0 0.0
    %6876 = vmatpush1.msra.mxu0 0.0
    %6877 = vmatprep.subr.mxu0 0.0
    %6878 = vmatpush1.msra.mxu0 0.0
    %6879 = vmatprep.subr.mxu0 0.0
    %6880 = vmatpush1.msra.mxu0 0.0
    %6881 = vmatprep.subr.mxu0 0.0
    %6882 = vmatpush1.msra.mxu0 0.0
    %6883 = vmatprep.subr.mxu0 0.0
    %6884 = vmatpush1.msra.mxu0 0.0
    %6885 = vmatprep.subr.mxu0 0.0
    %6886 = vmatpush1.msra.mxu0 0.0
    %6887 = vmatprep.subr.mxu0 0.0
    %6888 = vmatpush1.msra.mxu0 0.0
    %6889 = vmatprep.subr.mxu0 0.0
    %6890 = vmatpush1.msra.mxu0 0.0
    %6891 = vmatprep.subr.mxu0 0.0
    %6892 = vmatpush1.msra.mxu0 0.0
    %6893 = vmatprep.mubr.f32.mxu0 0.0
    %6894 = vmatmul.mubr.f32.gmra.mrb[0].mxu0 %v6827
    %v6895 = vpop.f32.mrb[0].mxu0
    %v6896 = vadd.f32 0.0, %v6895
    %v6897 = vpop.f32.mrb[0].mxu0
    %6898 = vdwg.mxu0
    %6899 = vmatprep.subr.mxu0 0.0
    %6900 = vmatpush1.msra.mxu0 1.0
    %6901 = vmatprep.subr.mxu0 0.0
    %6902 = vmatpush1.msra.mxu0 1.0
    %6903 = vmatprep.subr.mxu0 0.0
    %6904 = vmatpush1.msra.mxu0 0.0
    %6905 = vmatprep.subr.mxu0 0.0
    %6906 = vmatpush1.msra.mxu0 0.0
    %6907 = vmatprep.subr.mxu0 0.0
    %6908 = vmatpush1.msra.mxu0 0.0
    %6909 = vmatprep.subr.mxu0 0.0
    %6910 = vmatpush1.msra.mxu0 0.0
    %6911 = vmatprep.subr.mxu0 0.0
    %6912 = vmatpush1.msra.mxu0 0.0
    %6913 = vmatprep.subr.mxu0 0.0
    %6914 = vmatpush1.msra.mxu0 0.0
    %6915 = vmatprep.subr.mxu0 0.0
    %6916 = vmatpush1.msra.mxu0 0.0
    %6917 = vmatprep.subr.mxu0 0.0
    %6918 = vmatpush1.msra.mxu0 0.0
    %6919 = vmatprep.subr.mxu0 0.0
    %6920 = vmatpush1.msra.mxu0 0.0
    %6921 = vmatprep.subr.mxu0 0.0
    %6922 = vmatpush1.msra.mxu0 0.0
    %6923 = vmatprep.subr.mxu0 0.0
    %6924 = vmatpush1.msra.mxu0 0.0
    %6925 = vmatprep.subr.mxu0 0.0
    %6926 = vmatpush1.msra.mxu0 0.0
    %6927 = vmatprep.subr.mxu0 0.0
    %6928 = vmatpush1.msra.mxu0 0.0
    %6929 = vmatprep.subr.mxu0 0.0
    %6930 = vmatpush1.msra.mxu0 0.0
    %6931 = vmatprep.subr.mxu0 0.0
    %6932 = vmatpush1.msra.mxu0 0.0
    %6933 = vmatprep.subr.mxu0 0.0
    %6934 = vmatpush1.msra.mxu0 0.0
    %6935 = vmatprep.subr.mxu0 0.0
    %6936 = vmatpush1.msra.mxu0 0.0
    %6937 = vmatprep.subr.mxu0 0.0
    %6938 = vmatpush1.msra.mxu0 0.0
    %6939 = vmatprep.subr.mxu0 0.0
    %6940 = vmatpush1.msra.mxu0 0.0
    %6941 = vmatprep.subr.mxu0 0.0
    %6942 = vmatpush1.msra.mxu0 0.0
    %6943 = vmatprep.subr.mxu0 0.0
    %6944 = vmatpush1.msra.mxu0 0.0
    %6945 = vmatprep.subr.mxu0 0.0
    %6946 = vmatpush1.msra.mxu0 0.0
    %6947 = vmatprep.subr.mxu0 0.0
    %6948 = vmatpush1.msra.mxu0 0.0
    %6949 = vmatprep.subr.mxu0 0.0
    %6950 = vmatpush1.msra.mxu0 0.0
    %6951 = vmatprep.subr.mxu0 0.0
    %6952 = vmatpush1.msra.mxu0 0.0
    %6953 = vmatprep.subr.mxu0 0.0
    %6954 = vmatpush1.msra.mxu0 0.0
    %6955 = vmatprep.subr.mxu0 0.0
    %6956 = vmatpush1.msra.mxu0 0.0
    %6957 = vmatprep.subr.mxu0 0.0
    %6958 = vmatpush1.msra.mxu0 0.0
    %6959 = vmatprep.subr.mxu0 0.0
    %6960 = vmatpush1.msra.mxu0 0.0
    %6961 = vmatprep.subr.mxu0 0.0
    %6962 = vmatpush1.msra.mxu0 0.0
    %6963 = vmatprep.mubr.f32.mxu0 0.0
    %6964 = vmatmul.mubr.f32.gmra.mrb[0].mxu0 %v6827
    %v6965 = vpop.f32.mrb[0].mxu0
    %v6966 = vadd.f32 0.0, %v6965
    %v6967 = vpop.f32.mrb[0].mxu0
    %6968 = vdwg.mxu0
    %6970 = vset.pattern.permute.xlu0 0
    %6971 = vperm.xlu0 %6970, %v6966
    %v6972 = vpop.permute.xlu0 %6971
    %v6974 = vmul.f32 %v6972, %v1132
    %v6975 = vsub.f32 %v6896, %v6974
    %v6976 = vmul.f32 %v6975, %v6975
    %vm6977 = vcmask 125952
    %v6978 = vsel %vm6977, %v6976, 0.0
    %6979 = vadd.xlane.f32.xlu0 %v6978
    %v6980 = vpop.xlane.xlu0 %6979
    %v6981 = vadd.f32 %v6980, 1e-12
    %v6982 = vrsqrt.pop %v6981
    %v6983 = vmul.f32 %v6975, %v6982
    %v6984 = vmul.f32 %v6983, %v6983
    %v6985 = vsel %vm6977, %v6984, 0.0
    %6986 = vadd.xlane.f32.xlu0 %v6985
    %v6987 = vpop.xlane.xlu0 %6986
    %v6988 = vrot.slane %v6987, 4
    %v6989 = vadd.f32 %v6987, %v6988
    %v6990 = vrot.slane %v6989, 2
    %v6991 = vadd.f32 %v6989, %v6990
    %v6992 = vrot.slane %v6991, 1
    %v6993 = vadd.f32 %v6991, %v6992
    %s6994 = vtos %v6993
    %s6995 = sadd.f32 %s6994, 1e-12
    %v6996 = vstv %s6995
    %v6997 = vrsqrt.pop %v6996
    %s6998 = vtos %v6997
    %v6999 = vstv %s6998
    %v7000 = vmul.f32 %v6983, %v6999
    %v7001 = vld [vmem:[%s12] sm:$0x1]
    %v7002 = vld [vmem:[%s11] sm:$0xff]
    %v7003 = vld [vmem:[%s11 + $0x8] sm:$0xff]
    %v7005 = vsel %vm1185, %v7000, 0
    %7007 = vmatprep.subr.mxu0 0.0
    %7008 = vmatpush1.msra.mxu0 %v7002
    %7009 = vmatprep.subr.mxu0 0.0
    %7010 = vmatpush1.msra.mxu0 %v7003
    %7011 = vmatprep.subr.mxu0 0.0
    %7012 = vmatpush1.msra.mxu0 0.0
    %7013 = vmatprep.subr.mxu0 0.0
    %7014 = vmatpush1.msra.mxu0 0.0
    %7015 = vmatprep.subr.mxu0 0.0
    %7016 = vmatpush1.msra.mxu0 0.0
    %7017 = vmatprep.subr.mxu0 0.0
    %7018 = vmatpush1.msra.mxu0 0.0
    %7019 = vmatprep.subr.mxu0 0.0
    %7020 = vmatpush1.msra.mxu0 0.0
    %7021 = vmatprep.subr.mxu0 0.0
    %7022 = vmatpush1.msra.mxu0 0.0
    %7023 = vmatprep.subr.mxu0 0.0
    %7024 = vmatpush1.msra.mxu0 0.0
    %7025 = vmatprep.subr.mxu0 0.0
    %7026 = vmatpush1.msra.mxu0 0.0
    %7027 = vmatprep.subr.mxu0 0.0
    %7028 = vmatpush1.msra.mxu0 0.0
    %7029 = vmatprep.subr.mxu0 0.0
    %7030 = vmatpush1.msra.mxu0 0.0
    %7031 = vmatprep.subr.mxu0 0.0
    %7032 = vmatpush1.msra.mxu0 0.0
    %7033 = vmatprep.subr.mxu0 0.0
    %7034 = vmatpush1.msra.mxu0 0.0
    %7035 = vmatprep.subr.mxu0 0.0
    %7036 = vmatpush1.msra.mxu0 0.0
    %7037 = vmatprep.subr.mxu0 0.0
    %7038 = vmatpush1.msra.mxu0 0.0
    %7039 = vmatprep.subr.mxu0 0.0
    %7040 = vmatpush1.msra.mxu0 0.0
    %7041 = vmatprep.subr.mxu0 0.0
    %7042 = vmatpush1.msra.mxu0 0.0
    %7043 = vmatprep.subr.mxu0 0.0
    %7044 = vmatpush1.msra.mxu0 0.0
    %7045 = vmatprep.subr.mxu0 0.0
    %7046 = vmatpush1.msra.mxu0 0.0
    %7047 = vmatprep.subr.mxu0 0.0
    %7048 = vmatpush1.msra.mxu0 0.0
    %7049 = vmatprep.subr.mxu0 0.0
    %7050 = vmatpush1.msra.mxu0 0.0
    %7051 = vmatprep.subr.mxu0 0.0
    %7052 = vmatpush1.msra.mxu0 0.0
    %7053 = vmatprep.subr.mxu0 0.0
    %7054 = vmatpush1.msra.mxu0 0.0
    %7055 = vmatprep.subr.mxu0 0.0
    %7056 = vmatpush1.msra.mxu0 0.0
    %7057 = vmatprep.subr.mxu0 0.0
    %7058 = vmatpush1.msra.mxu0 0.0
    %7059 = vmatprep.subr.mxu0 0.0
    %7060 = vmatpush1.msra.mxu0 0.0
    %7061 = vmatprep.subr.mxu0 0.0
    %7062 = vmatpush1.msra.mxu0 0.0
    %7063 = vmatprep.subr.mxu0 0.0
    %7064 = vmatpush1.msra.mxu0 0.0
    %7065 = vmatprep.subr.mxu0 0.0
    %7066 = vmatpush1.msra.mxu0 0.0
    %7067 = vmatprep.subr.mxu0 0.0
    %7068 = vmatpush1.msra.mxu0 0.0
    %7069 = vmatprep.subr.mxu0 0.0
    %7070 = vmatpush1.msra.mxu0 0.0
    %7071 = vmatprep.mubr.f32.mxu0 0.0
    %7072 = vmatmul.mubr.f32.gmra.mrb[0].mxu0 %v7005
    %v7073 = vpop.f32.mrb[0].mxu0
    %v7074 = vadd.f32 0.0, %v7073
    %v7075 = vpop.f32.mrb[0].mxu0
    %7076 = vdwg.mxu0
    %v7077 = vadd.f32 %v7001, %v7074
    %v7078 = vld [vmem:[%s11 + $0x10] sm:$0xff]
    %v7079 = vld [vmem:[%s11 + $0x18] sm:$0xff]
    %v7080 = vrot.slane %v7000, 1
    %v7081 = vsel %vm1185, %v7080, 0
    %7083 = vmatprep.subr.mxu0 0.0
    %7084 = vmatpush1.msra.mxu0 %v7078
    %7085 = vmatprep.subr.mxu0 0.0
    %7086 = vmatpush1.msra.mxu0 %v7079
    %7087 = vmatprep.subr.mxu0 0.0
    %7088 = vmatpush1.msra.mxu0 0.0
    %7089 = vmatprep.subr.mxu0 0.0
    %7090 = vmatpush1.msra.mxu0 0.0
    %7091 = vmatprep.subr.mxu0 0.0
    %7092 = vmatpush1.msra.mxu0 0.0
    %7093 = vmatprep.subr.mxu0 0.0
    %7094 = vmatpush1.msra.mxu0 0.0
    %7095 = vmatprep.subr.mxu0 0.0
    %7096 = vmatpush1.msra.mxu0 0.0
    %7097 = vmatprep.subr.mxu0 0.0
    %7098 = vmatpush1.msra.mxu0 0.0
    %7099 = vmatprep.subr.mxu0 0.0
    %7100 = vmatpush1.msra.mxu0 0.0
    %7101 = vmatprep.subr.mxu0 0.0
    %7102 = vmatpush1.msra.mxu0 0.0
    %7103 = vmatprep.subr.mxu0 0.0
    %7104 = vmatpush1.msra.mxu0 0.0
    %7105 = vmatprep.subr.mxu0 0.0
    %7106 = vmatpush1.msra.mxu0 0.0
    %7107 = vmatprep.subr.mxu0 0.0
    %7108 = vmatpush1.msra.mxu0 0.0
    %7109 = vmatprep.subr.mxu0 0.0
    %7110 = vmatpush1.msra.mxu0 0.0
    %7111 = vmatprep.subr.mxu0 0.0
    %7112 = vmatpush1.msra.mxu0 0.0
    %7113 = vmatprep.subr.mxu0 0.0
    %7114 = vmatpush1.msra.mxu0 0.0
    %7115 = vmatprep.subr.mxu0 0.0
    %7116 = vmatpush1.msra.mxu0 0.0
    %7117 = vmatprep.subr.mxu0 0.0
    %7118 = vmatpush1.msra.mxu0 0.0
    %7119 = vmatprep.subr.mxu0 0.0
    %7120 = vmatpush1.msra.mxu0 0.0
    %7121 = vmatprep.subr.mxu0 0.0
    %7122 = vmatpush1.msra.mxu0 0.0
    %7123 = vmatprep.subr.mxu0 0.0
    %7124 = vmatpush1.msra.mxu0 0.0
    %7125 = vmatprep.subr.mxu0 0.0
    %7126 = vmatpush1.msra.mxu0 0.0
    %7127 = vmatprep.subr.mxu0 0.0
    %7128 = vmatpush1.msra.mxu0 0.0
    %7129 = vmatprep.subr.mxu0 0.0
    %7130 = vmatpush1.msra.mxu0 0.0
    %7131 = vmatprep.subr.mxu0 0.0
    %7132 = vmatpush1.msra.mxu0 0.0
    %7133 = vmatprep.subr.mxu0 0.0
    %7134 = vmatpush1.msra.mxu0 0.0
    %7135 = vmatprep.subr.mxu0 0.0
    %7136 = vmatpush1.msra.mxu0 0.0
    %7137 = vmatprep.subr.mxu0 0.0
    %7138 = vmatpush1.msra.mxu0 0.0
    %7139 = vmatprep.subr.mxu0 0.0
    %7140 = vmatpush1.msra.mxu0 0.0
    %7141 = vmatprep.subr.mxu0 0.0
    %7142 = vmatpush1.msra.mxu0 0.0
    %7143 = vmatprep.subr.mxu0 0.0
    %7144 = vmatpush1.msra.mxu0 0.0
    %7145 = vmatprep.subr.mxu0 0.0
    %7146 = vmatpush1.msra.mxu0 0.0
    %7147 = vmatprep.mubr.f32.mxu0 0.0
    %7148 = vmatmul.mubr.f32.gmra.mrb[0].mxu0 %v7081
    %v7149 = vpop.f32.mrb[0].mxu0
    %v7150 = vadd.f32 0.0, %v7149
    %v7151 = vpop.f32.mrb[0].mxu0
    %7152 = vdwg.mxu0
    %v7153 = vadd.f32 %v7077, %v7150
    %v7154 = vld [vmem:[%s11 + $0x20] sm:$0xff]
    %v7155 = vld [vmem:[%s11 + $0x28] sm:$0xff]
    %v7156 = vrot.slane %v7000, 2
    %v7157 = vsel %vm1185, %v7156, 0
    %7159 = vmatprep.subr.mxu0 0.0
    %7160 = vmatpush1.msra.mxu0 %v7154
    %7161 = vmatprep.subr.mxu0 0.0
    %7162 = vmatpush1.msra.mxu0 %v7155
    %7163 = vmatprep.subr.mxu0 0.0
    %7164 = vmatpush1.msra.mxu0 0.0
    %7165 = vmatprep.subr.mxu0 0.0
    %7166 = vmatpush1.msra.mxu0 0.0
    %7167 = vmatprep.subr.mxu0 0.0
    %7168 = vmatpush1.msra.mxu0 0.0
    %7169 = vmatprep.subr.mxu0 0.0
    %7170 = vmatpush1.msra.mxu0 0.0
    %7171 = vmatprep.subr.mxu0 0.0
    %7172 = vmatpush1.msra.mxu0 0.0
    %7173 = vmatprep.subr.mxu0 0.0
    %7174 = vmatpush1.msra.mxu0 0.0
    %7175 = vmatprep.subr.mxu0 0.0
    %7176 = vmatpush1.msra.mxu0 0.0
    %7177 = vmatprep.subr.mxu0 0.0
    %7178 = vmatpush1.msra.mxu0 0.0
    %7179 = vmatprep.subr.mxu0 0.0
    %7180 = vmatpush1.msra.mxu0 0.0
    %7181 = vmatprep.subr.mxu0 0.0
    %7182 = vmatpush1.msra.mxu0 0.0
    %7183 = vmatprep.subr.mxu0 0.0
    %7184 = vmatpush1.msra.mxu0 0.0
    %7185 = vmatprep.subr.mxu0 0.0
    %7186 = vmatpush1.msra.mxu0 0.0
    %7187 = vmatprep.subr.mxu0 0.0
    %7188 = vmatpush1.msra.mxu0 0.0
    %7189 = vmatprep.subr.mxu0 0.0
    %7190 = vmatpush1.msra.mxu0 0.0
    %7191 = vmatprep.subr.mxu0 0.0
    %7192 = vmatpush1.msra.mxu0 0.0
    %7193 = vmatprep.subr.mxu0 0.0
    %7194 = vmatpush1.msra.mxu0 0.0
    %7195 = vmatprep.subr.mxu0 0.0
    %7196 = vmatpush1.msra.mxu0 0.0
    %7197 = vmatprep.subr.mxu0 0.0
    %7198 = vmatpush1.msra.mxu0 0.0
    %7199 = vmatprep.subr.mxu0 0.0
    %7200 = vmatpush1.msra.mxu0 0.0
    %7201 = vmatprep.subr.mxu0 0.0
    %7202 = vmatpush1.msra.mxu0 0.0
    %7203 = vmatprep.subr.mxu0 0.0
    %7204 = vmatpush1.msra.mxu0 0.0
    %7205 = vmatprep.subr.mxu0 0.0
    %7206 = vmatpush1.msra.mxu0 0.0
    %7207 = vmatprep.subr.mxu0 0.0
    %7208 = vmatpush1.msra.mxu0 0.0
    %7209 = vmatprep.subr.mxu0 0.0
    %7210 = vmatpush1.msra.mxu0 0.0
    %7211 = vmatprep.subr.mxu0 0.0
    %7212 = vmatpush1.msra.mxu0 0.0
    %7213 = vmatprep.subr.mxu0 0.0
    %7214 = vmatpush1.msra.mxu0 0.0
    %7215 = vmatprep.subr.mxu0 0.0
    %7216 = vmatpush1.msra.mxu0 0.0
    %7217 = vmatprep.subr.mxu0 0.0
    %7218 = vmatpush1.msra.mxu0 0.0
    %7219 = vmatprep.subr.mxu0 0.0
    %7220 = vmatpush1.msra.mxu0 0.0
    %7221 = vmatprep.subr.mxu0 0.0
    %7222 = vmatpush1.msra.mxu0 0.0
    %7223 = vmatprep.mubr.f32.mxu0 0.0
    %7224 = vmatmul.mubr.f32.gmra.mrb[0].mxu0 %v7157
    %v7225 = vpop.f32.mrb[0].mxu0
    %v7226 = vadd.f32 0.0, %v7225
    %v7227 = vpop.f32.mrb[0].mxu0
    %7228 = vdwg.mxu0
    %v7229 = vadd.f32 %v7153, %v7226
    %v7230 = vld [vmem:[%s11 + $0x30] sm:$0xff]
    %v7231 = vld [vmem:[%s11 + $0x38] sm:$0xff]
    %v7232 = vrot.slane %v7000, 3
    %v7233 = vsel %vm1185, %v7232, 0
    %7235 = vmatprep.subr.mxu0 0.0
    %7236 = vmatpush1.msra.mxu0 %v7230
    %7237 = vmatprep.subr.mxu0 0.0
    %7238 = vmatpush1.msra.mxu0 %v7231
    %7239 = vmatprep.subr.mxu0 0.0
    %7240 = vmatpush1.msra.mxu0 0.0
    %7241 = vmatprep.subr.mxu0 0.0
    %7242 = vmatpush1.msra.mxu0 0.0
    %7243 = vmatprep.subr.mxu0 0.0
    %7244 = vmatpush1.msra.mxu0 0.0
    %7245 = vmatprep.subr.mxu0 0.0
    %7246 = vmatpush1.msra.mxu0 0.0
    %7247 = vmatprep.subr.mxu0 0.0
    %7248 = vmatpush1.msra.mxu0 0.0
    %7249 = vmatprep.subr.mxu0 0.0
    %7250 = vmatpush1.msra.mxu0 0.0
    %7251 = vmatprep.subr.mxu0 0.0
    %7252 = vmatpush1.msra.mxu0 0.0
    %7253 = vmatprep.subr.mxu0 0.0
    %7254 = vmatpush1.msra.mxu0 0.0
    %7255 = vmatprep.subr.mxu0 0.0
    %7256 = vmatpush1.msra.mxu0 0.0
    %7257 = vmatprep.subr.mxu0 0.0
    %7258 = vmatpush1.msra.mxu0 0.0
    %7259 = vmatprep.subr.mxu0 0.0
    %7260 = vmatpush1.msra.mxu0 0.0
    %7261 = vmatprep.subr.mxu0 0.0
    %7262 = vmatpush1.msra.mxu0 0.0
    %7263 = vmatprep.subr.mxu0 0.0
    %7264 = vmatpush1.msra.mxu0 0.0
    %7265 = vmatprep.subr.mxu0 0.0
    %7266 = vmatpush1.msra.mxu0 0.0
    %7267 = vmatprep.subr.mxu0 0.0
    %7268 = vmatpush1.msra.mxu0 0.0
    %7269 = vmatprep.subr.mxu0 0.0
    %7270 = vmatpush1.msra.mxu0 0.0
    %7271 = vmatprep.subr.mxu0 0.0
    %7272 = vmatpush1.msra.mxu0 0.0
    %7273 = vmatprep.subr.mxu0 0.0
    %7274 = vmatpush1.msra.mxu0 0.0
    %7275 = vmatprep.subr.mxu0 0.0
    %7276 = vmatpush1.msra.mxu0 0.0
    %7277 = vmatprep.subr.mxu0 0.0
    %7278 = vmatpush1.msra.mxu0 0.0
    %7279 = vmatprep.subr.mxu0 0.0
    %7280 = vmatpush1.msra.mxu0 0.0
    %7281 = vmatprep.subr.mxu0 0.0
    %7282 = vmatpush1.msra.mxu0 0.0
    %7283 = vmatprep.subr.mxu0 0.0
    %7284 = vmatpush1.msra.mxu0 0.0
    %7285 = vmatprep.subr.mxu0 0.0
    %7286 = vmatpush1.msra.mxu0 0.0
    %7287 = vmatprep.subr.mxu0 0.0
    %7288 = vmatpush1.msra.mxu0 0.0
    %7289 = vmatprep.subr.mxu0 0.0
    %7290 = vmatpush1.msra.mxu0 0.0
    %7291 = vmatprep.subr.mxu0 0.0
    %7292 = vmatpush1.msra.mxu0 0.0
    %7293 = vmatprep.subr.mxu0 0.0
    %7294 = vmatpush1.msra.mxu0 0.0
    %7295 = vmatprep.subr.mxu0 0.0
    %7296 = vmatpush1.msra.mxu0 0.0
    %7297 = vmatprep.subr.mxu0 0.0
    %7298 = vmatpush1.msra.mxu0 0.0
    %7299 = vmatprep.mubr.f32.mxu0 0.0
    %7300 = vmatmul.mubr.f32.gmra.mrb[0].mxu0 %v7233
    %v7301 = vpop.f32.mrb[0].mxu0
    %v7302 = vadd.f32 0.0, %v7301
    %v7303 = vpop.f32.mrb[0].mxu0
    %7304 = vdwg.mxu0
    %v7305 = vadd.f32 %v7229, %v7302
    %v7306 = vmax.f32 %v7305, 0.0
    %v7307 = vld [vmem:[%s13] sm:$0xff]
    %v7308 = vld [vmem:[%s13 + $0x8] sm:$0xff]
    %v7309 = vld [vmem:[%s13 + $0x10] sm:$0xff]
    %v7310 = vld [vmem:[%s13 + $0x18] sm:$0xff]
    %v7311 = vld [vmem:[%s14] sm:$0x1]
    %vm7312 = vcmask 261120
    %v7314 = vsel %vm7312, %v7306, 0
    %7316 = vmatprep.subr.mxu0 0.0
    %7317 = vmatpush1.msra.mxu0 %v7307
    %7318 = vmatprep.subr.mxu0 0.0
    %7319 = vmatpush1.msra.mxu0 %v7308
    %7320 = vmatprep.subr.mxu0 0.0
    %7321 = vmatpush1.msra.mxu0 %v7309
    %7322 = vmatprep.subr.mxu0 0.0
    %7323 = vmatpush1.msra.mxu0 %v7310
    %7324 = vmatprep.subr.mxu0 0.0
    %7325 = vmatpush1.msra.mxu0 0.0
    %7326 = vmatprep.subr.mxu0 0.0
    %7327 = vmatpush1.msra.mxu0 0.0
    %7328 = vmatprep.subr.mxu0 0.0
    %7329 = vmatpush1.msra.mxu0 0.0
    %7330 = vmatprep.subr.mxu0 0.0
    %7331 = vmatpush1.msra.mxu0 0.0
    %7332 = vmatprep.subr.mxu0 0.0
    %7333 = vmatpush1.msra.mxu0 0.0
    %7334 = vmatprep.subr.mxu0 0.0
    %7335 = vmatpush1.msra.mxu0 0.0
    %7336 = vmatprep.subr.mxu0 0.0
    %7337 = vmatpush1.msra.mxu0 0.0
    %7338 = vmatprep.subr.mxu0 0.0
    %7339 = vmatpush1.msra.mxu0 0.0
    %7340 = vmatprep.subr.mxu0 0.0
    %7341 = vmatpush1.msra.mxu0 0.0
    %7342 = vmatprep.subr.mxu0 0.0
    %7343 = vmatpush1.msra.mxu0 0.0
    %7344 = vmatprep.subr.mxu0 0.0
    %7345 = vmatpush1.msra.mxu0 0.0
    %7346 = vmatprep.subr.mxu0 0.0
    %7347 = vmatpush1.msra.mxu0 0.0
    %7348 = vmatprep.subr.mxu0 0.0
    %7349 = vmatpush1.msra.mxu0 0.0
    %7350 = vmatprep.subr.mxu0 0.0
    %7351 = vmatpush1.msra.mxu0 0.0
    %7352 = vmatprep.subr.mxu0 0.0
    %7353 = vmatpush1.msra.mxu0 0.0
    %7354 = vmatprep.subr.mxu0 0.0
    %7355 = vmatpush1.msra.mxu0 0.0
    %7356 = vmatprep.subr.mxu0 0.0
    %7357 = vmatpush1.msra.mxu0 0.0
    %7358 = vmatprep.subr.mxu0 0.0
    %7359 = vmatpush1.msra.mxu0 0.0
    %7360 = vmatprep.subr.mxu0 0.0
    %7361 = vmatpush1.msra.mxu0 0.0
    %7362 = vmatprep.subr.mxu0 0.0
    %7363 = vmatpush1.msra.mxu0 0.0
    %7364 = vmatprep.subr.mxu0 0.0
    %7365 = vmatpush1.msra.mxu0 0.0
    %7366 = vmatprep.subr.mxu0 0.0
    %7367 = vmatpush1.msra.mxu0 0.0
    %7368 = vmatprep.subr.mxu0 0.0
    %7369 = vmatpush1.msra.mxu0 0.0
    %7370 = vmatprep.subr.mxu0 0.0
    %7371 = vmatpush1.msra.mxu0 0.0
    %7372 = vmatprep.subr.mxu0 0.0
    %7373 = vmatpush1.msra.mxu0 0.0
    %7374 = vmatprep.subr.mxu0 0.0
    %7375 = vmatpush1.msra.mxu0 0.0
    %7376 = vmatprep.subr.mxu0 0.0
    %7377 = vmatpush1.msra.mxu0 0.0
    %7378 = vmatprep.subr.mxu0 0.0
    %7379 = vmatpush1.msra.mxu0 0.0
    %7380 = vmatprep.mubr.f32.mxu0 0.0
    %7381 = vmatmul.mubr.f32.gmra.mrb[0].mxu0 %v7314
    %v7382 = vpop.f32.mrb[0].mxu0
    %v7383 = vadd.f32 %v7311, %v7382
    %v7384 = vpop.f32.mrb[0].mxu0
    %7385 = vdwg.mxu0
    %7386 = vxpose.xlu0.b32.start [1/16] %v6791, 128
    %7387 = vxpose.xlu0.b32.cont [2/16] %v6793, 128
    %7388 = vxpose.xlu0.b32.cont [3/16] 0.0, 128
    %7389 = vxpose.xlu0.b32.cont [4/16] 0.0, 128
    %7390 = vxpose.xlu0.b32.cont [5/16] 0.0, 128
    %7391 = vxpose.xlu0.b32.cont [6/16] 0.0, 128
    %7392 = vxpose.xlu0.b32.cont [7/16] 0.0, 128
    %7393 = vxpose.xlu0.b32.cont [8/16] 0.0, 128
    %7394 = vxpose.xlu0.b32.cont [9/16] 0.0, 128
    %7395 = vxpose.xlu0.b32.cont [10/16] 0.0, 128
    %7396 = vxpose.xlu0.b32.cont [11/16] 0.0, 128
    %7397 = vxpose.xlu0.b32.cont [12/16] 0.0, 128
    %7398 = vxpose.xlu0.b32.cont [13/16] 0.0, 128
    %7399 = vxpose.xlu0.b32.cont [14/16] 0.0, 128
    %7400 = vxpose.xlu0.b32.cont [15/16] 0.0, 128
    %7401 = vxpose.xlu0.b32.end [16/16] 0.0, 128
    %v7402 = vpop.trf.xlu0
    %v7403 = vpop.trf.xlu0
    %v7404 = vpop.trf.xlu0
    %v7405 = vpop.trf.xlu0
    %v7406 = vpop.trf.xlu0
    %v7407 = vpop.trf.xlu0
    %v7408 = vpop.trf.xlu0
    %v7409 = vpop.trf.xlu0
    %v7410 = vpop.trf.xlu0
    %v7411 = vpop.trf.xlu0
    %v7412 = vpop.trf.xlu0
    %v7413 = vpop.trf.xlu0
    %v7414 = vpop.trf.xlu0
    %v7415 = vpop.trf.xlu0
    %v7416 = vpop.trf.xlu0
    %v7417 = vpop.trf.xlu0
    %v7419 = vsel %vm1185, %v7402, 0
    %7421 = vmatprep.subr.mxu0 0.0
    %7422 = vmatpush1.msra.mxu0 %v6642
    %7423 = vmatprep.subr.mxu0 0.0
    %7424 = vmatpush1.msra.mxu0 %v6643
    %7425 = vmatprep.subr.mxu0 0.0
    %7426 = vmatpush1.msra.mxu0 0.0
    %7427 = vmatprep.subr.mxu0 0.0
    %7428 = vmatpush1.msra.mxu0 0.0
    %7429 = vmatprep.subr.mxu0 0.0
    %7430 = vmatpush1.msra.mxu0 0.0
    %7431 = vmatprep.subr.mxu0 0.0
    %7432 = vmatpush1.msra.mxu0 0.0
    %7433 = vmatprep.subr.mxu0 0.0
    %7434 = vmatpush1.msra.mxu0 0.0
    %7435 = vmatprep.subr.mxu0 0.0
    %7436 = vmatpush1.msra.mxu0 0.0
    %7437 = vmatprep.subr.mxu0 0.0
    %7438 = vmatpush1.msra.mxu0 0.0
    %7439 = vmatprep.subr.mxu0 0.0
    %7440 = vmatpush1.msra.mxu0 0.0
    %7441 = vmatprep.subr.mxu0 0.0
    %7442 = vmatpush1.msra.mxu0 0.0
    %7443 = vmatprep.subr.mxu0 0.0
    %7444 = vmatpush1.msra.mxu0 0.0
    %7445 = vmatprep.subr.mxu0 0.0
    %7446 = vmatpush1.msra.mxu0 0.0
    %7447 = vmatprep.subr.mxu0 0.0
    %7448 = vmatpush1.msra.mxu0 0.0
    %7449 = vmatprep.subr.mxu0 0.0
    %7450 = vmatpush1.msra.mxu0 0.0
    %7451 = vmatprep.subr.mxu0 0.0
    %7452 = vmatpush1.msra.mxu0 0.0
    %7453 = vmatprep.subr.mxu0 0.0
    %7454 = vmatpush1.msra.mxu0 0.0
    %7455 = vmatprep.subr.mxu0 0.0
    %7456 = vmatpush1.msra.mxu0 0.0
    %7457 = vmatprep.subr.mxu0 0.0
    %7458 = vmatpush1.msra.mxu0 0.0
    %7459 = vmatprep.subr.mxu0 0.0
    %7460 = vmatpush1.msra.mxu0 0.0
    %7461 = vmatprep.subr.mxu0 0.0
    %7462 = vmatpush1.msra.mxu0 0.0
    %7463 = vmatprep.subr.mxu0 0.0
    %7464 = vmatpush1.msra.mxu0 0.0
    %7465 = vmatprep.subr.mxu0 0.0
    %7466 = vmatpush1.msra.mxu0 0.0
    %7467 = vmatprep.subr.mxu0 0.0
    %7468 = vmatpush1.msra.mxu0 0.0
    %7469 = vmatprep.subr.mxu0 0.0
    %7470 = vmatpush1.msra.mxu0 0.0
    %7471 = vmatprep.subr.mxu0 0.0
    %7472 = vmatpush1.msra.mxu0 0.0
    %7473 = vmatprep.subr.mxu0 0.0
    %7474 = vmatpush1.msra.mxu0 0.0
    %7475 = vmatprep.subr.mxu0 0.0
    %7476 = vmatpush1.msra.mxu0 0.0
    %7477 = vmatprep.subr.mxu0 0.0
    %7478 = vmatpush1.msra.mxu0 0.0
    %7479 = vmatprep.subr.mxu0 0.0
    %7480 = vmatpush1.msra.mxu0 0.0
    %7481 = vmatprep.subr.mxu0 0.0
    %7482 = vmatpush1.msra.mxu0 0.0
    %7483 = vmatprep.subr.mxu0 0.0
    %7484 = vmatpush1.msra.mxu0 0.0
    %7485 = vmatprep.mubr.f32.mxu0 0.0
    %7486 = vmatmul.mubr.f32.gmra.mrb[0].mxu0 %v7419
    %v7487 = vpop.f32.mrb[0].mxu0
    %v7488 = vadd.f32 0.0, %v7487
    %v7489 = vpop.f32.mrb[0].mxu0
    %7490 = vdwg.mxu0
    %7491 = vmatprep.subr.mxu0 0.0
    %7492 = vmatpush1.msra.mxu0 1.0
    %7493 = vmatprep.subr.mxu0 0.0
    %7494 = vmatpush1.msra.mxu0 1.0
    %7495 = vmatprep.subr.mxu0 0.0
    %7496 = vmatpush1.msra.mxu0 0.0
    %7497 = vmatprep.subr.mxu0 0.0
    %7498 = vmatpush1.msra.mxu0 0.0
    %7499 = vmatprep.subr.mxu0 0.0
    %7500 = vmatpush1.msra.mxu0 0.0
    %7501 = vmatprep.subr.mxu0 0.0
    %7502 = vmatpush1.msra.mxu0 0.0
    %7503 = vmatprep.subr.mxu0 0.0
    %7504 = vmatpush1.msra.mxu0 0.0
    %7505 = vmatprep.subr.mxu0 0.0
    %7506 = vmatpush1.msra.mxu0 0.0
    %7507 = vmatprep.subr.mxu0 0.0
    %7508 = vmatpush1.msra.mxu0 0.0
    %7509 = vmatprep.subr.mxu0 0.0
    %7510 = vmatpush1.msra.mxu0 0.0
    %7511 = vmatprep.subr.mxu0 0.0
    %7512 = vmatpush1.msra.mxu0 0.0
    %7513 = vmatprep.subr.mxu0 0.0
    %7514 = vmatpush1.msra.mxu0 0.0
    %7515 = vmatprep.subr.mxu0 0.0
    %7516 = vmatpush1.msra.mxu0 0.0
    %7517 = vmatprep.subr.mxu0 0.0
    %7518 = vmatpush1.msra.mxu0 0.0
    %7519 = vmatprep.subr.mxu0 0.0
    %7520 = vmatpush1.msra.mxu0 0.0
    %7521 = vmatprep.subr.mxu0 0.0
    %7522 = vmatpush1.msra.mxu0 0.0
    %7523 = vmatprep.subr.mxu0 0.0
    %7524 = vmatpush1.msra.mxu0 0.0
    %7525 = vmatprep.subr.mxu0 0.0
    %7526 = vmatpush1.msra.mxu0 0.0
    %7527 = vmatprep.subr.mxu0 0.0
    %7528 = vmatpush1.msra.mxu0 0.0
    %7529 = vmatprep.subr.mxu0 0.0
    %7530 = vmatpush1.msra.mxu0 0.0
    %7531 = vmatprep.subr.mxu0 0.0
    %7532 = vmatpush1.msra.mxu0 0.0
    %7533 = vmatprep.subr.mxu0 0.0
    %7534 = vmatpush1.msra.mxu0 0.0
    %7535 = vmatprep.subr.mxu0 0.0
    %7536 = vmatpush1.msra.mxu0 0.0
    %7537 = vmatprep.subr.mxu0 0.0
    %7538 = vmatpush1.msra.mxu0 0.0
    %7539 = vmatprep.subr.mxu0 0.0
    %7540 = vmatpush1.msra.mxu0 0.0
    %7541 = vmatprep.subr.mxu0 0.0
    %7542 = vmatpush1.msra.mxu0 0.0
    %7543 = vmatprep.subr.mxu0 0.0
    %7544 = vmatpush1.msra.mxu0 0.0
    %7545 = vmatprep.subr.mxu0 0.0
    %7546 = vmatpush1.msra.mxu0 0.0
    %7547 = vmatprep.subr.mxu0 0.0
    %7548 = vmatpush1.msra.mxu0 0.0
    %7549 = vmatprep.subr.mxu0 0.0
    %7550 = vmatpush1.msra.mxu0 0.0
    %7551 = vmatprep.subr.mxu0 0.0
    %7552 = vmatpush1.msra.mxu0 0.0
    %7553 = vmatprep.subr.mxu0 0.0
    %7554 = vmatpush1.msra.mxu0 0.0
    %7555 = vmatprep.mubr.f32.mxu0 0.0
    %7556 = vmatmul.mubr.f32.gmra.mrb[0].mxu0 %v7419
    %v7557 = vpop.f32.mrb[0].mxu0
    %v7558 = vadd.f32 0.0, %v7557
    %v7559 = vpop.f32.mrb[0].mxu0
    %7560 = vdwg.mxu0
    %7562 = vset.pattern.permute.xlu0 0
    %7563 = vperm.xlu0 %7562, %v7558
    %v7564 = vpop.permute.xlu0 %7563
    %v7566 = vmul.f32 %v7564, %v1132
    %v7567 = vsub.f32 %v7488, %v7566
    %v7568 = vmul.f32 %v7567, %v7567
    %v7569 = vsel %vm6977, %v7568, 0.0
    %7570 = vadd.xlane.f32.xlu0 %v7569
    %v7571 = vpop.xlane.xlu0 %7570
    %v7572 = vadd.f32 %v7571, 1e-12
    %v7573 = vrsqrt.pop %v7572
    %v7574 = vmul.f32 %v7567, %v7573
    %v7575 = vmul.f32 %v7574, %v7574
    %v7576 = vsel %vm6977, %v7575, 0.0
    %7577 = vadd.xlane.f32.xlu0 %v7576
    %v7578 = vpop.xlane.xlu0 %7577
    %v7579 = vrot.slane %v7578, 4
    %v7580 = vadd.f32 %v7578, %v7579
    %v7581 = vrot.slane %v7580, 2
    %v7582 = vadd.f32 %v7580, %v7581
    %v7583 = vrot.slane %v7582, 1
    %v7584 = vadd.f32 %v7582, %v7583
    %s7585 = vtos %v7584
    %s7586 = sadd.f32 %s7585, 1e-12
    %v7587 = vstv %s7586
    %v7588 = vrsqrt.pop %v7587
    %s7589 = vtos %v7588
    %v7590 = vstv %s7589
    %v7591 = vmul.f32 %v7574, %v7590
    %v7593 = vsel %vm1185, %v7591, 0
    %7595 = vmatprep.subr.mxu0 0.0
    %7596 = vmatpush1.msra.mxu0 %v7002
    %7597 = vmatprep.subr.mxu0 0.0
    %7598 = vmatpush1.msra.mxu0 %v7003
    %7599 = vmatprep.subr.mxu0 0.0
    %7600 = vmatpush1.msra.mxu0 0.0
    %7601 = vmatprep.subr.mxu0 0.0
    %7602 = vmatpush1.msra.mxu0 0.0
    %7603 = vmatprep.subr.mxu0 0.0
    %7604 = vmatpush1.msra.mxu0 0.0
    %7605 = vmatprep.subr.mxu0 0.0
    %7606 = vmatpush1.msra.mxu0 0.0
    %7607 = vmatprep.subr.mxu0 0.0
    %7608 = vmatpush1.msra.mxu0 0.0
    %7609 = vmatprep.subr.mxu0 0.0
    %7610 = vmatpush1.msra.mxu0 0.0
    %7611 = vmatprep.subr.mxu0 0.0
    %7612 = vmatpush1.msra.mxu0 0.0
    %7613 = vmatprep.subr.mxu0 0.0
    %7614 = vmatpush1.msra.mxu0 0.0
    %7615 = vmatprep.subr.mxu0 0.0
    %7616 = vmatpush1.msra.mxu0 0.0
    %7617 = vmatprep.subr.mxu0 0.0
    %7618 = vmatpush1.msra.mxu0 0.0
    %7619 = vmatprep.subr.mxu0 0.0
    %7620 = vmatpush1.msra.mxu0 0.0
    %7621 = vmatprep.subr.mxu0 0.0
    %7622 = vmatpush1.msra.mxu0 0.0
    %7623 = vmatprep.subr.mxu0 0.0
    %7624 = vmatpush1.msra.mxu0 0.0
    %7625 = vmatprep.subr.mxu0 0.0
    %7626 = vmatpush1.msra.mxu0 0.0
    %7627 = vmatprep.subr.mxu0 0.0
    %7628 = vmatpush1.msra.mxu0 0.0
    %7629 = vmatprep.subr.mxu0 0.0
    %7630 = vmatpush1.msra.mxu0 0.0
    %7631 = vmatprep.subr.mxu0 0.0
    %7632 = vmatpush1.msra.mxu0 0.0
    %7633 = vmatprep.subr.mxu0 0.0
    %7634 = vmatpush1.msra.mxu0 0.0
    %7635 = vmatprep.subr.mxu0 0.0
    %7636 = vmatpush1.msra.mxu0 0.0
    %7637 = vmatprep.subr.mxu0 0.0
    %7638 = vmatpush1.msra.mxu0 0.0
    %7639 = vmatprep.subr.mxu0 0.0
    %7640 = vmatpush1.msra.mxu0 0.0
    %7641 = vmatprep.subr.mxu0 0.0
    %7642 = vmatpush1.msra.mxu0 0.0
    %7643 = vmatprep.subr.mxu0 0.0
    %7644 = vmatpush1.msra.mxu0 0.0
    %7645 = vmatprep.subr.mxu0 0.0
    %7646 = vmatpush1.msra.mxu0 0.0
    %7647 = vmatprep.subr.mxu0 0.0
    %7648 = vmatpush1.msra.mxu0 0.0
    %7649 = vmatprep.subr.mxu0 0.0
    %7650 = vmatpush1.msra.mxu0 0.0
    %7651 = vmatprep.subr.mxu0 0.0
    %7652 = vmatpush1.msra.mxu0 0.0
    %7653 = vmatprep.subr.mxu0 0.0
    %7654 = vmatpush1.msra.mxu0 0.0
    %7655 = vmatprep.subr.mxu0 0.0
    %7656 = vmatpush1.msra.mxu0 0.0
    %7657 = vmatprep.subr.mxu0 0.0
    %7658 = vmatpush1.msra.mxu0 0.0
    %7659 = vmatprep.mubr.f32.mxu0 0.0
    %7660 = vmatmul.mubr.f32.gmra.mrb[0].mxu0 %v7593
    %v7661 = vpop.f32.mrb[0].mxu0
    %v7662 = vadd.f32 0.0, %v7661
    %v7663 = vpop.f32.mrb[0].mxu0
    %7664 = vdwg.mxu0
    %v7665 = vadd.f32 %v7001, %v7662
    %v7666 = vrot.slane %v7591, 1
    %v7667 = vsel %vm1185, %v7666, 0
    %7669 = vmatprep.subr.mxu0 0.0
    %7670 = vmatpush1.msra.mxu0 %v7078
    %7671 = vmatprep.subr.mxu0 0.0
    %7672 = vmatpush1.msra.mxu0 %v7079
    %7673 = vmatprep.subr.mxu0 0.0
    %7674 = vmatpush1.msra.mxu0 0.0
    %7675 = vmatprep.subr.mxu0 0.0
    %7676 = vmatpush1.msra.mxu0 0.0
    %7677 = vmatprep.subr.mxu0 0.0
    %7678 = vmatpush1.msra.mxu0 0.0
    %7679 = vmatprep.subr.mxu0 0.0
    %7680 = vmatpush1.msra.mxu0 0.0
    %7681 = vmatprep.subr.mxu0 0.0
    %7682 = vmatpush1.msra.mxu0 0.0
    %7683 = vmatprep.subr.mxu0 0.0
    %7684 = vmatpush1.msra.mxu0 0.0
    %7685 = vmatprep.subr.mxu0 0.0
    %7686 = vmatpush1.msra.mxu0 0.0
    %7687 = vmatprep.subr.mxu0 0.0
    %7688 = vmatpush1.msra.mxu0 0.0
    %7689 = vmatprep.subr.mxu0 0.0
    %7690 = vmatpush1.msra.mxu0 0.0
    %7691 = vmatprep.subr.mxu0 0.0
    %7692 = vmatpush1.msra.mxu0 0.0
    %7693 = vmatprep.subr.mxu0 0.0
    %7694 = vmatpush1.msra.mxu0 0.0
    %7695 = vmatprep.subr.mxu0 0.0
    %7696 = vmatpush1.msra.mxu0 0.0
    %7697 = vmatprep.subr.mxu0 0.0
    %7698 = vmatpush1.msra.mxu0 0.0
    %7699 = vmatprep.subr.mxu0 0.0
    %7700 = vmatpush1.msra.mxu0 0.0
    %7701 = vmatprep.subr.mxu0 0.0
    %7702 = vmatpush1.msra.mxu0 0.0
    %7703 = vmatprep.subr.mxu0 0.0
    %7704 = vmatpush1.msra.mxu0 0.0
    %7705 = vmatprep.subr.mxu0 0.0
    %7706 = vmatpush1.msra.mxu0 0.0
    %7707 = vmatprep.subr.mxu0 0.0
    %7708 = vmatpush1.msra.mxu0 0.0
    %7709 = vmatprep.subr.mxu0 0.0
    %7710 = vmatpush1.msra.mxu0 0.0
    %7711 = vmatprep.subr.mxu0 0.0
    %7712 = vmatpush1.msra.mxu0 0.0
    %7713 = vmatprep.subr.mxu0 0.0
    %7714 = vmatpush1.msra.mxu0 0.0
    %7715 = vmatprep.subr.mxu0 0.0
    %7716 = vmatpush1.msra.mxu0 0.0
    %7717 = vmatprep.subr.mxu0 0.0
    %7718 = vmatpush1.msra.mxu0 0.0
    %7719 = vmatprep.subr.mxu0 0.0
    %7720 = vmatpush1.msra.mxu0 0.0
    %7721 = vmatprep.subr.mxu0 0.0
    %7722 = vmatpush1.msra.mxu0 0.0
    %7723 = vmatprep.subr.mxu0 0.0
    %7724 = vmatpush1.msra.mxu0 0.0
    %7725 = vmatprep.subr.mxu0 0.0
    %7726 = vmatpush1.msra.mxu0 0.0
    %7727 = vmatprep.subr.mxu0 0.0
    %7728 = vmatpush1.msra.mxu0 0.0
    %7729 = vmatprep.subr.mxu0 0.0
    %7730 = vmatpush1.msra.mxu0 0.0
    %7731 = vmatprep.subr.mxu0 0.0
    %7732 = vmatpush1.msra.mxu0 0.0
    %7733 = vmatprep.mubr.f32.mxu0 0.0
    %7734 = vmatmul.mubr.f32.gmra.mrb[0].mxu0 %v7667
    %v7735 = vpop.f32.mrb[0].mxu0
    %v7736 = vadd.f32 0.0, %v7735
    %v7737 = vpop.f32.mrb[0].mxu0
    %7738 = vdwg.mxu0
    %v7739 = vadd.f32 %v7665, %v7736
    %v7740 = vrot.slane %v7591, 2
    %v7741 = vsel %vm1185, %v7740, 0
    %7743 = vmatprep.subr.mxu0 0.0
    %7744 = vmatpush1.msra.mxu0 %v7154
    %7745 = vmatprep.subr.mxu0 0.0
    %7746 = vmatpush1.msra.mxu0 %v7155
    %7747 = vmatprep.subr.mxu0 0.0
    %7748 = vmatpush1.msra.mxu0 0.0
    %7749 = vmatprep.subr.mxu0 0.0
    %7750 = vmatpush1.msra.mxu0 0.0
    %7751 = vmatprep.subr.mxu0 0.0
    %7752 = vmatpush1.msra.mxu0 0.0
    %7753 = vmatprep.subr.mxu0 0.0
    %7754 = vmatpush1.msra.mxu0 0.0
    %7755 = vmatprep.subr.mxu0 0.0
    %7756 = vmatpush1.msra.mxu0 0.0
    %7757 = vmatprep.subr.mxu0 0.0
    %7758 = vmatpush1.msra.mxu0 0.0
    %7759 = vmatprep.subr.mxu0 0.0
    %7760 = vmatpush1.msra.mxu0 0.0
    %7761 = vmatprep.subr.mxu0 0.0
    %7762 = vmatpush1.msra.mxu0 0.0
    %7763 = vmatprep.subr.mxu0 0.0
    %7764 = vmatpush1.msra.mxu0 0.0
    %7765 = vmatprep.subr.mxu0 0.0
    %7766 = vmatpush1.msra.mxu0 0.0
    %7767 = vmatprep.subr.mxu0 0.0
    %7768 = vmatpush1.msra.mxu0 0.0
    %7769 = vmatprep.subr.mxu0 0.0
    %7770 = vmatpush1.msra.mxu0 0.0
    %7771 = vmatprep.subr.mxu0 0.0
    %7772 = vmatpush1.msra.mxu0 0.0
    %7773 = vmatprep.subr.mxu0 0.0
    %7774 = vmatpush1.msra.mxu0 0.0
    %7775 = vmatprep.subr.mxu0 0.0
    %7776 = vmatpush1.msra.mxu0 0.0
    %7777 = vmatprep.subr.mxu0 0.0
    %7778 = vmatpush1.msra.mxu0 0.0
    %7779 = vmatprep.subr.mxu0 0.0
    %7780 = vmatpush1.msra.mxu0 0.0
    %7781 = vmatprep.subr.mxu0 0.0
    %7782 = vmatpush1.msra.mxu0 0.0
    %7783 = vmatprep.subr.mxu0 0.0
    %7784 = vmatpush1.msra.mxu0 0.0
    %7785 = vmatprep.subr.mxu0 0.0
    %7786 = vmatpush1.msra.mxu0 0.0
    %7787 = vmatprep.subr.mxu0 0.0
    %7788 = vmatpush1.msra.mxu0 0.0
    %7789 = vmatprep.subr.mxu0 0.0
    %7790 = vmatpush1.msra.mxu0 0.0
    %7791 = vmatprep.subr.mxu0 0.0
    %7792 = vmatpush1.msra.mxu0 0.0
    %7793 = vmatprep.subr.mxu0 0.0
    %7794 = vmatpush1.msra.mxu0 0.0
    %7795 = vmatprep.subr.mxu0 0.0
    %7796 = vmatpush1.msra.mxu0 0.0
    %7797 = vmatprep.subr.mxu0 0.0
    %7798 = vmatpush1.msra.mxu0 0.0
    %7799 = vmatprep.subr.mxu0 0.0
    %7800 = vmatpush1.msra.mxu0 0.0
    %7801 = vmatprep.subr.mxu0 0.0
    %7802 = vmatpush1.msra.mxu0 0.0
    %7803 = vmatprep.subr.mxu0 0.0
    %7804 = vmatpush1.msra.mxu0 0.0
    %7805 = vmatprep.subr.mxu0 0.0
    %7806 = vmatpush1.msra.mxu0 0.0
    %7807 = vmatprep.mubr.f32.mxu0 0.0
    %7808 = vmatmul.mubr.f32.gmra.mrb[0].mxu0 %v7741
    %v7809 = vpop.f32.mrb[0].mxu0
    %v7810 = vadd.f32 0.0, %v7809
    %v7811 = vpop.f32.mrb[0].mxu0
    %7812 = vdwg.mxu0
    %v7813 = vadd.f32 %v7739, %v7810
    %v7814 = vrot.slane %v7591, 3
    %v7815 = vsel %vm1185, %v7814, 0
    %7817 = vmatprep.subr.mxu0 0.0
    %7818 = vmatpush1.msra.mxu0 %v7230
    %7819 = vmatprep.subr.mxu0 0.0
    %7820 = vmatpush1.msra.mxu0 %v7231
    %7821 = vmatprep.subr.mxu0 0.0
    %7822 = vmatpush1.msra.mxu0 0.0
    %7823 = vmatprep.subr.mxu0 0.0
    %7824 = vmatpush1.msra.mxu0 0.0
    %7825 = vmatprep.subr.mxu0 0.0
    %7826 = vmatpush1.msra.mxu0 0.0
    %7827 = vmatprep.subr.mxu0 0.0
    %7828 = vmatpush1.msra.mxu0 0.0
    %7829 = vmatprep.subr.mxu0 0.0
    %7830 = vmatpush1.msra.mxu0 0.0
    %7831 = vmatprep.subr.mxu0 0.0
    %7832 = vmatpush1.msra.mxu0 0.0
    %7833 = vmatprep.subr.mxu0 0.0
    %7834 = vmatpush1.msra.mxu0 0.0
    %7835 = vmatprep.subr.mxu0 0.0
    %7836 = vmatpush1.msra.mxu0 0.0
    %7837 = vmatprep.subr.mxu0 0.0
    %7838 = vmatpush1.msra.mxu0 0.0
    %7839 = vmatprep.subr.mxu0 0.0
    %7840 = vmatpush1.msra.mxu0 0.0
    %7841 = vmatprep.subr.mxu0 0.0
    %7842 = vmatpush1.msra.mxu0 0.0
    %7843 = vmatprep.subr.mxu0 0.0
    %7844 = vmatpush1.msra.mxu0 0.0
    %7845 = vmatprep.subr.mxu0 0.0
    %7846 = vmatpush1.msra.mxu0 0.0
    %7847 = vmatprep.subr.mxu0 0.0
    %7848 = vmatpush1.msra.mxu0 0.0
    %7849 = vmatprep.subr.mxu0 0.0
    %7850 = vmatpush1.msra.mxu0 0.0
    %7851 = vmatprep.subr.mxu0 0.0
    %7852 = vmatpush1.msra.mxu0 0.0
    %7853 = vmatprep.subr.mxu0 0.0
    %7854 = vmatpush1.msra.mxu0 0.0
    %7855 = vmatprep.subr.mxu0 0.0
    %7856 = vmatpush1.msra.mxu0 0.0
    %7857 = vmatprep.subr.mxu0 0.0
    %7858 = vmatpush1.msra.mxu0 0.0
    %7859 = vmatprep.subr.mxu0 0.0
    %7860 = vmatpush1.msra.mxu0 0.0
    %7861 = vmatprep.subr.mxu0 0.0
    %7862 = vmatpush1.msra.mxu0 0.0
    %7863 = vmatprep.subr.mxu0 0.0
    %7864 = vmatpush1.msra.mxu0 0.0
    %7865 = vmatprep.subr.mxu0 0.0
    %7866 = vmatpush1.msra.mxu0 0.0
    %7867 = vmatprep.subr.mxu0 0.0
    %7868 = vmatpush1.msra.mxu0 0.0
    %7869 = vmatprep.subr.mxu0 0.0
    %7870 = vmatpush1.msra.mxu0 0.0
    %7871 = vmatprep.subr.mxu0 0.0
    %7872 = vmatpush1.msra.mxu0 0.0
    %7873 = vmatprep.subr.mxu0 0.0
    %7874 = vmatpush1.msra.mxu0 0.0
    %7875 = vmatprep.subr.mxu0 0.0
    %7876 = vmatpush1.msra.mxu0 0.0
    %7877 = vmatprep.subr.mxu0 0.0
    %7878 = vmatpush1.msra.mxu0 0.0
    %7879 = vmatprep.subr.mxu0 0.0
    %7880 = vmatpush1.msra.mxu0 0.0
    %7881 = vmatprep.mubr.f32.mxu0 0.0
    %7882 = vmatmul.mubr.f32.gmra.mrb[0].mxu0 %v7815
    %v7883 = vpop.f32.mrb[0].mxu0
    %v7884 = vadd.f32 0.0, %v7883
    %v7885 = vpop.f32.mrb[0].mxu0
    %7886 = vdwg.mxu0
    %v7887 = vadd.f32 %v7813, %v7884
    %v7888 = vmax.f32 %v7887, 0.0
    %v7890 = vsel %vm7312, %v7888, 0
    %7892 = vmatprep.subr.mxu0 0.0
    %7893 = vmatpush1.msra.mxu0 %v7307
    %7894 = vmatprep.subr.mxu0 0.0
    %7895 = vmatpush1.msra.mxu0 %v7308
    %7896 = vmatprep.subr.mxu0 0.0
    %7897 = vmatpush1.msra.mxu0 %v7309
    %7898 = vmatprep.subr.mxu0 0.0
    %7899 = vmatpush1.msra.mxu0 %v7310
    %7900 = vmatprep.subr.mxu0 0.0
    %7901 = vmatpush1.msra.mxu0 0.0
    %7902 = vmatprep.subr.mxu0 0.0
    %7903 = vmatpush1.msra.mxu0 0.0
    %7904 = vmatprep.subr.mxu0 0.0
    %7905 = vmatpush1.msra.mxu0 0.0
    %7906 = vmatprep.subr.mxu0 0.0
    %7907 = vmatpush1.msra.mxu0 0.0
    %7908 = vmatprep.subr.mxu0 0.0
    %7909 = vmatpush1.msra.mxu0 0.0
    %7910 = vmatprep.subr.mxu0 0.0
    %7911 = vmatpush1.msra.mxu0 0.0
    %7912 = vmatprep.subr.mxu0 0.0
    %7913 = vmatpush1.msra.mxu0 0.0
    %7914 = vmatprep.subr.mxu0 0.0
    %7915 = vmatpush1.msra.mxu0 0.0
    %7916 = vmatprep.subr.mxu0 0.0
    %7917 = vmatpush1.msra.mxu0 0.0
    %7918 = vmatprep.subr.mxu0 0.0
    %7919 = vmatpush1.msra.mxu0 0.0
    %7920 = vmatprep.subr.mxu0 0.0
    %7921 = vmatpush1.msra.mxu0 0.0
    %7922 = vmatprep.subr.mxu0 0.0
    %7923 = vmatpush1.msra.mxu0 0.0
    %7924 = vmatprep.subr.mxu0 0.0
    %7925 = vmatpush1.msra.mxu0 0.0
    %7926 = vmatprep.subr.mxu0 0.0
    %7927 = vmatpush1.msra.mxu0 0.0
    %7928 = vmatprep.subr.mxu0 0.0
    %7929 = vmatpush1.msra.mxu0 0.0
    %7930 = vmatprep.subr.mxu0 0.0
    %7931 = vmatpush1.msra.mxu0 0.0
    %7932 = vmatprep.subr.mxu0 0.0
    %7933 = vmatpush1.msra.mxu0 0.0
    %7934 = vmatprep.subr.mxu0 0.0
    %7935 = vmatpush1.msra.mxu0 0.0
    %7936 = vmatprep.subr.mxu0 0.0
    %7937 = vmatpush1.msra.mxu0 0.0
    %7938 = vmatprep.subr.mxu0 0.0
    %7939 = vmatpush1.msra.mxu0 0.0
    %7940 = vmatprep.subr.mxu0 0.0
    %7941 = vmatpush1.msra.mxu0 0.0
    %7942 = vmatprep.subr.mxu0 0.0
    %7943 = vmatpush1.msra.mxu0 0.0
    %7944 = vmatprep.subr.mxu0 0.0
    %7945 = vmatpush1.msra.mxu0 0.0
    %7946 = vmatprep.subr.mxu0 0.0
    %7947 = vmatpush1.msra.mxu0 0.0
    %7948 = vmatprep.subr.mxu0 0.0
    %7949 = vmatpush1.msra.mxu0 0.0
    %7950 = vmatprep.subr.mxu0 0.0
    %7951 = vmatpush1.msra.mxu0 0.0
    %7952 = vmatprep.subr.mxu0 0.0
    %7953 = vmatpush1.msra.mxu0 0.0
    %7954 = vmatprep.subr.mxu0 0.0
    %7955 = vmatpush1.msra.mxu0 0.0
    %7956 = vmatprep.mubr.f32.mxu0 0.0
    %7957 = vmatmul.mubr.f32.gmra.mrb[0].mxu0 %v7890
    %v7958 = vpop.f32.mrb[0].mxu0
    %v7959 = vadd.f32 %v7311, %v7958
    %v7960 = vpop.f32.mrb[0].mxu0
    %7961 = vdwg.mxu0
    %v7963 = vrot.slane %v7959, 7
    %vm7965 = vcmask 1040384
    %v7966 = vsel %vm7965, %v7383, %v7963
    %vm7967 = vcmask 50176
    %7968 = vst.msk [vmem:[#allocation2] sm:$0x3] %vm7967, %v7966
    // Predicated region
    $region62: #{embednet_forward.1} parent=1 // pred_check
      _
    $region63: #{embednet_forward.1} parent=1 // pred_check_branch
      %7970 = sbr.rel (0) target = $region65
    $region64: #{embednet_forward.1} parent=1 // pred_region
      %s7972 = ssub.s32 32, 32
      %7973 = vsyncadd [#allocation3], %s7972
      %s7975 = sshll.u32 [#allocation2], 4
      %s7976 = int_to_ptr.vmem [resolvable:$true] %s7975
      %7978 = dma.vmem_to_hbm [thread:$0]  %s7976, 32, %s15, [#allocation3]
    $region65: #{embednet_forward.1} parent=1 // pred_fallthru
      _
    // Predicated region
    $region66: #{embednet_forward.1} parent=1 // pred_check
      _
    $region67: #{embednet_forward.1} parent=1 // pred_check_branch
      %7980 = sbr.rel (0) target = $region69
    $region68: #{embednet_forward.1} parent=1 // pred_region
      %7981 = dma.done [#allocation3], 32
    $region69: #{embednet_forward.1} parent=1 // pred_fallthru
      _
    %7982 = vsyncpa [#allocation3], 1

</llo_original>
